<compile_context>
chip_gen: v7x
topology: tpu7x:2x2x1
jax: 0.10.0
libtpu: 0.0.40
codegen_flags: <defaults>
</compile_context>

<pallas_src>
import jax
import jax.numpy as jnp
from jax.experimental import pallas as pl
from jax.experimental.pallas import tpu as pltpu

EPS = 1e-5  # nn.LayerNorm default


def _full_spec(shape):
    nd = len(shape)
    return pl.BlockSpec(shape, lambda i, _nd=nd: (0,) * _nd)


def make_attention_kernel(B, N, D, heads, dim_head):
    inner = heads * dim_head
    scale = dim_head ** -0.5

    def kernel(x_ref, g_ref, b_ref, wqkv_ref, wout_ref, bout_ref, o_ref):
        # ---- LayerNorm(dim) over the feature (lane) axis, whole batch at once ----
        x = x_ref[...].reshape(B * N, D)                       # (B*N, D)
        mu = jnp.mean(x, axis=-1, keepdims=True)
        xc = x - mu
        var = jnp.mean(xc * xc, axis=-1, keepdims=True)
        xn = xc * jax.lax.rsqrt(var + EPS) * g_ref[...] + b_ref[...]

        # ---- fused QKV projection: one (B*N, D) @ (D, 3*inner) MXU matmul ----
        qkv = jnp.dot(xn, wqkv_ref[...], preferred_element_type=jnp.float32)

        # ---- per-head scaled-dot-product attention, batched over B per einsum ----
        head_outs = []
        for h in range(heads):                                 # static unroll (8)
            lo = h * dim_head
            q = qkv[:, lo:lo + dim_head].reshape(B, N, dim_head)
            k = qkv[:, inner + lo:inner + lo + dim_head].reshape(B, N, dim_head)
            v = qkv[:, 2 * inner + lo:2 * inner + lo + dim_head].reshape(B, N, dim_head)

            dots = jnp.einsum('bnd,bmd->bnm', q, k,
                              preferred_element_type=jnp.float32) * scale
            m = jnp.max(dots, axis=-1, keepdims=True)
            e = jnp.exp(dots - m)
            denom = jnp.sum(e, axis=-1, keepdims=True)
            attn = e * pl.reciprocal(denom, approx=True)       # EUP, not VALU divide

            head_outs.append(jnp.einsum('bnm,bmd->bnd', attn, v,
                                        preferred_element_type=jnp.float32))

        # ---- 'b h n d -> b n (h d)' + ONE output projection against full wout ----
        out = jnp.concatenate(head_outs, axis=-1).reshape(B * N, inner)
        y = jnp.dot(out, wout_ref[...], preferred_element_type=jnp.float32) + bout_ref[...]
        o_ref[...] = y.reshape(B, N, D)

    return kernel


def attention_forward(x, params, heads, dim_head):
    B, N, D = x.shape
    kernel = make_attention_kernel(B, N, D, heads, dim_head)
    args = (x, params['gamma'], params['beta'],
            params['wqkv'], params['wout'], params['bout'])
    return pl.pallas_call(
        kernel,
        grid=(1,),                                   # whole batch in one grid step
        in_specs=[_full_spec(a.shape) for a in args],
        out_specs=_full_spec((B, N, D)),
        out_shape=jax.ShapeDtypeStruct((B, N, D), jnp.float32),
        compiler_params=pltpu.CompilerParams(dimension_semantics=("arbitrary",)),
    )(*args)


def attention_reference(x, params, heads, dim_head):
    """Pure-JAX reference mirroring the PyTorch Attention module (dropout p=0)."""
    B, N, D = x.shape
    inner = heads * dim_head
    mu = jnp.mean(x, axis=-1, keepdims=True)
    var = jnp.mean((x - mu) ** 2, axis=-1, keepdims=True)
    xn = (x - mu) / jnp.sqrt(var + EPS) * params['gamma'][0] + params['beta'][0]
    qkv = xn @ params['wqkv']
    q, k, v = jnp.split(qkv, 3, axis=-1)

    def split_heads(t):
        return t.reshape(B, N, heads, dim_head).transpose(0, 2, 1, 3)

    q, k, v = map(split_heads, (q, k, v))
    dots = jnp.einsum('bhid,bhjd->bhij', q, k) * (dim_head ** -0.5)
    attn = jax.nn.softmax(dots, axis=-1)
    out = jnp.einsum('bhij,bhjd->bhid', attn, v)
    out = out.transpose(0, 2, 1, 3).reshape(B, N, inner)
    return out @ params['wout'] + params['bout'][0]


if __name__ == "__main__":
    B, N, D = 2, 128, 128          # batch, tokens, model dim (lane-dense)
    HEADS, DIM_HEAD = 8, 64        # module defaults
    INNER = HEADS * DIM_HEAD

    key = jax.random.PRNGKey(0)
    kx, kq, ko, kb = jax.random.split(key, 4)
    x = jax.random.normal(kx, (B, N, D), jnp.float32)
    params = dict(
        gamma=jnp.ones((1, D), jnp.float32),
        beta=jnp.zeros((1, D), jnp.float32),
        wqkv=0.05 * jax.random.normal(kq, (D, 3 * INNER), jnp.float32),   # Linear, no bias
        wout=0.05 * jax.random.normal(ko, (INNER, D), jnp.float32),       # to_out Linear
        bout=0.02 * jax.random.normal(kb, (1, D), jnp.float32),
    )

    fwd = jax.jit(lambda xx: attention_forward(xx, params, HEADS, DIM_HEAD))
    y = fwd(x)
    jax.block_until_ready(y)

    y_ref = attention_reference(x, params, HEADS, DIM_HEAD)
    assert y.shape == (B, N, D)
    assert bool(jnp.all(jnp.isfinite(y)))
    err = float(jnp.max(jnp.abs(y - y_ref)))
    assert err < 2e-2, f"max abs error vs reference: {err}"
    print("KERNEL_OK")
</pallas_src>

<mosaic_0001>
module attributes {stable_mosaic.version = 11 : i64} {
  func.func @kernel(%arg0: i32, %arg1: memref<2x128x128xf32, #tpu.memory_space<vmem>>, %arg2: memref<1x128xf32, #tpu.memory_space<vmem>>, %arg3: memref<1x128xf32, #tpu.memory_space<vmem>>, %arg4: memref<128x1536xf32, #tpu.memory_space<vmem>>, %arg5: memref<512x128xf32, #tpu.memory_space<vmem>>, %arg6: memref<1x128xf32, #tpu.memory_space<vmem>>, %arg7: memref<2x128x128xf32, #tpu.memory_space<vmem>>) attributes {dimension_semantics = [#tpu.dimension_semantics<arbitrary>], iteration_bounds = array<i64: 1>, scalar_prefetch = 0 : i64, scratch_operands = 0 : i64, tpu.core_type = #tpu.core_type<tc>, window_params = [{pipeline_mode = #tpu.pipeline_mode<synchronous>, transform_indices = @transform_0, window_bounds = array<i64: 2, 128, 128>}, {pipeline_mode = #tpu.pipeline_mode<synchronous>, transform_indices = @transform_1, window_bounds = array<i64: 1, 128>}, {pipeline_mode = #tpu.pipeline_mode<synchronous>, transform_indices = @transform_2, window_bounds = array<i64: 1, 128>}, {pipeline_mode = #tpu.pipeline_mode<synchronous>, transform_indices = @transform_3, window_bounds = array<i64: 128, 1536>}, {pipeline_mode = #tpu.pipeline_mode<synchronous>, transform_indices = @transform_4, window_bounds = array<i64: 512, 128>}, {pipeline_mode = #tpu.pipeline_mode<synchronous>, transform_indices = @transform_5, window_bounds = array<i64: 1, 128>}, {pipeline_mode = #tpu.pipeline_mode<synchronous>, transform_indices = @transform_6, window_bounds = array<i64: 2, 128, 128>}]} {
    %c0 = arith.constant 0 : index
    %c0_0 = arith.constant 0 : index
    %c0_1 = arith.constant 0 : index
    %0 = vector.load %arg1[%c0, %c0_0, %c0_1] : memref<2x128x128xf32, #tpu.memory_space<vmem>>, vector<2x128x128xf32>
    %1 = vector.shape_cast %0 : vector<2x128x128xf32> to vector<256x128xf32>
    %cst = arith.constant dense<0.000000e+00> : vector<256xf32>
    %2 = vector.multi_reduction <add>, %1, %cst [1] : vector<256x128xf32> to vector<256xf32>
    %3 = vector.shape_cast %2 : vector<256xf32> to vector<256x1xf32>
    %cst_2 = arith.constant 1.280000e+02 : f32
    %4 = vector.broadcast %cst_2 : f32 to vector<256x1xf32>
    %5 = arith.divf %3, %4 : vector<256x1xf32>
    %6 = vector.broadcast %5 : vector<256x1xf32> to vector<256x128xf32>
    %7 = arith.subf %1, %6 : vector<256x128xf32>
    %8 = arith.mulf %7, %7 : vector<256x128xf32>
    %cst_3 = arith.constant dense<0.000000e+00> : vector<256xf32>
    %9 = vector.multi_reduction <add>, %8, %cst_3 [1] : vector<256x128xf32> to vector<256xf32>
    %10 = vector.shape_cast %9 : vector<256xf32> to vector<256x1xf32>
    %cst_4 = arith.constant 1.280000e+02 : f32
    %11 = vector.broadcast %cst_4 : f32 to vector<256x1xf32>
    %12 = arith.divf %10, %11 : vector<256x1xf32>
    %cst_5 = arith.constant 9.99999974E-6 : f32
    %13 = vector.broadcast %cst_5 : f32 to vector<256x1xf32>
    %14 = arith.addf %12, %13 : vector<256x1xf32>
    %15 = math.rsqrt %14 : vector<256x1xf32>
    %16 = vector.broadcast %15 : vector<256x1xf32> to vector<256x128xf32>
    %17 = arith.mulf %7, %16 : vector<256x128xf32>
    %c0_6 = arith.constant 0 : index
    %c0_7 = arith.constant 0 : index
    %18 = vector.load %arg2[%c0_6, %c0_7] : memref<1x128xf32, #tpu.memory_space<vmem>>, vector<1x128xf32>
    %19 = vector.broadcast %18 : vector<1x128xf32> to vector<256x128xf32>
    %20 = arith.mulf %17, %19 : vector<256x128xf32>
    %c0_8 = arith.constant 0 : index
    %c0_9 = arith.constant 0 : index
    %21 = vector.load %arg3[%c0_8, %c0_9] : memref<1x128xf32, #tpu.memory_space<vmem>>, vector<1x128xf32>
    %22 = vector.broadcast %21 : vector<1x128xf32> to vector<256x128xf32>
    %23 = arith.addf %20, %22 : vector<256x128xf32>
    %c0_10 = arith.constant 0 : index
    %c0_11 = arith.constant 0 : index
    %24 = vector.load %arg4[%c0_10, %c0_11] : memref<128x1536xf32, #tpu.memory_space<vmem>>, vector<128x1536xf32>
    %cst_12 = arith.constant dense<0.000000e+00> : vector<256x1536xf32>
    %25 = tpu.matmul %23, %24, %cst_12 {dimension_numbers = #tpu.dot_dimension_numbers<[1], [0], [0], [1], [0, 0, 1, 1], [], []>} : vector<256x128xf32>, vector<128x1536xf32>, vector<256x1536xf32> -> vector<256x1536xf32>
    %26 = vector.extract_strided_slice %25 {offsets = [0, 0], sizes = [256, 64], strides = [1, 1]} : vector<256x1536xf32> to vector<256x64xf32>
    %27 = vector.shape_cast %26 : vector<256x64xf32> to vector<2x128x64xf32>
    %28 = vector.extract_strided_slice %25 {offsets = [0, 512], sizes = [256, 64], strides = [1, 1]} : vector<256x1536xf32> to vector<256x64xf32>
    %29 = vector.shape_cast %28 : vector<256x64xf32> to vector<2x128x64xf32>
    %30 = vector.extract_strided_slice %25 {offsets = [0, 1024], sizes = [256, 64], strides = [1, 1]} : vector<256x1536xf32> to vector<256x64xf32>
    %31 = vector.shape_cast %30 : vector<256x64xf32> to vector<2x128x64xf32>
    "tpu.trace_start"() <{level = 10 : i32, message = "bnd,bmd->bnm"}> : () -> ()
    %cst_13 = arith.constant dense<0.000000e+00> : vector<2x128x128xf32>
    %32 = tpu.matmul %27, %29, %cst_13 {dimension_numbers = #tpu.dot_dimension_numbers<[2], [2], [1], [1], [0, 0, 0, 1, 1, 1], [0], [0]>} : vector<2x128x64xf32>, vector<2x128x64xf32>, vector<2x128x128xf32> -> vector<2x128x128xf32>
    "tpu.trace_stop"() : () -> ()
    %cst_14 = arith.constant 1.250000e-01 : f32
    %33 = vector.broadcast %cst_14 : f32 to vector<2x128x128xf32>
    %34 = arith.mulf %32, %33 : vector<2x128x128xf32>
    %cst_15 = arith.constant dense<0xFF800000> : vector<2x128xf32>
    %35 = vector.multi_reduction <maximumf>, %34, %cst_15 [2] : vector<2x128x128xf32> to vector<2x128xf32>
    %36 = vector.shape_cast %35 : vector<2x128xf32> to vector<2x128x1xf32>
    %37 = vector.broadcast %36 : vector<2x128x1xf32> to vector<2x128x128xf32>
    %38 = arith.subf %34, %37 : vector<2x128x128xf32>
    %39 = math.exp %38 : vector<2x128x128xf32>
    %cst_16 = arith.constant dense<0.000000e+00> : vector<2x128xf32>
    %40 = vector.multi_reduction <add>, %39, %cst_16 [2] : vector<2x128x128xf32> to vector<2x128xf32>
    %41 = vector.shape_cast %40 : vector<2x128xf32> to vector<2x128x1xf32>
    %42 = tpu.reciprocal %41 {approx = true} : vector<2x128x1xf32> -> vector<2x128x1xf32>
    %43 = vector.broadcast %42 : vector<2x128x1xf32> to vector<2x128x128xf32>
    %44 = arith.mulf %39, %43 : vector<2x128x128xf32>
    "tpu.trace_start"() <{level = 10 : i32, message = "bnm,bmd->bnd"}> : () -> ()
    %cst_17 = arith.constant dense<0.000000e+00> : vector<2x128x64xf32>
    %45 = tpu.matmul %44, %31, %cst_17 {dimension_numbers = #tpu.dot_dimension_numbers<[2], [1], [1], [2], [0, 0, 0, 1, 1, 2], [0], [0]>} : vector<2x128x128xf32>, vector<2x128x64xf32>, vector<2x128x64xf32> -> vector<2x128x64xf32>
    "tpu.trace_stop"() : () -> ()
    %46 = vector.extract_strided_slice %25 {offsets = [0, 64], sizes = [256, 64], strides = [1, 1]} : vector<256x1536xf32> to vector<256x64xf32>
    %47 = vector.shape_cast %46 : vector<256x64xf32> to vector<2x128x64xf32>
    %48 = vector.extract_strided_slice %25 {offsets = [0, 576], sizes = [256, 64], strides = [1, 1]} : vector<256x1536xf32> to vector<256x64xf32>
    %49 = vector.shape_cast %48 : vector<256x64xf32> to vector<2x128x64xf32>
    %50 = vector.extract_strided_slice %25 {offsets = [0, 1088], sizes = [256, 64], strides = [1, 1]} : vector<256x1536xf32> to vector<256x64xf32>
    %51 = vector.shape_cast %50 : vector<256x64xf32> to vector<2x128x64xf32>
    "tpu.trace_start"() <{level = 10 : i32, message = "bnd,bmd->bnm"}> : () -> ()
    %cst_18 = arith.constant dense<0.000000e+00> : vector<2x128x128xf32>
    %52 = tpu.matmul %47, %49, %cst_18 {dimension_numbers = #tpu.dot_dimension_numbers<[2], [2], [1], [1], [0, 0, 0, 1, 1, 1], [0], [0]>} : vector<2x128x64xf32>, vector<2x128x64xf32>, vector<2x128x128xf32> -> vector<2x128x128xf32>
    "tpu.trace_stop"() : () -> ()
    %cst_19 = arith.constant 1.250000e-01 : f32
    %53 = vector.broadcast %cst_19 : f32 to vector<2x128x128xf32>
    %54 = arith.mulf %52, %53 : vector<2x128x128xf32>
    %cst_20 = arith.constant dense<0xFF800000> : vector<2x128xf32>
    %55 = vector.multi_reduction <maximumf>, %54, %cst_20 [2] : vector<2x128x128xf32> to vector<2x128xf32>
    %56 = vector.shape_cast %55 : vector<2x128xf32> to vector<2x128x1xf32>
    %57 = vector.broadcast %56 : vector<2x128x1xf32> to vector<2x128x128xf32>
    %58 = arith.subf %54, %57 : vector<2x128x128xf32>
    %59 = math.exp %58 : vector<2x128x128xf32>
    %cst_21 = arith.constant dense<0.000000e+00> : vector<2x128xf32>
    %60 = vector.multi_reduction <add>, %59, %cst_21 [2] : vector<2x128x128xf32> to vector<2x128xf32>
    %61 = vector.shape_cast %60 : vector<2x128xf32> to vector<2x128x1xf32>
    %62 = tpu.reciprocal %61 {approx = true} : vector<2x128x1xf32> -> vector<2x128x1xf32>
    %63 = vector.broadcast %62 : vector<2x128x1xf32> to vector<2x128x128xf32>
    %64 = arith.mulf %59, %63 : vector<2x128x128xf32>
    "tpu.trace_start"() <{level = 10 : i32, message = "bnm,bmd->bnd"}> : () -> ()
    %cst_22 = arith.constant dense<0.000000e+00> : vector<2x128x64xf32>
    %65 = tpu.matmul %64, %51, %cst_22 {dimension_numbers = #tpu.dot_dimension_numbers<[2], [1], [1], [2], [0, 0, 0, 1, 1, 2], [0], [0]>} : vector<2x128x128xf32>, vector<2x128x64xf32>, vector<2x128x64xf32> -> vector<2x128x64xf32>
    "tpu.trace_stop"() : () -> ()
    %66 = vector.extract_strided_slice %25 {offsets = [0, 128], sizes = [256, 64], strides = [1, 1]} : vector<256x1536xf32> to vector<256x64xf32>
    %67 = vector.shape_cast %66 : vector<256x64xf32> to vector<2x128x64xf32>
    %68 = vector.extract_strided_slice %25 {offsets = [0, 640], sizes = [256, 64], strides = [1, 1]} : vector<256x1536xf32> to vector<256x64xf32>
    %69 = vector.shape_cast %68 : vector<256x64xf32> to vector<2x128x64xf32>
    %70 = vector.extract_strided_slice %25 {offsets = [0, 1152], sizes = [256, 64], strides = [1, 1]} : vector<256x1536xf32> to vector<256x64xf32>
    %71 = vector.shape_cast %70 : vector<256x64xf32> to vector<2x128x64xf32>
    "tpu.trace_start"() <{level = 10 : i32, message = "bnd,bmd->bnm"}> : () -> ()
    %cst_23 = arith.constant dense<0.000000e+00> : vector<2x128x128xf32>
    %72 = tpu.matmul %67, %69, %cst_23 {dimension_numbers = #tpu.dot_dimension_numbers<[2], [2], [1], [1], [0, 0, 0, 1, 1, 1], [0], [0]>} : vector<2x128x64xf32>, vector<2x128x64xf32>, vector<2x128x128xf32> -> vector<2x128x128xf32>
    "tpu.trace_stop"() : () -> ()
    %cst_24 = arith.constant 1.250000e-01 : f32
    %73 = vector.broadcast %cst_24 : f32 to vector<2x128x128xf32>
    %74 = arith.mulf %72, %73 : vector<2x128x128xf32>
    %cst_25 = arith.constant dense<0xFF800000> : vector<2x128xf32>
    %75 = vector.multi_reduction <maximumf>, %74, %cst_25 [2] : vector<2x128x128xf32> to vector<2x128xf32>
    %76 = vector.shape_cast %75 : vector<2x128xf32> to vector<2x128x1xf32>
    %77 = vector.broadcast %76 : vector<2x128x1xf32> to vector<2x128x128xf32>
    %78 = arith.subf %74, %77 : vector<2x128x128xf32>
    %79 = math.exp %78 : vector<2x128x128xf32>
    %cst_26 = arith.constant dense<0.000000e+00> : vector<2x128xf32>
    %80 = vector.multi_reduction <add>, %79, %cst_26 [2] : vector<2x128x128xf32> to vector<2x128xf32>
    %81 = vector.shape_cast %80 : vector<2x128xf32> to vector<2x128x1xf32>
    %82 = tpu.reciprocal %81 {approx = true} : vector<2x128x1xf32> -> vector<2x128x1xf32>
    %83 = vector.broadcast %82 : vector<2x128x1xf32> to vector<2x128x128xf32>
    %84 = arith.mulf %79, %83 : vector<2x128x128xf32>
    "tpu.trace_start"() <{level = 10 : i32, message = "bnm,bmd->bnd"}> : () -> ()
    %cst_27 = arith.constant dense<0.000000e+00> : vector<2x128x64xf32>
    %85 = tpu.matmul %84, %71, %cst_27 {dimension_numbers = #tpu.dot_dimension_numbers<[2], [1], [1], [2], [0, 0, 0, 1, 1, 2], [0], [0]>} : vector<2x128x128xf32>, vector<2x128x64xf32>, vector<2x128x64xf32> -> vector<2x128x64xf32>
    "tpu.trace_stop"() : () -> ()
    %86 = vector.extract_strided_slice %25 {offsets = [0, 192], sizes = [256, 64], strides = [1, 1]} : vector<256x1536xf32> to vector<256x64xf32>
    %87 = vector.shape_cast %86 : vector<256x64xf32> to vector<2x128x64xf32>
    %88 = vector.extract_strided_slice %25 {offsets = [0, 704], sizes = [256, 64], strides = [1, 1]} : vector<256x1536xf32> to vector<256x64xf32>
    %89 = vector.shape_cast %88 : vector<256x64xf32> to vector<2x128x64xf32>
    %90 = vector.extract_strided_slice %25 {offsets = [0, 1216], sizes = [256, 64], strides = [1, 1]} : vector<256x1536xf32> to vector<256x64xf32>
    %91 = vector.shape_cast %90 : vector<256x64xf32> to vector<2x128x64xf32>
    "tpu.trace_start"() <{level = 10 : i32, message = "bnd,bmd->bnm"}> : () -> ()
    %cst_28 = arith.constant dense<0.000000e+00> : vector<2x128x128xf32>
    %92 = tpu.matmul %87, %89, %cst_28 {dimension_numbers = #tpu.dot_dimension_numbers<[2], [2], [1], [1], [0, 0, 0, 1, 1, 1], [0], [0]>} : vector<2x128x64xf32>, vector<2x128x64xf32>, vector<2x128x128xf32> -> vector<2x128x128xf32>
    "tpu.trace_stop"() : () -> ()
    %cst_29 = arith.constant 1.250000e-01 : f32
    %93 = vector.broadcast %cst_29 : f32 to vector<2x128x128xf32>
    %94 = arith.mulf %92, %93 : vector<2x128x128xf32>
    %cst_30 = arith.constant dense<0xFF800000> : vector<2x128xf32>
    %95 = vector.multi_reduction <maximumf>, %94, %cst_30 [2] : vector<2x128x128xf32> to vector<2x128xf32>
    %96 = vector.shape_cast %95 : vector<2x128xf32> to vector<2x128x1xf32>
    %97 = vector.broadcast %96 : vector<2x128x1xf32> to vector<2x128x128xf32>
    %98 = arith.subf %94, %97 : vector<2x128x128xf32>
    %99 = math.exp %98 : vector<2x128x128xf32>
    %cst_31 = arith.constant dense<0.000000e+00> : vector<2x128xf32>
    %100 = vector.multi_reduction <add>, %99, %cst_31 [2] : vector<2x128x128xf32> to vector<2x128xf32>
    %101 = vector.shape_cast %100 : vector<2x128xf32> to vector<2x128x1xf32>
    %102 = tpu.reciprocal %101 {approx = true} : vector<2x128x1xf32> -> vector<2x128x1xf32>
    %103 = vector.broadcast %102 : vector<2x128x1xf32> to vector<2x128x128xf32>
    %104 = arith.mulf %99, %103 : vector<2x128x128xf32>
    "tpu.trace_start"() <{level = 10 : i32, message = "bnm,bmd->bnd"}> : () -> ()
    %cst_32 = arith.constant dense<0.000000e+00> : vector<2x128x64xf32>
    %105 = tpu.matmul %104, %91, %cst_32 {dimension_numbers = #tpu.dot_dimension_numbers<[2], [1], [1], [2], [0, 0, 0, 1, 1, 2], [0], [0]>} : vector<2x128x128xf32>, vector<2x128x64xf32>, vector<2x128x64xf32> -> vector<2x128x64xf32>
    "tpu.trace_stop"() : () -> ()
    %106 = vector.extract_strided_slice %25 {offsets = [0, 256], sizes = [256, 64], strides = [1, 1]} : vector<256x1536xf32> to vector<256x64xf32>
    %107 = vector.shape_cast %106 : vector<256x64xf32> to vector<2x128x64xf32>
    %108 = vector.extract_strided_slice %25 {offsets = [0, 768], sizes = [256, 64], strides = [1, 1]} : vector<256x1536xf32> to vector<256x64xf32>
    %109 = vector.shape_cast %108 : vector<256x64xf32> to vector<2x128x64xf32>
    %110 = vector.extract_strided_slice %25 {offsets = [0, 1280], sizes = [256, 64], strides = [1, 1]} : vector<256x1536xf32> to vector<256x64xf32>
    %111 = vector.shape_cast %110 : vector<256x64xf32> to vector<2x128x64xf32>
    "tpu.trace_start"() <{level = 10 : i32, message = "bnd,bmd->bnm"}> : () -> ()
    %cst_33 = arith.constant dense<0.000000e+00> : vector<2x128x128xf32>
    %112 = tpu.matmul %107, %109, %cst_33 {dimension_numbers = #tpu.dot_dimension_numbers<[2], [2], [1], [1], [0, 0, 0, 1, 1, 1], [0], [0]>} : vector<2x128x64xf32>, vector<2x128x64xf32>, vector<2x128x128xf32> -> vector<2x128x128xf32>
    "tpu.trace_stop"() : () -> ()
    %cst_34 = arith.constant 1.250000e-01 : f32
    %113 = vector.broadcast %cst_34 : f32 to vector<2x128x128xf32>
    %114 = arith.mulf %112, %113 : vector<2x128x128xf32>
    %cst_35 = arith.constant dense<0xFF800000> : vector<2x128xf32>
    %115 = vector.multi_reduction <maximumf>, %114, %cst_35 [2] : vector<2x128x128xf32> to vector<2x128xf32>
    %116 = vector.shape_cast %115 : vector<2x128xf32> to vector<2x128x1xf32>
    %117 = vector.broadcast %116 : vector<2x128x1xf32> to vector<2x128x128xf32>
    %118 = arith.subf %114, %117 : vector<2x128x128xf32>
    %119 = math.exp %118 : vector<2x128x128xf32>
    %cst_36 = arith.constant dense<0.000000e+00> : vector<2x128xf32>
    %120 = vector.multi_reduction <add>, %119, %cst_36 [2] : vector<2x128x128xf32> to vector<2x128xf32>
    %121 = vector.shape_cast %120 : vector<2x128xf32> to vector<2x128x1xf32>
    %122 = tpu.reciprocal %121 {approx = true} : vector<2x128x1xf32> -> vector<2x128x1xf32>
    %123 = vector.broadcast %122 : vector<2x128x1xf32> to vector<2x128x128xf32>
    %124 = arith.mulf %119, %123 : vector<2x128x128xf32>
    "tpu.trace_start"() <{level = 10 : i32, message = "bnm,bmd->bnd"}> : () -> ()
    %cst_37 = arith.constant dense<0.000000e+00> : vector<2x128x64xf32>
    %125 = tpu.matmul %124, %111, %cst_37 {dimension_numbers = #tpu.dot_dimension_numbers<[2], [1], [1], [2], [0, 0, 0, 1, 1, 2], [0], [0]>} : vector<2x128x128xf32>, vector<2x128x64xf32>, vector<2x128x64xf32> -> vector<2x128x64xf32>
    "tpu.trace_stop"() : () -> ()
    %126 = vector.extract_strided_slice %25 {offsets = [0, 320], sizes = [256, 64], strides = [1, 1]} : vector<256x1536xf32> to vector<256x64xf32>
    %127 = vector.shape_cast %126 : vector<256x64xf32> to vector<2x128x64xf32>
    %128 = vector.extract_strided_slice %25 {offsets = [0, 832], sizes = [256, 64], strides = [1, 1]} : vector<256x1536xf32> to vector<256x64xf32>
    %129 = vector.shape_cast %128 : vector<256x64xf32> to vector<2x128x64xf32>
    %130 = vector.extract_strided_slice %25 {offsets = [0, 1344], sizes = [256, 64], strides = [1, 1]} : vector<256x1536xf32> to vector<256x64xf32>
    %131 = vector.shape_cast %130 : vector<256x64xf32> to vector<2x128x64xf32>
    "tpu.trace_start"() <{level = 10 : i32, message = "bnd,bmd->bnm"}> : () -> ()
    %cst_38 = arith.constant dense<0.000000e+00> : vector<2x128x128xf32>
    %132 = tpu.matmul %127, %129, %cst_38 {dimension_numbers = #tpu.dot_dimension_numbers<[2], [2], [1], [1], [0, 0, 0, 1, 1, 1], [0], [0]>} : vector<2x128x64xf32>, vector<2x128x64xf32>, vector<2x128x128xf32> -> vector<2x128x128xf32>
    "tpu.trace_stop"() : () -> ()
    %cst_39 = arith.constant 1.250000e-01 : f32
    %133 = vector.broadcast %cst_39 : f32 to vector<2x128x128xf32>
    %134 = arith.mulf %132, %133 : vector<2x128x128xf32>
    %cst_40 = arith.constant dense<0xFF800000> : vector<2x128xf32>
    %135 = vector.multi_reduction <maximumf>, %134, %cst_40 [2] : vector<2x128x128xf32> to vector<2x128xf32>
    %136 = vector.shape_cast %135 : vector<2x128xf32> to vector<2x128x1xf32>
    %137 = vector.broadcast %136 : vector<2x128x1xf32> to vector<2x128x128xf32>
    %138 = arith.subf %134, %137 : vector<2x128x128xf32>
    %139 = math.exp %138 : vector<2x128x128xf32>
    %cst_41 = arith.constant dense<0.000000e+00> : vector<2x128xf32>
    %140 = vector.multi_reduction <add>, %139, %cst_41 [2] : vector<2x128x128xf32> to vector<2x128xf32>
    %141 = vector.shape_cast %140 : vector<2x128xf32> to vector<2x128x1xf32>
    %142 = tpu.reciprocal %141 {approx = true} : vector<2x128x1xf32> -> vector<2x128x1xf32>
    %143 = vector.broadcast %142 : vector<2x128x1xf32> to vector<2x128x128xf32>
    %144 = arith.mulf %139, %143 : vector<2x128x128xf32>
    "tpu.trace_start"() <{level = 10 : i32, message = "bnm,bmd->bnd"}> : () -> ()
    %cst_42 = arith.constant dense<0.000000e+00> : vector<2x128x64xf32>
    %145 = tpu.matmul %144, %131, %cst_42 {dimension_numbers = #tpu.dot_dimension_numbers<[2], [1], [1], [2], [0, 0, 0, 1, 1, 2], [0], [0]>} : vector<2x128x128xf32>, vector<2x128x64xf32>, vector<2x128x64xf32> -> vector<2x128x64xf32>
    "tpu.trace_stop"() : () -> ()
    %146 = vector.extract_strided_slice %25 {offsets = [0, 384], sizes = [256, 64], strides = [1, 1]} : vector<256x1536xf32> to vector<256x64xf32>
    %147 = vector.shape_cast %146 : vector<256x64xf32> to vector<2x128x64xf32>
    %148 = vector.extract_strided_slice %25 {offsets = [0, 896], sizes = [256, 64], strides = [1, 1]} : vector<256x1536xf32> to vector<256x64xf32>
    %149 = vector.shape_cast %148 : vector<256x64xf32> to vector<2x128x64xf32>
    %150 = vector.extract_strided_slice %25 {offsets = [0, 1408], sizes = [256, 64], strides = [1, 1]} : vector<256x1536xf32> to vector<256x64xf32>
    %151 = vector.shape_cast %150 : vector<256x64xf32> to vector<2x128x64xf32>
    "tpu.trace_start"() <{level = 10 : i32, message = "bnd,bmd->bnm"}> : () -> ()
    %cst_43 = arith.constant dense<0.000000e+00> : vector<2x128x128xf32>
    %152 = tpu.matmul %147, %149, %cst_43 {dimension_numbers = #tpu.dot_dimension_numbers<[2], [2], [1], [1], [0, 0, 0, 1, 1, 1], [0], [0]>} : vector<2x128x64xf32>, vector<2x128x64xf32>, vector<2x128x128xf32> -> vector<2x128x128xf32>
    "tpu.trace_stop"() : () -> ()
    %cst_44 = arith.constant 1.250000e-01 : f32
    %153 = vector.broadcast %cst_44 : f32 to vector<2x128x128xf32>
    %154 = arith.mulf %152, %153 : vector<2x128x128xf32>
    %cst_45 = arith.constant dense<0xFF800000> : vector<2x128xf32>
    %155 = vector.multi_reduction <maximumf>, %154, %cst_45 [2] : vector<2x128x128xf32> to vector<2x128xf32>
    %156 = vector.shape_cast %155 : vector<2x128xf32> to vector<2x128x1xf32>
    %157 = vector.broadcast %156 : vector<2x128x1xf32> to vector<2x128x128xf32>
    %158 = arith.subf %154, %157 : vector<2x128x128xf32>
    %159 = math.exp %158 : vector<2x128x128xf32>
    %cst_46 = arith.constant dense<0.000000e+00> : vector<2x128xf32>
    %160 = vector.multi_reduction <add>, %159, %cst_46 [2] : vector<2x128x128xf32> to vector<2x128xf32>
    %161 = vector.shape_cast %160 : vector<2x128xf32> to vector<2x128x1xf32>
    %162 = tpu.reciprocal %161 {approx = true} : vector<2x128x1xf32> -> vector<2x128x1xf32>
    %163 = vector.broadcast %162 : vector<2x128x1xf32> to vector<2x128x128xf32>
    %164 = arith.mulf %159, %163 : vector<2x128x128xf32>
    "tpu.trace_start"() <{level = 10 : i32, message = "bnm,bmd->bnd"}> : () -> ()
    %cst_47 = arith.constant dense<0.000000e+00> : vector<2x128x64xf32>
    %165 = tpu.matmul %164, %151, %cst_47 {dimension_numbers = #tpu.dot_dimension_numbers<[2], [1], [1], [2], [0, 0, 0, 1, 1, 2], [0], [0]>} : vector<2x128x128xf32>, vector<2x128x64xf32>, vector<2x128x64xf32> -> vector<2x128x64xf32>
    "tpu.trace_stop"() : () -> ()
    %166 = vector.extract_strided_slice %25 {offsets = [0, 448], sizes = [256, 64], strides = [1, 1]} : vector<256x1536xf32> to vector<256x64xf32>
    %167 = vector.shape_cast %166 : vector<256x64xf32> to vector<2x128x64xf32>
    %168 = vector.extract_strided_slice %25 {offsets = [0, 960], sizes = [256, 64], strides = [1, 1]} : vector<256x1536xf32> to vector<256x64xf32>
    %169 = vector.shape_cast %168 : vector<256x64xf32> to vector<2x128x64xf32>
    %170 = vector.extract_strided_slice %25 {offsets = [0, 1472], sizes = [256, 64], strides = [1, 1]} : vector<256x1536xf32> to vector<256x64xf32>
    %171 = vector.shape_cast %170 : vector<256x64xf32> to vector<2x128x64xf32>
    "tpu.trace_start"() <{level = 10 : i32, message = "bnd,bmd->bnm"}> : () -> ()
    %cst_48 = arith.constant dense<0.000000e+00> : vector<2x128x128xf32>
    %172 = tpu.matmul %167, %169, %cst_48 {dimension_numbers = #tpu.dot_dimension_numbers<[2], [2], [1], [1], [0, 0, 0, 1, 1, 1], [0], [0]>} : vector<2x128x64xf32>, vector<2x128x64xf32>, vector<2x128x128xf32> -> vector<2x128x128xf32>
    "tpu.trace_stop"() : () -> ()
    %cst_49 = arith.constant 1.250000e-01 : f32
    %173 = vector.broadcast %cst_49 : f32 to vector<2x128x128xf32>
    %174 = arith.mulf %172, %173 : vector<2x128x128xf32>
    %cst_50 = arith.constant dense<0xFF800000> : vector<2x128xf32>
    %175 = vector.multi_reduction <maximumf>, %174, %cst_50 [2] : vector<2x128x128xf32> to vector<2x128xf32>
    %176 = vector.shape_cast %175 : vector<2x128xf32> to vector<2x128x1xf32>
    %177 = vector.broadcast %176 : vector<2x128x1xf32> to vector<2x128x128xf32>
    %178 = arith.subf %174, %177 : vector<2x128x128xf32>
    %179 = math.exp %178 : vector<2x128x128xf32>
    %cst_51 = arith.constant dense<0.000000e+00> : vector<2x128xf32>
    %180 = vector.multi_reduction <add>, %179, %cst_51 [2] : vector<2x128x128xf32> to vector<2x128xf32>
    %181 = vector.shape_cast %180 : vector<2x128xf32> to vector<2x128x1xf32>
    %182 = tpu.reciprocal %181 {approx = true} : vector<2x128x1xf32> -> vector<2x128x1xf32>
    %183 = vector.broadcast %182 : vector<2x128x1xf32> to vector<2x128x128xf32>
    %184 = arith.mulf %179, %183 : vector<2x128x128xf32>
    "tpu.trace_start"() <{level = 10 : i32, message = "bnm,bmd->bnd"}> : () -> ()
    %cst_52 = arith.constant dense<0.000000e+00> : vector<2x128x64xf32>
    %185 = tpu.matmul %184, %171, %cst_52 {dimension_numbers = #tpu.dot_dimension_numbers<[2], [1], [1], [2], [0, 0, 0, 1, 1, 2], [0], [0]>} : vector<2x128x128xf32>, vector<2x128x64xf32>, vector<2x128x64xf32> -> vector<2x128x64xf32>
    "tpu.trace_stop"() : () -> ()
    %186 = tpu.concatenate %45, %65, %85, %105, %125, %145, %165, %185 in 2 : vector<2x128x64xf32>, vector<2x128x64xf32>, vector<2x128x64xf32>, vector<2x128x64xf32>, vector<2x128x64xf32>, vector<2x128x64xf32>, vector<2x128x64xf32>, vector<2x128x64xf32> -> vector<2x128x512xf32>
    %187 = vector.shape_cast %186 : vector<2x128x512xf32> to vector<256x512xf32>
    %c0_53 = arith.constant 0 : index
    %c0_54 = arith.constant 0 : index
    %188 = vector.load %arg5[%c0_53, %c0_54] : memref<512x128xf32, #tpu.memory_space<vmem>>, vector<512x128xf32>
    %cst_55 = arith.constant dense<0.000000e+00> : vector<256x128xf32>
    %189 = tpu.matmul %187, %188, %cst_55 {dimension_numbers = #tpu.dot_dimension_numbers<[1], [0], [0], [1], [0, 0, 1, 1], [], []>} : vector<256x512xf32>, vector<512x128xf32>, vector<256x128xf32> -> vector<256x128xf32>
    %c0_56 = arith.constant 0 : index
    %c0_57 = arith.constant 0 : index
    %190 = vector.load %arg6[%c0_56, %c0_57] : memref<1x128xf32, #tpu.memory_space<vmem>>, vector<1x128xf32>
    %191 = vector.broadcast %190 : vector<1x128xf32> to vector<256x128xf32>
    %192 = arith.addf %189, %191 : vector<256x128xf32>
    %193 = vector.shape_cast %192 : vector<256x128xf32> to vector<2x128x128xf32>
    %c0_58 = arith.constant 0 : index
    %c0_59 = arith.constant 0 : index
    %c0_60 = arith.constant 0 : index
    %194 = vector.load %arg7[%c0_58, %c0_59, %c0_60] : memref<2x128x128xf32, #tpu.memory_space<vmem>>, vector<2x128x128xf32>
    tpu.vector_store %arg7[%c0_58, %c0_59, %c0_60], %193 {strides = array<i32>} : memref<2x128x128xf32, #tpu.memory_space<vmem>>, vector<2x128x128xf32>,
    return
  }
  func.func @transform_0(%arg0: i32) -> (i32, i32, i32) {
    %c0_i32 = arith.constant 0 : i32
    %c0_i32_0 = arith.constant 0 : i32
    %c0_i32_1 = arith.constant 0 : i32
    %c0_i32_2 = arith.constant 0 : i32
    return %c0_i32, %c0_i32_0, %c0_i32_1 : i32, i32, i32
  }
  func.func @transform_1(%arg0: i32) -> (i32, i32) {
    %c0_i32 = arith.constant 0 : i32
    %c0_i32_0 = arith.constant 0 : i32
    %c0_i32_1 = arith.constant 0 : i32
    return %c0_i32, %c0_i32_0 : i32, i32
  }
  func.func @transform_2(%arg0: i32) -> (i32, i32) {
    %c0_i32 = arith.constant 0 : i32
    %c0_i32_0 = arith.constant 0 : i32
    %c0_i32_1 = arith.constant 0 : i32
    return %c0_i32, %c0_i32_0 : i32, i32
  }
  func.func @transform_3(%arg0: i32) -> (i32, i32) {
    %c0_i32 = arith.constant 0 : i32
    %c0_i32_0 = arith.constant 0 : i32
    %c0_i32_1 = arith.constant 0 : i32
    return %c0_i32, %c0_i32_0 : i32, i32
  }
  func.func @transform_4(%arg0: i32) -> (i32, i32) {
    %c0_i32 = arith.constant 0 : i32
    %c0_i32_0 = arith.constant 0 : i32
    %c0_i32_1 = arith.constant 0 : i32
    return %c0_i32, %c0_i32_0 : i32, i32
  }
  func.func @transform_5(%arg0: i32) -> (i32, i32) {
    %c0_i32 = arith.constant 0 : i32
    %c0_i32_0 = arith.constant 0 : i32
    %c0_i32_1 = arith.constant 0 : i32
    return %c0_i32, %c0_i32_0 : i32, i32
  }
  func.func @transform_6(%arg0: i32) -> (i32, i32, i32) {
    %c0_i32 = arith.constant 0 : i32
    %c0_i32_0 = arith.constant 0 : i32
    %c0_i32_1 = arith.constant 0 : i32
    %c0_i32_2 = arith.constant 0 : i32
    return %c0_i32, %c0_i32_0, %c0_i32_1 : i32, i32, i32
  }
}

</mosaic_0001>

<llo_original>
// kernel: _lambda_.1
$region0: #{_lambda_.1}
  #allocation0 [shape = 'u32[]', space=smem, size = 0x4, offset = 0x4, fixed_abs, tag = 'smem constant byte address 0x4 - core index']
  #allocation1 [shape = 'u32[144,128]{1,0:T(1,128)}', space=vmem, size = 0x12000, scoped, tag = 'internal scratch']
  %s0 = inlined_call_operand.hbm [shape: f32[2,128,128], index: 0, kind: input, shape index: {}]
  %s1 = inlined_call_operand.vmem [shape: f32[1,128], index: 1, kind: input, shape index: {}]
  %s2 = inlined_call_operand.vmem [shape: f32[1,128], index: 2, kind: input, shape index: {}]
  %s3 = inlined_call_operand.hbm [shape: f32[128,1536], index: 3, kind: input, shape index: {}]
  %s4 = inlined_call_operand.hbm [shape: f32[512,128], index: 4, kind: input, shape index: {}]
  %s5 = inlined_call_operand.vmem [shape: f32[1,128], index: 5, kind: input, shape index: {}]
  %s6 = inlined_call_operand.hbm [shape: f32[2,128,128], index: 6, kind: output, shape index: {}]
  %s7 = sld [smem:[#allocation0]]
  $region46: #{_lambda_.1} parent=0
    _
  %s9 = ssub.s32 1, %s7
  %s10 = scalar_select 0, %s9, %s7
  $region1: #{_lambda_.1} parent=0
    #allocation2 [shape = 'u8[131072]{0}', space=vmem, size = 0x20000, scoped, tag = 'input window, operand 0, single buffered']
    #allocation3 [shape = 's32[1]{0}', space=sflag, size = 0x4, scoped, tag = 'scoped memory for _lambda_.1']
    #allocation4 [shape = 's32[1]{0}', space=sflag, size = 0x4, scoped, tag = 'scoped memory for _lambda_.1']
    #allocation5 [shape = 'u8[786432]{0}', space=vmem, size = 0xc0000, scoped, tag = 'input window, operand 3, single buffered']
    #allocation6 [shape = 's32[1]{0}', space=sflag, size = 0x4, scoped, tag = 'scoped memory for _lambda_.1']
    #allocation7 [shape = 'u8[262144]{0}', space=vmem, size = 0x40000, scoped, tag = 'input window, operand 4, single buffered']
    #allocation8 [shape = 'u8[131072]{0}', space=vmem, size = 0x20000, scoped, tag = 'output window, operand 0, single buffered']
    %11 = vsyncpa [#allocation3], 0
    %12 = vsyncpa [#allocation6], 0
    %13 = vsyncpa [#allocation4], 0
    // Predicated region
    $region2: #{_lambda_.1} parent=1 // pred_check
      _
    $region3: #{_lambda_.1} parent=1 // pred_check_branch
      %15 = sbr.rel (0) target = $region5
    $region4: #{_lambda_.1} parent=1 // pred_region
      %s17 = ssub.s32 4096, 4096
      %18 = vsyncadd [#allocation3], %s17
      %s19 = sshll.u32 [#allocation2], 4
      %s20 = int_to_ptr.vmem [resolvable:$true] %s19
      %25 = dma.hbm_to_vmem [thread:$0]  %s0, 4096, %s20, [#allocation3], 128, 128, 8
    $region5: #{_lambda_.1} parent=1 // pred_fallthru
      _
    // Predicated region
    $region6: #{_lambda_.1} parent=1 // pred_check
      _
    $region7: #{_lambda_.1} parent=1 // pred_check_branch
      %27 = sbr.rel (0) target = $region9
    $region8: #{_lambda_.1} parent=1 // pred_region
      _
    $region9: #{_lambda_.1} parent=1 // pred_fallthru
      _
    // Predicated region
    $region10: #{_lambda_.1} parent=1 // pred_check
      _
    $region11: #{_lambda_.1} parent=1 // pred_check_branch
      %29 = sbr.rel (0) target = $region13
    $region12: #{_lambda_.1} parent=1 // pred_region
      _
    $region13: #{_lambda_.1} parent=1 // pred_fallthru
      _
    // Predicated region
    $region14: #{_lambda_.1} parent=1 // pred_check
      _
    $region15: #{_lambda_.1} parent=1 // pred_check_branch
      %31 = sbr.rel (0) target = $region17
    $region16: #{_lambda_.1} parent=1 // pred_region
      %s33 = ssub.s32 24576, 24576
      %34 = vsyncadd [#allocation6], %s33
      %s35 = sshll.u32 [#allocation5], 4
      %s36 = int_to_ptr.vmem [resolvable:$true] %s35
      %41 = dma.hbm_to_vmem [thread:$0]  %s3, 24576, %s36, [#allocation6], 1536, 1536, 96
    $region17: #{_lambda_.1} parent=1 // pred_fallthru
      _
    // Predicated region
    $region18: #{_lambda_.1} parent=1 // pred_check
      _
    $region19: #{_lambda_.1} parent=1 // pred_check_branch
      %43 = sbr.rel (0) target = $region21
    $region20: #{_lambda_.1} parent=1 // pred_region
      %s45 = ssub.s32 8192, 8192
      %46 = vsyncadd [#allocation6], %s45
      %s47 = sshll.u32 [#allocation7], 4
      %s48 = int_to_ptr.vmem [resolvable:$true] %s47
      %53 = dma.hbm_to_vmem [thread:$0]  %s4, 8192, %s48, [#allocation6], 128, 128, 8
    $region21: #{_lambda_.1} parent=1 // pred_fallthru
      _
    // Predicated region
    $region22: #{_lambda_.1} parent=1 // pred_check
      _
    $region23: #{_lambda_.1} parent=1 // pred_check_branch
      %55 = sbr.rel (0) target = $region25
    $region24: #{_lambda_.1} parent=1 // pred_region
      _
    $region25: #{_lambda_.1} parent=1 // pred_fallthru
      _
    // Predicated region
    $region26: #{_lambda_.1} parent=1 // pred_check
      _
    $region27: #{_lambda_.1} parent=1 // pred_check_branch
      %57 = sbr.rel (0) target = $region29
    $region28: #{_lambda_.1} parent=1 // pred_region
      %58 = dma.done [#allocation3], 4096
    $region29: #{_lambda_.1} parent=1 // pred_fallthru
      _
    // Predicated region
    $region30: #{_lambda_.1} parent=1 // pred_check
      _
    $region31: #{_lambda_.1} parent=1 // pred_check_branch
      %60 = sbr.rel (0) target = $region33
    $region32: #{_lambda_.1} parent=1 // pred_region
      %61 = dma.done [#allocation6], 24576
    $region33: #{_lambda_.1} parent=1 // pred_fallthru
      _
    // Predicated region
    $region34: #{_lambda_.1} parent=1 // pred_check
      _
    $region35: #{_lambda_.1} parent=1 // pred_check_branch
      %63 = sbr.rel (0) target = $region37
    $region36: #{_lambda_.1} parent=1 // pred_region
      %64 = dma.done [#allocation6], 8192
    $region37: #{_lambda_.1} parent=1 // pred_fallthru
      _
    %v65 = vld [vmem:[#allocation2] sm:$0xff]
    %v66 = vld [vmem:[#allocation2 + $0x8] sm:$0xff]
    %v67 = vld [vmem:[#allocation2 + $0x10] sm:$0xff]
    %v68 = vld [vmem:[#allocation2 + $0x18] sm:$0xff]
    %v69 = vld [vmem:[#allocation2 + $0x20] sm:$0xff]
    %v70 = vld [vmem:[#allocation2 + $0x28] sm:$0xff]
    %v71 = vld [vmem:[#allocation2 + $0x30] sm:$0xff]
    %v72 = vld [vmem:[#allocation2 + $0x38] sm:$0xff]
    %v73 = vld [vmem:[#allocation2 + $0x40] sm:$0xff]
    %v74 = vld [vmem:[#allocation2 + $0x48] sm:$0xff]
    %v75 = vld [vmem:[#allocation2 + $0x50] sm:$0xff]
    %v76 = vld [vmem:[#allocation2 + $0x58] sm:$0xff]
    %v77 = vld [vmem:[#allocation2 + $0x60] sm:$0xff]
    %v78 = vld [vmem:[#allocation2 + $0x68] sm:$0xff]
    %v79 = vld [vmem:[#allocation2 + $0x70] sm:$0xff]
    %v80 = vld [vmem:[#allocation2 + $0x78] sm:$0xff]
    %v81 = vld [vmem:[#allocation2 + $0x80] sm:$0xff]
    %v82 = vld [vmem:[#allocation2 + $0x88] sm:$0xff]
    %v83 = vld [vmem:[#allocation2 + $0x90] sm:$0xff]
    %v84 = vld [vmem:[#allocation2 + $0x98] sm:$0xff]
    %v85 = vld [vmem:[#allocation2 + $0xa0] sm:$0xff]
    %v86 = vld [vmem:[#allocation2 + $0xa8] sm:$0xff]
    %v87 = vld [vmem:[#allocation2 + $0xb0] sm:$0xff]
    %v88 = vld [vmem:[#allocation2 + $0xb8] sm:$0xff]
    %v89 = vld [vmem:[#allocation2 + $0xc0] sm:$0xff]
    %v90 = vld [vmem:[#allocation2 + $0xc8] sm:$0xff]
    %v91 = vld [vmem:[#allocation2 + $0xd0] sm:$0xff]
    %v92 = vld [vmem:[#allocation2 + $0xd8] sm:$0xff]
    %v93 = vld [vmem:[#allocation2 + $0xe0] sm:$0xff]
    %v94 = vld [vmem:[#allocation2 + $0xe8] sm:$0xff]
    %v95 = vld [vmem:[#allocation2 + $0xf0] sm:$0xff]
    %v96 = vld [vmem:[#allocation2 + $0xf8] sm:$0xff]
    %97 = vadd.xlane.f32.xlu0 %v65
    %v98 = vpop.xlane.xlu0 %97
    %99 = vadd.xlane.f32.xlu0 %v66
    %v100 = vpop.xlane.xlu0 %99
    %101 = vadd.xlane.f32.xlu0 %v67
    %v102 = vpop.xlane.xlu0 %101
    %103 = vadd.xlane.f32.xlu0 %v68
    %v104 = vpop.xlane.xlu0 %103
    %105 = vadd.xlane.f32.xlu0 %v69
    %v106 = vpop.xlane.xlu0 %105
    %107 = vadd.xlane.f32.xlu0 %v70
    %v108 = vpop.xlane.xlu0 %107
    %109 = vadd.xlane.f32.xlu0 %v71
    %v110 = vpop.xlane.xlu0 %109
    %111 = vadd.xlane.f32.xlu0 %v72
    %v112 = vpop.xlane.xlu0 %111
    %113 = vadd.xlane.f32.xlu0 %v73
    %v114 = vpop.xlane.xlu0 %113
    %115 = vadd.xlane.f32.xlu0 %v74
    %v116 = vpop.xlane.xlu0 %115
    %117 = vadd.xlane.f32.xlu0 %v75
    %v118 = vpop.xlane.xlu0 %117
    %119 = vadd.xlane.f32.xlu0 %v76
    %v120 = vpop.xlane.xlu0 %119
    %121 = vadd.xlane.f32.xlu0 %v77
    %v122 = vpop.xlane.xlu0 %121
    %123 = vadd.xlane.f32.xlu0 %v78
    %v124 = vpop.xlane.xlu0 %123
    %125 = vadd.xlane.f32.xlu0 %v79
    %v126 = vpop.xlane.xlu0 %125
    %127 = vadd.xlane.f32.xlu0 %v80
    %v128 = vpop.xlane.xlu0 %127
    %129 = vadd.xlane.f32.xlu0 %v81
    %v130 = vpop.xlane.xlu0 %129
    %131 = vadd.xlane.f32.xlu0 %v82
    %v132 = vpop.xlane.xlu0 %131
    %133 = vadd.xlane.f32.xlu0 %v83
    %v134 = vpop.xlane.xlu0 %133
    %135 = vadd.xlane.f32.xlu0 %v84
    %v136 = vpop.xlane.xlu0 %135
    %137 = vadd.xlane.f32.xlu0 %v85
    %v138 = vpop.xlane.xlu0 %137
    %139 = vadd.xlane.f32.xlu0 %v86
    %v140 = vpop.xlane.xlu0 %139
    %141 = vadd.xlane.f32.xlu0 %v87
    %v142 = vpop.xlane.xlu0 %141
    %143 = vadd.xlane.f32.xlu0 %v88
    %v144 = vpop.xlane.xlu0 %143
    %145 = vadd.xlane.f32.xlu0 %v89
    %v146 = vpop.xlane.xlu0 %145
    %147 = vadd.xlane.f32.xlu0 %v90
    %v148 = vpop.xlane.xlu0 %147
    %149 = vadd.xlane.f32.xlu0 %v91
    %v150 = vpop.xlane.xlu0 %149
    %151 = vadd.xlane.f32.xlu0 %v92
    %v152 = vpop.xlane.xlu0 %151
    %153 = vadd.xlane.f32.xlu0 %v93
    %v154 = vpop.xlane.xlu0 %153
    %155 = vadd.xlane.f32.xlu0 %v94
    %v156 = vpop.xlane.xlu0 %155
    %157 = vadd.xlane.f32.xlu0 %v95
    %v158 = vpop.xlane.xlu0 %157
    %159 = vadd.xlane.f32.xlu0 %v96
    %v160 = vpop.xlane.xlu0 %159
    %v161 = vrcp.pop 128.0
    %v162 = vmul.f32 %v98, %v161
    %v163 = vmul.f32 %v100, %v161
    %v164 = vmul.f32 %v102, %v161
    %v165 = vmul.f32 %v104, %v161
    %v166 = vmul.f32 %v106, %v161
    %v167 = vmul.f32 %v108, %v161
    %v168 = vmul.f32 %v110, %v161
    %v169 = vmul.f32 %v112, %v161
    %v170 = vmul.f32 %v114, %v161
    %v171 = vmul.f32 %v116, %v161
    %v172 = vmul.f32 %v118, %v161
    %v173 = vmul.f32 %v120, %v161
    %v174 = vmul.f32 %v122, %v161
    %v175 = vmul.f32 %v124, %v161
    %v176 = vmul.f32 %v126, %v161
    %v177 = vmul.f32 %v128, %v161
    %v178 = vmul.f32 %v130, %v161
    %v179 = vmul.f32 %v132, %v161
    %v180 = vmul.f32 %v134, %v161
    %v181 = vmul.f32 %v136, %v161
    %v182 = vmul.f32 %v138, %v161
    %v183 = vmul.f32 %v140, %v161
    %v184 = vmul.f32 %v142, %v161
    %v185 = vmul.f32 %v144, %v161
    %v186 = vmul.f32 %v146, %v161
    %v187 = vmul.f32 %v148, %v161
    %v188 = vmul.f32 %v150, %v161
    %v189 = vmul.f32 %v152, %v161
    %v190 = vmul.f32 %v154, %v161
    %v191 = vmul.f32 %v156, %v161
    %v192 = vmul.f32 %v158, %v161
    %v193 = vmul.f32 %v160, %v161
    %v194 = vsub.f32 %v65, %v162
    %v195 = vsub.f32 %v66, %v163
    %v196 = vsub.f32 %v67, %v164
    %v197 = vsub.f32 %v68, %v165
    %v198 = vsub.f32 %v69, %v166
    %v199 = vsub.f32 %v70, %v167
    %v200 = vsub.f32 %v71, %v168
    %v201 = vsub.f32 %v72, %v169
    %v202 = vsub.f32 %v73, %v170
    %v203 = vsub.f32 %v74, %v171
    %v204 = vsub.f32 %v75, %v172
    %v205 = vsub.f32 %v76, %v173
    %v206 = vsub.f32 %v77, %v174
    %v207 = vsub.f32 %v78, %v175
    %v208 = vsub.f32 %v79, %v176
    %v209 = vsub.f32 %v80, %v177
    %v210 = vsub.f32 %v81, %v178
    %v211 = vsub.f32 %v82, %v179
    %v212 = vsub.f32 %v83, %v180
    %v213 = vsub.f32 %v84, %v181
    %v214 = vsub.f32 %v85, %v182
    %v215 = vsub.f32 %v86, %v183
    %v216 = vsub.f32 %v87, %v184
    %v217 = vsub.f32 %v88, %v185
    %v218 = vsub.f32 %v89, %v186
    %v219 = vsub.f32 %v90, %v187
    %v220 = vsub.f32 %v91, %v188
    %v221 = vsub.f32 %v92, %v189
    %v222 = vsub.f32 %v93, %v190
    %v223 = vsub.f32 %v94, %v191
    %v224 = vsub.f32 %v95, %v192
    %v225 = vsub.f32 %v96, %v193
    %v226 = vmul.f32 %v194, %v194
    %v227 = vmul.f32 %v195, %v195
    %v228 = vmul.f32 %v196, %v196
    %v229 = vmul.f32 %v197, %v197
    %v230 = vmul.f32 %v198, %v198
    %v231 = vmul.f32 %v199, %v199
    %v232 = vmul.f32 %v200, %v200
    %v233 = vmul.f32 %v201, %v201
    %v234 = vmul.f32 %v202, %v202
    %v235 = vmul.f32 %v203, %v203
    %v236 = vmul.f32 %v204, %v204
    %v237 = vmul.f32 %v205, %v205
    %v238 = vmul.f32 %v206, %v206
    %v239 = vmul.f32 %v207, %v207
    %v240 = vmul.f32 %v208, %v208
    %v241 = vmul.f32 %v209, %v209
    %v242 = vmul.f32 %v210, %v210
    %v243 = vmul.f32 %v211, %v211
    %v244 = vmul.f32 %v212, %v212
    %v245 = vmul.f32 %v213, %v213
    %v246 = vmul.f32 %v214, %v214
    %v247 = vmul.f32 %v215, %v215
    %v248 = vmul.f32 %v216, %v216
    %v249 = vmul.f32 %v217, %v217
    %v250 = vmul.f32 %v218, %v218
    %v251 = vmul.f32 %v219, %v219
    %v252 = vmul.f32 %v220, %v220
    %v253 = vmul.f32 %v221, %v221
    %v254 = vmul.f32 %v222, %v222
    %v255 = vmul.f32 %v223, %v223
    %v256 = vmul.f32 %v224, %v224
    %v257 = vmul.f32 %v225, %v225
    %258 = vadd.xlane.f32.xlu0 %v226
    %v259 = vpop.xlane.xlu0 %258
    %260 = vadd.xlane.f32.xlu0 %v227
    %v261 = vpop.xlane.xlu0 %260
    %262 = vadd.xlane.f32.xlu0 %v228
    %v263 = vpop.xlane.xlu0 %262
    %264 = vadd.xlane.f32.xlu0 %v229
    %v265 = vpop.xlane.xlu0 %264
    %266 = vadd.xlane.f32.xlu0 %v230
    %v267 = vpop.xlane.xlu0 %266
    %268 = vadd.xlane.f32.xlu0 %v231
    %v269 = vpop.xlane.xlu0 %268
    %270 = vadd.xlane.f32.xlu0 %v232
    %v271 = vpop.xlane.xlu0 %270
    %272 = vadd.xlane.f32.xlu0 %v233
    %v273 = vpop.xlane.xlu0 %272
    %274 = vadd.xlane.f32.xlu0 %v234
    %v275 = vpop.xlane.xlu0 %274
    %276 = vadd.xlane.f32.xlu0 %v235
    %v277 = vpop.xlane.xlu0 %276
    %278 = vadd.xlane.f32.xlu0 %v236
    %v279 = vpop.xlane.xlu0 %278
    %280 = vadd.xlane.f32.xlu0 %v237
    %v281 = vpop.xlane.xlu0 %280
    %282 = vadd.xlane.f32.xlu0 %v238
    %v283 = vpop.xlane.xlu0 %282
    %284 = vadd.xlane.f32.xlu0 %v239
    %v285 = vpop.xlane.xlu0 %284
    %286 = vadd.xlane.f32.xlu0 %v240
    %v287 = vpop.xlane.xlu0 %286
    %288 = vadd.xlane.f32.xlu0 %v241
    %v289 = vpop.xlane.xlu0 %288
    %290 = vadd.xlane.f32.xlu0 %v242
    %v291 = vpop.xlane.xlu0 %290
    %292 = vadd.xlane.f32.xlu0 %v243
    %v293 = vpop.xlane.xlu0 %292
    %294 = vadd.xlane.f32.xlu0 %v244
    %v295 = vpop.xlane.xlu0 %294
    %296 = vadd.xlane.f32.xlu0 %v245
    %v297 = vpop.xlane.xlu0 %296
    %298 = vadd.xlane.f32.xlu0 %v246
    %v299 = vpop.xlane.xlu0 %298
    %300 = vadd.xlane.f32.xlu0 %v247
    %v301 = vpop.xlane.xlu0 %300
    %302 = vadd.xlane.f32.xlu0 %v248
    %v303 = vpop.xlane.xlu0 %302
    %304 = vadd.xlane.f32.xlu0 %v249
    %v305 = vpop.xlane.xlu0 %304
    %306 = vadd.xlane.f32.xlu0 %v250
    %v307 = vpop.xlane.xlu0 %306
    %308 = vadd.xlane.f32.xlu0 %v251
    %v309 = vpop.xlane.xlu0 %308
    %310 = vadd.xlane.f32.xlu0 %v252
    %v311 = vpop.xlane.xlu0 %310
    %312 = vadd.xlane.f32.xlu0 %v253
    %v313 = vpop.xlane.xlu0 %312
    %314 = vadd.xlane.f32.xlu0 %v254
    %v315 = vpop.xlane.xlu0 %314
    %316 = vadd.xlane.f32.xlu0 %v255
    %v317 = vpop.xlane.xlu0 %316
    %318 = vadd.xlane.f32.xlu0 %v256
    %v319 = vpop.xlane.xlu0 %318
    %320 = vadd.xlane.f32.xlu0 %v257
    %v321 = vpop.xlane.xlu0 %320
    %v322 = vmul.f32 %v259, %v161
    %v323 = vmul.f32 %v261, %v161
    %v324 = vmul.f32 %v263, %v161
    %v325 = vmul.f32 %v265, %v161
    %v326 = vmul.f32 %v267, %v161
    %v327 = vmul.f32 %v269, %v161
    %v328 = vmul.f32 %v271, %v161
    %v329 = vmul.f32 %v273, %v161
    %v330 = vmul.f32 %v275, %v161
    %v331 = vmul.f32 %v277, %v161
    %v332 = vmul.f32 %v279, %v161
    %v333 = vmul.f32 %v281, %v161
    %v334 = vmul.f32 %v283, %v161
    %v335 = vmul.f32 %v285, %v161
    %v336 = vmul.f32 %v287, %v161
    %v337 = vmul.f32 %v289, %v161
    %v338 = vmul.f32 %v291, %v161
    %v339 = vmul.f32 %v293, %v161
    %v340 = vmul.f32 %v295, %v161
    %v341 = vmul.f32 %v297, %v161
    %v342 = vmul.f32 %v299, %v161
    %v343 = vmul.f32 %v301, %v161
    %v344 = vmul.f32 %v303, %v161
    %v345 = vmul.f32 %v305, %v161
    %v346 = vmul.f32 %v307, %v161
    %v347 = vmul.f32 %v309, %v161
    %v348 = vmul.f32 %v311, %v161
    %v349 = vmul.f32 %v313, %v161
    %v350 = vmul.f32 %v315, %v161
    %v351 = vmul.f32 %v317, %v161
    %v352 = vmul.f32 %v319, %v161
    %v353 = vmul.f32 %v321, %v161
    %v354 = vadd.f32 %v322, 1e-05
    %v355 = vadd.f32 %v323, 1e-05
    %v356 = vadd.f32 %v324, 1e-05
    %v357 = vadd.f32 %v325, 1e-05
    %v358 = vadd.f32 %v326, 1e-05
    %v359 = vadd.f32 %v327, 1e-05
    %v360 = vadd.f32 %v328, 1e-05
    %v361 = vadd.f32 %v329, 1e-05
    %v362 = vadd.f32 %v330, 1e-05
    %v363 = vadd.f32 %v331, 1e-05
    %v364 = vadd.f32 %v332, 1e-05
    %v365 = vadd.f32 %v333, 1e-05
    %v366 = vadd.f32 %v334, 1e-05
    %v367 = vadd.f32 %v335, 1e-05
    %v368 = vadd.f32 %v336, 1e-05
    %v369 = vadd.f32 %v337, 1e-05
    %v370 = vadd.f32 %v338, 1e-05
    %v371 = vadd.f32 %v339, 1e-05
    %v372 = vadd.f32 %v340, 1e-05
    %v373 = vadd.f32 %v341, 1e-05
    %v374 = vadd.f32 %v342, 1e-05
    %v375 = vadd.f32 %v343, 1e-05
    %v376 = vadd.f32 %v344, 1e-05
    %v377 = vadd.f32 %v345, 1e-05
    %v378 = vadd.f32 %v346, 1e-05
    %v379 = vadd.f32 %v347, 1e-05
    %v380 = vadd.f32 %v348, 1e-05
    %v381 = vadd.f32 %v349, 1e-05
    %v382 = vadd.f32 %v350, 1e-05
    %v383 = vadd.f32 %v351, 1e-05
    %v384 = vadd.f32 %v352, 1e-05
    %v385 = vadd.f32 %v353, 1e-05
    %v386 = vrsqrt.pop %v354
    %v387 = vrsqrt.pop %v355
    %v388 = vrsqrt.pop %v356
    %v389 = vrsqrt.pop %v357
    %v390 = vrsqrt.pop %v358
    %v391 = vrsqrt.pop %v359
    %v392 = vrsqrt.pop %v360
    %v393 = vrsqrt.pop %v361
    %v394 = vrsqrt.pop %v362
    %v395 = vrsqrt.pop %v363
    %v396 = vrsqrt.pop %v364
    %v397 = vrsqrt.pop %v365
    %v398 = vrsqrt.pop %v366
    %v399 = vrsqrt.pop %v367
    %v400 = vrsqrt.pop %v368
    %v401 = vrsqrt.pop %v369
    %v402 = vrsqrt.pop %v370
    %v403 = vrsqrt.pop %v371
    %v404 = vrsqrt.pop %v372
    %v405 = vrsqrt.pop %v373
    %v406 = vrsqrt.pop %v374
    %v407 = vrsqrt.pop %v375
    %v408 = vrsqrt.pop %v376
    %v409 = vrsqrt.pop %v377
    %v410 = vrsqrt.pop %v378
    %v411 = vrsqrt.pop %v379
    %v412 = vrsqrt.pop %v380
    %v413 = vrsqrt.pop %v381
    %v414 = vrsqrt.pop %v382
    %v415 = vrsqrt.pop %v383
    %v416 = vrsqrt.pop %v384
    %v417 = vrsqrt.pop %v385
    %v418 = vmul.f32 %v194, %v386
    %v419 = vmul.f32 %v195, %v387
    %v420 = vmul.f32 %v196, %v388
    %v421 = vmul.f32 %v197, %v389
    %v422 = vmul.f32 %v198, %v390
    %v423 = vmul.f32 %v199, %v391
    %v424 = vmul.f32 %v200, %v392
    %v425 = vmul.f32 %v201, %v393
    %v426 = vmul.f32 %v202, %v394
    %v427 = vmul.f32 %v203, %v395
    %v428 = vmul.f32 %v204, %v396
    %v429 = vmul.f32 %v205, %v397
    %v430 = vmul.f32 %v206, %v398
    %v431 = vmul.f32 %v207, %v399
    %v432 = vmul.f32 %v208, %v400
    %v433 = vmul.f32 %v209, %v401
    %v434 = vmul.f32 %v210, %v402
    %v435 = vmul.f32 %v211, %v403
    %v436 = vmul.f32 %v212, %v404
    %v437 = vmul.f32 %v213, %v405
    %v438 = vmul.f32 %v214, %v406
    %v439 = vmul.f32 %v215, %v407
    %v440 = vmul.f32 %v216, %v408
    %v441 = vmul.f32 %v217, %v409
    %v442 = vmul.f32 %v218, %v410
    %v443 = vmul.f32 %v219, %v411
    %v444 = vmul.f32 %v220, %v412
    %v445 = vmul.f32 %v221, %v413
    %v446 = vmul.f32 %v222, %v414
    %v447 = vmul.f32 %v223, %v415
    %v448 = vmul.f32 %v224, %v416
    %v449 = vmul.f32 %v225, %v417
    %v450 = vld [vmem:[%s1] sm:$0x1]
    %v452 = vlaneseq
    %v453 = vshrl.u32 %v452, 7
    %v454 = vsub.s32 0, %v453
    %v455 = vrot.slane %v450, %v454
    %v457 = vmul.f32 %v418, %v455
    %v458 = vmul.f32 %v419, %v455
    %v459 = vmul.f32 %v420, %v455
    %v460 = vmul.f32 %v421, %v455
    %v461 = vmul.f32 %v422, %v455
    %v462 = vmul.f32 %v423, %v455
    %v463 = vmul.f32 %v424, %v455
    %v464 = vmul.f32 %v425, %v455
    %v465 = vmul.f32 %v426, %v455
    %v466 = vmul.f32 %v427, %v455
    %v467 = vmul.f32 %v428, %v455
    %v468 = vmul.f32 %v429, %v455
    %v469 = vmul.f32 %v430, %v455
    %v470 = vmul.f32 %v431, %v455
    %v471 = vmul.f32 %v432, %v455
    %v472 = vmul.f32 %v433, %v455
    %v473 = vmul.f32 %v434, %v455
    %v474 = vmul.f32 %v435, %v455
    %v475 = vmul.f32 %v436, %v455
    %v476 = vmul.f32 %v437, %v455
    %v477 = vmul.f32 %v438, %v455
    %v478 = vmul.f32 %v439, %v455
    %v479 = vmul.f32 %v440, %v455
    %v480 = vmul.f32 %v441, %v455
    %v481 = vmul.f32 %v442, %v455
    %v482 = vmul.f32 %v443, %v455
    %v483 = vmul.f32 %v444, %v455
    %v484 = vmul.f32 %v445, %v455
    %v485 = vmul.f32 %v446, %v455
    %v486 = vmul.f32 %v447, %v455
    %v487 = vmul.f32 %v448, %v455
    %v488 = vmul.f32 %v449, %v455
    %v489 = vld [vmem:[%s2] sm:$0x1]
    %v491 = vlaneseq
    %v492 = vshrl.u32 %v491, 7
    %v493 = vsub.s32 0, %v492
    %v494 = vrot.slane %v489, %v493
    %v496 = vadd.f32 %v457, %v494
    %v497 = vadd.f32 %v458, %v494
    %v498 = vadd.f32 %v459, %v494
    %v499 = vadd.f32 %v460, %v494
    %v500 = vadd.f32 %v461, %v494
    %v501 = vadd.f32 %v462, %v494
    %v502 = vadd.f32 %v463, %v494
    %v503 = vadd.f32 %v464, %v494
    %v504 = vadd.f32 %v465, %v494
    %v505 = vadd.f32 %v466, %v494
    %v506 = vadd.f32 %v467, %v494
    %v507 = vadd.f32 %v468, %v494
    %v508 = vadd.f32 %v469, %v494
    %v509 = vadd.f32 %v470, %v494
    %v510 = vadd.f32 %v471, %v494
    %v511 = vadd.f32 %v472, %v494
    %v512 = vadd.f32 %v473, %v494
    %v513 = vadd.f32 %v474, %v494
    %v514 = vadd.f32 %v475, %v494
    %v515 = vadd.f32 %v476, %v494
    %v516 = vadd.f32 %v477, %v494
    %v517 = vadd.f32 %v478, %v494
    %v518 = vadd.f32 %v479, %v494
    %v519 = vadd.f32 %v480, %v494
    %v520 = vadd.f32 %v481, %v494
    %v521 = vadd.f32 %v482, %v494
    %v522 = vadd.f32 %v483, %v494
    %v523 = vadd.f32 %v484, %v494
    %v524 = vadd.f32 %v485, %v494
    %v525 = vadd.f32 %v486, %v494
    %v526 = vadd.f32 %v487, %v494
    %v527 = vadd.f32 %v488, %v494
    %v528 = vld [vmem:[#allocation5] sm:$0xff]
    %v529 = vld [vmem:[#allocation5 + $0x8] sm:$0xff]
    %v530 = vld [vmem:[#allocation5 + $0x10] sm:$0xff]
    %v531 = vld [vmem:[#allocation5 + $0x18] sm:$0xff]
    %v532 = vld [vmem:[#allocation5 + $0x20] sm:$0xff]
    %v533 = vld [vmem:[#allocation5 + $0x28] sm:$0xff]
    %v534 = vld [vmem:[#allocation5 + $0x30] sm:$0xff]
    %v535 = vld [vmem:[#allocation5 + $0x38] sm:$0xff]
    %v536 = vld [vmem:[#allocation5 + $0x40] sm:$0xff]
    %v537 = vld [vmem:[#allocation5 + $0x48] sm:$0xff]
    %v538 = vld [vmem:[#allocation5 + $0x50] sm:$0xff]
    %v539 = vld [vmem:[#allocation5 + $0x58] sm:$0xff]
    %v540 = vld [vmem:[#allocation5 + $0x60] sm:$0xff]
    %v541 = vld [vmem:[#allocation5 + $0x68] sm:$0xff]
    %v542 = vld [vmem:[#allocation5 + $0x70] sm:$0xff]
    %v543 = vld [vmem:[#allocation5 + $0x78] sm:$0xff]
    %v544 = vld [vmem:[#allocation5 + $0x80] sm:$0xff]
    %v545 = vld [vmem:[#allocation5 + $0x88] sm:$0xff]
    %v546 = vld [vmem:[#allocation5 + $0x90] sm:$0xff]
    %v547 = vld [vmem:[#allocation5 + $0x98] sm:$0xff]
    %v548 = vld [vmem:[#allocation5 + $0xa0] sm:$0xff]
    %v549 = vld [vmem:[#allocation5 + $0xa8] sm:$0xff]
    %v550 = vld [vmem:[#allocation5 + $0xb0] sm:$0xff]
    %v551 = vld [vmem:[#allocation5 + $0xb8] sm:$0xff]
    %v552 = vld [vmem:[#allocation5 + $0xc0] sm:$0xff]
    %v553 = vld [vmem:[#allocation5 + $0xc8] sm:$0xff]
    %v554 = vld [vmem:[#allocation5 + $0xd0] sm:$0xff]
    %v555 = vld [vmem:[#allocation5 + $0xd8] sm:$0xff]
    %v556 = vld [vmem:[#allocation5 + $0xe0] sm:$0xff]
    %v557 = vld [vmem:[#allocation5 + $0xe8] sm:$0xff]
    %v558 = vld [vmem:[#allocation5 + $0xf0] sm:$0xff]
    %v559 = vld [vmem:[#allocation5 + $0xf8] sm:$0xff]
    %v560 = vld [vmem:[#allocation5 + $0x100] sm:$0xff]
    %v561 = vld [vmem:[#allocation5 + $0x108] sm:$0xff]
    %v562 = vld [vmem:[#allocation5 + $0x110] sm:$0xff]
    %v563 = vld [vmem:[#allocation5 + $0x118] sm:$0xff]
    %v564 = vld [vmem:[#allocation5 + $0x120] sm:$0xff]
    %v565 = vld [vmem:[#allocation5 + $0x128] sm:$0xff]
    %v566 = vld [vmem:[#allocation5 + $0x130] sm:$0xff]
    %v567 = vld [vmem:[#allocation5 + $0x138] sm:$0xff]
    %v568 = vld [vmem:[#allocation5 + $0x140] sm:$0xff]
    %v569 = vld [vmem:[#allocation5 + $0x148] sm:$0xff]
    %v570 = vld [vmem:[#allocation5 + $0x150] sm:$0xff]
    %v571 = vld [vmem:[#allocation5 + $0x158] sm:$0xff]
    %v572 = vld [vmem:[#allocation5 + $0x160] sm:$0xff]
    %v573 = vld [vmem:[#allocation5 + $0x168] sm:$0xff]
    %v574 = vld [vmem:[#allocation5 + $0x170] sm:$0xff]
    %v575 = vld [vmem:[#allocation5 + $0x178] sm:$0xff]
    %v576 = vld [vmem:[#allocation5 + $0x180] sm:$0xff]
    %v577 = vld [vmem:[#allocation5 + $0x188] sm:$0xff]
    %v578 = vld [vmem:[#allocation5 + $0x190] sm:$0xff]
    %v579 = vld [vmem:[#allocation5 + $0x198] sm:$0xff]
    %v580 = vld [vmem:[#allocation5 + $0x1a0] sm:$0xff]
    %v581 = vld [vmem:[#allocation5 + $0x1a8] sm:$0xff]
    %v582 = vld [vmem:[#allocation5 + $0x1b0] sm:$0xff]
    %v583 = vld [vmem:[#allocation5 + $0x1b8] sm:$0xff]
    %v584 = vld [vmem:[#allocation5 + $0x1c0] sm:$0xff]
    %v585 = vld [vmem:[#allocation5 + $0x1c8] sm:$0xff]
    %v586 = vld [vmem:[#allocation5 + $0x1d0] sm:$0xff]
    %v587 = vld [vmem:[#allocation5 + $0x1d8] sm:$0xff]
    %v588 = vld [vmem:[#allocation5 + $0x1e0] sm:$0xff]
    %v589 = vld [vmem:[#allocation5 + $0x1e8] sm:$0xff]
    %v590 = vld [vmem:[#allocation5 + $0x1f0] sm:$0xff]
    %v591 = vld [vmem:[#allocation5 + $0x1f8] sm:$0xff]
    %v592 = vld [vmem:[#allocation5 + $0x200] sm:$0xff]
    %v593 = vld [vmem:[#allocation5 + $0x208] sm:$0xff]
    %v594 = vld [vmem:[#allocation5 + $0x210] sm:$0xff]
    %v595 = vld [vmem:[#allocation5 + $0x218] sm:$0xff]
    %v596 = vld [vmem:[#allocation5 + $0x220] sm:$0xff]
    %v597 = vld [vmem:[#allocation5 + $0x228] sm:$0xff]
    %v598 = vld [vmem:[#allocation5 + $0x230] sm:$0xff]
    %v599 = vld [vmem:[#allocation5 + $0x238] sm:$0xff]
    %v600 = vld [vmem:[#allocation5 + $0x240] sm:$0xff]
    %v601 = vld [vmem:[#allocation5 + $0x248] sm:$0xff]
    %v602 = vld [vmem:[#allocation5 + $0x250] sm:$0xff]
    %v603 = vld [vmem:[#allocation5 + $0x258] sm:$0xff]
    %v604 = vld [vmem:[#allocation5 + $0x260] sm:$0xff]
    %v605 = vld [vmem:[#allocation5 + $0x268] sm:$0xff]
    %v606 = vld [vmem:[#allocation5 + $0x270] sm:$0xff]
    %v607 = vld [vmem:[#allocation5 + $0x278] sm:$0xff]
    %v608 = vld [vmem:[#allocation5 + $0x280] sm:$0xff]
    %v609 = vld [vmem:[#allocation5 + $0x288] sm:$0xff]
    %v610 = vld [vmem:[#allocation5 + $0x290] sm:$0xff]
    %v611 = vld [vmem:[#allocation5 + $0x298] sm:$0xff]
    %v612 = vld [vmem:[#allocation5 + $0x2a0] sm:$0xff]
    %v613 = vld [vmem:[#allocation5 + $0x2a8] sm:$0xff]
    %v614 = vld [vmem:[#allocation5 + $0x2b0] sm:$0xff]
    %v615 = vld [vmem:[#allocation5 + $0x2b8] sm:$0xff]
    %v616 = vld [vmem:[#allocation5 + $0x2c0] sm:$0xff]
    %v617 = vld [vmem:[#allocation5 + $0x2c8] sm:$0xff]
    %v618 = vld [vmem:[#allocation5 + $0x2d0] sm:$0xff]
    %v619 = vld [vmem:[#allocation5 + $0x2d8] sm:$0xff]
    %v620 = vld [vmem:[#allocation5 + $0x2e0] sm:$0xff]
    %v621 = vld [vmem:[#allocation5 + $0x2e8] sm:$0xff]
    %v622 = vld [vmem:[#allocation5 + $0x2f0] sm:$0xff]
    %v623 = vld [vmem:[#allocation5 + $0x2f8] sm:$0xff]
    %v624 = vld [vmem:[#allocation5 + $0x300] sm:$0xff]
    %v625 = vld [vmem:[#allocation5 + $0x308] sm:$0xff]
    %v626 = vld [vmem:[#allocation5 + $0x310] sm:$0xff]
    %v627 = vld [vmem:[#allocation5 + $0x318] sm:$0xff]
    %v628 = vld [vmem:[#allocation5 + $0x320] sm:$0xff]
    %v629 = vld [vmem:[#allocation5 + $0x328] sm:$0xff]
    %v630 = vld [vmem:[#allocation5 + $0x330] sm:$0xff]
    %v631 = vld [vmem:[#allocation5 + $0x338] sm:$0xff]
    %v632 = vld [vmem:[#allocation5 + $0x340] sm:$0xff]
    %v633 = vld [vmem:[#allocation5 + $0x348] sm:$0xff]
    %v634 = vld [vmem:[#allocation5 + $0x350] sm:$0xff]
    %v635 = vld [vmem:[#allocation5 + $0x358] sm:$0xff]
    %v636 = vld [vmem:[#allocation5 + $0x360] sm:$0xff]
    %v637 = vld [vmem:[#allocation5 + $0x368] sm:$0xff]
    %v638 = vld [vmem:[#allocation5 + $0x370] sm:$0xff]
    %v639 = vld [vmem:[#allocation5 + $0x378] sm:$0xff]
    %v640 = vld [vmem:[#allocation5 + $0x380] sm:$0xff]
    %v641 = vld [vmem:[#allocation5 + $0x388] sm:$0xff]
    %v642 = vld [vmem:[#allocation5 + $0x390] sm:$0xff]
    %v643 = vld [vmem:[#allocation5 + $0x398] sm:$0xff]
    %v644 = vld [vmem:[#allocation5 + $0x3a0] sm:$0xff]
    %v645 = vld [vmem:[#allocation5 + $0x3a8] sm:$0xff]
    %v646 = vld [vmem:[#allocation5 + $0x3b0] sm:$0xff]
    %v647 = vld [vmem:[#allocation5 + $0x3b8] sm:$0xff]
    %v648 = vld [vmem:[#allocation5 + $0x3c0] sm:$0xff]
    %v649 = vld [vmem:[#allocation5 + $0x3c8] sm:$0xff]
    %v650 = vld [vmem:[#allocation5 + $0x3d0] sm:$0xff]
    %v651 = vld [vmem:[#allocation5 + $0x3d8] sm:$0xff]
    %v652 = vld [vmem:[#allocation5 + $0x3e0] sm:$0xff]
    %v653 = vld [vmem:[#allocation5 + $0x3e8] sm:$0xff]
    %v654 = vld [vmem:[#allocation5 + $0x3f0] sm:$0xff]
    %v655 = vld [vmem:[#allocation5 + $0x3f8] sm:$0xff]
    %v656 = vld [vmem:[#allocation5 + $0x400] sm:$0xff]
    %v657 = vld [vmem:[#allocation5 + $0x408] sm:$0xff]
    %v658 = vld [vmem:[#allocation5 + $0x410] sm:$0xff]
    %v659 = vld [vmem:[#allocation5 + $0x418] sm:$0xff]
    %v660 = vld [vmem:[#allocation5 + $0x420] sm:$0xff]
    %v661 = vld [vmem:[#allocation5 + $0x428] sm:$0xff]
    %v662 = vld [vmem:[#allocation5 + $0x430] sm:$0xff]
    %v663 = vld [vmem:[#allocation5 + $0x438] sm:$0xff]
    %v664 = vld [vmem:[#allocation5 + $0x440] sm:$0xff]
    %v665 = vld [vmem:[#allocation5 + $0x448] sm:$0xff]
    %v666 = vld [vmem:[#allocation5 + $0x450] sm:$0xff]
    %v667 = vld [vmem:[#allocation5 + $0x458] sm:$0xff]
    %v668 = vld [vmem:[#allocation5 + $0x460] sm:$0xff]
    %v669 = vld [vmem:[#allocation5 + $0x468] sm:$0xff]
    %v670 = vld [vmem:[#allocation5 + $0x470] sm:$0xff]
    %v671 = vld [vmem:[#allocation5 + $0x478] sm:$0xff]
    %v672 = vld [vmem:[#allocation5 + $0x480] sm:$0xff]
    %v673 = vld [vmem:[#allocation5 + $0x488] sm:$0xff]
    %v674 = vld [vmem:[#allocation5 + $0x490] sm:$0xff]
    %v675 = vld [vmem:[#allocation5 + $0x498] sm:$0xff]
    %v676 = vld [vmem:[#allocation5 + $0x4a0] sm:$0xff]
    %v677 = vld [vmem:[#allocation5 + $0x4a8] sm:$0xff]
    %v678 = vld [vmem:[#allocation5 + $0x4b0] sm:$0xff]
    %v679 = vld [vmem:[#allocation5 + $0x4b8] sm:$0xff]
    %v680 = vld [vmem:[#allocation5 + $0x4c0] sm:$0xff]
    %v681 = vld [vmem:[#allocation5 + $0x4c8] sm:$0xff]
    %v682 = vld [vmem:[#allocation5 + $0x4d0] sm:$0xff]
    %v683 = vld [vmem:[#allocation5 + $0x4d8] sm:$0xff]
    %v684 = vld [vmem:[#allocation5 + $0x4e0] sm:$0xff]
    %v685 = vld [vmem:[#allocation5 + $0x4e8] sm:$0xff]
    %v686 = vld [vmem:[#allocation5 + $0x4f0] sm:$0xff]
    %v687 = vld [vmem:[#allocation5 + $0x4f8] sm:$0xff]
    %v688 = vld [vmem:[#allocation5 + $0x500] sm:$0xff]
    %v689 = vld [vmem:[#allocation5 + $0x508] sm:$0xff]
    %v690 = vld [vmem:[#allocation5 + $0x510] sm:$0xff]
    %v691 = vld [vmem:[#allocation5 + $0x518] sm:$0xff]
    %v692 = vld [vmem:[#allocation5 + $0x520] sm:$0xff]
    %v693 = vld [vmem:[#allocation5 + $0x528] sm:$0xff]
    %v694 = vld [vmem:[#allocation5 + $0x530] sm:$0xff]
    %v695 = vld [vmem:[#allocation5 + $0x538] sm:$0xff]
    %v696 = vld [vmem:[#allocation5 + $0x540] sm:$0xff]
    %v697 = vld [vmem:[#allocation5 + $0x548] sm:$0xff]
    %v698 = vld [vmem:[#allocation5 + $0x550] sm:$0xff]
    %v699 = vld [vmem:[#allocation5 + $0x558] sm:$0xff]
    %v700 = vld [vmem:[#allocation5 + $0x560] sm:$0xff]
    %v701 = vld [vmem:[#allocation5 + $0x568] sm:$0xff]
    %v702 = vld [vmem:[#allocation5 + $0x570] sm:$0xff]
    %v703 = vld [vmem:[#allocation5 + $0x578] sm:$0xff]
    %v704 = vld [vmem:[#allocation5 + $0x580] sm:$0xff]
    %v705 = vld [vmem:[#allocation5 + $0x588] sm:$0xff]
    %v706 = vld [vmem:[#allocation5 + $0x590] sm:$0xff]
    %v707 = vld [vmem:[#allocation5 + $0x598] sm:$0xff]
    %v708 = vld [vmem:[#allocation5 + $0x5a0] sm:$0xff]
    %v709 = vld [vmem:[#allocation5 + $0x5a8] sm:$0xff]
    %v710 = vld [vmem:[#allocation5 + $0x5b0] sm:$0xff]
    %v711 = vld [vmem:[#allocation5 + $0x5b8] sm:$0xff]
    %v712 = vld [vmem:[#allocation5 + $0x5c0] sm:$0xff]
    %v713 = vld [vmem:[#allocation5 + $0x5c8] sm:$0xff]
    %v714 = vld [vmem:[#allocation5 + $0x5d0] sm:$0xff]
    %v715 = vld [vmem:[#allocation5 + $0x5d8] sm:$0xff]
    %v716 = vld [vmem:[#allocation5 + $0x5e0] sm:$0xff]
    %v717 = vld [vmem:[#allocation5 + $0x5e8] sm:$0xff]
    %v718 = vld [vmem:[#allocation5 + $0x5f0] sm:$0xff]
    %v719 = vld [vmem:[#allocation5 + $0x5f8] sm:$0xff]
    %720 = vmatprep.subr.mxu0 %v529
    %721 = vmatpush1.msra.mxu0 %v528
    %722 = vmatprep.subr.mxu0 %v541
    %723 = vmatpush1.msra.mxu0 %v540
    %724 = vmatprep.subr.mxu0 %v553
    %725 = vmatpush1.msra.mxu0 %v552
    %726 = vmatprep.subr.mxu0 %v565
    %727 = vmatpush1.msra.mxu0 %v564
    %728 = vmatprep.subr.mxu0 %v577
    %729 = vmatpush1.msra.mxu0 %v576
    %730 = vmatprep.subr.mxu0 %v589
    %731 = vmatpush1.msra.mxu0 %v588
    %732 = vmatprep.subr.mxu0 %v601
    %733 = vmatpush1.msra.mxu0 %v600
    %734 = vmatprep.subr.mxu0 %v613
    %735 = vmatpush1.msra.mxu0 %v612
    %736 = vmatprep.subr.mxu0 %v625
    %737 = vmatpush1.msra.mxu0 %v624
    %738 = vmatprep.subr.mxu0 %v637
    %739 = vmatpush1.msra.mxu0 %v636
    %740 = vmatprep.subr.mxu0 %v649
    %741 = vmatpush1.msra.mxu0 %v648
    %742 = vmatprep.subr.mxu0 %v661
    %743 = vmatpush1.msra.mxu0 %v660
    %744 = vmatprep.subr.mxu0 %v673
    %745 = vmatpush1.msra.mxu0 %v672
    %746 = vmatprep.subr.mxu0 %v685
    %747 = vmatpush1.msra.mxu0 %v684
    %748 = vmatprep.subr.mxu0 %v697
    %749 = vmatpush1.msra.mxu0 %v696
    %750 = vmatprep.subr.mxu0 %v709
    %751 = vmatpush1.msra.mxu0 %v708
    %752 = vmatprep.subr.mxu0 0.0
    %753 = vmatpush1.msra.mxu0 0.0
    %754 = vmatprep.subr.mxu0 0.0
    %755 = vmatpush1.msra.mxu0 0.0
    %756 = vmatprep.subr.mxu0 0.0
    %757 = vmatpush1.msra.mxu0 0.0
    %758 = vmatprep.subr.mxu0 0.0
    %759 = vmatpush1.msra.mxu0 0.0
    %760 = vmatprep.subr.mxu0 0.0
    %761 = vmatpush1.msra.mxu0 0.0
    %762 = vmatprep.subr.mxu0 0.0
    %763 = vmatpush1.msra.mxu0 0.0
    %764 = vmatprep.subr.mxu0 0.0
    %765 = vmatpush1.msra.mxu0 0.0
    %766 = vmatprep.subr.mxu0 0.0
    %767 = vmatpush1.msra.mxu0 0.0
    %768 = vmatprep.subr.mxu0 0.0
    %769 = vmatpush1.msra.mxu0 0.0
    %770 = vmatprep.subr.mxu0 0.0
    %771 = vmatpush1.msra.mxu0 0.0
    %772 = vmatprep.subr.mxu0 0.0
    %773 = vmatpush1.msra.mxu0 0.0
    %774 = vmatprep.subr.mxu0 0.0
    %775 = vmatpush1.msra.mxu0 0.0
    %776 = vmatprep.subr.mxu0 0.0
    %777 = vmatpush1.msra.mxu0 0.0
    %778 = vmatprep.subr.mxu0 0.0
    %779 = vmatpush1.msra.mxu0 0.0
    %780 = vmatprep.subr.mxu0 0.0
    %781 = vmatpush1.msra.mxu0 0.0
    %782 = vmatprep.subr.mxu0 0.0
    %783 = vmatpush1.msra.mxu0 0.0
    %784 = vmatprep.mubr.f32.mxu0 0.0
    %785 = vmatmul.mubr.f32.gmra.mrb[0].mxu0 %v496
    %v786 = vpop.f32.mrb[0].mxu0
    %v787 = vadd.f32 0.0, %v786
    %v788 = vpop.f32.mrb[0].mxu0
    %v789 = vadd.f32 0.0, %v788
    %790 = vmatprep.mubr.f32.mxu0 0.0
    %791 = vmatmul.mubr.f32.gmra.mrb[0].mxu0 %v497
    %v792 = vpop.f32.mrb[0].mxu0
    %v793 = vadd.f32 0.0, %v792
    %v794 = vpop.f32.mrb[0].mxu0
    %v795 = vadd.f32 0.0, %v794
    %796 = vmatprep.mubr.f32.mxu0 0.0
    %797 = vmatmul.mubr.f32.gmra.mrb[0].mxu0 %v498
    %v798 = vpop.f32.mrb[0].mxu0
    %v799 = vadd.f32 0.0, %v798
    %v800 = vpop.f32.mrb[0].mxu0
    %v801 = vadd.f32 0.0, %v800
    %802 = vmatprep.mubr.f32.mxu0 0.0
    %803 = vmatmul.mubr.f32.gmra.mrb[0].mxu0 %v499
    %v804 = vpop.f32.mrb[0].mxu0
    %v805 = vadd.f32 0.0, %v804
    %v806 = vpop.f32.mrb[0].mxu0
    %v807 = vadd.f32 0.0, %v806
    %808 = vmatprep.mubr.f32.mxu0 0.0
    %809 = vmatmul.mubr.f32.gmra.mrb[0].mxu0 %v500
    %v810 = vpop.f32.mrb[0].mxu0
    %v811 = vadd.f32 0.0, %v810
    %v812 = vpop.f32.mrb[0].mxu0
    %v813 = vadd.f32 0.0, %v812
    %814 = vmatprep.mubr.f32.mxu0 0.0
    %815 = vmatmul.mubr.f32.gmra.mrb[0].mxu0 %v501
    %v816 = vpop.f32.mrb[0].mxu0
    %v817 = vadd.f32 0.0, %v816
    %v818 = vpop.f32.mrb[0].mxu0
    %v819 = vadd.f32 0.0, %v818
    %820 = vmatprep.mubr.f32.mxu0 0.0
    %821 = vmatmul.mubr.f32.gmra.mrb[0].mxu0 %v502
    %v822 = vpop.f32.mrb[0].mxu0
    %v823 = vadd.f32 0.0, %v822
    %v824 = vpop.f32.mrb[0].mxu0
    %v825 = vadd.f32 0.0, %v824
    %826 = vmatprep.mubr.f32.mxu0 0.0
    %827 = vmatmul.mubr.f32.gmra.mrb[0].mxu0 %v503
    %v828 = vpop.f32.mrb[0].mxu0
    %v829 = vadd.f32 0.0, %v828
    %v830 = vpop.f32.mrb[0].mxu0
    %v831 = vadd.f32 0.0, %v830
    %832 = vmatprep.mubr.f32.mxu0 0.0
    %833 = vmatmul.mubr.f32.gmra.mrb[0].mxu0 %v504
    %v834 = vpop.f32.mrb[0].mxu0
    %v835 = vadd.f32 0.0, %v834
    %v836 = vpop.f32.mrb[0].mxu0
    %v837 = vadd.f32 0.0, %v836
    %838 = vmatprep.mubr.f32.mxu0 0.0
    %839 = vmatmul.mubr.f32.gmra.mrb[0].mxu0 %v505
    %v840 = vpop.f32.mrb[0].mxu0
    %v841 = vadd.f32 0.0, %v840
    %v842 = vpop.f32.mrb[0].mxu0
    %v843 = vadd.f32 0.0, %v842
    %844 = vmatprep.mubr.f32.mxu0 0.0
    %845 = vmatmul.mubr.f32.gmra.mrb[0].mxu0 %v506
    %v846 = vpop.f32.mrb[0].mxu0
    %v847 = vadd.f32 0.0, %v846
    %v848 = vpop.f32.mrb[0].mxu0
    %v849 = vadd.f32 0.0, %v848
    %850 = vmatprep.mubr.f32.mxu0 0.0
    %851 = vmatmul.mubr.f32.gmra.mrb[0].mxu0 %v507
    %v852 = vpop.f32.mrb[0].mxu0
    %v853 = vadd.f32 0.0, %v852
    %v854 = vpop.f32.mrb[0].mxu0
    %v855 = vadd.f32 0.0, %v854
    %856 = vmatprep.mubr.f32.mxu0 0.0
    %857 = vmatmul.mubr.f32.gmra.mrb[0].mxu0 %v508
    %v858 = vpop.f32.mrb[0].mxu0
    %v859 = vadd.f32 0.0, %v858
    %v860 = vpop.f32.mrb[0].mxu0
    %v861 = vadd.f32 0.0, %v860
    %862 = vmatprep.mubr.f32.mxu0 0.0
    %863 = vmatmul.mubr.f32.gmra.mrb[0].mxu0 %v509
    %v864 = vpop.f32.mrb[0].mxu0
    %v865 = vadd.f32 0.0, %v864
    %v866 = vpop.f32.mrb[0].mxu0
    %v867 = vadd.f32 0.0, %v866
    %868 = vmatprep.mubr.f32.mxu0 0.0
    %869 = vmatmul.mubr.f32.gmra.mrb[0].mxu0 %v510
    %v870 = vpop.f32.mrb[0].mxu0
    %v871 = vadd.f32 0.0, %v870
    %v872 = vpop.f32.mrb[0].mxu0
    %v873 = vadd.f32 0.0, %v872
    %874 = vmatprep.mubr.f32.mxu0 0.0
    %875 = vmatmul.mubr.f32.gmra.mrb[0].mxu0 %v511
    %v876 = vpop.f32.mrb[0].mxu0
    %v877 = vadd.f32 0.0, %v876
    %v878 = vpop.f32.mrb[0].mxu0
    %v879 = vadd.f32 0.0, %v878
    %880 = vmatprep.mubr.f32.mxu0 0.0
    %881 = vmatmul.mubr.f32.gmra.mrb[0].mxu0 %v512
    %v882 = vpop.f32.mrb[0].mxu0
    %v883 = vadd.f32 0.0, %v882
    %v884 = vpop.f32.mrb[0].mxu0
    %v885 = vadd.f32 0.0, %v884
    %886 = vmatprep.mubr.f32.mxu0 0.0
    %887 = vmatmul.mubr.f32.gmra.mrb[0].mxu0 %v513
    %v888 = vpop.f32.mrb[0].mxu0
    %v889 = vadd.f32 0.0, %v888
    %v890 = vpop.f32.mrb[0].mxu0
    %v891 = vadd.f32 0.0, %v890
    %892 = vmatprep.mubr.f32.mxu0 0.0
    %893 = vmatmul.mubr.f32.gmra.mrb[0].mxu0 %v514
    %v894 = vpop.f32.mrb[0].mxu0
    %v895 = vadd.f32 0.0, %v894
    %v896 = vpop.f32.mrb[0].mxu0
    %v897 = vadd.f32 0.0, %v896
    %898 = vmatprep.mubr.f32.mxu0 0.0
    %899 = vmatmul.mubr.f32.gmra.mrb[0].mxu0 %v515
    %v900 = vpop.f32.mrb[0].mxu0
    %v901 = vadd.f32 0.0, %v900
    %v902 = vpop.f32.mrb[0].mxu0
    %v903 = vadd.f32 0.0, %v902
    %904 = vmatprep.mubr.f32.mxu0 0.0
    %905 = vmatmul.mubr.f32.gmra.mrb[0].mxu0 %v516
    %v906 = vpop.f32.mrb[0].mxu0
    %v907 = vadd.f32 0.0, %v906
    %v908 = vpop.f32.mrb[0].mxu0
    %v909 = vadd.f32 0.0, %v908
    %910 = vmatprep.mubr.f32.mxu0 0.0
    %911 = vmatmul.mubr.f32.gmra.mrb[0].mxu0 %v517
    %v912 = vpop.f32.mrb[0].mxu0
    %v913 = vadd.f32 0.0, %v912
    %v914 = vpop.f32.mrb[0].mxu0
    %v915 = vadd.f32 0.0, %v914
    %916 = vmatprep.mubr.f32.mxu0 0.0
    %917 = vmatmul.mubr.f32.gmra.mrb[0].mxu0 %v518
    %v918 = vpop.f32.mrb[0].mxu0
    %v919 = vadd.f32 0.0, %v918
    %v920 = vpop.f32.mrb[0].mxu0
    %v921 = vadd.f32 0.0, %v920
    %922 = vmatprep.mubr.f32.mxu0 0.0
    %923 = vmatmul.mubr.f32.gmra.mrb[0].mxu0 %v519
    %v924 = vpop.f32.mrb[0].mxu0
    %v925 = vadd.f32 0.0, %v924
    %v926 = vpop.f32.mrb[0].mxu0
    %v927 = vadd.f32 0.0, %v926
    %928 = vmatprep.mubr.f32.mxu0 0.0
    %929 = vmatmul.mubr.f32.gmra.mrb[0].mxu0 %v520
    %v930 = vpop.f32.mrb[0].mxu0
    %v931 = vadd.f32 0.0, %v930
    %v932 = vpop.f32.mrb[0].mxu0
    %v933 = vadd.f32 0.0, %v932
    %934 = vmatprep.mubr.f32.mxu0 0.0
    %935 = vmatmul.mubr.f32.gmra.mrb[0].mxu0 %v521
    %v936 = vpop.f32.mrb[0].mxu0
    %v937 = vadd.f32 0.0, %v936
    %v938 = vpop.f32.mrb[0].mxu0
    %v939 = vadd.f32 0.0, %v938
    %940 = vmatprep.mubr.f32.mxu0 0.0
    %941 = vmatmul.mubr.f32.gmra.mrb[0].mxu0 %v522
    %v942 = vpop.f32.mrb[0].mxu0
    %v943 = vadd.f32 0.0, %v942
    %v944 = vpop.f32.mrb[0].mxu0
    %v945 = vadd.f32 0.0, %v944
    %946 = vmatprep.mubr.f32.mxu0 0.0
    %947 = vmatmul.mubr.f32.gmra.mrb[0].mxu0 %v523
    %v948 = vpop.f32.mrb[0].mxu0
    %v949 = vadd.f32 0.0, %v948
    %v950 = vpop.f32.mrb[0].mxu0
    %v951 = vadd.f32 0.0, %v950
    %952 = vmatprep.mubr.f32.mxu0 0.0
    %953 = vmatmul.mubr.f32.gmra.mrb[0].mxu0 %v524
    %v954 = vpop.f32.mrb[0].mxu0
    %v955 = vadd.f32 0.0, %v954
    %v956 = vpop.f32.mrb[0].mxu0
    %v957 = vadd.f32 0.0, %v956
    %958 = vmatprep.mubr.f32.mxu0 0.0
    %959 = vmatmul.mubr.f32.gmra.mrb[0].mxu0 %v525
    %v960 = vpop.f32.mrb[0].mxu0
    %v961 = vadd.f32 0.0, %v960
    %v962 = vpop.f32.mrb[0].mxu0
    %v963 = vadd.f32 0.0, %v962
    %964 = vmatprep.mubr.f32.mxu0 0.0
    %965 = vmatmul.mubr.f32.gmra.mrb[0].mxu0 %v526
    %v966 = vpop.f32.mrb[0].mxu0
    %v967 = vadd.f32 0.0, %v966
    %v968 = vpop.f32.mrb[0].mxu0
    %v969 = vadd.f32 0.0, %v968
    %970 = vmatprep.mubr.f32.mxu0 0.0
    %971 = vmatmul.mubr.f32.gmra.mrb[0].mxu0 %v527
    %v972 = vpop.f32.mrb[0].mxu0
    %v973 = vadd.f32 0.0, %v972
    %v974 = vpop.f32.mrb[0].mxu0
    %v975 = vadd.f32 0.0, %v974
    %976 = vdwg.mxu0
    %977 = vmatprep.subr.mxu0 %v531
    %978 = vmatpush1.msra.mxu0 %v530
    %979 = vmatprep.subr.mxu0 %v543
    %980 = vmatpush1.msra.mxu0 %v542
    %981 = vmatprep.subr.mxu0 %v555
    %982 = vmatpush1.msra.mxu0 %v554
    %983 = vmatprep.subr.mxu0 %v567
    %984 = vmatpush1.msra.mxu0 %v566
    %985 = vmatprep.subr.mxu0 %v579
    %986 = vmatpush1.msra.mxu0 %v578
    %987 = vmatprep.subr.mxu0 %v591
    %988 = vmatpush1.msra.mxu0 %v590
    %989 = vmatprep.subr.mxu0 %v603
    %990 = vmatpush1.msra.mxu0 %v602
    %991 = vmatprep.subr.mxu0 %v615
    %992 = vmatpush1.msra.mxu0 %v614
    %993 = vmatprep.subr.mxu0 %v627
    %994 = vmatpush1.msra.mxu0 %v626
    %995 = vmatprep.subr.mxu0 %v639
    %996 = vmatpush1.msra.mxu0 %v638
    %997 = vmatprep.subr.mxu0 %v651
    %998 = vmatpush1.msra.mxu0 %v650
    %999 = vmatprep.subr.mxu0 %v663
    %1000 = vmatpush1.msra.mxu0 %v662
    %1001 = vmatprep.subr.mxu0 %v675
    %1002 = vmatpush1.msra.mxu0 %v674
    %1003 = vmatprep.subr.mxu0 %v687
    %1004 = vmatpush1.msra.mxu0 %v686
    %1005 = vmatprep.subr.mxu0 %v699
    %1006 = vmatpush1.msra.mxu0 %v698
    %1007 = vmatprep.subr.mxu0 %v711
    %1008 = vmatpush1.msra.mxu0 %v710
    %1009 = vmatprep.subr.mxu0 0.0
    %1010 = vmatpush1.msra.mxu0 0.0
    %1011 = vmatprep.subr.mxu0 0.0
    %1012 = vmatpush1.msra.mxu0 0.0
    %1013 = vmatprep.subr.mxu0 0.0
    %1014 = vmatpush1.msra.mxu0 0.0
    %1015 = vmatprep.subr.mxu0 0.0
    %1016 = vmatpush1.msra.mxu0 0.0
    %1017 = vmatprep.subr.mxu0 0.0
    %1018 = vmatpush1.msra.mxu0 0.0
    %1019 = vmatprep.subr.mxu0 0.0
    %1020 = vmatpush1.msra.mxu0 0.0
    %1021 = vmatprep.subr.mxu0 0.0
    %1022 = vmatpush1.msra.mxu0 0.0
    %1023 = vmatprep.subr.mxu0 0.0
    %1024 = vmatpush1.msra.mxu0 0.0
    %1025 = vmatprep.subr.mxu0 0.0
    %1026 = vmatpush1.msra.mxu0 0.0
    %1027 = vmatprep.subr.mxu0 0.0
    %1028 = vmatpush1.msra.mxu0 0.0
    %1029 = vmatprep.subr.mxu0 0.0
    %1030 = vmatpush1.msra.mxu0 0.0
    %1031 = vmatprep.subr.mxu0 0.0
    %1032 = vmatpush1.msra.mxu0 0.0
    %1033 = vmatprep.subr.mxu0 0.0
    %1034 = vmatpush1.msra.mxu0 0.0
    %1035 = vmatprep.subr.mxu0 0.0
    %1036 = vmatpush1.msra.mxu0 0.0
    %1037 = vmatprep.subr.mxu0 0.0
    %1038 = vmatpush1.msra.mxu0 0.0
    %1039 = vmatprep.subr.mxu0 0.0
    %1040 = vmatpush1.msra.mxu0 0.0
    %1041 = vmatprep.mubr.f32.mxu0 0.0
    %1042 = vmatmul.mubr.f32.gmra.mrb[0].mxu0 %v496
    %v1043 = vpop.f32.mrb[0].mxu0
    %v1044 = vadd.f32 0.0, %v1043
    %v1045 = vpop.f32.mrb[0].mxu0
    %v1046 = vadd.f32 0.0, %v1045
    %1047 = vmatprep.mubr.f32.mxu0 0.0
    %1048 = vmatmul.mubr.f32.gmra.mrb[0].mxu0 %v497
    %v1049 = vpop.f32.mrb[0].mxu0
    %v1050 = vadd.f32 0.0, %v1049
    %v1051 = vpop.f32.mrb[0].mxu0
    %v1052 = vadd.f32 0.0, %v1051
    %1053 = vmatprep.mubr.f32.mxu0 0.0
    %1054 = vmatmul.mubr.f32.gmra.mrb[0].mxu0 %v498
    %v1055 = vpop.f32.mrb[0].mxu0
    %v1056 = vadd.f32 0.0, %v1055
    %v1057 = vpop.f32.mrb[0].mxu0
    %v1058 = vadd.f32 0.0, %v1057
    %1059 = vmatprep.mubr.f32.mxu0 0.0
    %1060 = vmatmul.mubr.f32.gmra.mrb[0].mxu0 %v499
    %v1061 = vpop.f32.mrb[0].mxu0
    %v1062 = vadd.f32 0.0, %v1061
    %v1063 = vpop.f32.mrb[0].mxu0
    %v1064 = vadd.f32 0.0, %v1063
    %1065 = vmatprep.mubr.f32.mxu0 0.0
    %1066 = vmatmul.mubr.f32.gmra.mrb[0].mxu0 %v500
    %v1067 = vpop.f32.mrb[0].mxu0
    %v1068 = vadd.f32 0.0, %v1067
    %v1069 = vpop.f32.mrb[0].mxu0
    %v1070 = vadd.f32 0.0, %v1069
    %1071 = vmatprep.mubr.f32.mxu0 0.0
    %1072 = vmatmul.mubr.f32.gmra.mrb[0].mxu0 %v501
    %v1073 = vpop.f32.mrb[0].mxu0
    %v1074 = vadd.f32 0.0, %v1073
    %v1075 = vpop.f32.mrb[0].mxu0
    %v1076 = vadd.f32 0.0, %v1075
    %1077 = vmatprep.mubr.f32.mxu0 0.0
    %1078 = vmatmul.mubr.f32.gmra.mrb[0].mxu0 %v502
    %v1079 = vpop.f32.mrb[0].mxu0
    %v1080 = vadd.f32 0.0, %v1079
    %v1081 = vpop.f32.mrb[0].mxu0
    %v1082 = vadd.f32 0.0, %v1081
    %1083 = vmatprep.mubr.f32.mxu0 0.0
    %1084 = vmatmul.mubr.f32.gmra.mrb[0].mxu0 %v503
    %v1085 = vpop.f32.mrb[0].mxu0
    %v1086 = vadd.f32 0.0, %v1085
    %v1087 = vpop.f32.mrb[0].mxu0
    %v1088 = vadd.f32 0.0, %v1087
    %1089 = vmatprep.mubr.f32.mxu0 0.0
    %1090 = vmatmul.mubr.f32.gmra.mrb[0].mxu0 %v504
    %v1091 = vpop.f32.mrb[0].mxu0
    %v1092 = vadd.f32 0.0, %v1091
    %v1093 = vpop.f32.mrb[0].mxu0
    %v1094 = vadd.f32 0.0, %v1093
    %1095 = vmatprep.mubr.f32.mxu0 0.0
    %1096 = vmatmul.mubr.f32.gmra.mrb[0].mxu0 %v505
    %v1097 = vpop.f32.mrb[0].mxu0
    %v1098 = vadd.f32 0.0, %v1097
    %v1099 = vpop.f32.mrb[0].mxu0
    %v1100 = vadd.f32 0.0, %v1099
    %1101 = vmatprep.mubr.f32.mxu0 0.0
    %1102 = vmatmul.mubr.f32.gmra.mrb[0].mxu0 %v506
    %v1103 = vpop.f32.mrb[0].mxu0
    %v1104 = vadd.f32 0.0, %v1103
    %v1105 = vpop.f32.mrb[0].mxu0
    %v1106 = vadd.f32 0.0, %v1105
    %1107 = vmatprep.mubr.f32.mxu0 0.0
    %1108 = vmatmul.mubr.f32.gmra.mrb[0].mxu0 %v507
    %v1109 = vpop.f32.mrb[0].mxu0
    %v1110 = vadd.f32 0.0, %v1109
    %v1111 = vpop.f32.mrb[0].mxu0
    %v1112 = vadd.f32 0.0, %v1111
    %1113 = vmatprep.mubr.f32.mxu0 0.0
    %1114 = vmatmul.mubr.f32.gmra.mrb[0].mxu0 %v508
    %v1115 = vpop.f32.mrb[0].mxu0
    %v1116 = vadd.f32 0.0, %v1115
    %v1117 = vpop.f32.mrb[0].mxu0
    %v1118 = vadd.f32 0.0, %v1117
    %1119 = vmatprep.mubr.f32.mxu0 0.0
    %1120 = vmatmul.mubr.f32.gmra.mrb[0].mxu0 %v509
    %v1121 = vpop.f32.mrb[0].mxu0
    %v1122 = vadd.f32 0.0, %v1121
    %v1123 = vpop.f32.mrb[0].mxu0
    %v1124 = vadd.f32 0.0, %v1123
    %1125 = vmatprep.mubr.f32.mxu0 0.0
    %1126 = vmatmul.mubr.f32.gmra.mrb[0].mxu0 %v510
    %v1127 = vpop.f32.mrb[0].mxu0
    %v1128 = vadd.f32 0.0, %v1127
    %v1129 = vpop.f32.mrb[0].mxu0
    %v1130 = vadd.f32 0.0, %v1129
    %1131 = vmatprep.mubr.f32.mxu0 0.0
    %1132 = vmatmul.mubr.f32.gmra.mrb[0].mxu0 %v511
    %v1133 = vpop.f32.mrb[0].mxu0
    %v1134 = vadd.f32 0.0, %v1133
    %v1135 = vpop.f32.mrb[0].mxu0
    %v1136 = vadd.f32 0.0, %v1135
    %1137 = vmatprep.mubr.f32.mxu0 0.0
    %1138 = vmatmul.mubr.f32.gmra.mrb[0].mxu0 %v512
    %v1139 = vpop.f32.mrb[0].mxu0
    %v1140 = vadd.f32 0.0, %v1139
    %v1141 = vpop.f32.mrb[0].mxu0
    %v1142 = vadd.f32 0.0, %v1141
    %1143 = vmatprep.mubr.f32.mxu0 0.0
    %1144 = vmatmul.mubr.f32.gmra.mrb[0].mxu0 %v513
    %v1145 = vpop.f32.mrb[0].mxu0
    %v1146 = vadd.f32 0.0, %v1145
    %v1147 = vpop.f32.mrb[0].mxu0
    %v1148 = vadd.f32 0.0, %v1147
    %1149 = vmatprep.mubr.f32.mxu0 0.0
    %1150 = vmatmul.mubr.f32.gmra.mrb[0].mxu0 %v514
    %v1151 = vpop.f32.mrb[0].mxu0
    %v1152 = vadd.f32 0.0, %v1151
    %v1153 = vpop.f32.mrb[0].mxu0
    %v1154 = vadd.f32 0.0, %v1153
    %1155 = vmatprep.mubr.f32.mxu0 0.0
    %1156 = vmatmul.mubr.f32.gmra.mrb[0].mxu0 %v515
    %v1157 = vpop.f32.mrb[0].mxu0
    %v1158 = vadd.f32 0.0, %v1157
    %v1159 = vpop.f32.mrb[0].mxu0
    %v1160 = vadd.f32 0.0, %v1159
    %1161 = vmatprep.mubr.f32.mxu0 0.0
    %1162 = vmatmul.mubr.f32.gmra.mrb[0].mxu0 %v516
    %v1163 = vpop.f32.mrb[0].mxu0
    %v1164 = vadd.f32 0.0, %v1163
    %v1165 = vpop.f32.mrb[0].mxu0
    %v1166 = vadd.f32 0.0, %v1165
    %1167 = vmatprep.mubr.f32.mxu0 0.0
    %1168 = vmatmul.mubr.f32.gmra.mrb[0].mxu0 %v517
    %v1169 = vpop.f32.mrb[0].mxu0
    %v1170 = vadd.f32 0.0, %v1169
    %v1171 = vpop.f32.mrb[0].mxu0
    %v1172 = vadd.f32 0.0, %v1171
    %1173 = vmatprep.mubr.f32.mxu0 0.0
    %1174 = vmatmul.mubr.f32.gmra.mrb[0].mxu0 %v518
    %v1175 = vpop.f32.mrb[0].mxu0
    %v1176 = vadd.f32 0.0, %v1175
    %v1177 = vpop.f32.mrb[0].mxu0
    %v1178 = vadd.f32 0.0, %v1177
    %1179 = vmatprep.mubr.f32.mxu0 0.0
    %1180 = vmatmul.mubr.f32.gmra.mrb[0].mxu0 %v519
    %v1181 = vpop.f32.mrb[0].mxu0
    %v1182 = vadd.f32 0.0, %v1181
    %v1183 = vpop.f32.mrb[0].mxu0
    %v1184 = vadd.f32 0.0, %v1183
    %1185 = vmatprep.mubr.f32.mxu0 0.0
    %1186 = vmatmul.mubr.f32.gmra.mrb[0].mxu0 %v520
    %v1187 = vpop.f32.mrb[0].mxu0
    %v1188 = vadd.f32 0.0, %v1187
    %v1189 = vpop.f32.mrb[0].mxu0
    %v1190 = vadd.f32 0.0, %v1189
    %1191 = vmatprep.mubr.f32.mxu0 0.0
    %1192 = vmatmul.mubr.f32.gmra.mrb[0].mxu0 %v521
    %v1193 = vpop.f32.mrb[0].mxu0
    %v1194 = vadd.f32 0.0, %v1193
    %v1195 = vpop.f32.mrb[0].mxu0
    %v1196 = vadd.f32 0.0, %v1195
    %1197 = vmatprep.mubr.f32.mxu0 0.0
    %1198 = vmatmul.mubr.f32.gmra.mrb[0].mxu0 %v522
    %v1199 = vpop.f32.mrb[0].mxu0
    %v1200 = vadd.f32 0.0, %v1199
    %v1201 = vpop.f32.mrb[0].mxu0
    %v1202 = vadd.f32 0.0, %v1201
    %1203 = vmatprep.mubr.f32.mxu0 0.0
    %1204 = vmatmul.mubr.f32.gmra.mrb[0].mxu0 %v523
    %v1205 = vpop.f32.mrb[0].mxu0
    %v1206 = vadd.f32 0.0, %v1205
    %v1207 = vpop.f32.mrb[0].mxu0
    %v1208 = vadd.f32 0.0, %v1207
    %1209 = vmatprep.mubr.f32.mxu0 0.0
    %1210 = vmatmul.mubr.f32.gmra.mrb[0].mxu0 %v524
    %v1211 = vpop.f32.mrb[0].mxu0
    %v1212 = vadd.f32 0.0, %v1211
    %v1213 = vpop.f32.mrb[0].mxu0
    %v1214 = vadd.f32 0.0, %v1213
    %1215 = vmatprep.mubr.f32.mxu0 0.0
    %1216 = vmatmul.mubr.f32.gmra.mrb[0].mxu0 %v525
    %v1217 = vpop.f32.mrb[0].mxu0
    %v1218 = vadd.f32 0.0, %v1217
    %v1219 = vpop.f32.mrb[0].mxu0
    %v1220 = vadd.f32 0.0, %v1219
    %1221 = vmatprep.mubr.f32.mxu0 0.0
    %1222 = vmatmul.mubr.f32.gmra.mrb[0].mxu0 %v526
    %v1223 = vpop.f32.mrb[0].mxu0
    %v1224 = vadd.f32 0.0, %v1223
    %v1225 = vpop.f32.mrb[0].mxu0
    %v1226 = vadd.f32 0.0, %v1225
    %1227 = vmatprep.mubr.f32.mxu0 0.0
    %1228 = vmatmul.mubr.f32.gmra.mrb[0].mxu0 %v527
    %v1229 = vpop.f32.mrb[0].mxu0
    %v1230 = vadd.f32 0.0, %v1229
    %v1231 = vpop.f32.mrb[0].mxu0
    %v1232 = vadd.f32 0.0, %v1231
    %1233 = vdwg.mxu0
    %1234 = vmatprep.subr.mxu0 %v533
    %1235 = vmatpush1.msra.mxu0 %v532
    %1236 = vmatprep.subr.mxu0 %v545
    %1237 = vmatpush1.msra.mxu0 %v544
    %1238 = vmatprep.subr.mxu0 %v557
    %1239 = vmatpush1.msra.mxu0 %v556
    %1240 = vmatprep.subr.mxu0 %v569
    %1241 = vmatpush1.msra.mxu0 %v568
    %1242 = vmatprep.subr.mxu0 %v581
    %1243 = vmatpush1.msra.mxu0 %v580
    %1244 = vmatprep.subr.mxu0 %v593
    %1245 = vmatpush1.msra.mxu0 %v592
    %1246 = vmatprep.subr.mxu0 %v605
    %1247 = vmatpush1.msra.mxu0 %v604
    %1248 = vmatprep.subr.mxu0 %v617
    %1249 = vmatpush1.msra.mxu0 %v616
    %1250 = vmatprep.subr.mxu0 %v629
    %1251 = vmatpush1.msra.mxu0 %v628
    %1252 = vmatprep.subr.mxu0 %v641
    %1253 = vmatpush1.msra.mxu0 %v640
    %1254 = vmatprep.subr.mxu0 %v653
    %1255 = vmatpush1.msra.mxu0 %v652
    %1256 = vmatprep.subr.mxu0 %v665
    %1257 = vmatpush1.msra.mxu0 %v664
    %1258 = vmatprep.subr.mxu0 %v677
    %1259 = vmatpush1.msra.mxu0 %v676
    %1260 = vmatprep.subr.mxu0 %v689
    %1261 = vmatpush1.msra.mxu0 %v688
    %1262 = vmatprep.subr.mxu0 %v701
    %1263 = vmatpush1.msra.mxu0 %v700
    %1264 = vmatprep.subr.mxu0 %v713
    %1265 = vmatpush1.msra.mxu0 %v712
    %1266 = vmatprep.subr.mxu0 0.0
    %1267 = vmatpush1.msra.mxu0 0.0
    %1268 = vmatprep.subr.mxu0 0.0
    %1269 = vmatpush1.msra.mxu0 0.0
    %1270 = vmatprep.subr.mxu0 0.0
    %1271 = vmatpush1.msra.mxu0 0.0
    %1272 = vmatprep.subr.mxu0 0.0
    %1273 = vmatpush1.msra.mxu0 0.0
    %1274 = vmatprep.subr.mxu0 0.0
    %1275 = vmatpush1.msra.mxu0 0.0
    %1276 = vmatprep.subr.mxu0 0.0
    %1277 = vmatpush1.msra.mxu0 0.0
    %1278 = vmatprep.subr.mxu0 0.0
    %1279 = vmatpush1.msra.mxu0 0.0
    %1280 = vmatprep.subr.mxu0 0.0
    %1281 = vmatpush1.msra.mxu0 0.0
    %1282 = vmatprep.subr.mxu0 0.0
    %1283 = vmatpush1.msra.mxu0 0.0
    %1284 = vmatprep.subr.mxu0 0.0
    %1285 = vmatpush1.msra.mxu0 0.0
    %1286 = vmatprep.subr.mxu0 0.0
    %1287 = vmatpush1.msra.mxu0 0.0
    %1288 = vmatprep.subr.mxu0 0.0
    %1289 = vmatpush1.msra.mxu0 0.0
    %1290 = vmatprep.subr.mxu0 0.0
    %1291 = vmatpush1.msra.mxu0 0.0
    %1292 = vmatprep.subr.mxu0 0.0
    %1293 = vmatpush1.msra.mxu0 0.0
    %1294 = vmatprep.subr.mxu0 0.0
    %1295 = vmatpush1.msra.mxu0 0.0
    %1296 = vmatprep.subr.mxu0 0.0
    %1297 = vmatpush1.msra.mxu0 0.0
    %1298 = vmatprep.mubr.f32.mxu0 0.0
    %1299 = vmatmul.mubr.f32.gmra.mrb[0].mxu0 %v496
    %v1300 = vpop.f32.mrb[0].mxu0
    %v1301 = vadd.f32 0.0, %v1300
    %v1302 = vpop.f32.mrb[0].mxu0
    %v1303 = vadd.f32 0.0, %v1302
    %1304 = vmatprep.mubr.f32.mxu0 0.0
    %1305 = vmatmul.mubr.f32.gmra.mrb[0].mxu0 %v497
    %v1306 = vpop.f32.mrb[0].mxu0
    %v1307 = vadd.f32 0.0, %v1306
    %v1308 = vpop.f32.mrb[0].mxu0
    %v1309 = vadd.f32 0.0, %v1308
    %1310 = vmatprep.mubr.f32.mxu0 0.0
    %1311 = vmatmul.mubr.f32.gmra.mrb[0].mxu0 %v498
    %v1312 = vpop.f32.mrb[0].mxu0
    %v1313 = vadd.f32 0.0, %v1312
    %v1314 = vpop.f32.mrb[0].mxu0
    %v1315 = vadd.f32 0.0, %v1314
    %1316 = vmatprep.mubr.f32.mxu0 0.0
    %1317 = vmatmul.mubr.f32.gmra.mrb[0].mxu0 %v499
    %v1318 = vpop.f32.mrb[0].mxu0
    %v1319 = vadd.f32 0.0, %v1318
    %v1320 = vpop.f32.mrb[0].mxu0
    %v1321 = vadd.f32 0.0, %v1320
    %1322 = vmatprep.mubr.f32.mxu0 0.0
    %1323 = vmatmul.mubr.f32.gmra.mrb[0].mxu0 %v500
    %v1324 = vpop.f32.mrb[0].mxu0
    %v1325 = vadd.f32 0.0, %v1324
    %v1326 = vpop.f32.mrb[0].mxu0
    %v1327 = vadd.f32 0.0, %v1326
    %1328 = vmatprep.mubr.f32.mxu0 0.0
    %1329 = vmatmul.mubr.f32.gmra.mrb[0].mxu0 %v501
    %v1330 = vpop.f32.mrb[0].mxu0
    %v1331 = vadd.f32 0.0, %v1330
    %v1332 = vpop.f32.mrb[0].mxu0
    %v1333 = vadd.f32 0.0, %v1332
    %1334 = vmatprep.mubr.f32.mxu0 0.0
    %1335 = vmatmul.mubr.f32.gmra.mrb[0].mxu0 %v502
    %v1336 = vpop.f32.mrb[0].mxu0
    %v1337 = vadd.f32 0.0, %v1336
    %v1338 = vpop.f32.mrb[0].mxu0
    %v1339 = vadd.f32 0.0, %v1338
    %1340 = vmatprep.mubr.f32.mxu0 0.0
    %1341 = vmatmul.mubr.f32.gmra.mrb[0].mxu0 %v503
    %v1342 = vpop.f32.mrb[0].mxu0
    %v1343 = vadd.f32 0.0, %v1342
    %v1344 = vpop.f32.mrb[0].mxu0
    %v1345 = vadd.f32 0.0, %v1344
    %1346 = vmatprep.mubr.f32.mxu0 0.0
    %1347 = vmatmul.mubr.f32.gmra.mrb[0].mxu0 %v504
    %v1348 = vpop.f32.mrb[0].mxu0
    %v1349 = vadd.f32 0.0, %v1348
    %v1350 = vpop.f32.mrb[0].mxu0
    %v1351 = vadd.f32 0.0, %v1350
    %1352 = vmatprep.mubr.f32.mxu0 0.0
    %1353 = vmatmul.mubr.f32.gmra.mrb[0].mxu0 %v505
    %v1354 = vpop.f32.mrb[0].mxu0
    %v1355 = vadd.f32 0.0, %v1354
    %v1356 = vpop.f32.mrb[0].mxu0
    %v1357 = vadd.f32 0.0, %v1356
    %1358 = vmatprep.mubr.f32.mxu0 0.0
    %1359 = vmatmul.mubr.f32.gmra.mrb[0].mxu0 %v506
    %v1360 = vpop.f32.mrb[0].mxu0
    %v1361 = vadd.f32 0.0, %v1360
    %v1362 = vpop.f32.mrb[0].mxu0
    %v1363 = vadd.f32 0.0, %v1362
    %1364 = vmatprep.mubr.f32.mxu0 0.0
    %1365 = vmatmul.mubr.f32.gmra.mrb[0].mxu0 %v507
    %v1366 = vpop.f32.mrb[0].mxu0
    %v1367 = vadd.f32 0.0, %v1366
    %v1368 = vpop.f32.mrb[0].mxu0
    %v1369 = vadd.f32 0.0, %v1368
    %1370 = vmatprep.mubr.f32.mxu0 0.0
    %1371 = vmatmul.mubr.f32.gmra.mrb[0].mxu0 %v508
    %v1372 = vpop.f32.mrb[0].mxu0
    %v1373 = vadd.f32 0.0, %v1372
    %v1374 = vpop.f32.mrb[0].mxu0
    %v1375 = vadd.f32 0.0, %v1374
    %1376 = vmatprep.mubr.f32.mxu0 0.0
    %1377 = vmatmul.mubr.f32.gmra.mrb[0].mxu0 %v509
    %v1378 = vpop.f32.mrb[0].mxu0
    %v1379 = vadd.f32 0.0, %v1378
    %v1380 = vpop.f32.mrb[0].mxu0
    %v1381 = vadd.f32 0.0, %v1380
    %1382 = vmatprep.mubr.f32.mxu0 0.0
    %1383 = vmatmul.mubr.f32.gmra.mrb[0].mxu0 %v510
    %v1384 = vpop.f32.mrb[0].mxu0
    %v1385 = vadd.f32 0.0, %v1384
    %v1386 = vpop.f32.mrb[0].mxu0
    %v1387 = vadd.f32 0.0, %v1386
    %1388 = vmatprep.mubr.f32.mxu0 0.0
    %1389 = vmatmul.mubr.f32.gmra.mrb[0].mxu0 %v511
    %v1390 = vpop.f32.mrb[0].mxu0
    %v1391 = vadd.f32 0.0, %v1390
    %v1392 = vpop.f32.mrb[0].mxu0
    %v1393 = vadd.f32 0.0, %v1392
    %1394 = vmatprep.mubr.f32.mxu0 0.0
    %1395 = vmatmul.mubr.f32.gmra.mrb[0].mxu0 %v512
    %v1396 = vpop.f32.mrb[0].mxu0
    %v1397 = vadd.f32 0.0, %v1396
    %v1398 = vpop.f32.mrb[0].mxu0
    %v1399 = vadd.f32 0.0, %v1398
    %1400 = vmatprep.mubr.f32.mxu0 0.0
    %1401 = vmatmul.mubr.f32.gmra.mrb[0].mxu0 %v513
    %v1402 = vpop.f32.mrb[0].mxu0
    %v1403 = vadd.f32 0.0, %v1402
    %v1404 = vpop.f32.mrb[0].mxu0
    %v1405 = vadd.f32 0.0, %v1404
    %1406 = vmatprep.mubr.f32.mxu0 0.0
    %1407 = vmatmul.mubr.f32.gmra.mrb[0].mxu0 %v514
    %v1408 = vpop.f32.mrb[0].mxu0
    %v1409 = vadd.f32 0.0, %v1408
    %v1410 = vpop.f32.mrb[0].mxu0
    %v1411 = vadd.f32 0.0, %v1410
    %1412 = vmatprep.mubr.f32.mxu0 0.0
    %1413 = vmatmul.mubr.f32.gmra.mrb[0].mxu0 %v515
    %v1414 = vpop.f32.mrb[0].mxu0
    %v1415 = vadd.f32 0.0, %v1414
    %v1416 = vpop.f32.mrb[0].mxu0
    %v1417 = vadd.f32 0.0, %v1416
    %1418 = vmatprep.mubr.f32.mxu0 0.0
    %1419 = vmatmul.mubr.f32.gmra.mrb[0].mxu0 %v516
    %v1420 = vpop.f32.mrb[0].mxu0
    %v1421 = vadd.f32 0.0, %v1420
    %v1422 = vpop.f32.mrb[0].mxu0
    %v1423 = vadd.f32 0.0, %v1422
    %1424 = vmatprep.mubr.f32.mxu0 0.0
    %1425 = vmatmul.mubr.f32.gmra.mrb[0].mxu0 %v517
    %v1426 = vpop.f32.mrb[0].mxu0
    %v1427 = vadd.f32 0.0, %v1426
    %v1428 = vpop.f32.mrb[0].mxu0
    %v1429 = vadd.f32 0.0, %v1428
    %1430 = vmatprep.mubr.f32.mxu0 0.0
    %1431 = vmatmul.mubr.f32.gmra.mrb[0].mxu0 %v518
    %v1432 = vpop.f32.mrb[0].mxu0
    %v1433 = vadd.f32 0.0, %v1432
    %v1434 = vpop.f32.mrb[0].mxu0
    %v1435 = vadd.f32 0.0, %v1434
    %1436 = vmatprep.mubr.f32.mxu0 0.0
    %1437 = vmatmul.mubr.f32.gmra.mrb[0].mxu0 %v519
    %v1438 = vpop.f32.mrb[0].mxu0
    %v1439 = vadd.f32 0.0, %v1438
    %v1440 = vpop.f32.mrb[0].mxu0
    %v1441 = vadd.f32 0.0, %v1440
    %1442 = vmatprep.mubr.f32.mxu0 0.0
    %1443 = vmatmul.mubr.f32.gmra.mrb[0].mxu0 %v520
    %v1444 = vpop.f32.mrb[0].mxu0
    %v1445 = vadd.f32 0.0, %v1444
    %v1446 = vpop.f32.mrb[0].mxu0
    %v1447 = vadd.f32 0.0, %v1446
    %1448 = vmatprep.mubr.f32.mxu0 0.0
    %1449 = vmatmul.mubr.f32.gmra.mrb[0].mxu0 %v521
    %v1450 = vpop.f32.mrb[0].mxu0
    %v1451 = vadd.f32 0.0, %v1450
    %v1452 = vpop.f32.mrb[0].mxu0
    %v1453 = vadd.f32 0.0, %v1452
    %1454 = vmatprep.mubr.f32.mxu0 0.0
    %1455 = vmatmul.mubr.f32.gmra.mrb[0].mxu0 %v522
    %v1456 = vpop.f32.mrb[0].mxu0
    %v1457 = vadd.f32 0.0, %v1456
    %v1458 = vpop.f32.mrb[0].mxu0
    %v1459 = vadd.f32 0.0, %v1458
    %1460 = vmatprep.mubr.f32.mxu0 0.0
    %1461 = vmatmul.mubr.f32.gmra.mrb[0].mxu0 %v523
    %v1462 = vpop.f32.mrb[0].mxu0
    %v1463 = vadd.f32 0.0, %v1462
    %v1464 = vpop.f32.mrb[0].mxu0
    %v1465 = vadd.f32 0.0, %v1464
    %1466 = vmatprep.mubr.f32.mxu0 0.0
    %1467 = vmatmul.mubr.f32.gmra.mrb[0].mxu0 %v524
    %v1468 = vpop.f32.mrb[0].mxu0
    %v1469 = vadd.f32 0.0, %v1468
    %v1470 = vpop.f32.mrb[0].mxu0
    %v1471 = vadd.f32 0.0, %v1470
    %1472 = vmatprep.mubr.f32.mxu0 0.0
    %1473 = vmatmul.mubr.f32.gmra.mrb[0].mxu0 %v525
    %v1474 = vpop.f32.mrb[0].mxu0
    %v1475 = vadd.f32 0.0, %v1474
    %v1476 = vpop.f32.mrb[0].mxu0
    %v1477 = vadd.f32 0.0, %v1476
    %1478 = vmatprep.mubr.f32.mxu0 0.0
    %1479 = vmatmul.mubr.f32.gmra.mrb[0].mxu0 %v526
    %v1480 = vpop.f32.mrb[0].mxu0
    %v1481 = vadd.f32 0.0, %v1480
    %v1482 = vpop.f32.mrb[0].mxu0
    %v1483 = vadd.f32 0.0, %v1482
    %1484 = vmatprep.mubr.f32.mxu0 0.0
    %1485 = vmatmul.mubr.f32.gmra.mrb[0].mxu0 %v527
    %v1486 = vpop.f32.mrb[0].mxu0
    %v1487 = vadd.f32 0.0, %v1486
    %v1488 = vpop.f32.mrb[0].mxu0
    %v1489 = vadd.f32 0.0, %v1488
    %1490 = vdwg.mxu0
    %1491 = vmatprep.subr.mxu0 %v535
    %1492 = vmatpush1.msra.mxu0 %v534
    %1493 = vmatprep.subr.mxu0 %v547
    %1494 = vmatpush1.msra.mxu0 %v546
    %1495 = vmatprep.subr.mxu0 %v559
    %1496 = vmatpush1.msra.mxu0 %v558
    %1497 = vmatprep.subr.mxu0 %v571
    %1498 = vmatpush1.msra.mxu0 %v570
    %1499 = vmatprep.subr.mxu0 %v583
    %1500 = vmatpush1.msra.mxu0 %v582
    %1501 = vmatprep.subr.mxu0 %v595
    %1502 = vmatpush1.msra.mxu0 %v594
    %1503 = vmatprep.subr.mxu0 %v607
    %1504 = vmatpush1.msra.mxu0 %v606
    %1505 = vmatprep.subr.mxu0 %v619
    %1506 = vmatpush1.msra.mxu0 %v618
    %1507 = vmatprep.subr.mxu0 %v631
    %1508 = vmatpush1.msra.mxu0 %v630
    %1509 = vmatprep.subr.mxu0 %v643
    %1510 = vmatpush1.msra.mxu0 %v642
    %1511 = vmatprep.subr.mxu0 %v655
    %1512 = vmatpush1.msra.mxu0 %v654
    %1513 = vmatprep.subr.mxu0 %v667
    %1514 = vmatpush1.msra.mxu0 %v666
    %1515 = vmatprep.subr.mxu0 %v679
    %1516 = vmatpush1.msra.mxu0 %v678
    %1517 = vmatprep.subr.mxu0 %v691
    %1518 = vmatpush1.msra.mxu0 %v690
    %1519 = vmatprep.subr.mxu0 %v703
    %1520 = vmatpush1.msra.mxu0 %v702
    %1521 = vmatprep.subr.mxu0 %v715
    %1522 = vmatpush1.msra.mxu0 %v714
    %1523 = vmatprep.subr.mxu0 0.0
    %1524 = vmatpush1.msra.mxu0 0.0
    %1525 = vmatprep.subr.mxu0 0.0
    %1526 = vmatpush1.msra.mxu0 0.0
    %1527 = vmatprep.subr.mxu0 0.0
    %1528 = vmatpush1.msra.mxu0 0.0
    %1529 = vmatprep.subr.mxu0 0.0
    %1530 = vmatpush1.msra.mxu0 0.0
    %1531 = vmatprep.subr.mxu0 0.0
    %1532 = vmatpush1.msra.mxu0 0.0
    %1533 = vmatprep.subr.mxu0 0.0
    %1534 = vmatpush1.msra.mxu0 0.0
    %1535 = vmatprep.subr.mxu0 0.0
    %1536 = vmatpush1.msra.mxu0 0.0
    %1537 = vmatprep.subr.mxu0 0.0
    %1538 = vmatpush1.msra.mxu0 0.0
    %1539 = vmatprep.subr.mxu0 0.0
    %1540 = vmatpush1.msra.mxu0 0.0
    %1541 = vmatprep.subr.mxu0 0.0
    %1542 = vmatpush1.msra.mxu0 0.0
    %1543 = vmatprep.subr.mxu0 0.0
    %1544 = vmatpush1.msra.mxu0 0.0
    %1545 = vmatprep.subr.mxu0 0.0
    %1546 = vmatpush1.msra.mxu0 0.0
    %1547 = vmatprep.subr.mxu0 0.0
    %1548 = vmatpush1.msra.mxu0 0.0
    %1549 = vmatprep.subr.mxu0 0.0
    %1550 = vmatpush1.msra.mxu0 0.0
    %1551 = vmatprep.subr.mxu0 0.0
    %1552 = vmatpush1.msra.mxu0 0.0
    %1553 = vmatprep.subr.mxu0 0.0
    %1554 = vmatpush1.msra.mxu0 0.0
    %1555 = vmatprep.mubr.f32.mxu0 0.0
    %1556 = vmatmul.mubr.f32.gmra.mrb[0].mxu0 %v496
    %v1557 = vpop.f32.mrb[0].mxu0
    %v1558 = vadd.f32 0.0, %v1557
    %v1559 = vpop.f32.mrb[0].mxu0
    %v1560 = vadd.f32 0.0, %v1559
    %1561 = vmatprep.mubr.f32.mxu0 0.0
    %1562 = vmatmul.mubr.f32.gmra.mrb[0].mxu0 %v497
    %v1563 = vpop.f32.mrb[0].mxu0
    %v1564 = vadd.f32 0.0, %v1563
    %v1565 = vpop.f32.mrb[0].mxu0
    %v1566 = vadd.f32 0.0, %v1565
    %1567 = vmatprep.mubr.f32.mxu0 0.0
    %1568 = vmatmul.mubr.f32.gmra.mrb[0].mxu0 %v498
    %v1569 = vpop.f32.mrb[0].mxu0
    %v1570 = vadd.f32 0.0, %v1569
    %v1571 = vpop.f32.mrb[0].mxu0
    %v1572 = vadd.f32 0.0, %v1571
    %1573 = vmatprep.mubr.f32.mxu0 0.0
    %1574 = vmatmul.mubr.f32.gmra.mrb[0].mxu0 %v499
    %v1575 = vpop.f32.mrb[0].mxu0
    %v1576 = vadd.f32 0.0, %v1575
    %v1577 = vpop.f32.mrb[0].mxu0
    %v1578 = vadd.f32 0.0, %v1577
    %1579 = vmatprep.mubr.f32.mxu0 0.0
    %1580 = vmatmul.mubr.f32.gmra.mrb[0].mxu0 %v500
    %v1581 = vpop.f32.mrb[0].mxu0
    %v1582 = vadd.f32 0.0, %v1581
    %v1583 = vpop.f32.mrb[0].mxu0
    %v1584 = vadd.f32 0.0, %v1583
    %1585 = vmatprep.mubr.f32.mxu0 0.0
    %1586 = vmatmul.mubr.f32.gmra.mrb[0].mxu0 %v501
    %v1587 = vpop.f32.mrb[0].mxu0
    %v1588 = vadd.f32 0.0, %v1587
    %v1589 = vpop.f32.mrb[0].mxu0
    %v1590 = vadd.f32 0.0, %v1589
    %1591 = vmatprep.mubr.f32.mxu0 0.0
    %1592 = vmatmul.mubr.f32.gmra.mrb[0].mxu0 %v502
    %v1593 = vpop.f32.mrb[0].mxu0
    %v1594 = vadd.f32 0.0, %v1593
    %v1595 = vpop.f32.mrb[0].mxu0
    %v1596 = vadd.f32 0.0, %v1595
    %1597 = vmatprep.mubr.f32.mxu0 0.0
    %1598 = vmatmul.mubr.f32.gmra.mrb[0].mxu0 %v503
    %v1599 = vpop.f32.mrb[0].mxu0
    %v1600 = vadd.f32 0.0, %v1599
    %v1601 = vpop.f32.mrb[0].mxu0
    %v1602 = vadd.f32 0.0, %v1601
    %1603 = vmatprep.mubr.f32.mxu0 0.0
    %1604 = vmatmul.mubr.f32.gmra.mrb[0].mxu0 %v504
    %v1605 = vpop.f32.mrb[0].mxu0
    %v1606 = vadd.f32 0.0, %v1605
    %v1607 = vpop.f32.mrb[0].mxu0
    %v1608 = vadd.f32 0.0, %v1607
    %1609 = vmatprep.mubr.f32.mxu0 0.0
    %1610 = vmatmul.mubr.f32.gmra.mrb[0].mxu0 %v505
    %v1611 = vpop.f32.mrb[0].mxu0
    %v1612 = vadd.f32 0.0, %v1611
    %v1613 = vpop.f32.mrb[0].mxu0
    %v1614 = vadd.f32 0.0, %v1613
    %1615 = vmatprep.mubr.f32.mxu0 0.0
    %1616 = vmatmul.mubr.f32.gmra.mrb[0].mxu0 %v506
    %v1617 = vpop.f32.mrb[0].mxu0
    %v1618 = vadd.f32 0.0, %v1617
    %v1619 = vpop.f32.mrb[0].mxu0
    %v1620 = vadd.f32 0.0, %v1619
    %1621 = vmatprep.mubr.f32.mxu0 0.0
    %1622 = vmatmul.mubr.f32.gmra.mrb[0].mxu0 %v507
    %v1623 = vpop.f32.mrb[0].mxu0
    %v1624 = vadd.f32 0.0, %v1623
    %v1625 = vpop.f32.mrb[0].mxu0
    %v1626 = vadd.f32 0.0, %v1625
    %1627 = vmatprep.mubr.f32.mxu0 0.0
    %1628 = vmatmul.mubr.f32.gmra.mrb[0].mxu0 %v508
    %v1629 = vpop.f32.mrb[0].mxu0
    %v1630 = vadd.f32 0.0, %v1629
    %v1631 = vpop.f32.mrb[0].mxu0
    %v1632 = vadd.f32 0.0, %v1631
    %1633 = vmatprep.mubr.f32.mxu0 0.0
    %1634 = vmatmul.mubr.f32.gmra.mrb[0].mxu0 %v509
    %v1635 = vpop.f32.mrb[0].mxu0
    %v1636 = vadd.f32 0.0, %v1635
    %v1637 = vpop.f32.mrb[0].mxu0
    %v1638 = vadd.f32 0.0, %v1637
    %1639 = vmatprep.mubr.f32.mxu0 0.0
    %1640 = vmatmul.mubr.f32.gmra.mrb[0].mxu0 %v510
    %v1641 = vpop.f32.mrb[0].mxu0
    %v1642 = vadd.f32 0.0, %v1641
    %v1643 = vpop.f32.mrb[0].mxu0
    %v1644 = vadd.f32 0.0, %v1643
    %1645 = vmatprep.mubr.f32.mxu0 0.0
    %1646 = vmatmul.mubr.f32.gmra.mrb[0].mxu0 %v511
    %v1647 = vpop.f32.mrb[0].mxu0
    %v1648 = vadd.f32 0.0, %v1647
    %v1649 = vpop.f32.mrb[0].mxu0
    %v1650 = vadd.f32 0.0, %v1649
    %1651 = vmatprep.mubr.f32.mxu0 0.0
    %1652 = vmatmul.mubr.f32.gmra.mrb[0].mxu0 %v512
    %v1653 = vpop.f32.mrb[0].mxu0
    %v1654 = vadd.f32 0.0, %v1653
    %v1655 = vpop.f32.mrb[0].mxu0
    %v1656 = vadd.f32 0.0, %v1655
    %1657 = vmatprep.mubr.f32.mxu0 0.0
    %1658 = vmatmul.mubr.f32.gmra.mrb[0].mxu0 %v513
    %v1659 = vpop.f32.mrb[0].mxu0
    %v1660 = vadd.f32 0.0, %v1659
    %v1661 = vpop.f32.mrb[0].mxu0
    %v1662 = vadd.f32 0.0, %v1661
    %1663 = vmatprep.mubr.f32.mxu0 0.0
    %1664 = vmatmul.mubr.f32.gmra.mrb[0].mxu0 %v514
    %v1665 = vpop.f32.mrb[0].mxu0
    %v1666 = vadd.f32 0.0, %v1665
    %v1667 = vpop.f32.mrb[0].mxu0
    %v1668 = vadd.f32 0.0, %v1667
    %1669 = vmatprep.mubr.f32.mxu0 0.0
    %1670 = vmatmul.mubr.f32.gmra.mrb[0].mxu0 %v515
    %v1671 = vpop.f32.mrb[0].mxu0
    %v1672 = vadd.f32 0.0, %v1671
    %v1673 = vpop.f32.mrb[0].mxu0
    %v1674 = vadd.f32 0.0, %v1673
    %1675 = vmatprep.mubr.f32.mxu0 0.0
    %1676 = vmatmul.mubr.f32.gmra.mrb[0].mxu0 %v516
    %v1677 = vpop.f32.mrb[0].mxu0
    %v1678 = vadd.f32 0.0, %v1677
    %v1679 = vpop.f32.mrb[0].mxu0
    %v1680 = vadd.f32 0.0, %v1679
    %1681 = vmatprep.mubr.f32.mxu0 0.0
    %1682 = vmatmul.mubr.f32.gmra.mrb[0].mxu0 %v517
    %v1683 = vpop.f32.mrb[0].mxu0
    %v1684 = vadd.f32 0.0, %v1683
    %v1685 = vpop.f32.mrb[0].mxu0
    %v1686 = vadd.f32 0.0, %v1685
    %1687 = vmatprep.mubr.f32.mxu0 0.0
    %1688 = vmatmul.mubr.f32.gmra.mrb[0].mxu0 %v518
    %v1689 = vpop.f32.mrb[0].mxu0
    %v1690 = vadd.f32 0.0, %v1689
    %v1691 = vpop.f32.mrb[0].mxu0
    %v1692 = vadd.f32 0.0, %v1691
    %1693 = vmatprep.mubr.f32.mxu0 0.0
    %1694 = vmatmul.mubr.f32.gmra.mrb[0].mxu0 %v519
    %v1695 = vpop.f32.mrb[0].mxu0
    %v1696 = vadd.f32 0.0, %v1695
    %v1697 = vpop.f32.mrb[0].mxu0
    %v1698 = vadd.f32 0.0, %v1697
    %1699 = vmatprep.mubr.f32.mxu0 0.0
    %1700 = vmatmul.mubr.f32.gmra.mrb[0].mxu0 %v520
    %v1701 = vpop.f32.mrb[0].mxu0
    %v1702 = vadd.f32 0.0, %v1701
    %v1703 = vpop.f32.mrb[0].mxu0
    %v1704 = vadd.f32 0.0, %v1703
    %1705 = vmatprep.mubr.f32.mxu0 0.0
    %1706 = vmatmul.mubr.f32.gmra.mrb[0].mxu0 %v521
    %v1707 = vpop.f32.mrb[0].mxu0
    %v1708 = vadd.f32 0.0, %v1707
    %v1709 = vpop.f32.mrb[0].mxu0
    %v1710 = vadd.f32 0.0, %v1709
    %1711 = vmatprep.mubr.f32.mxu0 0.0
    %1712 = vmatmul.mubr.f32.gmra.mrb[0].mxu0 %v522
    %v1713 = vpop.f32.mrb[0].mxu0
    %v1714 = vadd.f32 0.0, %v1713
    %v1715 = vpop.f32.mrb[0].mxu0
    %v1716 = vadd.f32 0.0, %v1715
    %1717 = vmatprep.mubr.f32.mxu0 0.0
    %1718 = vmatmul.mubr.f32.gmra.mrb[0].mxu0 %v523
    %v1719 = vpop.f32.mrb[0].mxu0
    %v1720 = vadd.f32 0.0, %v1719
    %v1721 = vpop.f32.mrb[0].mxu0
    %v1722 = vadd.f32 0.0, %v1721
    %1723 = vmatprep.mubr.f32.mxu0 0.0
    %1724 = vmatmul.mubr.f32.gmra.mrb[0].mxu0 %v524
    %v1725 = vpop.f32.mrb[0].mxu0
    %v1726 = vadd.f32 0.0, %v1725
    %v1727 = vpop.f32.mrb[0].mxu0
    %v1728 = vadd.f32 0.0, %v1727
    %1729 = vmatprep.mubr.f32.mxu0 0.0
    %1730 = vmatmul.mubr.f32.gmra.mrb[0].mxu0 %v525
    %v1731 = vpop.f32.mrb[0].mxu0
    %v1732 = vadd.f32 0.0, %v1731
    %v1733 = vpop.f32.mrb[0].mxu0
    %v1734 = vadd.f32 0.0, %v1733
    %1735 = vmatprep.mubr.f32.mxu0 0.0
    %1736 = vmatmul.mubr.f32.gmra.mrb[0].mxu0 %v526
    %v1737 = vpop.f32.mrb[0].mxu0
    %v1738 = vadd.f32 0.0, %v1737
    %v1739 = vpop.f32.mrb[0].mxu0
    %v1740 = vadd.f32 0.0, %v1739
    %1741 = vmatprep.mubr.f32.mxu0 0.0
    %1742 = vmatmul.mubr.f32.gmra.mrb[0].mxu0 %v527
    %v1743 = vpop.f32.mrb[0].mxu0
    %v1744 = vadd.f32 0.0, %v1743
    %v1745 = vpop.f32.mrb[0].mxu0
    %v1746 = vadd.f32 0.0, %v1745
    %1747 = vdwg.mxu0
    %1748 = vmatprep.subr.mxu0 %v537
    %1749 = vmatpush1.msra.mxu0 %v536
    %1750 = vmatprep.subr.mxu0 %v549
    %1751 = vmatpush1.msra.mxu0 %v548
    %1752 = vmatprep.subr.mxu0 %v561
    %1753 = vmatpush1.msra.mxu0 %v560
    %1754 = vmatprep.subr.mxu0 %v573
    %1755 = vmatpush1.msra.mxu0 %v572
    %1756 = vmatprep.subr.mxu0 %v585
    %1757 = vmatpush1.msra.mxu0 %v584
    %1758 = vmatprep.subr.mxu0 %v597
    %1759 = vmatpush1.msra.mxu0 %v596
    %1760 = vmatprep.subr.mxu0 %v609
    %1761 = vmatpush1.msra.mxu0 %v608
    %1762 = vmatprep.subr.mxu0 %v621
    %1763 = vmatpush1.msra.mxu0 %v620
    %1764 = vmatprep.subr.mxu0 %v633
    %1765 = vmatpush1.msra.mxu0 %v632
    %1766 = vmatprep.subr.mxu0 %v645
    %1767 = vmatpush1.msra.mxu0 %v644
    %1768 = vmatprep.subr.mxu0 %v657
    %1769 = vmatpush1.msra.mxu0 %v656
    %1770 = vmatprep.subr.mxu0 %v669
    %1771 = vmatpush1.msra.mxu0 %v668
    %1772 = vmatprep.subr.mxu0 %v681
    %1773 = vmatpush1.msra.mxu0 %v680
    %1774 = vmatprep.subr.mxu0 %v693
    %1775 = vmatpush1.msra.mxu0 %v692
    %1776 = vmatprep.subr.mxu0 %v705
    %1777 = vmatpush1.msra.mxu0 %v704
    %1778 = vmatprep.subr.mxu0 %v717
    %1779 = vmatpush1.msra.mxu0 %v716
    %1780 = vmatprep.subr.mxu0 0.0
    %1781 = vmatpush1.msra.mxu0 0.0
    %1782 = vmatprep.subr.mxu0 0.0
    %1783 = vmatpush1.msra.mxu0 0.0
    %1784 = vmatprep.subr.mxu0 0.0
    %1785 = vmatpush1.msra.mxu0 0.0
    %1786 = vmatprep.subr.mxu0 0.0
    %1787 = vmatpush1.msra.mxu0 0.0
    %1788 = vmatprep.subr.mxu0 0.0
    %1789 = vmatpush1.msra.mxu0 0.0
    %1790 = vmatprep.subr.mxu0 0.0
    %1791 = vmatpush1.msra.mxu0 0.0
    %1792 = vmatprep.subr.mxu0 0.0
    %1793 = vmatpush1.msra.mxu0 0.0
    %1794 = vmatprep.subr.mxu0 0.0
    %1795 = vmatpush1.msra.mxu0 0.0
    %1796 = vmatprep.subr.mxu0 0.0
    %1797 = vmatpush1.msra.mxu0 0.0
    %1798 = vmatprep.subr.mxu0 0.0
    %1799 = vmatpush1.msra.mxu0 0.0
    %1800 = vmatprep.subr.mxu0 0.0
    %1801 = vmatpush1.msra.mxu0 0.0
    %1802 = vmatprep.subr.mxu0 0.0
    %1803 = vmatpush1.msra.mxu0 0.0
    %1804 = vmatprep.subr.mxu0 0.0
    %1805 = vmatpush1.msra.mxu0 0.0
    %1806 = vmatprep.subr.mxu0 0.0
    %1807 = vmatpush1.msra.mxu0 0.0
    %1808 = vmatprep.subr.mxu0 0.0
    %1809 = vmatpush1.msra.mxu0 0.0
    %1810 = vmatprep.subr.mxu0 0.0
    %1811 = vmatpush1.msra.mxu0 0.0
    %1812 = vmatprep.mubr.f32.mxu0 0.0
    %1813 = vmatmul.mubr.f32.gmra.mrb[0].mxu0 %v496
    %v1814 = vpop.f32.mrb[0].mxu0
    %v1815 = vadd.f32 0.0, %v1814
    %v1816 = vpop.f32.mrb[0].mxu0
    %v1817 = vadd.f32 0.0, %v1816
    %1818 = vmatprep.mubr.f32.mxu0 0.0
    %1819 = vmatmul.mubr.f32.gmra.mrb[0].mxu0 %v497
    %v1820 = vpop.f32.mrb[0].mxu0
    %v1821 = vadd.f32 0.0, %v1820
    %v1822 = vpop.f32.mrb[0].mxu0
    %v1823 = vadd.f32 0.0, %v1822
    %1824 = vmatprep.mubr.f32.mxu0 0.0
    %1825 = vmatmul.mubr.f32.gmra.mrb[0].mxu0 %v498
    %v1826 = vpop.f32.mrb[0].mxu0
    %v1827 = vadd.f32 0.0, %v1826
    %v1828 = vpop.f32.mrb[0].mxu0
    %v1829 = vadd.f32 0.0, %v1828
    %1830 = vmatprep.mubr.f32.mxu0 0.0
    %1831 = vmatmul.mubr.f32.gmra.mrb[0].mxu0 %v499
    %v1832 = vpop.f32.mrb[0].mxu0
    %v1833 = vadd.f32 0.0, %v1832
    %v1834 = vpop.f32.mrb[0].mxu0
    %v1835 = vadd.f32 0.0, %v1834
    %1836 = vmatprep.mubr.f32.mxu0 0.0
    %1837 = vmatmul.mubr.f32.gmra.mrb[0].mxu0 %v500
    %v1838 = vpop.f32.mrb[0].mxu0
    %v1839 = vadd.f32 0.0, %v1838
    %v1840 = vpop.f32.mrb[0].mxu0
    %v1841 = vadd.f32 0.0, %v1840
    %1842 = vmatprep.mubr.f32.mxu0 0.0
    %1843 = vmatmul.mubr.f32.gmra.mrb[0].mxu0 %v501
    %v1844 = vpop.f32.mrb[0].mxu0
    %v1845 = vadd.f32 0.0, %v1844
    %v1846 = vpop.f32.mrb[0].mxu0
    %v1847 = vadd.f32 0.0, %v1846
    %1848 = vmatprep.mubr.f32.mxu0 0.0
    %1849 = vmatmul.mubr.f32.gmra.mrb[0].mxu0 %v502
    %v1850 = vpop.f32.mrb[0].mxu0
    %v1851 = vadd.f32 0.0, %v1850
    %v1852 = vpop.f32.mrb[0].mxu0
    %v1853 = vadd.f32 0.0, %v1852
    %1854 = vmatprep.mubr.f32.mxu0 0.0
    %1855 = vmatmul.mubr.f32.gmra.mrb[0].mxu0 %v503
    %v1856 = vpop.f32.mrb[0].mxu0
    %v1857 = vadd.f32 0.0, %v1856
    %v1858 = vpop.f32.mrb[0].mxu0
    %v1859 = vadd.f32 0.0, %v1858
    %1860 = vmatprep.mubr.f32.mxu0 0.0
    %1861 = vmatmul.mubr.f32.gmra.mrb[0].mxu0 %v504
    %v1862 = vpop.f32.mrb[0].mxu0
    %v1863 = vadd.f32 0.0, %v1862
    %v1864 = vpop.f32.mrb[0].mxu0
    %v1865 = vadd.f32 0.0, %v1864
    %1866 = vmatprep.mubr.f32.mxu0 0.0
    %1867 = vmatmul.mubr.f32.gmra.mrb[0].mxu0 %v505
    %v1868 = vpop.f32.mrb[0].mxu0
    %v1869 = vadd.f32 0.0, %v1868
    %v1870 = vpop.f32.mrb[0].mxu0
    %v1871 = vadd.f32 0.0, %v1870
    %1872 = vmatprep.mubr.f32.mxu0 0.0
    %1873 = vmatmul.mubr.f32.gmra.mrb[0].mxu0 %v506
    %v1874 = vpop.f32.mrb[0].mxu0
    %v1875 = vadd.f32 0.0, %v1874
    %v1876 = vpop.f32.mrb[0].mxu0
    %v1877 = vadd.f32 0.0, %v1876
    %1878 = vmatprep.mubr.f32.mxu0 0.0
    %1879 = vmatmul.mubr.f32.gmra.mrb[0].mxu0 %v507
    %v1880 = vpop.f32.mrb[0].mxu0
    %v1881 = vadd.f32 0.0, %v1880
    %v1882 = vpop.f32.mrb[0].mxu0
    %v1883 = vadd.f32 0.0, %v1882
    %1884 = vmatprep.mubr.f32.mxu0 0.0
    %1885 = vmatmul.mubr.f32.gmra.mrb[0].mxu0 %v508
    %v1886 = vpop.f32.mrb[0].mxu0
    %v1887 = vadd.f32 0.0, %v1886
    %v1888 = vpop.f32.mrb[0].mxu0
    %v1889 = vadd.f32 0.0, %v1888
    %1890 = vmatprep.mubr.f32.mxu0 0.0
    %1891 = vmatmul.mubr.f32.gmra.mrb[0].mxu0 %v509
    %v1892 = vpop.f32.mrb[0].mxu0
    %v1893 = vadd.f32 0.0, %v1892
    %v1894 = vpop.f32.mrb[0].mxu0
    %v1895 = vadd.f32 0.0, %v1894
    %1896 = vmatprep.mubr.f32.mxu0 0.0
    %1897 = vmatmul.mubr.f32.gmra.mrb[0].mxu0 %v510
    %v1898 = vpop.f32.mrb[0].mxu0
    %v1899 = vadd.f32 0.0, %v1898
    %v1900 = vpop.f32.mrb[0].mxu0
    %v1901 = vadd.f32 0.0, %v1900
    %1902 = vmatprep.mubr.f32.mxu0 0.0
    %1903 = vmatmul.mubr.f32.gmra.mrb[0].mxu0 %v511
    %v1904 = vpop.f32.mrb[0].mxu0
    %v1905 = vadd.f32 0.0, %v1904
    %v1906 = vpop.f32.mrb[0].mxu0
    %v1907 = vadd.f32 0.0, %v1906
    %1908 = vmatprep.mubr.f32.mxu0 0.0
    %1909 = vmatmul.mubr.f32.gmra.mrb[0].mxu0 %v512
    %v1910 = vpop.f32.mrb[0].mxu0
    %v1911 = vadd.f32 0.0, %v1910
    %v1912 = vpop.f32.mrb[0].mxu0
    %v1913 = vadd.f32 0.0, %v1912
    %1914 = vmatprep.mubr.f32.mxu0 0.0
    %1915 = vmatmul.mubr.f32.gmra.mrb[0].mxu0 %v513
    %v1916 = vpop.f32.mrb[0].mxu0
    %v1917 = vadd.f32 0.0, %v1916
    %v1918 = vpop.f32.mrb[0].mxu0
    %v1919 = vadd.f32 0.0, %v1918
    %1920 = vmatprep.mubr.f32.mxu0 0.0
    %1921 = vmatmul.mubr.f32.gmra.mrb[0].mxu0 %v514
    %v1922 = vpop.f32.mrb[0].mxu0
    %v1923 = vadd.f32 0.0, %v1922
    %v1924 = vpop.f32.mrb[0].mxu0
    %v1925 = vadd.f32 0.0, %v1924
    %1926 = vmatprep.mubr.f32.mxu0 0.0
    %1927 = vmatmul.mubr.f32.gmra.mrb[0].mxu0 %v515
    %v1928 = vpop.f32.mrb[0].mxu0
    %v1929 = vadd.f32 0.0, %v1928
    %v1930 = vpop.f32.mrb[0].mxu0
    %v1931 = vadd.f32 0.0, %v1930
    %1932 = vmatprep.mubr.f32.mxu0 0.0
    %1933 = vmatmul.mubr.f32.gmra.mrb[0].mxu0 %v516
    %v1934 = vpop.f32.mrb[0].mxu0
    %v1935 = vadd.f32 0.0, %v1934
    %v1936 = vpop.f32.mrb[0].mxu0
    %v1937 = vadd.f32 0.0, %v1936
    %1938 = vmatprep.mubr.f32.mxu0 0.0
    %1939 = vmatmul.mubr.f32.gmra.mrb[0].mxu0 %v517
    %v1940 = vpop.f32.mrb[0].mxu0
    %v1941 = vadd.f32 0.0, %v1940
    %v1942 = vpop.f32.mrb[0].mxu0
    %v1943 = vadd.f32 0.0, %v1942
    %1944 = vmatprep.mubr.f32.mxu0 0.0
    %1945 = vmatmul.mubr.f32.gmra.mrb[0].mxu0 %v518
    %v1946 = vpop.f32.mrb[0].mxu0
    %v1947 = vadd.f32 0.0, %v1946
    %v1948 = vpop.f32.mrb[0].mxu0
    %v1949 = vadd.f32 0.0, %v1948
    %1950 = vmatprep.mubr.f32.mxu0 0.0
    %1951 = vmatmul.mubr.f32.gmra.mrb[0].mxu0 %v519
    %v1952 = vpop.f32.mrb[0].mxu0
    %v1953 = vadd.f32 0.0, %v1952
    %v1954 = vpop.f32.mrb[0].mxu0
    %v1955 = vadd.f32 0.0, %v1954
    %1956 = vmatprep.mubr.f32.mxu0 0.0
    %1957 = vmatmul.mubr.f32.gmra.mrb[0].mxu0 %v520
    %v1958 = vpop.f32.mrb[0].mxu0
    %v1959 = vadd.f32 0.0, %v1958
    %v1960 = vpop.f32.mrb[0].mxu0
    %v1961 = vadd.f32 0.0, %v1960
    %1962 = vmatprep.mubr.f32.mxu0 0.0
    %1963 = vmatmul.mubr.f32.gmra.mrb[0].mxu0 %v521
    %v1964 = vpop.f32.mrb[0].mxu0
    %v1965 = vadd.f32 0.0, %v1964
    %v1966 = vpop.f32.mrb[0].mxu0
    %v1967 = vadd.f32 0.0, %v1966
    %1968 = vmatprep.mubr.f32.mxu0 0.0
    %1969 = vmatmul.mubr.f32.gmra.mrb[0].mxu0 %v522
    %v1970 = vpop.f32.mrb[0].mxu0
    %v1971 = vadd.f32 0.0, %v1970
    %v1972 = vpop.f32.mrb[0].mxu0
    %v1973 = vadd.f32 0.0, %v1972
    %1974 = vmatprep.mubr.f32.mxu0 0.0
    %1975 = vmatmul.mubr.f32.gmra.mrb[0].mxu0 %v523
    %v1976 = vpop.f32.mrb[0].mxu0
    %v1977 = vadd.f32 0.0, %v1976
    %v1978 = vpop.f32.mrb[0].mxu0
    %v1979 = vadd.f32 0.0, %v1978
    %1980 = vmatprep.mubr.f32.mxu0 0.0
    %1981 = vmatmul.mubr.f32.gmra.mrb[0].mxu0 %v524
    %v1982 = vpop.f32.mrb[0].mxu0
    %v1983 = vadd.f32 0.0, %v1982
    %v1984 = vpop.f32.mrb[0].mxu0
    %v1985 = vadd.f32 0.0, %v1984
    %1986 = vmatprep.mubr.f32.mxu0 0.0
    %1987 = vmatmul.mubr.f32.gmra.mrb[0].mxu0 %v525
    %v1988 = vpop.f32.mrb[0].mxu0
    %v1989 = vadd.f32 0.0, %v1988
    %v1990 = vpop.f32.mrb[0].mxu0
    %v1991 = vadd.f32 0.0, %v1990
    %1992 = vmatprep.mubr.f32.mxu0 0.0
    %1993 = vmatmul.mubr.f32.gmra.mrb[0].mxu0 %v526
    %v1994 = vpop.f32.mrb[0].mxu0
    %v1995 = vadd.f32 0.0, %v1994
    %v1996 = vpop.f32.mrb[0].mxu0
    %v1997 = vadd.f32 0.0, %v1996
    %1998 = vmatprep.mubr.f32.mxu0 0.0
    %1999 = vmatmul.mubr.f32.gmra.mrb[0].mxu0 %v527
    %v2000 = vpop.f32.mrb[0].mxu0
    %v2001 = vadd.f32 0.0, %v2000
    %v2002 = vpop.f32.mrb[0].mxu0
    %v2003 = vadd.f32 0.0, %v2002
    %2004 = vdwg.mxu0
    %2005 = vmatprep.subr.mxu0 %v539
    %2006 = vmatpush1.msra.mxu0 %v538
    %2007 = vmatprep.subr.mxu0 %v551
    %2008 = vmatpush1.msra.mxu0 %v550
    %2009 = vmatprep.subr.mxu0 %v563
    %2010 = vmatpush1.msra.mxu0 %v562
    %2011 = vmatprep.subr.mxu0 %v575
    %2012 = vmatpush1.msra.mxu0 %v574
    %2013 = vmatprep.subr.mxu0 %v587
    %2014 = vmatpush1.msra.mxu0 %v586
    %2015 = vmatprep.subr.mxu0 %v599
    %2016 = vmatpush1.msra.mxu0 %v598
    %2017 = vmatprep.subr.mxu0 %v611
    %2018 = vmatpush1.msra.mxu0 %v610
    %2019 = vmatprep.subr.mxu0 %v623
    %2020 = vmatpush1.msra.mxu0 %v622
    %2021 = vmatprep.subr.mxu0 %v635
    %2022 = vmatpush1.msra.mxu0 %v634
    %2023 = vmatprep.subr.mxu0 %v647
    %2024 = vmatpush1.msra.mxu0 %v646
    %2025 = vmatprep.subr.mxu0 %v659
    %2026 = vmatpush1.msra.mxu0 %v658
    %2027 = vmatprep.subr.mxu0 %v671
    %2028 = vmatpush1.msra.mxu0 %v670
    %2029 = vmatprep.subr.mxu0 %v683
    %2030 = vmatpush1.msra.mxu0 %v682
    %2031 = vmatprep.subr.mxu0 %v695
    %2032 = vmatpush1.msra.mxu0 %v694
    %2033 = vmatprep.subr.mxu0 %v707
    %2034 = vmatpush1.msra.mxu0 %v706
    %2035 = vmatprep.subr.mxu0 %v719
    %2036 = vmatpush1.msra.mxu0 %v718
    %2037 = vmatprep.subr.mxu0 0.0
    %2038 = vmatpush1.msra.mxu0 0.0
    %2039 = vmatprep.subr.mxu0 0.0
    %2040 = vmatpush1.msra.mxu0 0.0
    %2041 = vmatprep.subr.mxu0 0.0
    %2042 = vmatpush1.msra.mxu0 0.0
    %2043 = vmatprep.subr.mxu0 0.0
    %2044 = vmatpush1.msra.mxu0 0.0
    %2045 = vmatprep.subr.mxu0 0.0
    %2046 = vmatpush1.msra.mxu0 0.0
    %2047 = vmatprep.subr.mxu0 0.0
    %2048 = vmatpush1.msra.mxu0 0.0
    %2049 = vmatprep.subr.mxu0 0.0
    %2050 = vmatpush1.msra.mxu0 0.0
    %2051 = vmatprep.subr.mxu0 0.0
    %2052 = vmatpush1.msra.mxu0 0.0
    %2053 = vmatprep.subr.mxu0 0.0
    %2054 = vmatpush1.msra.mxu0 0.0
    %2055 = vmatprep.subr.mxu0 0.0
    %2056 = vmatpush1.msra.mxu0 0.0
    %2057 = vmatprep.subr.mxu0 0.0
    %2058 = vmatpush1.msra.mxu0 0.0
    %2059 = vmatprep.subr.mxu0 0.0
    %2060 = vmatpush1.msra.mxu0 0.0
    %2061 = vmatprep.subr.mxu0 0.0
    %2062 = vmatpush1.msra.mxu0 0.0
    %2063 = vmatprep.subr.mxu0 0.0
    %2064 = vmatpush1.msra.mxu0 0.0
    %2065 = vmatprep.subr.mxu0 0.0
    %2066 = vmatpush1.msra.mxu0 0.0
    %2067 = vmatprep.subr.mxu0 0.0
    %2068 = vmatpush1.msra.mxu0 0.0
    %2069 = vmatprep.mubr.f32.mxu0 0.0
    %2070 = vmatmul.mubr.f32.gmra.mrb[0].mxu0 %v496
    %v2071 = vpop.f32.mrb[0].mxu0
    %v2072 = vadd.f32 0.0, %v2071
    %v2073 = vpop.f32.mrb[0].mxu0
    %v2074 = vadd.f32 0.0, %v2073
    %2075 = vmatprep.mubr.f32.mxu0 0.0
    %2076 = vmatmul.mubr.f32.gmra.mrb[0].mxu0 %v497
    %v2077 = vpop.f32.mrb[0].mxu0
    %v2078 = vadd.f32 0.0, %v2077
    %v2079 = vpop.f32.mrb[0].mxu0
    %v2080 = vadd.f32 0.0, %v2079
    %2081 = vmatprep.mubr.f32.mxu0 0.0
    %2082 = vmatmul.mubr.f32.gmra.mrb[0].mxu0 %v498
    %v2083 = vpop.f32.mrb[0].mxu0
    %v2084 = vadd.f32 0.0, %v2083
    %v2085 = vpop.f32.mrb[0].mxu0
    %v2086 = vadd.f32 0.0, %v2085
    %2087 = vmatprep.mubr.f32.mxu0 0.0
    %2088 = vmatmul.mubr.f32.gmra.mrb[0].mxu0 %v499
    %v2089 = vpop.f32.mrb[0].mxu0
    %v2090 = vadd.f32 0.0, %v2089
    %v2091 = vpop.f32.mrb[0].mxu0
    %v2092 = vadd.f32 0.0, %v2091
    %2093 = vmatprep.mubr.f32.mxu0 0.0
    %2094 = vmatmul.mubr.f32.gmra.mrb[0].mxu0 %v500
    %v2095 = vpop.f32.mrb[0].mxu0
    %v2096 = vadd.f32 0.0, %v2095
    %v2097 = vpop.f32.mrb[0].mxu0
    %v2098 = vadd.f32 0.0, %v2097
    %2099 = vmatprep.mubr.f32.mxu0 0.0
    %2100 = vmatmul.mubr.f32.gmra.mrb[0].mxu0 %v501
    %v2101 = vpop.f32.mrb[0].mxu0
    %v2102 = vadd.f32 0.0, %v2101
    %v2103 = vpop.f32.mrb[0].mxu0
    %v2104 = vadd.f32 0.0, %v2103
    %2105 = vmatprep.mubr.f32.mxu0 0.0
    %2106 = vmatmul.mubr.f32.gmra.mrb[0].mxu0 %v502
    %v2107 = vpop.f32.mrb[0].mxu0
    %v2108 = vadd.f32 0.0, %v2107
    %v2109 = vpop.f32.mrb[0].mxu0
    %v2110 = vadd.f32 0.0, %v2109
    %2111 = vmatprep.mubr.f32.mxu0 0.0
    %2112 = vmatmul.mubr.f32.gmra.mrb[0].mxu0 %v503
    %v2113 = vpop.f32.mrb[0].mxu0
    %v2114 = vadd.f32 0.0, %v2113
    %v2115 = vpop.f32.mrb[0].mxu0
    %v2116 = vadd.f32 0.0, %v2115
    %2117 = vmatprep.mubr.f32.mxu0 0.0
    %2118 = vmatmul.mubr.f32.gmra.mrb[0].mxu0 %v504
    %v2119 = vpop.f32.mrb[0].mxu0
    %v2120 = vadd.f32 0.0, %v2119
    %v2121 = vpop.f32.mrb[0].mxu0
    %v2122 = vadd.f32 0.0, %v2121
    %2123 = vmatprep.mubr.f32.mxu0 0.0
    %2124 = vmatmul.mubr.f32.gmra.mrb[0].mxu0 %v505
    %v2125 = vpop.f32.mrb[0].mxu0
    %v2126 = vadd.f32 0.0, %v2125
    %v2127 = vpop.f32.mrb[0].mxu0
    %v2128 = vadd.f32 0.0, %v2127
    %2129 = vmatprep.mubr.f32.mxu0 0.0
    %2130 = vmatmul.mubr.f32.gmra.mrb[0].mxu0 %v506
    %v2131 = vpop.f32.mrb[0].mxu0
    %v2132 = vadd.f32 0.0, %v2131
    %v2133 = vpop.f32.mrb[0].mxu0
    %v2134 = vadd.f32 0.0, %v2133
    %2135 = vmatprep.mubr.f32.mxu0 0.0
    %2136 = vmatmul.mubr.f32.gmra.mrb[0].mxu0 %v507
    %v2137 = vpop.f32.mrb[0].mxu0
    %v2138 = vadd.f32 0.0, %v2137
    %v2139 = vpop.f32.mrb[0].mxu0
    %v2140 = vadd.f32 0.0, %v2139
    %2141 = vmatprep.mubr.f32.mxu0 0.0
    %2142 = vmatmul.mubr.f32.gmra.mrb[0].mxu0 %v508
    %v2143 = vpop.f32.mrb[0].mxu0
    %v2144 = vadd.f32 0.0, %v2143
    %v2145 = vpop.f32.mrb[0].mxu0
    %v2146 = vadd.f32 0.0, %v2145
    %2147 = vmatprep.mubr.f32.mxu0 0.0
    %2148 = vmatmul.mubr.f32.gmra.mrb[0].mxu0 %v509
    %v2149 = vpop.f32.mrb[0].mxu0
    %v2150 = vadd.f32 0.0, %v2149
    %v2151 = vpop.f32.mrb[0].mxu0
    %v2152 = vadd.f32 0.0, %v2151
    %2153 = vmatprep.mubr.f32.mxu0 0.0
    %2154 = vmatmul.mubr.f32.gmra.mrb[0].mxu0 %v510
    %v2155 = vpop.f32.mrb[0].mxu0
    %v2156 = vadd.f32 0.0, %v2155
    %v2157 = vpop.f32.mrb[0].mxu0
    %v2158 = vadd.f32 0.0, %v2157
    %2159 = vmatprep.mubr.f32.mxu0 0.0
    %2160 = vmatmul.mubr.f32.gmra.mrb[0].mxu0 %v511
    %v2161 = vpop.f32.mrb[0].mxu0
    %v2162 = vadd.f32 0.0, %v2161
    %v2163 = vpop.f32.mrb[0].mxu0
    %v2164 = vadd.f32 0.0, %v2163
    %2165 = vmatprep.mubr.f32.mxu0 0.0
    %2166 = vmatmul.mubr.f32.gmra.mrb[0].mxu0 %v512
    %v2167 = vpop.f32.mrb[0].mxu0
    %v2168 = vadd.f32 0.0, %v2167
    %v2169 = vpop.f32.mrb[0].mxu0
    %v2170 = vadd.f32 0.0, %v2169
    %2171 = vmatprep.mubr.f32.mxu0 0.0
    %2172 = vmatmul.mubr.f32.gmra.mrb[0].mxu0 %v513
    %v2173 = vpop.f32.mrb[0].mxu0
    %v2174 = vadd.f32 0.0, %v2173
    %v2175 = vpop.f32.mrb[0].mxu0
    %v2176 = vadd.f32 0.0, %v2175
    %2177 = vmatprep.mubr.f32.mxu0 0.0
    %2178 = vmatmul.mubr.f32.gmra.mrb[0].mxu0 %v514
    %v2179 = vpop.f32.mrb[0].mxu0
    %v2180 = vadd.f32 0.0, %v2179
    %v2181 = vpop.f32.mrb[0].mxu0
    %v2182 = vadd.f32 0.0, %v2181
    %2183 = vmatprep.mubr.f32.mxu0 0.0
    %2184 = vmatmul.mubr.f32.gmra.mrb[0].mxu0 %v515
    %v2185 = vpop.f32.mrb[0].mxu0
    %v2186 = vadd.f32 0.0, %v2185
    %v2187 = vpop.f32.mrb[0].mxu0
    %v2188 = vadd.f32 0.0, %v2187
    %2189 = vmatprep.mubr.f32.mxu0 0.0
    %2190 = vmatmul.mubr.f32.gmra.mrb[0].mxu0 %v516
    %v2191 = vpop.f32.mrb[0].mxu0
    %v2192 = vadd.f32 0.0, %v2191
    %v2193 = vpop.f32.mrb[0].mxu0
    %v2194 = vadd.f32 0.0, %v2193
    %2195 = vmatprep.mubr.f32.mxu0 0.0
    %2196 = vmatmul.mubr.f32.gmra.mrb[0].mxu0 %v517
    %v2197 = vpop.f32.mrb[0].mxu0
    %v2198 = vadd.f32 0.0, %v2197
    %v2199 = vpop.f32.mrb[0].mxu0
    %v2200 = vadd.f32 0.0, %v2199
    %2201 = vmatprep.mubr.f32.mxu0 0.0
    %2202 = vmatmul.mubr.f32.gmra.mrb[0].mxu0 %v518
    %v2203 = vpop.f32.mrb[0].mxu0
    %v2204 = vadd.f32 0.0, %v2203
    %v2205 = vpop.f32.mrb[0].mxu0
    %v2206 = vadd.f32 0.0, %v2205
    %2207 = vmatprep.mubr.f32.mxu0 0.0
    %2208 = vmatmul.mubr.f32.gmra.mrb[0].mxu0 %v519
    %v2209 = vpop.f32.mrb[0].mxu0
    %v2210 = vadd.f32 0.0, %v2209
    %v2211 = vpop.f32.mrb[0].mxu0
    %v2212 = vadd.f32 0.0, %v2211
    %2213 = vmatprep.mubr.f32.mxu0 0.0
    %2214 = vmatmul.mubr.f32.gmra.mrb[0].mxu0 %v520
    %v2215 = vpop.f32.mrb[0].mxu0
    %v2216 = vadd.f32 0.0, %v2215
    %v2217 = vpop.f32.mrb[0].mxu0
    %v2218 = vadd.f32 0.0, %v2217
    %2219 = vmatprep.mubr.f32.mxu0 0.0
    %2220 = vmatmul.mubr.f32.gmra.mrb[0].mxu0 %v521
    %v2221 = vpop.f32.mrb[0].mxu0
    %v2222 = vadd.f32 0.0, %v2221
    %v2223 = vpop.f32.mrb[0].mxu0
    %v2224 = vadd.f32 0.0, %v2223
    %2225 = vmatprep.mubr.f32.mxu0 0.0
    %2226 = vmatmul.mubr.f32.gmra.mrb[0].mxu0 %v522
    %v2227 = vpop.f32.mrb[0].mxu0
    %v2228 = vadd.f32 0.0, %v2227
    %v2229 = vpop.f32.mrb[0].mxu0
    %v2230 = vadd.f32 0.0, %v2229
    %2231 = vmatprep.mubr.f32.mxu0 0.0
    %2232 = vmatmul.mubr.f32.gmra.mrb[0].mxu0 %v523
    %v2233 = vpop.f32.mrb[0].mxu0
    %v2234 = vadd.f32 0.0, %v2233
    %v2235 = vpop.f32.mrb[0].mxu0
    %v2236 = vadd.f32 0.0, %v2235
    %2237 = vmatprep.mubr.f32.mxu0 0.0
    %2238 = vmatmul.mubr.f32.gmra.mrb[0].mxu0 %v524
    %v2239 = vpop.f32.mrb[0].mxu0
    %v2240 = vadd.f32 0.0, %v2239
    %v2241 = vpop.f32.mrb[0].mxu0
    %v2242 = vadd.f32 0.0, %v2241
    %2243 = vmatprep.mubr.f32.mxu0 0.0
    %2244 = vmatmul.mubr.f32.gmra.mrb[0].mxu0 %v525
    %v2245 = vpop.f32.mrb[0].mxu0
    %v2246 = vadd.f32 0.0, %v2245
    %v2247 = vpop.f32.mrb[0].mxu0
    %v2248 = vadd.f32 0.0, %v2247
    %2249 = vmatprep.mubr.f32.mxu0 0.0
    %2250 = vmatmul.mubr.f32.gmra.mrb[0].mxu0 %v526
    %v2251 = vpop.f32.mrb[0].mxu0
    %v2252 = vadd.f32 0.0, %v2251
    %v2253 = vpop.f32.mrb[0].mxu0
    %v2254 = vadd.f32 0.0, %v2253
    %2255 = vmatprep.mubr.f32.mxu0 0.0
    %2256 = vmatmul.mubr.f32.gmra.mrb[0].mxu0 %v527
    %v2257 = vpop.f32.mrb[0].mxu0
    %v2258 = vadd.f32 0.0, %v2257
    %v2259 = vpop.f32.mrb[0].mxu0
    %v2260 = vadd.f32 0.0, %v2259
    %2261 = vdwg.mxu0
    %vm2262 = vcmask 523264
    %v2264 = vsel %vm2262, %v787, 0
    %v2267 = vsel %vm2262, %v793, 0
    %v2270 = vsel %vm2262, %v799, 0
    %v2273 = vsel %vm2262, %v805, 0
    %v2276 = vsel %vm2262, %v811, 0
    %v2279 = vsel %vm2262, %v817, 0
    %v2282 = vsel %vm2262, %v823, 0
    %v2285 = vsel %vm2262, %v829, 0
    %v2288 = vsel %vm2262, %v835, 0
    %v2291 = vsel %vm2262, %v841, 0
    %v2294 = vsel %vm2262, %v847, 0
    %v2297 = vsel %vm2262, %v853, 0
    %v2300 = vsel %vm2262, %v859, 0
    %v2303 = vsel %vm2262, %v865, 0
    %v2306 = vsel %vm2262, %v871, 0
    %v2309 = vsel %vm2262, %v877, 0
    %v2312 = vsel %vm2262, %v1301, 0
    %v2315 = vsel %vm2262, %v1307, 0
    %v2318 = vsel %vm2262, %v1313, 0
    %v2321 = vsel %vm2262, %v1319, 0
    %v2324 = vsel %vm2262, %v1325, 0
    %v2327 = vsel %vm2262, %v1331, 0
    %v2330 = vsel %vm2262, %v1337, 0
    %v2333 = vsel %vm2262, %v1343, 0
    %v2336 = vsel %vm2262, %v1349, 0
    %v2339 = vsel %vm2262, %v1355, 0
    %v2342 = vsel %vm2262, %v1361, 0
    %v2345 = vsel %vm2262, %v1367, 0
    %v2348 = vsel %vm2262, %v1373, 0
    %v2351 = vsel %vm2262, %v1379, 0
    %v2354 = vsel %vm2262, %v1385, 0
    %v2357 = vsel %vm2262, %v1391, 0
    %2359 = vmatprep.subr.mxu0 0.0
    %2360 = vmatpush1.xpose.msra.mxu0 %v2312
    %2361 = vmatprep.subr.mxu0 0.0
    %2362 = vmatpush1.xpose.msra.mxu0 %v2315
    %2363 = vmatprep.subr.mxu0 0.0
    %2364 = vmatpush1.xpose.msra.mxu0 %v2318
    %2365 = vmatprep.subr.mxu0 0.0
    %2366 = vmatpush1.xpose.msra.mxu0 %v2321
    %2367 = vmatprep.subr.mxu0 0.0
    %2368 = vmatpush1.xpose.msra.mxu0 %v2324
    %2369 = vmatprep.subr.mxu0 0.0
    %2370 = vmatpush1.xpose.msra.mxu0 %v2327
    %2371 = vmatprep.subr.mxu0 0.0
    %2372 = vmatpush1.xpose.msra.mxu0 %v2330
    %2373 = vmatprep.subr.mxu0 0.0
    %2374 = vmatpush1.xpose.msra.mxu0 %v2333
    %2375 = vmatprep.subr.mxu0 0.0
    %2376 = vmatpush1.xpose.msra.mxu0 %v2336
    %2377 = vmatprep.subr.mxu0 0.0
    %2378 = vmatpush1.xpose.msra.mxu0 %v2339
    %2379 = vmatprep.subr.mxu0 0.0
    %2380 = vmatpush1.xpose.msra.mxu0 %v2342
    %2381 = vmatprep.subr.mxu0 0.0
    %2382 = vmatpush1.xpose.msra.mxu0 %v2345
    %2383 = vmatprep.subr.mxu0 0.0
    %2384 = vmatpush1.xpose.msra.mxu0 %v2348
    %2385 = vmatprep.subr.mxu0 0.0
    %2386 = vmatpush1.xpose.msra.mxu0 %v2351
    %2387 = vmatprep.subr.mxu0 0.0
    %2388 = vmatpush1.xpose.msra.mxu0 %v2354
    %2389 = vmatprep.subr.mxu0 0.0
    %2390 = vmatpush1.xpose.msra.mxu0 %v2357
    %2391 = vmatprep.subr.mxu0 0.0
    %2392 = vmatpush1.xpose.msra.mxu0 0.0
    %2393 = vmatprep.subr.mxu0 0.0
    %2394 = vmatpush1.xpose.msra.mxu0 0.0
    %2395 = vmatprep.subr.mxu0 0.0
    %2396 = vmatpush1.xpose.msra.mxu0 0.0
    %2397 = vmatprep.subr.mxu0 0.0
    %2398 = vmatpush1.xpose.msra.mxu0 0.0
    %2399 = vmatprep.subr.mxu0 0.0
    %2400 = vmatpush1.xpose.msra.mxu0 0.0
    %2401 = vmatprep.subr.mxu0 0.0
    %2402 = vmatpush1.xpose.msra.mxu0 0.0
    %2403 = vmatprep.subr.mxu0 0.0
    %2404 = vmatpush1.xpose.msra.mxu0 0.0
    %2405 = vmatprep.subr.mxu0 0.0
    %2406 = vmatpush1.xpose.msra.mxu0 0.0
    %2407 = vmatprep.subr.mxu0 0.0
    %2408 = vmatpush1.xpose.msra.mxu0 0.0
    %2409 = vmatprep.subr.mxu0 0.0
    %2410 = vmatpush1.xpose.msra.mxu0 0.0
    %2411 = vmatprep.subr.mxu0 0.0
    %2412 = vmatpush1.xpose.msra.mxu0 0.0
    %2413 = vmatprep.subr.mxu0 0.0
    %2414 = vmatpush1.xpose.msra.mxu0 0.0
    %2415 = vmatprep.subr.mxu0 0.0
    %2416 = vmatpush1.xpose.msra.mxu0 0.0
    %2417 = vmatprep.subr.mxu0 0.0
    %2418 = vmatpush1.xpose.msra.mxu0 0.0
    %2419 = vmatprep.subr.mxu0 0.0
    %2420 = vmatpush1.xpose.msra.mxu0 0.0
    %2421 = vmatprep.subr.mxu0 0.0
    %2422 = vmatpush1.xpose.msra.mxu0 0.0
    %2423 = vmatprep.mubr.f32.mxu0 0.0
    %2424 = vmatmul.mubr.f32.gmra.mrb[0].mxu0 %v2264
    %v2425 = vpop.f32.mrb[0].mxu0
    %v2426 = vadd.f32 0.0, %v2425
    %v2427 = vpop.f32.mrb[0].mxu0
    %2428 = vmatprep.mubr.f32.mxu0 0.0
    %2429 = vmatmul.mubr.f32.gmra.mrb[0].mxu0 %v2267
    %v2430 = vpop.f32.mrb[0].mxu0
    %v2431 = vadd.f32 0.0, %v2430
    %v2432 = vpop.f32.mrb[0].mxu0
    %2433 = vmatprep.mubr.f32.mxu0 0.0
    %2434 = vmatmul.mubr.f32.gmra.mrb[0].mxu0 %v2270
    %v2435 = vpop.f32.mrb[0].mxu0
    %v2436 = vadd.f32 0.0, %v2435
    %v2437 = vpop.f32.mrb[0].mxu0
    %2438 = vmatprep.mubr.f32.mxu0 0.0
    %2439 = vmatmul.mubr.f32.gmra.mrb[0].mxu0 %v2273
    %v2440 = vpop.f32.mrb[0].mxu0
    %v2441 = vadd.f32 0.0, %v2440
    %v2442 = vpop.f32.mrb[0].mxu0
    %2443 = vmatprep.mubr.f32.mxu0 0.0
    %2444 = vmatmul.mubr.f32.gmra.mrb[0].mxu0 %v2276
    %v2445 = vpop.f32.mrb[0].mxu0
    %v2446 = vadd.f32 0.0, %v2445
    %v2447 = vpop.f32.mrb[0].mxu0
    %2448 = vmatprep.mubr.f32.mxu0 0.0
    %2449 = vmatmul.mubr.f32.gmra.mrb[0].mxu0 %v2279
    %v2450 = vpop.f32.mrb[0].mxu0
    %v2451 = vadd.f32 0.0, %v2450
    %v2452 = vpop.f32.mrb[0].mxu0
    %2453 = vmatprep.mubr.f32.mxu0 0.0
    %2454 = vmatmul.mubr.f32.gmra.mrb[0].mxu0 %v2282
    %v2455 = vpop.f32.mrb[0].mxu0
    %v2456 = vadd.f32 0.0, %v2455
    %v2457 = vpop.f32.mrb[0].mxu0
    %2458 = vmatprep.mubr.f32.mxu0 0.0
    %2459 = vmatmul.mubr.f32.gmra.mrb[0].mxu0 %v2285
    %v2460 = vpop.f32.mrb[0].mxu0
    %v2461 = vadd.f32 0.0, %v2460
    %v2462 = vpop.f32.mrb[0].mxu0
    %2463 = vmatprep.mubr.f32.mxu0 0.0
    %2464 = vmatmul.mubr.f32.gmra.mrb[0].mxu0 %v2288
    %v2465 = vpop.f32.mrb[0].mxu0
    %v2466 = vadd.f32 0.0, %v2465
    %v2467 = vpop.f32.mrb[0].mxu0
    %2468 = vmatprep.mubr.f32.mxu0 0.0
    %2469 = vmatmul.mubr.f32.gmra.mrb[0].mxu0 %v2291
    %v2470 = vpop.f32.mrb[0].mxu0
    %v2471 = vadd.f32 0.0, %v2470
    %v2472 = vpop.f32.mrb[0].mxu0
    %2473 = vmatprep.mubr.f32.mxu0 0.0
    %2474 = vmatmul.mubr.f32.gmra.mrb[0].mxu0 %v2294
    %v2475 = vpop.f32.mrb[0].mxu0
    %v2476 = vadd.f32 0.0, %v2475
    %v2477 = vpop.f32.mrb[0].mxu0
    %2478 = vmatprep.mubr.f32.mxu0 0.0
    %2479 = vmatmul.mubr.f32.gmra.mrb[0].mxu0 %v2297
    %v2480 = vpop.f32.mrb[0].mxu0
    %v2481 = vadd.f32 0.0, %v2480
    %v2482 = vpop.f32.mrb[0].mxu0
    %2483 = vmatprep.mubr.f32.mxu0 0.0
    %2484 = vmatmul.mubr.f32.gmra.mrb[0].mxu0 %v2300
    %v2485 = vpop.f32.mrb[0].mxu0
    %v2486 = vadd.f32 0.0, %v2485
    %v2487 = vpop.f32.mrb[0].mxu0
    %2488 = vmatprep.mubr.f32.mxu0 0.0
    %2489 = vmatmul.mubr.f32.gmra.mrb[0].mxu0 %v2303
    %v2490 = vpop.f32.mrb[0].mxu0
    %v2491 = vadd.f32 0.0, %v2490
    %v2492 = vpop.f32.mrb[0].mxu0
    %2493 = vmatprep.mubr.f32.mxu0 0.0
    %2494 = vmatmul.mubr.f32.gmra.mrb[0].mxu0 %v2306
    %v2495 = vpop.f32.mrb[0].mxu0
    %v2496 = vadd.f32 0.0, %v2495
    %v2497 = vpop.f32.mrb[0].mxu0
    %2498 = vmatprep.mubr.f32.mxu0 0.0
    %2499 = vmatmul.mubr.f32.gmra.mrb[0].mxu0 %v2309
    %v2500 = vpop.f32.mrb[0].mxu0
    %v2501 = vadd.f32 0.0, %v2500
    %v2502 = vpop.f32.mrb[0].mxu0
    %2503 = vdwg.mxu0
    %v2505 = vsel %vm2262, %v883, 0
    %v2508 = vsel %vm2262, %v889, 0
    %v2511 = vsel %vm2262, %v895, 0
    %v2514 = vsel %vm2262, %v901, 0
    %v2517 = vsel %vm2262, %v907, 0
    %v2520 = vsel %vm2262, %v913, 0
    %v2523 = vsel %vm2262, %v919, 0
    %v2526 = vsel %vm2262, %v925, 0
    %v2529 = vsel %vm2262, %v931, 0
    %v2532 = vsel %vm2262, %v937, 0
    %v2535 = vsel %vm2262, %v943, 0
    %v2538 = vsel %vm2262, %v949, 0
    %v2541 = vsel %vm2262, %v955, 0
    %v2544 = vsel %vm2262, %v961, 0
    %v2547 = vsel %vm2262, %v967, 0
    %v2550 = vsel %vm2262, %v973, 0
    %v2553 = vsel %vm2262, %v1397, 0
    %v2556 = vsel %vm2262, %v1403, 0
    %v2559 = vsel %vm2262, %v1409, 0
    %v2562 = vsel %vm2262, %v1415, 0
    %v2565 = vsel %vm2262, %v1421, 0
    %v2568 = vsel %vm2262, %v1427, 0
    %v2571 = vsel %vm2262, %v1433, 0
    %v2574 = vsel %vm2262, %v1439, 0
    %v2577 = vsel %vm2262, %v1445, 0
    %v2580 = vsel %vm2262, %v1451, 0
    %v2583 = vsel %vm2262, %v1457, 0
    %v2586 = vsel %vm2262, %v1463, 0
    %v2589 = vsel %vm2262, %v1469, 0
    %v2592 = vsel %vm2262, %v1475, 0
    %v2595 = vsel %vm2262, %v1481, 0
    %v2598 = vsel %vm2262, %v1487, 0
    %2600 = vmatprep.subr.mxu0 0.0
    %2601 = vmatpush1.xpose.msra.mxu0 %v2553
    %2602 = vmatprep.subr.mxu0 0.0
    %2603 = vmatpush1.xpose.msra.mxu0 %v2556
    %2604 = vmatprep.subr.mxu0 0.0
    %2605 = vmatpush1.xpose.msra.mxu0 %v2559
    %2606 = vmatprep.subr.mxu0 0.0
    %2607 = vmatpush1.xpose.msra.mxu0 %v2562
    %2608 = vmatprep.subr.mxu0 0.0
    %2609 = vmatpush1.xpose.msra.mxu0 %v2565
    %2610 = vmatprep.subr.mxu0 0.0
    %2611 = vmatpush1.xpose.msra.mxu0 %v2568
    %2612 = vmatprep.subr.mxu0 0.0
    %2613 = vmatpush1.xpose.msra.mxu0 %v2571
    %2614 = vmatprep.subr.mxu0 0.0
    %2615 = vmatpush1.xpose.msra.mxu0 %v2574
    %2616 = vmatprep.subr.mxu0 0.0
    %2617 = vmatpush1.xpose.msra.mxu0 %v2577
    %2618 = vmatprep.subr.mxu0 0.0
    %2619 = vmatpush1.xpose.msra.mxu0 %v2580
    %2620 = vmatprep.subr.mxu0 0.0
    %2621 = vmatpush1.xpose.msra.mxu0 %v2583
    %2622 = vmatprep.subr.mxu0 0.0
    %2623 = vmatpush1.xpose.msra.mxu0 %v2586
    %2624 = vmatprep.subr.mxu0 0.0
    %2625 = vmatpush1.xpose.msra.mxu0 %v2589
    %2626 = vmatprep.subr.mxu0 0.0
    %2627 = vmatpush1.xpose.msra.mxu0 %v2592
    %2628 = vmatprep.subr.mxu0 0.0
    %2629 = vmatpush1.xpose.msra.mxu0 %v2595
    %2630 = vmatprep.subr.mxu0 0.0
    %2631 = vmatpush1.xpose.msra.mxu0 %v2598
    %2632 = vmatprep.subr.mxu0 0.0
    %2633 = vmatpush1.xpose.msra.mxu0 0.0
    %2634 = vmatprep.subr.mxu0 0.0
    %2635 = vmatpush1.xpose.msra.mxu0 0.0
    %2636 = vmatprep.subr.mxu0 0.0
    %2637 = vmatpush1.xpose.msra.mxu0 0.0
    %2638 = vmatprep.subr.mxu0 0.0
    %2639 = vmatpush1.xpose.msra.mxu0 0.0
    %2640 = vmatprep.subr.mxu0 0.0
    %2641 = vmatpush1.xpose.msra.mxu0 0.0
    %2642 = vmatprep.subr.mxu0 0.0
    %2643 = vmatpush1.xpose.msra.mxu0 0.0
    %2644 = vmatprep.subr.mxu0 0.0
    %2645 = vmatpush1.xpose.msra.mxu0 0.0
    %2646 = vmatprep.subr.mxu0 0.0
    %2647 = vmatpush1.xpose.msra.mxu0 0.0
    %2648 = vmatprep.subr.mxu0 0.0
    %2649 = vmatpush1.xpose.msra.mxu0 0.0
    %2650 = vmatprep.subr.mxu0 0.0
    %2651 = vmatpush1.xpose.msra.mxu0 0.0
    %2652 = vmatprep.subr.mxu0 0.0
    %2653 = vmatpush1.xpose.msra.mxu0 0.0
    %2654 = vmatprep.subr.mxu0 0.0
    %2655 = vmatpush1.xpose.msra.mxu0 0.0
    %2656 = vmatprep.subr.mxu0 0.0
    %2657 = vmatpush1.xpose.msra.mxu0 0.0
    %2658 = vmatprep.subr.mxu0 0.0
    %2659 = vmatpush1.xpose.msra.mxu0 0.0
    %2660 = vmatprep.subr.mxu0 0.0
    %2661 = vmatpush1.xpose.msra.mxu0 0.0
    %2662 = vmatprep.subr.mxu0 0.0
    %2663 = vmatpush1.xpose.msra.mxu0 0.0
    %2664 = vmatprep.mubr.f32.mxu0 0.0
    %2665 = vmatmul.mubr.f32.gmra.mrb[0].mxu0 %v2505
    %v2666 = vpop.f32.mrb[0].mxu0
    %v2667 = vadd.f32 0.0, %v2666
    %v2668 = vpop.f32.mrb[0].mxu0
    %2669 = vmatprep.mubr.f32.mxu0 0.0
    %2670 = vmatmul.mubr.f32.gmra.mrb[0].mxu0 %v2508
    %v2671 = vpop.f32.mrb[0].mxu0
    %v2672 = vadd.f32 0.0, %v2671
    %v2673 = vpop.f32.mrb[0].mxu0
    %2674 = vmatprep.mubr.f32.mxu0 0.0
    %2675 = vmatmul.mubr.f32.gmra.mrb[0].mxu0 %v2511
    %v2676 = vpop.f32.mrb[0].mxu0
    %v2677 = vadd.f32 0.0, %v2676
    %v2678 = vpop.f32.mrb[0].mxu0
    %2679 = vmatprep.mubr.f32.mxu0 0.0
    %2680 = vmatmul.mubr.f32.gmra.mrb[0].mxu0 %v2514
    %v2681 = vpop.f32.mrb[0].mxu0
    %v2682 = vadd.f32 0.0, %v2681
    %v2683 = vpop.f32.mrb[0].mxu0
    %2684 = vmatprep.mubr.f32.mxu0 0.0
    %2685 = vmatmul.mubr.f32.gmra.mrb[0].mxu0 %v2517
    %v2686 = vpop.f32.mrb[0].mxu0
    %v2687 = vadd.f32 0.0, %v2686
    %v2688 = vpop.f32.mrb[0].mxu0
    %2689 = vmatprep.mubr.f32.mxu0 0.0
    %2690 = vmatmul.mubr.f32.gmra.mrb[0].mxu0 %v2520
    %v2691 = vpop.f32.mrb[0].mxu0
    %v2692 = vadd.f32 0.0, %v2691
    %v2693 = vpop.f32.mrb[0].mxu0
    %2694 = vmatprep.mubr.f32.mxu0 0.0
    %2695 = vmatmul.mubr.f32.gmra.mrb[0].mxu0 %v2523
    %v2696 = vpop.f32.mrb[0].mxu0
    %v2697 = vadd.f32 0.0, %v2696
    %v2698 = vpop.f32.mrb[0].mxu0
    %2699 = vmatprep.mubr.f32.mxu0 0.0
    %2700 = vmatmul.mubr.f32.gmra.mrb[0].mxu0 %v2526
    %v2701 = vpop.f32.mrb[0].mxu0
    %v2702 = vadd.f32 0.0, %v2701
    %v2703 = vpop.f32.mrb[0].mxu0
    %2704 = vmatprep.mubr.f32.mxu0 0.0
    %2705 = vmatmul.mubr.f32.gmra.mrb[0].mxu0 %v2529
    %v2706 = vpop.f32.mrb[0].mxu0
    %v2707 = vadd.f32 0.0, %v2706
    %v2708 = vpop.f32.mrb[0].mxu0
    %2709 = vmatprep.mubr.f32.mxu0 0.0
    %2710 = vmatmul.mubr.f32.gmra.mrb[0].mxu0 %v2532
    %v2711 = vpop.f32.mrb[0].mxu0
    %v2712 = vadd.f32 0.0, %v2711
    %v2713 = vpop.f32.mrb[0].mxu0
    %2714 = vmatprep.mubr.f32.mxu0 0.0
    %2715 = vmatmul.mubr.f32.gmra.mrb[0].mxu0 %v2535
    %v2716 = vpop.f32.mrb[0].mxu0
    %v2717 = vadd.f32 0.0, %v2716
    %v2718 = vpop.f32.mrb[0].mxu0
    %2719 = vmatprep.mubr.f32.mxu0 0.0
    %2720 = vmatmul.mubr.f32.gmra.mrb[0].mxu0 %v2538
    %v2721 = vpop.f32.mrb[0].mxu0
    %v2722 = vadd.f32 0.0, %v2721
    %v2723 = vpop.f32.mrb[0].mxu0
    %2724 = vmatprep.mubr.f32.mxu0 0.0
    %2725 = vmatmul.mubr.f32.gmra.mrb[0].mxu0 %v2541
    %v2726 = vpop.f32.mrb[0].mxu0
    %v2727 = vadd.f32 0.0, %v2726
    %v2728 = vpop.f32.mrb[0].mxu0
    %2729 = vmatprep.mubr.f32.mxu0 0.0
    %2730 = vmatmul.mubr.f32.gmra.mrb[0].mxu0 %v2544
    %v2731 = vpop.f32.mrb[0].mxu0
    %v2732 = vadd.f32 0.0, %v2731
    %v2733 = vpop.f32.mrb[0].mxu0
    %2734 = vmatprep.mubr.f32.mxu0 0.0
    %2735 = vmatmul.mubr.f32.gmra.mrb[0].mxu0 %v2547
    %v2736 = vpop.f32.mrb[0].mxu0
    %v2737 = vadd.f32 0.0, %v2736
    %v2738 = vpop.f32.mrb[0].mxu0
    %2739 = vmatprep.mubr.f32.mxu0 0.0
    %2740 = vmatmul.mubr.f32.gmra.mrb[0].mxu0 %v2550
    %v2741 = vpop.f32.mrb[0].mxu0
    %v2742 = vadd.f32 0.0, %v2741
    %v2743 = vpop.f32.mrb[0].mxu0
    %2744 = vdwg.mxu0
    %v2745 = vmul.f32 %v2426, 0.125
    %v2746 = vmul.f32 %v2431, 0.125
    %v2747 = vmul.f32 %v2436, 0.125
    %v2748 = vmul.f32 %v2441, 0.125
    %v2749 = vmul.f32 %v2446, 0.125
    %v2750 = vmul.f32 %v2451, 0.125
    %v2751 = vmul.f32 %v2456, 0.125
    %v2752 = vmul.f32 %v2461, 0.125
    %v2753 = vmul.f32 %v2466, 0.125
    %v2754 = vmul.f32 %v2471, 0.125
    %v2755 = vmul.f32 %v2476, 0.125
    %v2756 = vmul.f32 %v2481, 0.125
    %v2757 = vmul.f32 %v2486, 0.125
    %v2758 = vmul.f32 %v2491, 0.125
    %v2759 = vmul.f32 %v2496, 0.125
    %v2760 = vmul.f32 %v2501, 0.125
    %v2761 = vmul.f32 %v2667, 0.125
    %v2762 = vmul.f32 %v2672, 0.125
    %v2763 = vmul.f32 %v2677, 0.125
    %v2764 = vmul.f32 %v2682, 0.125
    %v2765 = vmul.f32 %v2687, 0.125
    %v2766 = vmul.f32 %v2692, 0.125
    %v2767 = vmul.f32 %v2697, 0.125
    %v2768 = vmul.f32 %v2702, 0.125
    %v2769 = vmul.f32 %v2707, 0.125
    %v2770 = vmul.f32 %v2712, 0.125
    %v2771 = vmul.f32 %v2717, 0.125
    %v2772 = vmul.f32 %v2722, 0.125
    %v2773 = vmul.f32 %v2727, 0.125
    %v2774 = vmul.f32 %v2732, 0.125
    %v2775 = vmul.f32 %v2737, 0.125
    %v2776 = vmul.f32 %v2742, 0.125
    %2777 = vmax.xlane.f32.xlu0 %v2745
    %v2778 = vpop.xlane.xlu0 %2777
    %2779 = vmax.xlane.f32.xlu0 %v2746
    %v2780 = vpop.xlane.xlu0 %2779
    %2781 = vmax.xlane.f32.xlu0 %v2747
    %v2782 = vpop.xlane.xlu0 %2781
    %2783 = vmax.xlane.f32.xlu0 %v2748
    %v2784 = vpop.xlane.xlu0 %2783
    %2785 = vmax.xlane.f32.xlu0 %v2749
    %v2786 = vpop.xlane.xlu0 %2785
    %2787 = vmax.xlane.f32.xlu0 %v2750
    %v2788 = vpop.xlane.xlu0 %2787
    %2789 = vmax.xlane.f32.xlu0 %v2751
    %v2790 = vpop.xlane.xlu0 %2789
    %2791 = vmax.xlane.f32.xlu0 %v2752
    %v2792 = vpop.xlane.xlu0 %2791
    %2793 = vmax.xlane.f32.xlu0 %v2753
    %v2794 = vpop.xlane.xlu0 %2793
    %2795 = vmax.xlane.f32.xlu0 %v2754
    %v2796 = vpop.xlane.xlu0 %2795
    %2797 = vmax.xlane.f32.xlu0 %v2755
    %v2798 = vpop.xlane.xlu0 %2797
    %2799 = vmax.xlane.f32.xlu0 %v2756
    %v2800 = vpop.xlane.xlu0 %2799
    %2801 = vmax.xlane.f32.xlu0 %v2757
    %v2802 = vpop.xlane.xlu0 %2801
    %2803 = vmax.xlane.f32.xlu0 %v2758
    %v2804 = vpop.xlane.xlu0 %2803
    %2805 = vmax.xlane.f32.xlu0 %v2759
    %v2806 = vpop.xlane.xlu0 %2805
    %2807 = vmax.xlane.f32.xlu0 %v2760
    %v2808 = vpop.xlane.xlu0 %2807
    %2809 = vmax.xlane.f32.xlu0 %v2761
    %v2810 = vpop.xlane.xlu0 %2809
    %2811 = vmax.xlane.f32.xlu0 %v2762
    %v2812 = vpop.xlane.xlu0 %2811
    %2813 = vmax.xlane.f32.xlu0 %v2763
    %v2814 = vpop.xlane.xlu0 %2813
    %2815 = vmax.xlane.f32.xlu0 %v2764
    %v2816 = vpop.xlane.xlu0 %2815
    %2817 = vmax.xlane.f32.xlu0 %v2765
    %v2818 = vpop.xlane.xlu0 %2817
    %2819 = vmax.xlane.f32.xlu0 %v2766
    %v2820 = vpop.xlane.xlu0 %2819
    %2821 = vmax.xlane.f32.xlu0 %v2767
    %v2822 = vpop.xlane.xlu0 %2821
    %2823 = vmax.xlane.f32.xlu0 %v2768
    %v2824 = vpop.xlane.xlu0 %2823
    %2825 = vmax.xlane.f32.xlu0 %v2769
    %v2826 = vpop.xlane.xlu0 %2825
    %2827 = vmax.xlane.f32.xlu0 %v2770
    %v2828 = vpop.xlane.xlu0 %2827
    %2829 = vmax.xlane.f32.xlu0 %v2771
    %v2830 = vpop.xlane.xlu0 %2829
    %2831 = vmax.xlane.f32.xlu0 %v2772
    %v2832 = vpop.xlane.xlu0 %2831
    %2833 = vmax.xlane.f32.xlu0 %v2773
    %v2834 = vpop.xlane.xlu0 %2833
    %2835 = vmax.xlane.f32.xlu0 %v2774
    %v2836 = vpop.xlane.xlu0 %2835
    %2837 = vmax.xlane.f32.xlu0 %v2775
    %v2838 = vpop.xlane.xlu0 %2837
    %2839 = vmax.xlane.f32.xlu0 %v2776
    %v2840 = vpop.xlane.xlu0 %2839
    %v2841 = vsub.f32 %v2745, %v2778
    %v2842 = vsub.f32 %v2746, %v2780
    %v2843 = vsub.f32 %v2747, %v2782
    %v2844 = vsub.f32 %v2748, %v2784
    %v2845 = vsub.f32 %v2749, %v2786
    %v2846 = vsub.f32 %v2750, %v2788
    %v2847 = vsub.f32 %v2751, %v2790
    %v2848 = vsub.f32 %v2752, %v2792
    %v2849 = vsub.f32 %v2753, %v2794
    %v2850 = vsub.f32 %v2754, %v2796
    %v2851 = vsub.f32 %v2755, %v2798
    %v2852 = vsub.f32 %v2756, %v2800
    %v2853 = vsub.f32 %v2757, %v2802
    %v2854 = vsub.f32 %v2758, %v2804
    %v2855 = vsub.f32 %v2759, %v2806
    %v2856 = vsub.f32 %v2760, %v2808
    %v2857 = vsub.f32 %v2761, %v2810
    %v2858 = vsub.f32 %v2762, %v2812
    %v2859 = vsub.f32 %v2763, %v2814
    %v2860 = vsub.f32 %v2764, %v2816
    %v2861 = vsub.f32 %v2765, %v2818
    %v2862 = vsub.f32 %v2766, %v2820
    %v2863 = vsub.f32 %v2767, %v2822
    %v2864 = vsub.f32 %v2768, %v2824
    %v2865 = vsub.f32 %v2769, %v2826
    %v2866 = vsub.f32 %v2770, %v2828
    %v2867 = vsub.f32 %v2771, %v2830
    %v2868 = vsub.f32 %v2772, %v2832
    %v2869 = vsub.f32 %v2773, %v2834
    %v2870 = vsub.f32 %v2774, %v2836
    %v2871 = vsub.f32 %v2775, %v2838
    %v2872 = vsub.f32 %v2776, %v2840
    %v2873 = vmul.f32 %v2841, 1.442695
    %v2874 = vpow.pop %v2873
    %v2875 = vmul.f32 %v2842, 1.442695
    %v2876 = vpow.pop %v2875
    %v2877 = vmul.f32 %v2843, 1.442695
    %v2878 = vpow.pop %v2877
    %v2879 = vmul.f32 %v2844, 1.442695
    %v2880 = vpow.pop %v2879
    %v2881 = vmul.f32 %v2845, 1.442695
    %v2882 = vpow.pop %v2881
    %v2883 = vmul.f32 %v2846, 1.442695
    %v2884 = vpow.pop %v2883
    %v2885 = vmul.f32 %v2847, 1.442695
    %v2886 = vpow.pop %v2885
    %v2887 = vmul.f32 %v2848, 1.442695
    %v2888 = vpow.pop %v2887
    %v2889 = vmul.f32 %v2849, 1.442695
    %v2890 = vpow.pop %v2889
    %v2891 = vmul.f32 %v2850, 1.442695
    %v2892 = vpow.pop %v2891
    %v2893 = vmul.f32 %v2851, 1.442695
    %v2894 = vpow.pop %v2893
    %v2895 = vmul.f32 %v2852, 1.442695
    %v2896 = vpow.pop %v2895
    %v2897 = vmul.f32 %v2853, 1.442695
    %v2898 = vpow.pop %v2897
    %v2899 = vmul.f32 %v2854, 1.442695
    %v2900 = vpow.pop %v2899
    %v2901 = vmul.f32 %v2855, 1.442695
    %v2902 = vpow.pop %v2901
    %v2903 = vmul.f32 %v2856, 1.442695
    %v2904 = vpow.pop %v2903
    %v2905 = vmul.f32 %v2857, 1.442695
    %v2906 = vpow.pop %v2905
    %v2907 = vmul.f32 %v2858, 1.442695
    %v2908 = vpow.pop %v2907
    %v2909 = vmul.f32 %v2859, 1.442695
    %v2910 = vpow.pop %v2909
    %v2911 = vmul.f32 %v2860, 1.442695
    %v2912 = vpow.pop %v2911
    %v2913 = vmul.f32 %v2861, 1.442695
    %v2914 = vpow.pop %v2913
    %v2915 = vmul.f32 %v2862, 1.442695
    %v2916 = vpow.pop %v2915
    %v2917 = vmul.f32 %v2863, 1.442695
    %v2918 = vpow.pop %v2917
    %v2919 = vmul.f32 %v2864, 1.442695
    %v2920 = vpow.pop %v2919
    %v2921 = vmul.f32 %v2865, 1.442695
    %v2922 = vpow.pop %v2921
    %v2923 = vmul.f32 %v2866, 1.442695
    %v2924 = vpow.pop %v2923
    %v2925 = vmul.f32 %v2867, 1.442695
    %v2926 = vpow.pop %v2925
    %v2927 = vmul.f32 %v2868, 1.442695
    %v2928 = vpow.pop %v2927
    %v2929 = vmul.f32 %v2869, 1.442695
    %v2930 = vpow.pop %v2929
    %v2931 = vmul.f32 %v2870, 1.442695
    %v2932 = vpow.pop %v2931
    %v2933 = vmul.f32 %v2871, 1.442695
    %v2934 = vpow.pop %v2933
    %v2935 = vmul.f32 %v2872, 1.442695
    %v2936 = vpow.pop %v2935
    %2937 = vadd.xlane.f32.xlu0 %v2874
    %v2938 = vpop.xlane.xlu0 %2937
    %2939 = vadd.xlane.f32.xlu0 %v2876
    %v2940 = vpop.xlane.xlu0 %2939
    %2941 = vadd.xlane.f32.xlu0 %v2878
    %v2942 = vpop.xlane.xlu0 %2941
    %2943 = vadd.xlane.f32.xlu0 %v2880
    %v2944 = vpop.xlane.xlu0 %2943
    %2945 = vadd.xlane.f32.xlu0 %v2882
    %v2946 = vpop.xlane.xlu0 %2945
    %2947 = vadd.xlane.f32.xlu0 %v2884
    %v2948 = vpop.xlane.xlu0 %2947
    %2949 = vadd.xlane.f32.xlu0 %v2886
    %v2950 = vpop.xlane.xlu0 %2949
    %2951 = vadd.xlane.f32.xlu0 %v2888
    %v2952 = vpop.xlane.xlu0 %2951
    %2953 = vadd.xlane.f32.xlu0 %v2890
    %v2954 = vpop.xlane.xlu0 %2953
    %2955 = vadd.xlane.f32.xlu0 %v2892
    %v2956 = vpop.xlane.xlu0 %2955
    %2957 = vadd.xlane.f32.xlu0 %v2894
    %v2958 = vpop.xlane.xlu0 %2957
    %2959 = vadd.xlane.f32.xlu0 %v2896
    %v2960 = vpop.xlane.xlu0 %2959
    %2961 = vadd.xlane.f32.xlu0 %v2898
    %v2962 = vpop.xlane.xlu0 %2961
    %2963 = vadd.xlane.f32.xlu0 %v2900
    %v2964 = vpop.xlane.xlu0 %2963
    %2965 = vadd.xlane.f32.xlu0 %v2902
    %v2966 = vpop.xlane.xlu0 %2965
    %2967 = vadd.xlane.f32.xlu0 %v2904
    %v2968 = vpop.xlane.xlu0 %2967
    %2969 = vadd.xlane.f32.xlu0 %v2906
    %v2970 = vpop.xlane.xlu0 %2969
    %2971 = vadd.xlane.f32.xlu0 %v2908
    %v2972 = vpop.xlane.xlu0 %2971
    %2973 = vadd.xlane.f32.xlu0 %v2910
    %v2974 = vpop.xlane.xlu0 %2973
    %2975 = vadd.xlane.f32.xlu0 %v2912
    %v2976 = vpop.xlane.xlu0 %2975
    %2977 = vadd.xlane.f32.xlu0 %v2914
    %v2978 = vpop.xlane.xlu0 %2977
    %2979 = vadd.xlane.f32.xlu0 %v2916
    %v2980 = vpop.xlane.xlu0 %2979
    %2981 = vadd.xlane.f32.xlu0 %v2918
    %v2982 = vpop.xlane.xlu0 %2981
    %2983 = vadd.xlane.f32.xlu0 %v2920
    %v2984 = vpop.xlane.xlu0 %2983
    %2985 = vadd.xlane.f32.xlu0 %v2922
    %v2986 = vpop.xlane.xlu0 %2985
    %2987 = vadd.xlane.f32.xlu0 %v2924
    %v2988 = vpop.xlane.xlu0 %2987
    %2989 = vadd.xlane.f32.xlu0 %v2926
    %v2990 = vpop.xlane.xlu0 %2989
    %2991 = vadd.xlane.f32.xlu0 %v2928
    %v2992 = vpop.xlane.xlu0 %2991
    %2993 = vadd.xlane.f32.xlu0 %v2930
    %v2994 = vpop.xlane.xlu0 %2993
    %2995 = vadd.xlane.f32.xlu0 %v2932
    %v2996 = vpop.xlane.xlu0 %2995
    %2997 = vadd.xlane.f32.xlu0 %v2934
    %v2998 = vpop.xlane.xlu0 %2997
    %2999 = vadd.xlane.f32.xlu0 %v2936
    %v3000 = vpop.xlane.xlu0 %2999
    %v3001 = vrcp.pop %v2938
    %v3002 = vrcp.pop %v2940
    %v3003 = vrcp.pop %v2942
    %v3004 = vrcp.pop %v2944
    %v3005 = vrcp.pop %v2946
    %v3006 = vrcp.pop %v2948
    %v3007 = vrcp.pop %v2950
    %v3008 = vrcp.pop %v2952
    %v3009 = vrcp.pop %v2954
    %v3010 = vrcp.pop %v2956
    %v3011 = vrcp.pop %v2958
    %v3012 = vrcp.pop %v2960
    %v3013 = vrcp.pop %v2962
    %v3014 = vrcp.pop %v2964
    %v3015 = vrcp.pop %v2966
    %v3016 = vrcp.pop %v2968
    %v3017 = vrcp.pop %v2970
    %v3018 = vrcp.pop %v2972
    %v3019 = vrcp.pop %v2974
    %v3020 = vrcp.pop %v2976
    %v3021 = vrcp.pop %v2978
    %v3022 = vrcp.pop %v2980
    %v3023 = vrcp.pop %v2982
    %v3024 = vrcp.pop %v2984
    %v3025 = vrcp.pop %v2986
    %v3026 = vrcp.pop %v2988
    %v3027 = vrcp.pop %v2990
    %v3028 = vrcp.pop %v2992
    %v3029 = vrcp.pop %v2994
    %v3030 = vrcp.pop %v2996
    %v3031 = vrcp.pop %v2998
    %v3032 = vrcp.pop %v3000
    %v3033 = vmul.f32 %v2874, %v3001
    %v3034 = vmul.f32 %v2876, %v3002
    %v3035 = vmul.f32 %v2878, %v3003
    %v3036 = vmul.f32 %v2880, %v3004
    %v3037 = vmul.f32 %v2882, %v3005
    %v3038 = vmul.f32 %v2884, %v3006
    %v3039 = vmul.f32 %v2886, %v3007
    %v3040 = vmul.f32 %v2888, %v3008
    %v3041 = vmul.f32 %v2890, %v3009
    %v3042 = vmul.f32 %v2892, %v3010
    %v3043 = vmul.f32 %v2894, %v3011
    %v3044 = vmul.f32 %v2896, %v3012
    %v3045 = vmul.f32 %v2898, %v3013
    %v3046 = vmul.f32 %v2900, %v3014
    %v3047 = vmul.f32 %v2902, %v3015
    %v3048 = vmul.f32 %v2904, %v3016
    %v3049 = vmul.f32 %v2906, %v3017
    %v3050 = vmul.f32 %v2908, %v3018
    %v3051 = vmul.f32 %v2910, %v3019
    %v3052 = vmul.f32 %v2912, %v3020
    %v3053 = vmul.f32 %v2914, %v3021
    %v3054 = vmul.f32 %v2916, %v3022
    %v3055 = vmul.f32 %v2918, %v3023
    %v3056 = vmul.f32 %v2920, %v3024
    %v3057 = vmul.f32 %v2922, %v3025
    %v3058 = vmul.f32 %v2924, %v3026
    %v3059 = vmul.f32 %v2926, %v3027
    %v3060 = vmul.f32 %v2928, %v3028
    %v3061 = vmul.f32 %v2930, %v3029
    %v3062 = vmul.f32 %v2932, %v3030
    %v3063 = vmul.f32 %v2934, %v3031
    %v3064 = vmul.f32 %v2936, %v3032
    %3065 = vmatprep.subr.mxu0 0.0
    %3066 = vmatpush1.msra.mxu0 %v1815
    %3067 = vmatprep.subr.mxu0 0.0
    %3068 = vmatpush1.msra.mxu0 %v1821
    %3069 = vmatprep.subr.mxu0 0.0
    %3070 = vmatpush1.msra.mxu0 %v1827
    %3071 = vmatprep.subr.mxu0 0.0
    %3072 = vmatpush1.msra.mxu0 %v1833
    %3073 = vmatprep.subr.mxu0 0.0
    %3074 = vmatpush1.msra.mxu0 %v1839
    %3075 = vmatprep.subr.mxu0 0.0
    %3076 = vmatpush1.msra.mxu0 %v1845
    %3077 = vmatprep.subr.mxu0 0.0
    %3078 = vmatpush1.msra.mxu0 %v1851
    %3079 = vmatprep.subr.mxu0 0.0
    %3080 = vmatpush1.msra.mxu0 %v1857
    %3081 = vmatprep.subr.mxu0 0.0
    %3082 = vmatpush1.msra.mxu0 %v1863
    %3083 = vmatprep.subr.mxu0 0.0
    %3084 = vmatpush1.msra.mxu0 %v1869
    %3085 = vmatprep.subr.mxu0 0.0
    %3086 = vmatpush1.msra.mxu0 %v1875
    %3087 = vmatprep.subr.mxu0 0.0
    %3088 = vmatpush1.msra.mxu0 %v1881
    %3089 = vmatprep.subr.mxu0 0.0
    %3090 = vmatpush1.msra.mxu0 %v1887
    %3091 = vmatprep.subr.mxu0 0.0
    %3092 = vmatpush1.msra.mxu0 %v1893
    %3093 = vmatprep.subr.mxu0 0.0
    %3094 = vmatpush1.msra.mxu0 %v1899
    %3095 = vmatprep.subr.mxu0 0.0
    %3096 = vmatpush1.msra.mxu0 %v1905
    %3097 = vmatprep.subr.mxu0 0.0
    %3098 = vmatpush1.msra.mxu0 0.0
    %3099 = vmatprep.subr.mxu0 0.0
    %3100 = vmatpush1.msra.mxu0 0.0
    %3101 = vmatprep.subr.mxu0 0.0
    %3102 = vmatpush1.msra.mxu0 0.0
    %3103 = vmatprep.subr.mxu0 0.0
    %3104 = vmatpush1.msra.mxu0 0.0
    %3105 = vmatprep.subr.mxu0 0.0
    %3106 = vmatpush1.msra.mxu0 0.0
    %3107 = vmatprep.subr.mxu0 0.0
    %3108 = vmatpush1.msra.mxu0 0.0
    %3109 = vmatprep.subr.mxu0 0.0
    %3110 = vmatpush1.msra.mxu0 0.0
    %3111 = vmatprep.subr.mxu0 0.0
    %3112 = vmatpush1.msra.mxu0 0.0
    %3113 = vmatprep.subr.mxu0 0.0
    %3114 = vmatpush1.msra.mxu0 0.0
    %3115 = vmatprep.subr.mxu0 0.0
    %3116 = vmatpush1.msra.mxu0 0.0
    %3117 = vmatprep.subr.mxu0 0.0
    %3118 = vmatpush1.msra.mxu0 0.0
    %3119 = vmatprep.subr.mxu0 0.0
    %3120 = vmatpush1.msra.mxu0 0.0
    %3121 = vmatprep.subr.mxu0 0.0
    %3122 = vmatpush1.msra.mxu0 0.0
    %3123 = vmatprep.subr.mxu0 0.0
    %3124 = vmatpush1.msra.mxu0 0.0
    %3125 = vmatprep.subr.mxu0 0.0
    %3126 = vmatpush1.msra.mxu0 0.0
    %3127 = vmatprep.subr.mxu0 0.0
    %3128 = vmatpush1.msra.mxu0 0.0
    %3129 = vmatprep.mubr.f32.mxu0 0.0
    %3130 = vmatmul.mubr.f32.gmra.mrb[0].mxu0 %v3033
    %v3131 = vpop.f32.mrb[0].mxu0
    %v3132 = vadd.f32 0.0, %v3131
    %v3133 = vpop.f32.mrb[0].mxu0
    %3134 = vmatprep.mubr.f32.mxu0 0.0
    %3135 = vmatmul.mubr.f32.gmra.mrb[0].mxu0 %v3034
    %v3136 = vpop.f32.mrb[0].mxu0
    %v3137 = vadd.f32 0.0, %v3136
    %v3138 = vpop.f32.mrb[0].mxu0
    %3139 = vmatprep.mubr.f32.mxu0 0.0
    %3140 = vmatmul.mubr.f32.gmra.mrb[0].mxu0 %v3035
    %v3141 = vpop.f32.mrb[0].mxu0
    %v3142 = vadd.f32 0.0, %v3141
    %v3143 = vpop.f32.mrb[0].mxu0
    %3144 = vmatprep.mubr.f32.mxu0 0.0
    %3145 = vmatmul.mubr.f32.gmra.mrb[0].mxu0 %v3036
    %v3146 = vpop.f32.mrb[0].mxu0
    %v3147 = vadd.f32 0.0, %v3146
    %v3148 = vpop.f32.mrb[0].mxu0
    %3149 = vmatprep.mubr.f32.mxu0 0.0
    %3150 = vmatmul.mubr.f32.gmra.mrb[0].mxu0 %v3037
    %v3151 = vpop.f32.mrb[0].mxu0
    %v3152 = vadd.f32 0.0, %v3151
    %v3153 = vpop.f32.mrb[0].mxu0
    %3154 = vmatprep.mubr.f32.mxu0 0.0
    %3155 = vmatmul.mubr.f32.gmra.mrb[0].mxu0 %v3038
    %v3156 = vpop.f32.mrb[0].mxu0
    %v3157 = vadd.f32 0.0, %v3156
    %v3158 = vpop.f32.mrb[0].mxu0
    %3159 = vmatprep.mubr.f32.mxu0 0.0
    %3160 = vmatmul.mubr.f32.gmra.mrb[0].mxu0 %v3039
    %v3161 = vpop.f32.mrb[0].mxu0
    %v3162 = vadd.f32 0.0, %v3161
    %v3163 = vpop.f32.mrb[0].mxu0
    %3164 = vmatprep.mubr.f32.mxu0 0.0
    %3165 = vmatmul.mubr.f32.gmra.mrb[0].mxu0 %v3040
    %v3166 = vpop.f32.mrb[0].mxu0
    %v3167 = vadd.f32 0.0, %v3166
    %v3168 = vpop.f32.mrb[0].mxu0
    %3169 = vmatprep.mubr.f32.mxu0 0.0
    %3170 = vmatmul.mubr.f32.gmra.mrb[0].mxu0 %v3041
    %v3171 = vpop.f32.mrb[0].mxu0
    %v3172 = vadd.f32 0.0, %v3171
    %v3173 = vpop.f32.mrb[0].mxu0
    %3174 = vmatprep.mubr.f32.mxu0 0.0
    %3175 = vmatmul.mubr.f32.gmra.mrb[0].mxu0 %v3042
    %v3176 = vpop.f32.mrb[0].mxu0
    %v3177 = vadd.f32 0.0, %v3176
    %v3178 = vpop.f32.mrb[0].mxu0
    %3179 = vmatprep.mubr.f32.mxu0 0.0
    %3180 = vmatmul.mubr.f32.gmra.mrb[0].mxu0 %v3043
    %v3181 = vpop.f32.mrb[0].mxu0
    %v3182 = vadd.f32 0.0, %v3181
    %v3183 = vpop.f32.mrb[0].mxu0
    %3184 = vmatprep.mubr.f32.mxu0 0.0
    %3185 = vmatmul.mubr.f32.gmra.mrb[0].mxu0 %v3044
    %v3186 = vpop.f32.mrb[0].mxu0
    %v3187 = vadd.f32 0.0, %v3186
    %v3188 = vpop.f32.mrb[0].mxu0
    %3189 = vmatprep.mubr.f32.mxu0 0.0
    %3190 = vmatmul.mubr.f32.gmra.mrb[0].mxu0 %v3045
    %v3191 = vpop.f32.mrb[0].mxu0
    %v3192 = vadd.f32 0.0, %v3191
    %v3193 = vpop.f32.mrb[0].mxu0
    %3194 = vmatprep.mubr.f32.mxu0 0.0
    %3195 = vmatmul.mubr.f32.gmra.mrb[0].mxu0 %v3046
    %v3196 = vpop.f32.mrb[0].mxu0
    %v3197 = vadd.f32 0.0, %v3196
    %v3198 = vpop.f32.mrb[0].mxu0
    %3199 = vmatprep.mubr.f32.mxu0 0.0
    %3200 = vmatmul.mubr.f32.gmra.mrb[0].mxu0 %v3047
    %v3201 = vpop.f32.mrb[0].mxu0
    %v3202 = vadd.f32 0.0, %v3201
    %v3203 = vpop.f32.mrb[0].mxu0
    %3204 = vmatprep.mubr.f32.mxu0 0.0
    %3205 = vmatmul.mubr.f32.gmra.mrb[0].mxu0 %v3048
    %v3206 = vpop.f32.mrb[0].mxu0
    %v3207 = vadd.f32 0.0, %v3206
    %v3208 = vpop.f32.mrb[0].mxu0
    %3209 = vdwg.mxu0
    %3210 = vmatprep.subr.mxu0 0.0
    %3211 = vmatpush1.msra.mxu0 %v1911
    %3212 = vmatprep.subr.mxu0 0.0
    %3213 = vmatpush1.msra.mxu0 %v1917
    %3214 = vmatprep.subr.mxu0 0.0
    %3215 = vmatpush1.msra.mxu0 %v1923
    %3216 = vmatprep.subr.mxu0 0.0
    %3217 = vmatpush1.msra.mxu0 %v1929
    %3218 = vmatprep.subr.mxu0 0.0
    %3219 = vmatpush1.msra.mxu0 %v1935
    %3220 = vmatprep.subr.mxu0 0.0
    %3221 = vmatpush1.msra.mxu0 %v1941
    %3222 = vmatprep.subr.mxu0 0.0
    %3223 = vmatpush1.msra.mxu0 %v1947
    %3224 = vmatprep.subr.mxu0 0.0
    %3225 = vmatpush1.msra.mxu0 %v1953
    %3226 = vmatprep.subr.mxu0 0.0
    %3227 = vmatpush1.msra.mxu0 %v1959
    %3228 = vmatprep.subr.mxu0 0.0
    %3229 = vmatpush1.msra.mxu0 %v1965
    %3230 = vmatprep.subr.mxu0 0.0
    %3231 = vmatpush1.msra.mxu0 %v1971
    %3232 = vmatprep.subr.mxu0 0.0
    %3233 = vmatpush1.msra.mxu0 %v1977
    %3234 = vmatprep.subr.mxu0 0.0
    %3235 = vmatpush1.msra.mxu0 %v1983
    %3236 = vmatprep.subr.mxu0 0.0
    %3237 = vmatpush1.msra.mxu0 %v1989
    %3238 = vmatprep.subr.mxu0 0.0
    %3239 = vmatpush1.msra.mxu0 %v1995
    %3240 = vmatprep.subr.mxu0 0.0
    %3241 = vmatpush1.msra.mxu0 %v2001
    %3242 = vmatprep.subr.mxu0 0.0
    %3243 = vmatpush1.msra.mxu0 0.0
    %3244 = vmatprep.subr.mxu0 0.0
    %3245 = vmatpush1.msra.mxu0 0.0
    %3246 = vmatprep.subr.mxu0 0.0
    %3247 = vmatpush1.msra.mxu0 0.0
    %3248 = vmatprep.subr.mxu0 0.0
    %3249 = vmatpush1.msra.mxu0 0.0
    %3250 = vmatprep.subr.mxu0 0.0
    %3251 = vmatpush1.msra.mxu0 0.0
    %3252 = vmatprep.subr.mxu0 0.0
    %3253 = vmatpush1.msra.mxu0 0.0
    %3254 = vmatprep.subr.mxu0 0.0
    %3255 = vmatpush1.msra.mxu0 0.0
    %3256 = vmatprep.subr.mxu0 0.0
    %3257 = vmatpush1.msra.mxu0 0.0
    %3258 = vmatprep.subr.mxu0 0.0
    %3259 = vmatpush1.msra.mxu0 0.0
    %3260 = vmatprep.subr.mxu0 0.0
    %3261 = vmatpush1.msra.mxu0 0.0
    %3262 = vmatprep.subr.mxu0 0.0
    %3263 = vmatpush1.msra.mxu0 0.0
    %3264 = vmatprep.subr.mxu0 0.0
    %3265 = vmatpush1.msra.mxu0 0.0
    %3266 = vmatprep.subr.mxu0 0.0
    %3267 = vmatpush1.msra.mxu0 0.0
    %3268 = vmatprep.subr.mxu0 0.0
    %3269 = vmatpush1.msra.mxu0 0.0
    %3270 = vmatprep.subr.mxu0 0.0
    %3271 = vmatpush1.msra.mxu0 0.0
    %3272 = vmatprep.subr.mxu0 0.0
    %3273 = vmatpush1.msra.mxu0 0.0
    %3274 = vmatprep.mubr.f32.mxu0 0.0
    %3275 = vmatmul.mubr.f32.gmra.mrb[0].mxu0 %v3049
    %v3276 = vpop.f32.mrb[0].mxu0
    %v3277 = vadd.f32 0.0, %v3276
    %v3278 = vpop.f32.mrb[0].mxu0
    %3279 = vmatprep.mubr.f32.mxu0 0.0
    %3280 = vmatmul.mubr.f32.gmra.mrb[0].mxu0 %v3050
    %v3281 = vpop.f32.mrb[0].mxu0
    %v3282 = vadd.f32 0.0, %v3281
    %v3283 = vpop.f32.mrb[0].mxu0
    %3284 = vmatprep.mubr.f32.mxu0 0.0
    %3285 = vmatmul.mubr.f32.gmra.mrb[0].mxu0 %v3051
    %v3286 = vpop.f32.mrb[0].mxu0
    %v3287 = vadd.f32 0.0, %v3286
    %v3288 = vpop.f32.mrb[0].mxu0
    %3289 = vmatprep.mubr.f32.mxu0 0.0
    %3290 = vmatmul.mubr.f32.gmra.mrb[0].mxu0 %v3052
    %v3291 = vpop.f32.mrb[0].mxu0
    %v3292 = vadd.f32 0.0, %v3291
    %v3293 = vpop.f32.mrb[0].mxu0
    %3294 = vmatprep.mubr.f32.mxu0 0.0
    %3295 = vmatmul.mubr.f32.gmra.mrb[0].mxu0 %v3053
    %v3296 = vpop.f32.mrb[0].mxu0
    %v3297 = vadd.f32 0.0, %v3296
    %v3298 = vpop.f32.mrb[0].mxu0
    %3299 = vmatprep.mubr.f32.mxu0 0.0
    %3300 = vmatmul.mubr.f32.gmra.mrb[0].mxu0 %v3054
    %v3301 = vpop.f32.mrb[0].mxu0
    %v3302 = vadd.f32 0.0, %v3301
    %v3303 = vpop.f32.mrb[0].mxu0
    %3304 = vmatprep.mubr.f32.mxu0 0.0
    %3305 = vmatmul.mubr.f32.gmra.mrb[0].mxu0 %v3055
    %v3306 = vpop.f32.mrb[0].mxu0
    %v3307 = vadd.f32 0.0, %v3306
    %v3308 = vpop.f32.mrb[0].mxu0
    %3309 = vmatprep.mubr.f32.mxu0 0.0
    %3310 = vmatmul.mubr.f32.gmra.mrb[0].mxu0 %v3056
    %v3311 = vpop.f32.mrb[0].mxu0
    %v3312 = vadd.f32 0.0, %v3311
    %v3313 = vpop.f32.mrb[0].mxu0
    %3314 = vmatprep.mubr.f32.mxu0 0.0
    %3315 = vmatmul.mubr.f32.gmra.mrb[0].mxu0 %v3057
    %v3316 = vpop.f32.mrb[0].mxu0
    %v3317 = vadd.f32 0.0, %v3316
    %v3318 = vpop.f32.mrb[0].mxu0
    %3319 = vmatprep.mubr.f32.mxu0 0.0
    %3320 = vmatmul.mubr.f32.gmra.mrb[0].mxu0 %v3058
    %v3321 = vpop.f32.mrb[0].mxu0
    %v3322 = vadd.f32 0.0, %v3321
    %v3323 = vpop.f32.mrb[0].mxu0
    %3324 = vmatprep.mubr.f32.mxu0 0.0
    %3325 = vmatmul.mubr.f32.gmra.mrb[0].mxu0 %v3059
    %v3326 = vpop.f32.mrb[0].mxu0
    %v3327 = vadd.f32 0.0, %v3326
    %v3328 = vpop.f32.mrb[0].mxu0
    %3329 = vmatprep.mubr.f32.mxu0 0.0
    %3330 = vmatmul.mubr.f32.gmra.mrb[0].mxu0 %v3060
    %v3331 = vpop.f32.mrb[0].mxu0
    %v3332 = vadd.f32 0.0, %v3331
    %v3333 = vpop.f32.mrb[0].mxu0
    %3334 = vmatprep.mubr.f32.mxu0 0.0
    %3335 = vmatmul.mubr.f32.gmra.mrb[0].mxu0 %v3061
    %v3336 = vpop.f32.mrb[0].mxu0
    %v3337 = vadd.f32 0.0, %v3336
    %v3338 = vpop.f32.mrb[0].mxu0
    %3339 = vmatprep.mubr.f32.mxu0 0.0
    %3340 = vmatmul.mubr.f32.gmra.mrb[0].mxu0 %v3062
    %v3341 = vpop.f32.mrb[0].mxu0
    %v3342 = vadd.f32 0.0, %v3341
    %v3343 = vpop.f32.mrb[0].mxu0
    %3344 = vmatprep.mubr.f32.mxu0 0.0
    %3345 = vmatmul.mubr.f32.gmra.mrb[0].mxu0 %v3063
    %v3346 = vpop.f32.mrb[0].mxu0
    %v3347 = vadd.f32 0.0, %v3346
    %v3348 = vpop.f32.mrb[0].mxu0
    %3349 = vmatprep.mubr.f32.mxu0 0.0
    %3350 = vmatmul.mubr.f32.gmra.mrb[0].mxu0 %v3064
    %v3351 = vpop.f32.mrb[0].mxu0
    %v3352 = vadd.f32 0.0, %v3351
    %v3353 = vpop.f32.mrb[0].mxu0
    %3354 = vdwg.mxu0
    %3355 = vrot.lane.b32.xlu0 %v787, 64
    %v3356 = vpop.permute.xlu0 %3355
    %3357 = vrot.lane.b32.xlu0 %v793, 64
    %v3358 = vpop.permute.xlu0 %3357
    %3359 = vrot.lane.b32.xlu0 %v799, 64
    %v3360 = vpop.permute.xlu0 %3359
    %3361 = vrot.lane.b32.xlu0 %v805, 64
    %v3362 = vpop.permute.xlu0 %3361
    %3363 = vrot.lane.b32.xlu0 %v811, 64
    %v3364 = vpop.permute.xlu0 %3363
    %3365 = vrot.lane.b32.xlu0 %v817, 64
    %v3366 = vpop.permute.xlu0 %3365
    %3367 = vrot.lane.b32.xlu0 %v823, 64
    %v3368 = vpop.permute.xlu0 %3367
    %3369 = vrot.lane.b32.xlu0 %v829, 64
    %v3370 = vpop.permute.xlu0 %3369
    %3371 = vrot.lane.b32.xlu0 %v835, 64
    %v3372 = vpop.permute.xlu0 %3371
    %3373 = vrot.lane.b32.xlu0 %v841, 64
    %v3374 = vpop.permute.xlu0 %3373
    %3375 = vrot.lane.b32.xlu0 %v847, 64
    %v3376 = vpop.permute.xlu0 %3375
    %3377 = vrot.lane.b32.xlu0 %v853, 64
    %v3378 = vpop.permute.xlu0 %3377
    %3379 = vrot.lane.b32.xlu0 %v859, 64
    %v3380 = vpop.permute.xlu0 %3379
    %3381 = vrot.lane.b32.xlu0 %v865, 64
    %v3382 = vpop.permute.xlu0 %3381
    %3383 = vrot.lane.b32.xlu0 %v871, 64
    %v3384 = vpop.permute.xlu0 %3383
    %3385 = vrot.lane.b32.xlu0 %v877, 64
    %v3386 = vpop.permute.xlu0 %3385
    %3387 = vrot.lane.b32.xlu0 %v1301, 64
    %v3388 = vpop.permute.xlu0 %3387
    %3389 = vrot.lane.b32.xlu0 %v1307, 64
    %v3390 = vpop.permute.xlu0 %3389
    %3391 = vrot.lane.b32.xlu0 %v1313, 64
    %v3392 = vpop.permute.xlu0 %3391
    %3393 = vrot.lane.b32.xlu0 %v1319, 64
    %v3394 = vpop.permute.xlu0 %3393
    %3395 = vrot.lane.b32.xlu0 %v1325, 64
    %v3396 = vpop.permute.xlu0 %3395
    %3397 = vrot.lane.b32.xlu0 %v1331, 64
    %v3398 = vpop.permute.xlu0 %3397
    %3399 = vrot.lane.b32.xlu0 %v1337, 64
    %v3400 = vpop.permute.xlu0 %3399
    %3401 = vrot.lane.b32.xlu0 %v1343, 64
    %v3402 = vpop.permute.xlu0 %3401
    %3403 = vrot.lane.b32.xlu0 %v1349, 64
    %v3404 = vpop.permute.xlu0 %3403
    %3405 = vrot.lane.b32.xlu0 %v1355, 64
    %v3406 = vpop.permute.xlu0 %3405
    %3407 = vrot.lane.b32.xlu0 %v1361, 64
    %v3408 = vpop.permute.xlu0 %3407
    %3409 = vrot.lane.b32.xlu0 %v1367, 64
    %v3410 = vpop.permute.xlu0 %3409
    %3411 = vrot.lane.b32.xlu0 %v1373, 64
    %v3412 = vpop.permute.xlu0 %3411
    %3413 = vrot.lane.b32.xlu0 %v1379, 64
    %v3414 = vpop.permute.xlu0 %3413
    %3415 = vrot.lane.b32.xlu0 %v1385, 64
    %v3416 = vpop.permute.xlu0 %3415
    %3417 = vrot.lane.b32.xlu0 %v1391, 64
    %v3418 = vpop.permute.xlu0 %3417
    %v3419 = vsel %vm2262, %v3356, 0
    %v3421 = vsel %vm2262, %v3358, 0
    %v3423 = vsel %vm2262, %v3360, 0
    %v3425 = vsel %vm2262, %v3362, 0
    %v3427 = vsel %vm2262, %v3364, 0
    %v3429 = vsel %vm2262, %v3366, 0
    %v3431 = vsel %vm2262, %v3368, 0
    %v3433 = vsel %vm2262, %v3370, 0
    %v3435 = vsel %vm2262, %v3372, 0
    %v3437 = vsel %vm2262, %v3374, 0
    %v3439 = vsel %vm2262, %v3376, 0
    %v3441 = vsel %vm2262, %v3378, 0
    %v3443 = vsel %vm2262, %v3380, 0
    %v3445 = vsel %vm2262, %v3382, 0
    %v3447 = vsel %vm2262, %v3384, 0
    %v3449 = vsel %vm2262, %v3386, 0
    %v3451 = vsel %vm2262, %v3388, 0
    %v3453 = vsel %vm2262, %v3390, 0
    %v3455 = vsel %vm2262, %v3392, 0
    %v3457 = vsel %vm2262, %v3394, 0
    %v3459 = vsel %vm2262, %v3396, 0
    %v3461 = vsel %vm2262, %v3398, 0
    %v3463 = vsel %vm2262, %v3400, 0
    %v3465 = vsel %vm2262, %v3402, 0
    %v3467 = vsel %vm2262, %v3404, 0
    %v3469 = vsel %vm2262, %v3406, 0
    %v3471 = vsel %vm2262, %v3408, 0
    %v3473 = vsel %vm2262, %v3410, 0
    %v3475 = vsel %vm2262, %v3412, 0
    %v3477 = vsel %vm2262, %v3414, 0
    %v3479 = vsel %vm2262, %v3416, 0
    %v3481 = vsel %vm2262, %v3418, 0
    %3483 = vmatprep.subr.mxu0 0.0
    %3484 = vmatpush1.xpose.msra.mxu0 %v3451
    %3485 = vmatprep.subr.mxu0 0.0
    %3486 = vmatpush1.xpose.msra.mxu0 %v3453
    %3487 = vmatprep.subr.mxu0 0.0
    %3488 = vmatpush1.xpose.msra.mxu0 %v3455
    %3489 = vmatprep.subr.mxu0 0.0
    %3490 = vmatpush1.xpose.msra.mxu0 %v3457
    %3491 = vmatprep.subr.mxu0 0.0
    %3492 = vmatpush1.xpose.msra.mxu0 %v3459
    %3493 = vmatprep.subr.mxu0 0.0
    %3494 = vmatpush1.xpose.msra.mxu0 %v3461
    %3495 = vmatprep.subr.mxu0 0.0
    %3496 = vmatpush1.xpose.msra.mxu0 %v3463
    %3497 = vmatprep.subr.mxu0 0.0
    %3498 = vmatpush1.xpose.msra.mxu0 %v3465
    %3499 = vmatprep.subr.mxu0 0.0
    %3500 = vmatpush1.xpose.msra.mxu0 %v3467
    %3501 = vmatprep.subr.mxu0 0.0
    %3502 = vmatpush1.xpose.msra.mxu0 %v3469
    %3503 = vmatprep.subr.mxu0 0.0
    %3504 = vmatpush1.xpose.msra.mxu0 %v3471
    %3505 = vmatprep.subr.mxu0 0.0
    %3506 = vmatpush1.xpose.msra.mxu0 %v3473
    %3507 = vmatprep.subr.mxu0 0.0
    %3508 = vmatpush1.xpose.msra.mxu0 %v3475
    %3509 = vmatprep.subr.mxu0 0.0
    %3510 = vmatpush1.xpose.msra.mxu0 %v3477
    %3511 = vmatprep.subr.mxu0 0.0
    %3512 = vmatpush1.xpose.msra.mxu0 %v3479
    %3513 = vmatprep.subr.mxu0 0.0
    %3514 = vmatpush1.xpose.msra.mxu0 %v3481
    %3515 = vmatprep.subr.mxu0 0.0
    %3516 = vmatpush1.xpose.msra.mxu0 0.0
    %3517 = vmatprep.subr.mxu0 0.0
    %3518 = vmatpush1.xpose.msra.mxu0 0.0
    %3519 = vmatprep.subr.mxu0 0.0
    %3520 = vmatpush1.xpose.msra.mxu0 0.0
    %3521 = vmatprep.subr.mxu0 0.0
    %3522 = vmatpush1.xpose.msra.mxu0 0.0
    %3523 = vmatprep.subr.mxu0 0.0
    %3524 = vmatpush1.xpose.msra.mxu0 0.0
    %3525 = vmatprep.subr.mxu0 0.0
    %3526 = vmatpush1.xpose.msra.mxu0 0.0
    %3527 = vmatprep.subr.mxu0 0.0
    %3528 = vmatpush1.xpose.msra.mxu0 0.0
    %3529 = vmatprep.subr.mxu0 0.0
    %3530 = vmatpush1.xpose.msra.mxu0 0.0
    %3531 = vmatprep.subr.mxu0 0.0
    %3532 = vmatpush1.xpose.msra.mxu0 0.0
    %3533 = vmatprep.subr.mxu0 0.0
    %3534 = vmatpush1.xpose.msra.mxu0 0.0
    %3535 = vmatprep.subr.mxu0 0.0
    %3536 = vmatpush1.xpose.msra.mxu0 0.0
    %3537 = vmatprep.subr.mxu0 0.0
    %3538 = vmatpush1.xpose.msra.mxu0 0.0
    %3539 = vmatprep.subr.mxu0 0.0
    %3540 = vmatpush1.xpose.msra.mxu0 0.0
    %3541 = vmatprep.subr.mxu0 0.0
    %3542 = vmatpush1.xpose.msra.mxu0 0.0
    %3543 = vmatprep.subr.mxu0 0.0
    %3544 = vmatpush1.xpose.msra.mxu0 0.0
    %3545 = vmatprep.subr.mxu0 0.0
    %3546 = vmatpush1.xpose.msra.mxu0 0.0
    %3547 = vmatprep.mubr.f32.mxu0 0.0
    %3548 = vmatmul.mubr.f32.gmra.mrb[0].mxu0 %v3419
    %v3549 = vpop.f32.mrb[0].mxu0
    %v3550 = vadd.f32 0.0, %v3549
    %v3551 = vpop.f32.mrb[0].mxu0
    %3552 = vmatprep.mubr.f32.mxu0 0.0
    %3553 = vmatmul.mubr.f32.gmra.mrb[0].mxu0 %v3421
    %v3554 = vpop.f32.mrb[0].mxu0
    %v3555 = vadd.f32 0.0, %v3554
    %v3556 = vpop.f32.mrb[0].mxu0
    %3557 = vmatprep.mubr.f32.mxu0 0.0
    %3558 = vmatmul.mubr.f32.gmra.mrb[0].mxu0 %v3423
    %v3559 = vpop.f32.mrb[0].mxu0
    %v3560 = vadd.f32 0.0, %v3559
    %v3561 = vpop.f32.mrb[0].mxu0
    %3562 = vmatprep.mubr.f32.mxu0 0.0
    %3563 = vmatmul.mubr.f32.gmra.mrb[0].mxu0 %v3425
    %v3564 = vpop.f32.mrb[0].mxu0
    %v3565 = vadd.f32 0.0, %v3564
    %v3566 = vpop.f32.mrb[0].mxu0
    %3567 = vmatprep.mubr.f32.mxu0 0.0
    %3568 = vmatmul.mubr.f32.gmra.mrb[0].mxu0 %v3427
    %v3569 = vpop.f32.mrb[0].mxu0
    %v3570 = vadd.f32 0.0, %v3569
    %v3571 = vpop.f32.mrb[0].mxu0
    %3572 = vmatprep.mubr.f32.mxu0 0.0
    %3573 = vmatmul.mubr.f32.gmra.mrb[0].mxu0 %v3429
    %v3574 = vpop.f32.mrb[0].mxu0
    %v3575 = vadd.f32 0.0, %v3574
    %v3576 = vpop.f32.mrb[0].mxu0
    %3577 = vmatprep.mubr.f32.mxu0 0.0
    %3578 = vmatmul.mubr.f32.gmra.mrb[0].mxu0 %v3431
    %v3579 = vpop.f32.mrb[0].mxu0
    %v3580 = vadd.f32 0.0, %v3579
    %v3581 = vpop.f32.mrb[0].mxu0
    %3582 = vmatprep.mubr.f32.mxu0 0.0
    %3583 = vmatmul.mubr.f32.gmra.mrb[0].mxu0 %v3433
    %v3584 = vpop.f32.mrb[0].mxu0
    %v3585 = vadd.f32 0.0, %v3584
    %v3586 = vpop.f32.mrb[0].mxu0
    %3587 = vmatprep.mubr.f32.mxu0 0.0
    %3588 = vmatmul.mubr.f32.gmra.mrb[0].mxu0 %v3435
    %v3589 = vpop.f32.mrb[0].mxu0
    %v3590 = vadd.f32 0.0, %v3589
    %v3591 = vpop.f32.mrb[0].mxu0
    %3592 = vmatprep.mubr.f32.mxu0 0.0
    %3593 = vmatmul.mubr.f32.gmra.mrb[0].mxu0 %v3437
    %v3594 = vpop.f32.mrb[0].mxu0
    %v3595 = vadd.f32 0.0, %v3594
    %v3596 = vpop.f32.mrb[0].mxu0
    %3597 = vmatprep.mubr.f32.mxu0 0.0
    %3598 = vmatmul.mubr.f32.gmra.mrb[0].mxu0 %v3439
    %v3599 = vpop.f32.mrb[0].mxu0
    %v3600 = vadd.f32 0.0, %v3599
    %v3601 = vpop.f32.mrb[0].mxu0
    %3602 = vmatprep.mubr.f32.mxu0 0.0
    %3603 = vmatmul.mubr.f32.gmra.mrb[0].mxu0 %v3441
    %v3604 = vpop.f32.mrb[0].mxu0
    %v3605 = vadd.f32 0.0, %v3604
    %v3606 = vpop.f32.mrb[0].mxu0
    %3607 = vmatprep.mubr.f32.mxu0 0.0
    %3608 = vmatmul.mubr.f32.gmra.mrb[0].mxu0 %v3443
    %v3609 = vpop.f32.mrb[0].mxu0
    %v3610 = vadd.f32 0.0, %v3609
    %v3611 = vpop.f32.mrb[0].mxu0
    %3612 = vmatprep.mubr.f32.mxu0 0.0
    %3613 = vmatmul.mubr.f32.gmra.mrb[0].mxu0 %v3445
    %v3614 = vpop.f32.mrb[0].mxu0
    %v3615 = vadd.f32 0.0, %v3614
    %v3616 = vpop.f32.mrb[0].mxu0
    %3617 = vmatprep.mubr.f32.mxu0 0.0
    %3618 = vmatmul.mubr.f32.gmra.mrb[0].mxu0 %v3447
    %v3619 = vpop.f32.mrb[0].mxu0
    %v3620 = vadd.f32 0.0, %v3619
    %v3621 = vpop.f32.mrb[0].mxu0
    %3622 = vmatprep.mubr.f32.mxu0 0.0
    %3623 = vmatmul.mubr.f32.gmra.mrb[0].mxu0 %v3449
    %v3624 = vpop.f32.mrb[0].mxu0
    %v3625 = vadd.f32 0.0, %v3624
    %v3626 = vpop.f32.mrb[0].mxu0
    %3627 = vdwg.mxu0
    %3628 = vrot.lane.b32.xlu0 %v883, 64
    %v3629 = vpop.permute.xlu0 %3628
    %3630 = vrot.lane.b32.xlu0 %v889, 64
    %v3631 = vpop.permute.xlu0 %3630
    %3632 = vrot.lane.b32.xlu0 %v895, 64
    %v3633 = vpop.permute.xlu0 %3632
    %3634 = vrot.lane.b32.xlu0 %v901, 64
    %v3635 = vpop.permute.xlu0 %3634
    %3636 = vrot.lane.b32.xlu0 %v907, 64
    %v3637 = vpop.permute.xlu0 %3636
    %3638 = vrot.lane.b32.xlu0 %v913, 64
    %v3639 = vpop.permute.xlu0 %3638
    %3640 = vrot.lane.b32.xlu0 %v919, 64
    %v3641 = vpop.permute.xlu0 %3640
    %3642 = vrot.lane.b32.xlu0 %v925, 64
    %v3643 = vpop.permute.xlu0 %3642
    %3644 = vrot.lane.b32.xlu0 %v931, 64
    %v3645 = vpop.permute.xlu0 %3644
    %3646 = vrot.lane.b32.xlu0 %v937, 64
    %v3647 = vpop.permute.xlu0 %3646
    %3648 = vrot.lane.b32.xlu0 %v943, 64
    %v3649 = vpop.permute.xlu0 %3648
    %3650 = vrot.lane.b32.xlu0 %v949, 64
    %v3651 = vpop.permute.xlu0 %3650
    %3652 = vrot.lane.b32.xlu0 %v955, 64
    %v3653 = vpop.permute.xlu0 %3652
    %3654 = vrot.lane.b32.xlu0 %v961, 64
    %v3655 = vpop.permute.xlu0 %3654
    %3656 = vrot.lane.b32.xlu0 %v967, 64
    %v3657 = vpop.permute.xlu0 %3656
    %3658 = vrot.lane.b32.xlu0 %v973, 64
    %v3659 = vpop.permute.xlu0 %3658
    %3660 = vrot.lane.b32.xlu0 %v1397, 64
    %v3661 = vpop.permute.xlu0 %3660
    %3662 = vrot.lane.b32.xlu0 %v1403, 64
    %v3663 = vpop.permute.xlu0 %3662
    %3664 = vrot.lane.b32.xlu0 %v1409, 64
    %v3665 = vpop.permute.xlu0 %3664
    %3666 = vrot.lane.b32.xlu0 %v1415, 64
    %v3667 = vpop.permute.xlu0 %3666
    %3668 = vrot.lane.b32.xlu0 %v1421, 64
    %v3669 = vpop.permute.xlu0 %3668
    %3670 = vrot.lane.b32.xlu0 %v1427, 64
    %v3671 = vpop.permute.xlu0 %3670
    %3672 = vrot.lane.b32.xlu0 %v1433, 64
    %v3673 = vpop.permute.xlu0 %3672
    %3674 = vrot.lane.b32.xlu0 %v1439, 64
    %v3675 = vpop.permute.xlu0 %3674
    %3676 = vrot.lane.b32.xlu0 %v1445, 64
    %v3677 = vpop.permute.xlu0 %3676
    %3678 = vrot.lane.b32.xlu0 %v1451, 64
    %v3679 = vpop.permute.xlu0 %3678
    %3680 = vrot.lane.b32.xlu0 %v1457, 64
    %v3681 = vpop.permute.xlu0 %3680
    %3682 = vrot.lane.b32.xlu0 %v1463, 64
    %v3683 = vpop.permute.xlu0 %3682
    %3684 = vrot.lane.b32.xlu0 %v1469, 64
    %v3685 = vpop.permute.xlu0 %3684
    %3686 = vrot.lane.b32.xlu0 %v1475, 64
    %v3687 = vpop.permute.xlu0 %3686
    %3688 = vrot.lane.b32.xlu0 %v1481, 64
    %v3689 = vpop.permute.xlu0 %3688
    %3690 = vrot.lane.b32.xlu0 %v1487, 64
    %v3691 = vpop.permute.xlu0 %3690
    %v3692 = vsel %vm2262, %v3629, 0
    %v3694 = vsel %vm2262, %v3631, 0
    %v3696 = vsel %vm2262, %v3633, 0
    %v3698 = vsel %vm2262, %v3635, 0
    %v3700 = vsel %vm2262, %v3637, 0
    %v3702 = vsel %vm2262, %v3639, 0
    %v3704 = vsel %vm2262, %v3641, 0
    %v3706 = vsel %vm2262, %v3643, 0
    %v3708 = vsel %vm2262, %v3645, 0
    %v3710 = vsel %vm2262, %v3647, 0
    %v3712 = vsel %vm2262, %v3649, 0
    %v3714 = vsel %vm2262, %v3651, 0
    %v3716 = vsel %vm2262, %v3653, 0
    %v3718 = vsel %vm2262, %v3655, 0
    %v3720 = vsel %vm2262, %v3657, 0
    %v3722 = vsel %vm2262, %v3659, 0
    %v3724 = vsel %vm2262, %v3661, 0
    %v3726 = vsel %vm2262, %v3663, 0
    %v3728 = vsel %vm2262, %v3665, 0
    %v3730 = vsel %vm2262, %v3667, 0
    %v3732 = vsel %vm2262, %v3669, 0
    %v3734 = vsel %vm2262, %v3671, 0
    %v3736 = vsel %vm2262, %v3673, 0
    %v3738 = vsel %vm2262, %v3675, 0
    %v3740 = vsel %vm2262, %v3677, 0
    %v3742 = vsel %vm2262, %v3679, 0
    %v3744 = vsel %vm2262, %v3681, 0
    %v3746 = vsel %vm2262, %v3683, 0
    %v3748 = vsel %vm2262, %v3685, 0
    %v3750 = vsel %vm2262, %v3687, 0
    %v3752 = vsel %vm2262, %v3689, 0
    %v3754 = vsel %vm2262, %v3691, 0
    %3756 = vmatprep.subr.mxu0 0.0
    %3757 = vmatpush1.xpose.msra.mxu0 %v3724
    %3758 = vmatprep.subr.mxu0 0.0
    %3759 = vmatpush1.xpose.msra.mxu0 %v3726
    %3760 = vmatprep.subr.mxu0 0.0
    %3761 = vmatpush1.xpose.msra.mxu0 %v3728
    %3762 = vmatprep.subr.mxu0 0.0
    %3763 = vmatpush1.xpose.msra.mxu0 %v3730
    %3764 = vmatprep.subr.mxu0 0.0
    %3765 = vmatpush1.xpose.msra.mxu0 %v3732
    %3766 = vmatprep.subr.mxu0 0.0
    %3767 = vmatpush1.xpose.msra.mxu0 %v3734
    %3768 = vmatprep.subr.mxu0 0.0
    %3769 = vmatpush1.xpose.msra.mxu0 %v3736
    %3770 = vmatprep.subr.mxu0 0.0
    %3771 = vmatpush1.xpose.msra.mxu0 %v3738
    %3772 = vmatprep.subr.mxu0 0.0
    %3773 = vmatpush1.xpose.msra.mxu0 %v3740
    %3774 = vmatprep.subr.mxu0 0.0
    %3775 = vmatpush1.xpose.msra.mxu0 %v3742
    %3776 = vmatprep.subr.mxu0 0.0
    %3777 = vmatpush1.xpose.msra.mxu0 %v3744
    %3778 = vmatprep.subr.mxu0 0.0
    %3779 = vmatpush1.xpose.msra.mxu0 %v3746
    %3780 = vmatprep.subr.mxu0 0.0
    %3781 = vmatpush1.xpose.msra.mxu0 %v3748
    %3782 = vmatprep.subr.mxu0 0.0
    %3783 = vmatpush1.xpose.msra.mxu0 %v3750
    %3784 = vmatprep.subr.mxu0 0.0
    %3785 = vmatpush1.xpose.msra.mxu0 %v3752
    %3786 = vmatprep.subr.mxu0 0.0
    %3787 = vmatpush1.xpose.msra.mxu0 %v3754
    %3788 = vmatprep.subr.mxu0 0.0
    %3789 = vmatpush1.xpose.msra.mxu0 0.0
    %3790 = vmatprep.subr.mxu0 0.0
    %3791 = vmatpush1.xpose.msra.mxu0 0.0
    %3792 = vmatprep.subr.mxu0 0.0
    %3793 = vmatpush1.xpose.msra.mxu0 0.0
    %3794 = vmatprep.subr.mxu0 0.0
    %3795 = vmatpush1.xpose.msra.mxu0 0.0
    %3796 = vmatprep.subr.mxu0 0.0
    %3797 = vmatpush1.xpose.msra.mxu0 0.0
    %3798 = vmatprep.subr.mxu0 0.0
    %3799 = vmatpush1.xpose.msra.mxu0 0.0
    %3800 = vmatprep.subr.mxu0 0.0
    %3801 = vmatpush1.xpose.msra.mxu0 0.0
    %3802 = vmatprep.subr.mxu0 0.0
    %3803 = vmatpush1.xpose.msra.mxu0 0.0
    %3804 = vmatprep.subr.mxu0 0.0
    %3805 = vmatpush1.xpose.msra.mxu0 0.0
    %3806 = vmatprep.subr.mxu0 0.0
    %3807 = vmatpush1.xpose.msra.mxu0 0.0
    %3808 = vmatprep.subr.mxu0 0.0
    %3809 = vmatpush1.xpose.msra.mxu0 0.0
    %3810 = vmatprep.subr.mxu0 0.0
    %3811 = vmatpush1.xpose.msra.mxu0 0.0
    %3812 = vmatprep.subr.mxu0 0.0
    %3813 = vmatpush1.xpose.msra.mxu0 0.0
    %3814 = vmatprep.subr.mxu0 0.0
    %3815 = vmatpush1.xpose.msra.mxu0 0.0
    %3816 = vmatprep.subr.mxu0 0.0
    %3817 = vmatpush1.xpose.msra.mxu0 0.0
    %3818 = vmatprep.subr.mxu0 0.0
    %3819 = vmatpush1.xpose.msra.mxu0 0.0
    %3820 = vmatprep.mubr.f32.mxu0 0.0
    %3821 = vmatmul.mubr.f32.gmra.mrb[0].mxu0 %v3692
    %v3822 = vpop.f32.mrb[0].mxu0
    %v3823 = vadd.f32 0.0, %v3822
    %v3824 = vpop.f32.mrb[0].mxu0
    %3825 = vmatprep.mubr.f32.mxu0 0.0
    %3826 = vmatmul.mubr.f32.gmra.mrb[0].mxu0 %v3694
    %v3827 = vpop.f32.mrb[0].mxu0
    %v3828 = vadd.f32 0.0, %v3827
    %v3829 = vpop.f32.mrb[0].mxu0
    %3830 = vmatprep.mubr.f32.mxu0 0.0
    %3831 = vmatmul.mubr.f32.gmra.mrb[0].mxu0 %v3696
    %v3832 = vpop.f32.mrb[0].mxu0
    %v3833 = vadd.f32 0.0, %v3832
    %v3834 = vpop.f32.mrb[0].mxu0
    %3835 = vmatprep.mubr.f32.mxu0 0.0
    %3836 = vmatmul.mubr.f32.gmra.mrb[0].mxu0 %v3698
    %v3837 = vpop.f32.mrb[0].mxu0
    %v3838 = vadd.f32 0.0, %v3837
    %v3839 = vpop.f32.mrb[0].mxu0
    %3840 = vmatprep.mubr.f32.mxu0 0.0
    %3841 = vmatmul.mubr.f32.gmra.mrb[0].mxu0 %v3700
    %v3842 = vpop.f32.mrb[0].mxu0
    %v3843 = vadd.f32 0.0, %v3842
    %v3844 = vpop.f32.mrb[0].mxu0
    %3845 = vmatprep.mubr.f32.mxu0 0.0
    %3846 = vmatmul.mubr.f32.gmra.mrb[0].mxu0 %v3702
    %v3847 = vpop.f32.mrb[0].mxu0
    %v3848 = vadd.f32 0.0, %v3847
    %v3849 = vpop.f32.mrb[0].mxu0
    %3850 = vmatprep.mubr.f32.mxu0 0.0
    %3851 = vmatmul.mubr.f32.gmra.mrb[0].mxu0 %v3704
    %v3852 = vpop.f32.mrb[0].mxu0
    %v3853 = vadd.f32 0.0, %v3852
    %v3854 = vpop.f32.mrb[0].mxu0
    %3855 = vmatprep.mubr.f32.mxu0 0.0
    %3856 = vmatmul.mubr.f32.gmra.mrb[0].mxu0 %v3706
    %v3857 = vpop.f32.mrb[0].mxu0
    %v3858 = vadd.f32 0.0, %v3857
    %v3859 = vpop.f32.mrb[0].mxu0
    %3860 = vmatprep.mubr.f32.mxu0 0.0
    %3861 = vmatmul.mubr.f32.gmra.mrb[0].mxu0 %v3708
    %v3862 = vpop.f32.mrb[0].mxu0
    %v3863 = vadd.f32 0.0, %v3862
    %v3864 = vpop.f32.mrb[0].mxu0
    %3865 = vmatprep.mubr.f32.mxu0 0.0
    %3866 = vmatmul.mubr.f32.gmra.mrb[0].mxu0 %v3710
    %v3867 = vpop.f32.mrb[0].mxu0
    %v3868 = vadd.f32 0.0, %v3867
    %v3869 = vpop.f32.mrb[0].mxu0
    %3870 = vmatprep.mubr.f32.mxu0 0.0
    %3871 = vmatmul.mubr.f32.gmra.mrb[0].mxu0 %v3712
    %v3872 = vpop.f32.mrb[0].mxu0
    %v3873 = vadd.f32 0.0, %v3872
    %v3874 = vpop.f32.mrb[0].mxu0
    %3875 = vmatprep.mubr.f32.mxu0 0.0
    %3876 = vmatmul.mubr.f32.gmra.mrb[0].mxu0 %v3714
    %v3877 = vpop.f32.mrb[0].mxu0
    %v3878 = vadd.f32 0.0, %v3877
    %v3879 = vpop.f32.mrb[0].mxu0
    %3880 = vmatprep.mubr.f32.mxu0 0.0
    %3881 = vmatmul.mubr.f32.gmra.mrb[0].mxu0 %v3716
    %v3882 = vpop.f32.mrb[0].mxu0
    %v3883 = vadd.f32 0.0, %v3882
    %v3884 = vpop.f32.mrb[0].mxu0
    %3885 = vmatprep.mubr.f32.mxu0 0.0
    %3886 = vmatmul.mubr.f32.gmra.mrb[0].mxu0 %v3718
    %v3887 = vpop.f32.mrb[0].mxu0
    %v3888 = vadd.f32 0.0, %v3887
    %v3889 = vpop.f32.mrb[0].mxu0
    %3890 = vmatprep.mubr.f32.mxu0 0.0
    %3891 = vmatmul.mubr.f32.gmra.mrb[0].mxu0 %v3720
    %v3892 = vpop.f32.mrb[0].mxu0
    %v3893 = vadd.f32 0.0, %v3892
    %v3894 = vpop.f32.mrb[0].mxu0
    %3895 = vmatprep.mubr.f32.mxu0 0.0
    %3896 = vmatmul.mubr.f32.gmra.mrb[0].mxu0 %v3722
    %v3897 = vpop.f32.mrb[0].mxu0
    %v3898 = vadd.f32 0.0, %v3897
    %v3899 = vpop.f32.mrb[0].mxu0
    %3900 = vdwg.mxu0
    %v3901 = vmul.f32 %v3550, 0.125
    %v3902 = vmul.f32 %v3555, 0.125
    %v3903 = vmul.f32 %v3560, 0.125
    %v3904 = vmul.f32 %v3565, 0.125
    %v3905 = vmul.f32 %v3570, 0.125
    %v3906 = vmul.f32 %v3575, 0.125
    %v3907 = vmul.f32 %v3580, 0.125
    %v3908 = vmul.f32 %v3585, 0.125
    %v3909 = vmul.f32 %v3590, 0.125
    %v3910 = vmul.f32 %v3595, 0.125
    %v3911 = vmul.f32 %v3600, 0.125
    %v3912 = vmul.f32 %v3605, 0.125
    %v3913 = vmul.f32 %v3610, 0.125
    %v3914 = vmul.f32 %v3615, 0.125
    %v3915 = vmul.f32 %v3620, 0.125
    %v3916 = vmul.f32 %v3625, 0.125
    %v3917 = vmul.f32 %v3823, 0.125
    %v3918 = vmul.f32 %v3828, 0.125
    %v3919 = vmul.f32 %v3833, 0.125
    %v3920 = vmul.f32 %v3838, 0.125
    %v3921 = vmul.f32 %v3843, 0.125
    %v3922 = vmul.f32 %v3848, 0.125
    %v3923 = vmul.f32 %v3853, 0.125
    %v3924 = vmul.f32 %v3858, 0.125
    %v3925 = vmul.f32 %v3863, 0.125
    %v3926 = vmul.f32 %v3868, 0.125
    %v3927 = vmul.f32 %v3873, 0.125
    %v3928 = vmul.f32 %v3878, 0.125
    %v3929 = vmul.f32 %v3883, 0.125
    %v3930 = vmul.f32 %v3888, 0.125
    %v3931 = vmul.f32 %v3893, 0.125
    %v3932 = vmul.f32 %v3898, 0.125
    %3933 = vmax.xlane.f32.xlu0 %v3901
    %v3934 = vpop.xlane.xlu0 %3933
    %3935 = vmax.xlane.f32.xlu0 %v3902
    %v3936 = vpop.xlane.xlu0 %3935
    %3937 = vmax.xlane.f32.xlu0 %v3903
    %v3938 = vpop.xlane.xlu0 %3937
    %3939 = vmax.xlane.f32.xlu0 %v3904
    %v3940 = vpop.xlane.xlu0 %3939
    %3941 = vmax.xlane.f32.xlu0 %v3905
    %v3942 = vpop.xlane.xlu0 %3941
    %3943 = vmax.xlane.f32.xlu0 %v3906
    %v3944 = vpop.xlane.xlu0 %3943
    %3945 = vmax.xlane.f32.xlu0 %v3907
    %v3946 = vpop.xlane.xlu0 %3945
    %3947 = vmax.xlane.f32.xlu0 %v3908
    %v3948 = vpop.xlane.xlu0 %3947
    %3949 = vmax.xlane.f32.xlu0 %v3909
    %v3950 = vpop.xlane.xlu0 %3949
    %3951 = vmax.xlane.f32.xlu0 %v3910
    %v3952 = vpop.xlane.xlu0 %3951
    %3953 = vmax.xlane.f32.xlu0 %v3911
    %v3954 = vpop.xlane.xlu0 %3953
    %3955 = vmax.xlane.f32.xlu0 %v3912
    %v3956 = vpop.xlane.xlu0 %3955
    %3957 = vmax.xlane.f32.xlu0 %v3913
    %v3958 = vpop.xlane.xlu0 %3957
    %3959 = vmax.xlane.f32.xlu0 %v3914
    %v3960 = vpop.xlane.xlu0 %3959
    %3961 = vmax.xlane.f32.xlu0 %v3915
    %v3962 = vpop.xlane.xlu0 %3961
    %3963 = vmax.xlane.f32.xlu0 %v3916
    %v3964 = vpop.xlane.xlu0 %3963
    %3965 = vmax.xlane.f32.xlu0 %v3917
    %v3966 = vpop.xlane.xlu0 %3965
    %3967 = vmax.xlane.f32.xlu0 %v3918
    %v3968 = vpop.xlane.xlu0 %3967
    %3969 = vmax.xlane.f32.xlu0 %v3919
    %v3970 = vpop.xlane.xlu0 %3969
    %3971 = vmax.xlane.f32.xlu0 %v3920
    %v3972 = vpop.xlane.xlu0 %3971
    %3973 = vmax.xlane.f32.xlu0 %v3921
    %v3974 = vpop.xlane.xlu0 %3973
    %3975 = vmax.xlane.f32.xlu0 %v3922
    %v3976 = vpop.xlane.xlu0 %3975
    %3977 = vmax.xlane.f32.xlu0 %v3923
    %v3978 = vpop.xlane.xlu0 %3977
    %3979 = vmax.xlane.f32.xlu0 %v3924
    %v3980 = vpop.xlane.xlu0 %3979
    %3981 = vmax.xlane.f32.xlu0 %v3925
    %v3982 = vpop.xlane.xlu0 %3981
    %3983 = vmax.xlane.f32.xlu0 %v3926
    %v3984 = vpop.xlane.xlu0 %3983
    %3985 = vmax.xlane.f32.xlu0 %v3927
    %v3986 = vpop.xlane.xlu0 %3985
    %3987 = vmax.xlane.f32.xlu0 %v3928
    %v3988 = vpop.xlane.xlu0 %3987
    %3989 = vmax.xlane.f32.xlu0 %v3929
    %v3990 = vpop.xlane.xlu0 %3989
    %3991 = vmax.xlane.f32.xlu0 %v3930
    %v3992 = vpop.xlane.xlu0 %3991
    %3993 = vmax.xlane.f32.xlu0 %v3931
    %v3994 = vpop.xlane.xlu0 %3993
    %3995 = vmax.xlane.f32.xlu0 %v3932
    %v3996 = vpop.xlane.xlu0 %3995
    %v3997 = vsub.f32 %v3901, %v3934
    %v3998 = vsub.f32 %v3902, %v3936
    %v3999 = vsub.f32 %v3903, %v3938
    %v4000 = vsub.f32 %v3904, %v3940
    %v4001 = vsub.f32 %v3905, %v3942
    %v4002 = vsub.f32 %v3906, %v3944
    %v4003 = vsub.f32 %v3907, %v3946
    %v4004 = vsub.f32 %v3908, %v3948
    %v4005 = vsub.f32 %v3909, %v3950
    %v4006 = vsub.f32 %v3910, %v3952
    %v4007 = vsub.f32 %v3911, %v3954
    %v4008 = vsub.f32 %v3912, %v3956
    %v4009 = vsub.f32 %v3913, %v3958
    %v4010 = vsub.f32 %v3914, %v3960
    %v4011 = vsub.f32 %v3915, %v3962
    %v4012 = vsub.f32 %v3916, %v3964
    %v4013 = vsub.f32 %v3917, %v3966
    %v4014 = vsub.f32 %v3918, %v3968
    %v4015 = vsub.f32 %v3919, %v3970
    %v4016 = vsub.f32 %v3920, %v3972
    %v4017 = vsub.f32 %v3921, %v3974
    %v4018 = vsub.f32 %v3922, %v3976
    %v4019 = vsub.f32 %v3923, %v3978
    %v4020 = vsub.f32 %v3924, %v3980
    %v4021 = vsub.f32 %v3925, %v3982
    %v4022 = vsub.f32 %v3926, %v3984
    %v4023 = vsub.f32 %v3927, %v3986
    %v4024 = vsub.f32 %v3928, %v3988
    %v4025 = vsub.f32 %v3929, %v3990
    %v4026 = vsub.f32 %v3930, %v3992
    %v4027 = vsub.f32 %v3931, %v3994
    %v4028 = vsub.f32 %v3932, %v3996
    %v4029 = vmul.f32 %v3997, 1.442695
    %v4030 = vpow.pop %v4029
    %v4031 = vmul.f32 %v3998, 1.442695
    %v4032 = vpow.pop %v4031
    %v4033 = vmul.f32 %v3999, 1.442695
    %v4034 = vpow.pop %v4033
    %v4035 = vmul.f32 %v4000, 1.442695
    %v4036 = vpow.pop %v4035
    %v4037 = vmul.f32 %v4001, 1.442695
    %v4038 = vpow.pop %v4037
    %v4039 = vmul.f32 %v4002, 1.442695
    %v4040 = vpow.pop %v4039
    %v4041 = vmul.f32 %v4003, 1.442695
    %v4042 = vpow.pop %v4041
    %v4043 = vmul.f32 %v4004, 1.442695
    %v4044 = vpow.pop %v4043
    %v4045 = vmul.f32 %v4005, 1.442695
    %v4046 = vpow.pop %v4045
    %v4047 = vmul.f32 %v4006, 1.442695
    %v4048 = vpow.pop %v4047
    %v4049 = vmul.f32 %v4007, 1.442695
    %v4050 = vpow.pop %v4049
    %v4051 = vmul.f32 %v4008, 1.442695
    %v4052 = vpow.pop %v4051
    %v4053 = vmul.f32 %v4009, 1.442695
    %v4054 = vpow.pop %v4053
    %v4055 = vmul.f32 %v4010, 1.442695
    %v4056 = vpow.pop %v4055
    %v4057 = vmul.f32 %v4011, 1.442695
    %v4058 = vpow.pop %v4057
    %v4059 = vmul.f32 %v4012, 1.442695
    %v4060 = vpow.pop %v4059
    %v4061 = vmul.f32 %v4013, 1.442695
    %v4062 = vpow.pop %v4061
    %v4063 = vmul.f32 %v4014, 1.442695
    %v4064 = vpow.pop %v4063
    %v4065 = vmul.f32 %v4015, 1.442695
    %v4066 = vpow.pop %v4065
    %v4067 = vmul.f32 %v4016, 1.442695
    %v4068 = vpow.pop %v4067
    %v4069 = vmul.f32 %v4017, 1.442695
    %v4070 = vpow.pop %v4069
    %v4071 = vmul.f32 %v4018, 1.442695
    %v4072 = vpow.pop %v4071
    %v4073 = vmul.f32 %v4019, 1.442695
    %v4074 = vpow.pop %v4073
    %v4075 = vmul.f32 %v4020, 1.442695
    %v4076 = vpow.pop %v4075
    %v4077 = vmul.f32 %v4021, 1.442695
    %v4078 = vpow.pop %v4077
    %v4079 = vmul.f32 %v4022, 1.442695
    %v4080 = vpow.pop %v4079
    %v4081 = vmul.f32 %v4023, 1.442695
    %v4082 = vpow.pop %v4081
    %v4083 = vmul.f32 %v4024, 1.442695
    %v4084 = vpow.pop %v4083
    %v4085 = vmul.f32 %v4025, 1.442695
    %v4086 = vpow.pop %v4085
    %v4087 = vmul.f32 %v4026, 1.442695
    %v4088 = vpow.pop %v4087
    %v4089 = vmul.f32 %v4027, 1.442695
    %v4090 = vpow.pop %v4089
    %v4091 = vmul.f32 %v4028, 1.442695
    %v4092 = vpow.pop %v4091
    %4093 = vadd.xlane.f32.xlu0 %v4030
    %v4094 = vpop.xlane.xlu0 %4093
    %4095 = vadd.xlane.f32.xlu0 %v4032
    %v4096 = vpop.xlane.xlu0 %4095
    %4097 = vadd.xlane.f32.xlu0 %v4034
    %v4098 = vpop.xlane.xlu0 %4097
    %4099 = vadd.xlane.f32.xlu0 %v4036
    %v4100 = vpop.xlane.xlu0 %4099
    %4101 = vadd.xlane.f32.xlu0 %v4038
    %v4102 = vpop.xlane.xlu0 %4101
    %4103 = vadd.xlane.f32.xlu0 %v4040
    %v4104 = vpop.xlane.xlu0 %4103
    %4105 = vadd.xlane.f32.xlu0 %v4042
    %v4106 = vpop.xlane.xlu0 %4105
    %4107 = vadd.xlane.f32.xlu0 %v4044
    %v4108 = vpop.xlane.xlu0 %4107
    %4109 = vadd.xlane.f32.xlu0 %v4046
    %v4110 = vpop.xlane.xlu0 %4109
    %4111 = vadd.xlane.f32.xlu0 %v4048
    %v4112 = vpop.xlane.xlu0 %4111
    %4113 = vadd.xlane.f32.xlu0 %v4050
    %v4114 = vpop.xlane.xlu0 %4113
    %4115 = vadd.xlane.f32.xlu0 %v4052
    %v4116 = vpop.xlane.xlu0 %4115
    %4117 = vadd.xlane.f32.xlu0 %v4054
    %v4118 = vpop.xlane.xlu0 %4117
    %4119 = vadd.xlane.f32.xlu0 %v4056
    %v4120 = vpop.xlane.xlu0 %4119
    %4121 = vadd.xlane.f32.xlu0 %v4058
    %v4122 = vpop.xlane.xlu0 %4121
    %4123 = vadd.xlane.f32.xlu0 %v4060
    %v4124 = vpop.xlane.xlu0 %4123
    %4125 = vadd.xlane.f32.xlu0 %v4062
    %v4126 = vpop.xlane.xlu0 %4125
    %4127 = vadd.xlane.f32.xlu0 %v4064
    %v4128 = vpop.xlane.xlu0 %4127
    %4129 = vadd.xlane.f32.xlu0 %v4066
    %v4130 = vpop.xlane.xlu0 %4129
    %4131 = vadd.xlane.f32.xlu0 %v4068
    %v4132 = vpop.xlane.xlu0 %4131
    %4133 = vadd.xlane.f32.xlu0 %v4070
    %v4134 = vpop.xlane.xlu0 %4133
    %4135 = vadd.xlane.f32.xlu0 %v4072
    %v4136 = vpop.xlane.xlu0 %4135
    %4137 = vadd.xlane.f32.xlu0 %v4074
    %v4138 = vpop.xlane.xlu0 %4137
    %4139 = vadd.xlane.f32.xlu0 %v4076
    %v4140 = vpop.xlane.xlu0 %4139
    %4141 = vadd.xlane.f32.xlu0 %v4078
    %v4142 = vpop.xlane.xlu0 %4141
    %4143 = vadd.xlane.f32.xlu0 %v4080
    %v4144 = vpop.xlane.xlu0 %4143
    %4145 = vadd.xlane.f32.xlu0 %v4082
    %v4146 = vpop.xlane.xlu0 %4145
    %4147 = vadd.xlane.f32.xlu0 %v4084
    %v4148 = vpop.xlane.xlu0 %4147
    %4149 = vadd.xlane.f32.xlu0 %v4086
    %v4150 = vpop.xlane.xlu0 %4149
    %4151 = vadd.xlane.f32.xlu0 %v4088
    %v4152 = vpop.xlane.xlu0 %4151
    %4153 = vadd.xlane.f32.xlu0 %v4090
    %v4154 = vpop.xlane.xlu0 %4153
    %4155 = vadd.xlane.f32.xlu0 %v4092
    %v4156 = vpop.xlane.xlu0 %4155
    %v4157 = vrcp.pop %v4094
    %v4158 = vrcp.pop %v4096
    %v4159 = vrcp.pop %v4098
    %v4160 = vrcp.pop %v4100
    %v4161 = vrcp.pop %v4102
    %v4162 = vrcp.pop %v4104
    %v4163 = vrcp.pop %v4106
    %v4164 = vrcp.pop %v4108
    %v4165 = vrcp.pop %v4110
    %v4166 = vrcp.pop %v4112
    %v4167 = vrcp.pop %v4114
    %v4168 = vrcp.pop %v4116
    %v4169 = vrcp.pop %v4118
    %v4170 = vrcp.pop %v4120
    %v4171 = vrcp.pop %v4122
    %v4172 = vrcp.pop %v4124
    %v4173 = vrcp.pop %v4126
    %v4174 = vrcp.pop %v4128
    %v4175 = vrcp.pop %v4130
    %v4176 = vrcp.pop %v4132
    %v4177 = vrcp.pop %v4134
    %v4178 = vrcp.pop %v4136
    %v4179 = vrcp.pop %v4138
    %v4180 = vrcp.pop %v4140
    %v4181 = vrcp.pop %v4142
    %v4182 = vrcp.pop %v4144
    %v4183 = vrcp.pop %v4146
    %v4184 = vrcp.pop %v4148
    %v4185 = vrcp.pop %v4150
    %v4186 = vrcp.pop %v4152
    %v4187 = vrcp.pop %v4154
    %v4188 = vrcp.pop %v4156
    %v4189 = vmul.f32 %v4030, %v4157
    %v4190 = vmul.f32 %v4032, %v4158
    %v4191 = vmul.f32 %v4034, %v4159
    %v4192 = vmul.f32 %v4036, %v4160
    %v4193 = vmul.f32 %v4038, %v4161
    %v4194 = vmul.f32 %v4040, %v4162
    %v4195 = vmul.f32 %v4042, %v4163
    %v4196 = vmul.f32 %v4044, %v4164
    %v4197 = vmul.f32 %v4046, %v4165
    %v4198 = vmul.f32 %v4048, %v4166
    %v4199 = vmul.f32 %v4050, %v4167
    %v4200 = vmul.f32 %v4052, %v4168
    %v4201 = vmul.f32 %v4054, %v4169
    %v4202 = vmul.f32 %v4056, %v4170
    %v4203 = vmul.f32 %v4058, %v4171
    %v4204 = vmul.f32 %v4060, %v4172
    %v4205 = vmul.f32 %v4062, %v4173
    %v4206 = vmul.f32 %v4064, %v4174
    %v4207 = vmul.f32 %v4066, %v4175
    %v4208 = vmul.f32 %v4068, %v4176
    %v4209 = vmul.f32 %v4070, %v4177
    %v4210 = vmul.f32 %v4072, %v4178
    %v4211 = vmul.f32 %v4074, %v4179
    %v4212 = vmul.f32 %v4076, %v4180
    %v4213 = vmul.f32 %v4078, %v4181
    %v4214 = vmul.f32 %v4080, %v4182
    %v4215 = vmul.f32 %v4082, %v4183
    %v4216 = vmul.f32 %v4084, %v4184
    %v4217 = vmul.f32 %v4086, %v4185
    %v4218 = vmul.f32 %v4088, %v4186
    %v4219 = vmul.f32 %v4090, %v4187
    %v4220 = vmul.f32 %v4092, %v4188
    %4237 = vrot.lane.b32.xlu0 %v1815, 64
    %v4238 = vpop.permute.xlu0 %4237
    %4239 = vrot.lane.b32.xlu0 %v1821, 64
    %v4240 = vpop.permute.xlu0 %4239
    %4241 = vrot.lane.b32.xlu0 %v1827, 64
    %v4242 = vpop.permute.xlu0 %4241
    %4243 = vrot.lane.b32.xlu0 %v1833, 64
    %v4244 = vpop.permute.xlu0 %4243
    %4245 = vrot.lane.b32.xlu0 %v1839, 64
    %v4246 = vpop.permute.xlu0 %4245
    %4247 = vrot.lane.b32.xlu0 %v1845, 64
    %v4248 = vpop.permute.xlu0 %4247
    %4249 = vrot.lane.b32.xlu0 %v1851, 64
    %v4250 = vpop.permute.xlu0 %4249
    %4251 = vrot.lane.b32.xlu0 %v1857, 64
    %v4252 = vpop.permute.xlu0 %4251
    %4253 = vrot.lane.b32.xlu0 %v1863, 64
    %v4254 = vpop.permute.xlu0 %4253
    %4255 = vrot.lane.b32.xlu0 %v1869, 64
    %v4256 = vpop.permute.xlu0 %4255
    %4257 = vrot.lane.b32.xlu0 %v1875, 64
    %v4258 = vpop.permute.xlu0 %4257
    %4259 = vrot.lane.b32.xlu0 %v1881, 64
    %v4260 = vpop.permute.xlu0 %4259
    %4261 = vrot.lane.b32.xlu0 %v1887, 64
    %v4262 = vpop.permute.xlu0 %4261
    %4263 = vrot.lane.b32.xlu0 %v1893, 64
    %v4264 = vpop.permute.xlu0 %4263
    %4265 = vrot.lane.b32.xlu0 %v1899, 64
    %v4266 = vpop.permute.xlu0 %4265
    %4267 = vrot.lane.b32.xlu0 %v1905, 64
    %v4268 = vpop.permute.xlu0 %4267
    %4285 = vmatprep.subr.mxu0 0.0
    %4286 = vmatpush1.msra.mxu0 %v4238
    %4287 = vmatprep.subr.mxu0 0.0
    %4288 = vmatpush1.msra.mxu0 %v4240
    %4289 = vmatprep.subr.mxu0 0.0
    %4290 = vmatpush1.msra.mxu0 %v4242
    %4291 = vmatprep.subr.mxu0 0.0
    %4292 = vmatpush1.msra.mxu0 %v4244
    %4293 = vmatprep.subr.mxu0 0.0
    %4294 = vmatpush1.msra.mxu0 %v4246
    %4295 = vmatprep.subr.mxu0 0.0
    %4296 = vmatpush1.msra.mxu0 %v4248
    %4297 = vmatprep.subr.mxu0 0.0
    %4298 = vmatpush1.msra.mxu0 %v4250
    %4299 = vmatprep.subr.mxu0 0.0
    %4300 = vmatpush1.msra.mxu0 %v4252
    %4301 = vmatprep.subr.mxu0 0.0
    %4302 = vmatpush1.msra.mxu0 %v4254
    %4303 = vmatprep.subr.mxu0 0.0
    %4304 = vmatpush1.msra.mxu0 %v4256
    %4305 = vmatprep.subr.mxu0 0.0
    %4306 = vmatpush1.msra.mxu0 %v4258
    %4307 = vmatprep.subr.mxu0 0.0
    %4308 = vmatpush1.msra.mxu0 %v4260
    %4309 = vmatprep.subr.mxu0 0.0
    %4310 = vmatpush1.msra.mxu0 %v4262
    %4311 = vmatprep.subr.mxu0 0.0
    %4312 = vmatpush1.msra.mxu0 %v4264
    %4313 = vmatprep.subr.mxu0 0.0
    %4314 = vmatpush1.msra.mxu0 %v4266
    %4315 = vmatprep.subr.mxu0 0.0
    %4316 = vmatpush1.msra.mxu0 %v4268
    %4317 = vmatprep.subr.mxu0 0.0
    %4318 = vmatpush1.msra.mxu0 0.0
    %4319 = vmatprep.subr.mxu0 0.0
    %4320 = vmatpush1.msra.mxu0 0.0
    %4321 = vmatprep.subr.mxu0 0.0
    %4322 = vmatpush1.msra.mxu0 0.0
    %4323 = vmatprep.subr.mxu0 0.0
    %4324 = vmatpush1.msra.mxu0 0.0
    %4325 = vmatprep.subr.mxu0 0.0
    %4326 = vmatpush1.msra.mxu0 0.0
    %4327 = vmatprep.subr.mxu0 0.0
    %4328 = vmatpush1.msra.mxu0 0.0
    %4329 = vmatprep.subr.mxu0 0.0
    %4330 = vmatpush1.msra.mxu0 0.0
    %4331 = vmatprep.subr.mxu0 0.0
    %4332 = vmatpush1.msra.mxu0 0.0
    %4333 = vmatprep.subr.mxu0 0.0
    %4334 = vmatpush1.msra.mxu0 0.0
    %4335 = vmatprep.subr.mxu0 0.0
    %4336 = vmatpush1.msra.mxu0 0.0
    %4337 = vmatprep.subr.mxu0 0.0
    %4338 = vmatpush1.msra.mxu0 0.0
    %4339 = vmatprep.subr.mxu0 0.0
    %4340 = vmatpush1.msra.mxu0 0.0
    %4341 = vmatprep.subr.mxu0 0.0
    %4342 = vmatpush1.msra.mxu0 0.0
    %4343 = vmatprep.subr.mxu0 0.0
    %4344 = vmatpush1.msra.mxu0 0.0
    %4345 = vmatprep.subr.mxu0 0.0
    %4346 = vmatpush1.msra.mxu0 0.0
    %4347 = vmatprep.subr.mxu0 0.0
    %4348 = vmatpush1.msra.mxu0 0.0
    %4349 = vmatprep.mubr.f32.mxu0 0.0
    %4350 = vmatmul.mubr.f32.gmra.mrb[0].mxu0 %v4189
    %v4351 = vpop.f32.mrb[0].mxu0
    %v4352 = vadd.f32 0.0, %v4351
    %v4353 = vpop.f32.mrb[0].mxu0
    %4354 = vmatprep.mubr.f32.mxu0 0.0
    %4355 = vmatmul.mubr.f32.gmra.mrb[0].mxu0 %v4190
    %v4356 = vpop.f32.mrb[0].mxu0
    %v4357 = vadd.f32 0.0, %v4356
    %v4358 = vpop.f32.mrb[0].mxu0
    %4359 = vmatprep.mubr.f32.mxu0 0.0
    %4360 = vmatmul.mubr.f32.gmra.mrb[0].mxu0 %v4191
    %v4361 = vpop.f32.mrb[0].mxu0
    %v4362 = vadd.f32 0.0, %v4361
    %v4363 = vpop.f32.mrb[0].mxu0
    %4364 = vmatprep.mubr.f32.mxu0 0.0
    %4365 = vmatmul.mubr.f32.gmra.mrb[0].mxu0 %v4192
    %v4366 = vpop.f32.mrb[0].mxu0
    %v4367 = vadd.f32 0.0, %v4366
    %v4368 = vpop.f32.mrb[0].mxu0
    %4369 = vmatprep.mubr.f32.mxu0 0.0
    %4370 = vmatmul.mubr.f32.gmra.mrb[0].mxu0 %v4193
    %v4371 = vpop.f32.mrb[0].mxu0
    %v4372 = vadd.f32 0.0, %v4371
    %v4373 = vpop.f32.mrb[0].mxu0
    %4374 = vmatprep.mubr.f32.mxu0 0.0
    %4375 = vmatmul.mubr.f32.gmra.mrb[0].mxu0 %v4194
    %v4376 = vpop.f32.mrb[0].mxu0
    %v4377 = vadd.f32 0.0, %v4376
    %v4378 = vpop.f32.mrb[0].mxu0
    %4379 = vmatprep.mubr.f32.mxu0 0.0
    %4380 = vmatmul.mubr.f32.gmra.mrb[0].mxu0 %v4195
    %v4381 = vpop.f32.mrb[0].mxu0
    %v4382 = vadd.f32 0.0, %v4381
    %v4383 = vpop.f32.mrb[0].mxu0
    %4384 = vmatprep.mubr.f32.mxu0 0.0
    %4385 = vmatmul.mubr.f32.gmra.mrb[0].mxu0 %v4196
    %v4386 = vpop.f32.mrb[0].mxu0
    %v4387 = vadd.f32 0.0, %v4386
    %v4388 = vpop.f32.mrb[0].mxu0
    %4389 = vmatprep.mubr.f32.mxu0 0.0
    %4390 = vmatmul.mubr.f32.gmra.mrb[0].mxu0 %v4197
    %v4391 = vpop.f32.mrb[0].mxu0
    %v4392 = vadd.f32 0.0, %v4391
    %v4393 = vpop.f32.mrb[0].mxu0
    %4394 = vmatprep.mubr.f32.mxu0 0.0
    %4395 = vmatmul.mubr.f32.gmra.mrb[0].mxu0 %v4198
    %v4396 = vpop.f32.mrb[0].mxu0
    %v4397 = vadd.f32 0.0, %v4396
    %v4398 = vpop.f32.mrb[0].mxu0
    %4399 = vmatprep.mubr.f32.mxu0 0.0
    %4400 = vmatmul.mubr.f32.gmra.mrb[0].mxu0 %v4199
    %v4401 = vpop.f32.mrb[0].mxu0
    %v4402 = vadd.f32 0.0, %v4401
    %v4403 = vpop.f32.mrb[0].mxu0
    %4404 = vmatprep.mubr.f32.mxu0 0.0
    %4405 = vmatmul.mubr.f32.gmra.mrb[0].mxu0 %v4200
    %v4406 = vpop.f32.mrb[0].mxu0
    %v4407 = vadd.f32 0.0, %v4406
    %v4408 = vpop.f32.mrb[0].mxu0
    %4409 = vmatprep.mubr.f32.mxu0 0.0
    %4410 = vmatmul.mubr.f32.gmra.mrb[0].mxu0 %v4201
    %v4411 = vpop.f32.mrb[0].mxu0
    %v4412 = vadd.f32 0.0, %v4411
    %v4413 = vpop.f32.mrb[0].mxu0
    %4414 = vmatprep.mubr.f32.mxu0 0.0
    %4415 = vmatmul.mubr.f32.gmra.mrb[0].mxu0 %v4202
    %v4416 = vpop.f32.mrb[0].mxu0
    %v4417 = vadd.f32 0.0, %v4416
    %v4418 = vpop.f32.mrb[0].mxu0
    %4419 = vmatprep.mubr.f32.mxu0 0.0
    %4420 = vmatmul.mubr.f32.gmra.mrb[0].mxu0 %v4203
    %v4421 = vpop.f32.mrb[0].mxu0
    %v4422 = vadd.f32 0.0, %v4421
    %v4423 = vpop.f32.mrb[0].mxu0
    %4424 = vmatprep.mubr.f32.mxu0 0.0
    %4425 = vmatmul.mubr.f32.gmra.mrb[0].mxu0 %v4204
    %v4426 = vpop.f32.mrb[0].mxu0
    %v4427 = vadd.f32 0.0, %v4426
    %v4428 = vpop.f32.mrb[0].mxu0
    %4429 = vdwg.mxu0
    %4446 = vrot.lane.b32.xlu0 %v1911, 64
    %v4447 = vpop.permute.xlu0 %4446
    %4448 = vrot.lane.b32.xlu0 %v1917, 64
    %v4449 = vpop.permute.xlu0 %4448
    %4450 = vrot.lane.b32.xlu0 %v1923, 64
    %v4451 = vpop.permute.xlu0 %4450
    %4452 = vrot.lane.b32.xlu0 %v1929, 64
    %v4453 = vpop.permute.xlu0 %4452
    %4454 = vrot.lane.b32.xlu0 %v1935, 64
    %v4455 = vpop.permute.xlu0 %4454
    %4456 = vrot.lane.b32.xlu0 %v1941, 64
    %v4457 = vpop.permute.xlu0 %4456
    %4458 = vrot.lane.b32.xlu0 %v1947, 64
    %v4459 = vpop.permute.xlu0 %4458
    %4460 = vrot.lane.b32.xlu0 %v1953, 64
    %v4461 = vpop.permute.xlu0 %4460
    %4462 = vrot.lane.b32.xlu0 %v1959, 64
    %v4463 = vpop.permute.xlu0 %4462
    %4464 = vrot.lane.b32.xlu0 %v1965, 64
    %v4465 = vpop.permute.xlu0 %4464
    %4466 = vrot.lane.b32.xlu0 %v1971, 64
    %v4467 = vpop.permute.xlu0 %4466
    %4468 = vrot.lane.b32.xlu0 %v1977, 64
    %v4469 = vpop.permute.xlu0 %4468
    %4470 = vrot.lane.b32.xlu0 %v1983, 64
    %v4471 = vpop.permute.xlu0 %4470
    %4472 = vrot.lane.b32.xlu0 %v1989, 64
    %v4473 = vpop.permute.xlu0 %4472
    %4474 = vrot.lane.b32.xlu0 %v1995, 64
    %v4475 = vpop.permute.xlu0 %4474
    %4476 = vrot.lane.b32.xlu0 %v2001, 64
    %v4477 = vpop.permute.xlu0 %4476
    %4494 = vmatprep.subr.mxu0 0.0
    %4495 = vmatpush1.msra.mxu0 %v4447
    %4496 = vmatprep.subr.mxu0 0.0
    %4497 = vmatpush1.msra.mxu0 %v4449
    %4498 = vmatprep.subr.mxu0 0.0
    %4499 = vmatpush1.msra.mxu0 %v4451
    %4500 = vmatprep.subr.mxu0 0.0
    %4501 = vmatpush1.msra.mxu0 %v4453
    %4502 = vmatprep.subr.mxu0 0.0
    %4503 = vmatpush1.msra.mxu0 %v4455
    %4504 = vmatprep.subr.mxu0 0.0
    %4505 = vmatpush1.msra.mxu0 %v4457
    %4506 = vmatprep.subr.mxu0 0.0
    %4507 = vmatpush1.msra.mxu0 %v4459
    %4508 = vmatprep.subr.mxu0 0.0
    %4509 = vmatpush1.msra.mxu0 %v4461
    %4510 = vmatprep.subr.mxu0 0.0
    %4511 = vmatpush1.msra.mxu0 %v4463
    %4512 = vmatprep.subr.mxu0 0.0
    %4513 = vmatpush1.msra.mxu0 %v4465
    %4514 = vmatprep.subr.mxu0 0.0
    %4515 = vmatpush1.msra.mxu0 %v4467
    %4516 = vmatprep.subr.mxu0 0.0
    %4517 = vmatpush1.msra.mxu0 %v4469
    %4518 = vmatprep.subr.mxu0 0.0
    %4519 = vmatpush1.msra.mxu0 %v4471
    %4520 = vmatprep.subr.mxu0 0.0
    %4521 = vmatpush1.msra.mxu0 %v4473
    %4522 = vmatprep.subr.mxu0 0.0
    %4523 = vmatpush1.msra.mxu0 %v4475
    %4524 = vmatprep.subr.mxu0 0.0
    %4525 = vmatpush1.msra.mxu0 %v4477
    %4526 = vmatprep.subr.mxu0 0.0
    %4527 = vmatpush1.msra.mxu0 0.0
    %4528 = vmatprep.subr.mxu0 0.0
    %4529 = vmatpush1.msra.mxu0 0.0
    %4530 = vmatprep.subr.mxu0 0.0
    %4531 = vmatpush1.msra.mxu0 0.0
    %4532 = vmatprep.subr.mxu0 0.0
    %4533 = vmatpush1.msra.mxu0 0.0
    %4534 = vmatprep.subr.mxu0 0.0
    %4535 = vmatpush1.msra.mxu0 0.0
    %4536 = vmatprep.subr.mxu0 0.0
    %4537 = vmatpush1.msra.mxu0 0.0
    %4538 = vmatprep.subr.mxu0 0.0
    %4539 = vmatpush1.msra.mxu0 0.0
    %4540 = vmatprep.subr.mxu0 0.0
    %4541 = vmatpush1.msra.mxu0 0.0
    %4542 = vmatprep.subr.mxu0 0.0
    %4543 = vmatpush1.msra.mxu0 0.0
    %4544 = vmatprep.subr.mxu0 0.0
    %4545 = vmatpush1.msra.mxu0 0.0
    %4546 = vmatprep.subr.mxu0 0.0
    %4547 = vmatpush1.msra.mxu0 0.0
    %4548 = vmatprep.subr.mxu0 0.0
    %4549 = vmatpush1.msra.mxu0 0.0
    %4550 = vmatprep.subr.mxu0 0.0
    %4551 = vmatpush1.msra.mxu0 0.0
    %4552 = vmatprep.subr.mxu0 0.0
    %4553 = vmatpush1.msra.mxu0 0.0
    %4554 = vmatprep.subr.mxu0 0.0
    %4555 = vmatpush1.msra.mxu0 0.0
    %4556 = vmatprep.subr.mxu0 0.0
    %4557 = vmatpush1.msra.mxu0 0.0
    %4558 = vmatprep.mubr.f32.mxu0 0.0
    %4559 = vmatmul.mubr.f32.gmra.mrb[0].mxu0 %v4205
    %v4560 = vpop.f32.mrb[0].mxu0
    %v4561 = vadd.f32 0.0, %v4560
    %v4562 = vpop.f32.mrb[0].mxu0
    %4563 = vmatprep.mubr.f32.mxu0 0.0
    %4564 = vmatmul.mubr.f32.gmra.mrb[0].mxu0 %v4206
    %v4565 = vpop.f32.mrb[0].mxu0
    %v4566 = vadd.f32 0.0, %v4565
    %v4567 = vpop.f32.mrb[0].mxu0
    %4568 = vmatprep.mubr.f32.mxu0 0.0
    %4569 = vmatmul.mubr.f32.gmra.mrb[0].mxu0 %v4207
    %v4570 = vpop.f32.mrb[0].mxu0
    %v4571 = vadd.f32 0.0, %v4570
    %v4572 = vpop.f32.mrb[0].mxu0
    %4573 = vmatprep.mubr.f32.mxu0 0.0
    %4574 = vmatmul.mubr.f32.gmra.mrb[0].mxu0 %v4208
    %v4575 = vpop.f32.mrb[0].mxu0
    %v4576 = vadd.f32 0.0, %v4575
    %v4577 = vpop.f32.mrb[0].mxu0
    %4578 = vmatprep.mubr.f32.mxu0 0.0
    %4579 = vmatmul.mubr.f32.gmra.mrb[0].mxu0 %v4209
    %v4580 = vpop.f32.mrb[0].mxu0
    %v4581 = vadd.f32 0.0, %v4580
    %v4582 = vpop.f32.mrb[0].mxu0
    %4583 = vmatprep.mubr.f32.mxu0 0.0
    %4584 = vmatmul.mubr.f32.gmra.mrb[0].mxu0 %v4210
    %v4585 = vpop.f32.mrb[0].mxu0
    %v4586 = vadd.f32 0.0, %v4585
    %v4587 = vpop.f32.mrb[0].mxu0
    %4588 = vmatprep.mubr.f32.mxu0 0.0
    %4589 = vmatmul.mubr.f32.gmra.mrb[0].mxu0 %v4211
    %v4590 = vpop.f32.mrb[0].mxu0
    %v4591 = vadd.f32 0.0, %v4590
    %v4592 = vpop.f32.mrb[0].mxu0
    %4593 = vmatprep.mubr.f32.mxu0 0.0
    %4594 = vmatmul.mubr.f32.gmra.mrb[0].mxu0 %v4212
    %v4595 = vpop.f32.mrb[0].mxu0
    %v4596 = vadd.f32 0.0, %v4595
    %v4597 = vpop.f32.mrb[0].mxu0
    %4598 = vmatprep.mubr.f32.mxu0 0.0
    %4599 = vmatmul.mubr.f32.gmra.mrb[0].mxu0 %v4213
    %v4600 = vpop.f32.mrb[0].mxu0
    %v4601 = vadd.f32 0.0, %v4600
    %v4602 = vpop.f32.mrb[0].mxu0
    %4603 = vmatprep.mubr.f32.mxu0 0.0
    %4604 = vmatmul.mubr.f32.gmra.mrb[0].mxu0 %v4214
    %v4605 = vpop.f32.mrb[0].mxu0
    %v4606 = vadd.f32 0.0, %v4605
    %v4607 = vpop.f32.mrb[0].mxu0
    %4608 = vmatprep.mubr.f32.mxu0 0.0
    %4609 = vmatmul.mubr.f32.gmra.mrb[0].mxu0 %v4215
    %v4610 = vpop.f32.mrb[0].mxu0
    %v4611 = vadd.f32 0.0, %v4610
    %v4612 = vpop.f32.mrb[0].mxu0
    %4613 = vmatprep.mubr.f32.mxu0 0.0
    %4614 = vmatmul.mubr.f32.gmra.mrb[0].mxu0 %v4216
    %v4615 = vpop.f32.mrb[0].mxu0
    %v4616 = vadd.f32 0.0, %v4615
    %v4617 = vpop.f32.mrb[0].mxu0
    %4618 = vmatprep.mubr.f32.mxu0 0.0
    %4619 = vmatmul.mubr.f32.gmra.mrb[0].mxu0 %v4217
    %v4620 = vpop.f32.mrb[0].mxu0
    %v4621 = vadd.f32 0.0, %v4620
    %v4622 = vpop.f32.mrb[0].mxu0
    %4623 = vmatprep.mubr.f32.mxu0 0.0
    %4624 = vmatmul.mubr.f32.gmra.mrb[0].mxu0 %v4218
    %v4625 = vpop.f32.mrb[0].mxu0
    %v4626 = vadd.f32 0.0, %v4625
    %v4627 = vpop.f32.mrb[0].mxu0
    %4628 = vmatprep.mubr.f32.mxu0 0.0
    %4629 = vmatmul.mubr.f32.gmra.mrb[0].mxu0 %v4219
    %v4630 = vpop.f32.mrb[0].mxu0
    %v4631 = vadd.f32 0.0, %v4630
    %v4632 = vpop.f32.mrb[0].mxu0
    %4633 = vmatprep.mubr.f32.mxu0 0.0
    %4634 = vmatmul.mubr.f32.gmra.mrb[0].mxu0 %v4220
    %v4635 = vpop.f32.mrb[0].mxu0
    %v4636 = vadd.f32 0.0, %v4635
    %v4637 = vpop.f32.mrb[0].mxu0
    %4638 = vdwg.mxu0
    %v4640 = vsel %vm2262, %v789, 0
    %v4643 = vsel %vm2262, %v795, 0
    %v4646 = vsel %vm2262, %v801, 0
    %v4649 = vsel %vm2262, %v807, 0
    %v4652 = vsel %vm2262, %v813, 0
    %v4655 = vsel %vm2262, %v819, 0
    %v4658 = vsel %vm2262, %v825, 0
    %v4661 = vsel %vm2262, %v831, 0
    %v4664 = vsel %vm2262, %v837, 0
    %v4667 = vsel %vm2262, %v843, 0
    %v4670 = vsel %vm2262, %v849, 0
    %v4673 = vsel %vm2262, %v855, 0
    %v4676 = vsel %vm2262, %v861, 0
    %v4679 = vsel %vm2262, %v867, 0
    %v4682 = vsel %vm2262, %v873, 0
    %v4685 = vsel %vm2262, %v879, 0
    %v4688 = vsel %vm2262, %v1303, 0
    %v4691 = vsel %vm2262, %v1309, 0
    %v4694 = vsel %vm2262, %v1315, 0
    %v4697 = vsel %vm2262, %v1321, 0
    %v4700 = vsel %vm2262, %v1327, 0
    %v4703 = vsel %vm2262, %v1333, 0
    %v4706 = vsel %vm2262, %v1339, 0
    %v4709 = vsel %vm2262, %v1345, 0
    %v4712 = vsel %vm2262, %v1351, 0
    %v4715 = vsel %vm2262, %v1357, 0
    %v4718 = vsel %vm2262, %v1363, 0
    %v4721 = vsel %vm2262, %v1369, 0
    %v4724 = vsel %vm2262, %v1375, 0
    %v4727 = vsel %vm2262, %v1381, 0
    %v4730 = vsel %vm2262, %v1387, 0
    %v4733 = vsel %vm2262, %v1393, 0
    %4735 = vmatprep.subr.mxu0 0.0
    %4736 = vmatpush1.xpose.msra.mxu0 %v4688
    %4737 = vmatprep.subr.mxu0 0.0
    %4738 = vmatpush1.xpose.msra.mxu0 %v4691
    %4739 = vmatprep.subr.mxu0 0.0
    %4740 = vmatpush1.xpose.msra.mxu0 %v4694
    %4741 = vmatprep.subr.mxu0 0.0
    %4742 = vmatpush1.xpose.msra.mxu0 %v4697
    %4743 = vmatprep.subr.mxu0 0.0
    %4744 = vmatpush1.xpose.msra.mxu0 %v4700
    %4745 = vmatprep.subr.mxu0 0.0
    %4746 = vmatpush1.xpose.msra.mxu0 %v4703
    %4747 = vmatprep.subr.mxu0 0.0
    %4748 = vmatpush1.xpose.msra.mxu0 %v4706
    %4749 = vmatprep.subr.mxu0 0.0
    %4750 = vmatpush1.xpose.msra.mxu0 %v4709
    %4751 = vmatprep.subr.mxu0 0.0
    %4752 = vmatpush1.xpose.msra.mxu0 %v4712
    %4753 = vmatprep.subr.mxu0 0.0
    %4754 = vmatpush1.xpose.msra.mxu0 %v4715
    %4755 = vmatprep.subr.mxu0 0.0
    %4756 = vmatpush1.xpose.msra.mxu0 %v4718
    %4757 = vmatprep.subr.mxu0 0.0
    %4758 = vmatpush1.xpose.msra.mxu0 %v4721
    %4759 = vmatprep.subr.mxu0 0.0
    %4760 = vmatpush1.xpose.msra.mxu0 %v4724
    %4761 = vmatprep.subr.mxu0 0.0
    %4762 = vmatpush1.xpose.msra.mxu0 %v4727
    %4763 = vmatprep.subr.mxu0 0.0
    %4764 = vmatpush1.xpose.msra.mxu0 %v4730
    %4765 = vmatprep.subr.mxu0 0.0
    %4766 = vmatpush1.xpose.msra.mxu0 %v4733
    %4767 = vmatprep.subr.mxu0 0.0
    %4768 = vmatpush1.xpose.msra.mxu0 0.0
    %4769 = vmatprep.subr.mxu0 0.0
    %4770 = vmatpush1.xpose.msra.mxu0 0.0
    %4771 = vmatprep.subr.mxu0 0.0
    %4772 = vmatpush1.xpose.msra.mxu0 0.0
    %4773 = vmatprep.subr.mxu0 0.0
    %4774 = vmatpush1.xpose.msra.mxu0 0.0
    %4775 = vmatprep.subr.mxu0 0.0
    %4776 = vmatpush1.xpose.msra.mxu0 0.0
    %4777 = vmatprep.subr.mxu0 0.0
    %4778 = vmatpush1.xpose.msra.mxu0 0.0
    %4779 = vmatprep.subr.mxu0 0.0
    %4780 = vmatpush1.xpose.msra.mxu0 0.0
    %4781 = vmatprep.subr.mxu0 0.0
    %4782 = vmatpush1.xpose.msra.mxu0 0.0
    %4783 = vmatprep.subr.mxu0 0.0
    %4784 = vmatpush1.xpose.msra.mxu0 0.0
    %4785 = vmatprep.subr.mxu0 0.0
    %4786 = vmatpush1.xpose.msra.mxu0 0.0
    %4787 = vmatprep.subr.mxu0 0.0
    %4788 = vmatpush1.xpose.msra.mxu0 0.0
    %4789 = vmatprep.subr.mxu0 0.0
    %4790 = vmatpush1.xpose.msra.mxu0 0.0
    %4791 = vmatprep.subr.mxu0 0.0
    %4792 = vmatpush1.xpose.msra.mxu0 0.0
    %4793 = vmatprep.subr.mxu0 0.0
    %4794 = vmatpush1.xpose.msra.mxu0 0.0
    %4795 = vmatprep.subr.mxu0 0.0
    %4796 = vmatpush1.xpose.msra.mxu0 0.0
    %4797 = vmatprep.subr.mxu0 0.0
    %4798 = vmatpush1.xpose.msra.mxu0 0.0
    %4799 = vmatprep.mubr.f32.mxu0 0.0
    %4800 = vmatmul.mubr.f32.gmra.mrb[0].mxu0 %v4640
    %v4801 = vpop.f32.mrb[0].mxu0
    %v4802 = vadd.f32 0.0, %v4801
    %v4803 = vpop.f32.mrb[0].mxu0
    %4804 = vmatprep.mubr.f32.mxu0 0.0
    %4805 = vmatmul.mubr.f32.gmra.mrb[0].mxu0 %v4643
    %v4806 = vpop.f32.mrb[0].mxu0
    %v4807 = vadd.f32 0.0, %v4806
    %v4808 = vpop.f32.mrb[0].mxu0
    %4809 = vmatprep.mubr.f32.mxu0 0.0
    %4810 = vmatmul.mubr.f32.gmra.mrb[0].mxu0 %v4646
    %v4811 = vpop.f32.mrb[0].mxu0
    %v4812 = vadd.f32 0.0, %v4811
    %v4813 = vpop.f32.mrb[0].mxu0
    %4814 = vmatprep.mubr.f32.mxu0 0.0
    %4815 = vmatmul.mubr.f32.gmra.mrb[0].mxu0 %v4649
    %v4816 = vpop.f32.mrb[0].mxu0
    %v4817 = vadd.f32 0.0, %v4816
    %v4818 = vpop.f32.mrb[0].mxu0
    %4819 = vmatprep.mubr.f32.mxu0 0.0
    %4820 = vmatmul.mubr.f32.gmra.mrb[0].mxu0 %v4652
    %v4821 = vpop.f32.mrb[0].mxu0
    %v4822 = vadd.f32 0.0, %v4821
    %v4823 = vpop.f32.mrb[0].mxu0
    %4824 = vmatprep.mubr.f32.mxu0 0.0
    %4825 = vmatmul.mubr.f32.gmra.mrb[0].mxu0 %v4655
    %v4826 = vpop.f32.mrb[0].mxu0
    %v4827 = vadd.f32 0.0, %v4826
    %v4828 = vpop.f32.mrb[0].mxu0
    %4829 = vmatprep.mubr.f32.mxu0 0.0
    %4830 = vmatmul.mubr.f32.gmra.mrb[0].mxu0 %v4658
    %v4831 = vpop.f32.mrb[0].mxu0
    %v4832 = vadd.f32 0.0, %v4831
    %v4833 = vpop.f32.mrb[0].mxu0
    %4834 = vmatprep.mubr.f32.mxu0 0.0
    %4835 = vmatmul.mubr.f32.gmra.mrb[0].mxu0 %v4661
    %v4836 = vpop.f32.mrb[0].mxu0
    %v4837 = vadd.f32 0.0, %v4836
    %v4838 = vpop.f32.mrb[0].mxu0
    %4839 = vmatprep.mubr.f32.mxu0 0.0
    %4840 = vmatmul.mubr.f32.gmra.mrb[0].mxu0 %v4664
    %v4841 = vpop.f32.mrb[0].mxu0
    %v4842 = vadd.f32 0.0, %v4841
    %v4843 = vpop.f32.mrb[0].mxu0
    %4844 = vmatprep.mubr.f32.mxu0 0.0
    %4845 = vmatmul.mubr.f32.gmra.mrb[0].mxu0 %v4667
    %v4846 = vpop.f32.mrb[0].mxu0
    %v4847 = vadd.f32 0.0, %v4846
    %v4848 = vpop.f32.mrb[0].mxu0
    %4849 = vmatprep.mubr.f32.mxu0 0.0
    %4850 = vmatmul.mubr.f32.gmra.mrb[0].mxu0 %v4670
    %v4851 = vpop.f32.mrb[0].mxu0
    %v4852 = vadd.f32 0.0, %v4851
    %v4853 = vpop.f32.mrb[0].mxu0
    %4854 = vmatprep.mubr.f32.mxu0 0.0
    %4855 = vmatmul.mubr.f32.gmra.mrb[0].mxu0 %v4673
    %v4856 = vpop.f32.mrb[0].mxu0
    %v4857 = vadd.f32 0.0, %v4856
    %v4858 = vpop.f32.mrb[0].mxu0
    %4859 = vmatprep.mubr.f32.mxu0 0.0
    %4860 = vmatmul.mubr.f32.gmra.mrb[0].mxu0 %v4676
    %v4861 = vpop.f32.mrb[0].mxu0
    %v4862 = vadd.f32 0.0, %v4861
    %v4863 = vpop.f32.mrb[0].mxu0
    %4864 = vmatprep.mubr.f32.mxu0 0.0
    %4865 = vmatmul.mubr.f32.gmra.mrb[0].mxu0 %v4679
    %v4866 = vpop.f32.mrb[0].mxu0
    %v4867 = vadd.f32 0.0, %v4866
    %v4868 = vpop.f32.mrb[0].mxu0
    %4869 = vmatprep.mubr.f32.mxu0 0.0
    %4870 = vmatmul.mubr.f32.gmra.mrb[0].mxu0 %v4682
    %v4871 = vpop.f32.mrb[0].mxu0
    %v4872 = vadd.f32 0.0, %v4871
    %v4873 = vpop.f32.mrb[0].mxu0
    %4874 = vmatprep.mubr.f32.mxu0 0.0
    %4875 = vmatmul.mubr.f32.gmra.mrb[0].mxu0 %v4685
    %v4876 = vpop.f32.mrb[0].mxu0
    %v4877 = vadd.f32 0.0, %v4876
    %v4878 = vpop.f32.mrb[0].mxu0
    %4879 = vdwg.mxu0
    %v4881 = vsel %vm2262, %v885, 0
    %v4884 = vsel %vm2262, %v891, 0
    %v4887 = vsel %vm2262, %v897, 0
    %v4890 = vsel %vm2262, %v903, 0
    %v4893 = vsel %vm2262, %v909, 0
    %v4896 = vsel %vm2262, %v915, 0
    %v4899 = vsel %vm2262, %v921, 0
    %v4902 = vsel %vm2262, %v927, 0
    %v4905 = vsel %vm2262, %v933, 0
    %v4908 = vsel %vm2262, %v939, 0
    %v4911 = vsel %vm2262, %v945, 0
    %v4914 = vsel %vm2262, %v951, 0
    %v4917 = vsel %vm2262, %v957, 0
    %v4920 = vsel %vm2262, %v963, 0
    %v4923 = vsel %vm2262, %v969, 0
    %v4926 = vsel %vm2262, %v975, 0
    %v4929 = vsel %vm2262, %v1399, 0
    %v4932 = vsel %vm2262, %v1405, 0
    %v4935 = vsel %vm2262, %v1411, 0
    %v4938 = vsel %vm2262, %v1417, 0
    %v4941 = vsel %vm2262, %v1423, 0
    %v4944 = vsel %vm2262, %v1429, 0
    %v4947 = vsel %vm2262, %v1435, 0
    %v4950 = vsel %vm2262, %v1441, 0
    %v4953 = vsel %vm2262, %v1447, 0
    %v4956 = vsel %vm2262, %v1453, 0
    %v4959 = vsel %vm2262, %v1459, 0
    %v4962 = vsel %vm2262, %v1465, 0
    %v4965 = vsel %vm2262, %v1471, 0
    %v4968 = vsel %vm2262, %v1477, 0
    %v4971 = vsel %vm2262, %v1483, 0
    %v4974 = vsel %vm2262, %v1489, 0
    %4976 = vmatprep.subr.mxu0 0.0
    %4977 = vmatpush1.xpose.msra.mxu0 %v4929
    %4978 = vmatprep.subr.mxu0 0.0
    %4979 = vmatpush1.xpose.msra.mxu0 %v4932
    %4980 = vmatprep.subr.mxu0 0.0
    %4981 = vmatpush1.xpose.msra.mxu0 %v4935
    %4982 = vmatprep.subr.mxu0 0.0
    %4983 = vmatpush1.xpose.msra.mxu0 %v4938
    %4984 = vmatprep.subr.mxu0 0.0
    %4985 = vmatpush1.xpose.msra.mxu0 %v4941
    %4986 = vmatprep.subr.mxu0 0.0
    %4987 = vmatpush1.xpose.msra.mxu0 %v4944
    %4988 = vmatprep.subr.mxu0 0.0
    %4989 = vmatpush1.xpose.msra.mxu0 %v4947
    %4990 = vmatprep.subr.mxu0 0.0
    %4991 = vmatpush1.xpose.msra.mxu0 %v4950
    %4992 = vmatprep.subr.mxu0 0.0
    %4993 = vmatpush1.xpose.msra.mxu0 %v4953
    %4994 = vmatprep.subr.mxu0 0.0
    %4995 = vmatpush1.xpose.msra.mxu0 %v4956
    %4996 = vmatprep.subr.mxu0 0.0
    %4997 = vmatpush1.xpose.msra.mxu0 %v4959
    %4998 = vmatprep.subr.mxu0 0.0
    %4999 = vmatpush1.xpose.msra.mxu0 %v4962
    %5000 = vmatprep.subr.mxu0 0.0
    %5001 = vmatpush1.xpose.msra.mxu0 %v4965
    %5002 = vmatprep.subr.mxu0 0.0
    %5003 = vmatpush1.xpose.msra.mxu0 %v4968
    %5004 = vmatprep.subr.mxu0 0.0
    %5005 = vmatpush1.xpose.msra.mxu0 %v4971
    %5006 = vmatprep.subr.mxu0 0.0
    %5007 = vmatpush1.xpose.msra.mxu0 %v4974
    %5008 = vmatprep.subr.mxu0 0.0
    %5009 = vmatpush1.xpose.msra.mxu0 0.0
    %5010 = vmatprep.subr.mxu0 0.0
    %5011 = vmatpush1.xpose.msra.mxu0 0.0
    %5012 = vmatprep.subr.mxu0 0.0
    %5013 = vmatpush1.xpose.msra.mxu0 0.0
    %5014 = vmatprep.subr.mxu0 0.0
    %5015 = vmatpush1.xpose.msra.mxu0 0.0
    %5016 = vmatprep.subr.mxu0 0.0
    %5017 = vmatpush1.xpose.msra.mxu0 0.0
    %5018 = vmatprep.subr.mxu0 0.0
    %5019 = vmatpush1.xpose.msra.mxu0 0.0
    %5020 = vmatprep.subr.mxu0 0.0
    %5021 = vmatpush1.xpose.msra.mxu0 0.0
    %5022 = vmatprep.subr.mxu0 0.0
    %5023 = vmatpush1.xpose.msra.mxu0 0.0
    %5024 = vmatprep.subr.mxu0 0.0
    %5025 = vmatpush1.xpose.msra.mxu0 0.0
    %5026 = vmatprep.subr.mxu0 0.0
    %5027 = vmatpush1.xpose.msra.mxu0 0.0
    %5028 = vmatprep.subr.mxu0 0.0
    %5029 = vmatpush1.xpose.msra.mxu0 0.0
    %5030 = vmatprep.subr.mxu0 0.0
    %5031 = vmatpush1.xpose.msra.mxu0 0.0
    %5032 = vmatprep.subr.mxu0 0.0
    %5033 = vmatpush1.xpose.msra.mxu0 0.0
    %5034 = vmatprep.subr.mxu0 0.0
    %5035 = vmatpush1.xpose.msra.mxu0 0.0
    %5036 = vmatprep.subr.mxu0 0.0
    %5037 = vmatpush1.xpose.msra.mxu0 0.0
    %5038 = vmatprep.subr.mxu0 0.0
    %5039 = vmatpush1.xpose.msra.mxu0 0.0
    %5040 = vmatprep.mubr.f32.mxu0 0.0
    %5041 = vmatmul.mubr.f32.gmra.mrb[0].mxu0 %v4881
    %v5042 = vpop.f32.mrb[0].mxu0
    %v5043 = vadd.f32 0.0, %v5042
    %v5044 = vpop.f32.mrb[0].mxu0
    %5045 = vmatprep.mubr.f32.mxu0 0.0
    %5046 = vmatmul.mubr.f32.gmra.mrb[0].mxu0 %v4884
    %v5047 = vpop.f32.mrb[0].mxu0
    %v5048 = vadd.f32 0.0, %v5047
    %v5049 = vpop.f32.mrb[0].mxu0
    %5050 = vmatprep.mubr.f32.mxu0 0.0
    %5051 = vmatmul.mubr.f32.gmra.mrb[0].mxu0 %v4887
    %v5052 = vpop.f32.mrb[0].mxu0
    %v5053 = vadd.f32 0.0, %v5052
    %v5054 = vpop.f32.mrb[0].mxu0
    %5055 = vmatprep.mubr.f32.mxu0 0.0
    %5056 = vmatmul.mubr.f32.gmra.mrb[0].mxu0 %v4890
    %v5057 = vpop.f32.mrb[0].mxu0
    %v5058 = vadd.f32 0.0, %v5057
    %v5059 = vpop.f32.mrb[0].mxu0
    %5060 = vmatprep.mubr.f32.mxu0 0.0
    %5061 = vmatmul.mubr.f32.gmra.mrb[0].mxu0 %v4893
    %v5062 = vpop.f32.mrb[0].mxu0
    %v5063 = vadd.f32 0.0, %v5062
    %v5064 = vpop.f32.mrb[0].mxu0
    %5065 = vmatprep.mubr.f32.mxu0 0.0
    %5066 = vmatmul.mubr.f32.gmra.mrb[0].mxu0 %v4896
    %v5067 = vpop.f32.mrb[0].mxu0
    %v5068 = vadd.f32 0.0, %v5067
    %v5069 = vpop.f32.mrb[0].mxu0
    %5070 = vmatprep.mubr.f32.mxu0 0.0
    %5071 = vmatmul.mubr.f32.gmra.mrb[0].mxu0 %v4899
    %v5072 = vpop.f32.mrb[0].mxu0
    %v5073 = vadd.f32 0.0, %v5072
    %v5074 = vpop.f32.mrb[0].mxu0
    %5075 = vmatprep.mubr.f32.mxu0 0.0
    %5076 = vmatmul.mubr.f32.gmra.mrb[0].mxu0 %v4902
    %v5077 = vpop.f32.mrb[0].mxu0
    %v5078 = vadd.f32 0.0, %v5077
    %v5079 = vpop.f32.mrb[0].mxu0
    %5080 = vmatprep.mubr.f32.mxu0 0.0
    %5081 = vmatmul.mubr.f32.gmra.mrb[0].mxu0 %v4905
    %v5082 = vpop.f32.mrb[0].mxu0
    %v5083 = vadd.f32 0.0, %v5082
    %v5084 = vpop.f32.mrb[0].mxu0
    %5085 = vmatprep.mubr.f32.mxu0 0.0
    %5086 = vmatmul.mubr.f32.gmra.mrb[0].mxu0 %v4908
    %v5087 = vpop.f32.mrb[0].mxu0
    %v5088 = vadd.f32 0.0, %v5087
    %v5089 = vpop.f32.mrb[0].mxu0
    %5090 = vmatprep.mubr.f32.mxu0 0.0
    %5091 = vmatmul.mubr.f32.gmra.mrb[0].mxu0 %v4911
    %v5092 = vpop.f32.mrb[0].mxu0
    %v5093 = vadd.f32 0.0, %v5092
    %v5094 = vpop.f32.mrb[0].mxu0
    %5095 = vmatprep.mubr.f32.mxu0 0.0
    %5096 = vmatmul.mubr.f32.gmra.mrb[0].mxu0 %v4914
    %v5097 = vpop.f32.mrb[0].mxu0
    %v5098 = vadd.f32 0.0, %v5097
    %v5099 = vpop.f32.mrb[0].mxu0
    %5100 = vmatprep.mubr.f32.mxu0 0.0
    %5101 = vmatmul.mubr.f32.gmra.mrb[0].mxu0 %v4917
    %v5102 = vpop.f32.mrb[0].mxu0
    %v5103 = vadd.f32 0.0, %v5102
    %v5104 = vpop.f32.mrb[0].mxu0
    %5105 = vmatprep.mubr.f32.mxu0 0.0
    %5106 = vmatmul.mubr.f32.gmra.mrb[0].mxu0 %v4920
    %v5107 = vpop.f32.mrb[0].mxu0
    %v5108 = vadd.f32 0.0, %v5107
    %v5109 = vpop.f32.mrb[0].mxu0
    %5110 = vmatprep.mubr.f32.mxu0 0.0
    %5111 = vmatmul.mubr.f32.gmra.mrb[0].mxu0 %v4923
    %v5112 = vpop.f32.mrb[0].mxu0
    %v5113 = vadd.f32 0.0, %v5112
    %v5114 = vpop.f32.mrb[0].mxu0
    %5115 = vmatprep.mubr.f32.mxu0 0.0
    %5116 = vmatmul.mubr.f32.gmra.mrb[0].mxu0 %v4926
    %v5117 = vpop.f32.mrb[0].mxu0
    %v5118 = vadd.f32 0.0, %v5117
    %v5119 = vpop.f32.mrb[0].mxu0
    %5120 = vdwg.mxu0
    %v5121 = vmul.f32 %v4802, 0.125
    %v5122 = vmul.f32 %v4807, 0.125
    %v5123 = vmul.f32 %v4812, 0.125
    %v5124 = vmul.f32 %v4817, 0.125
    %v5125 = vmul.f32 %v4822, 0.125
    %v5126 = vmul.f32 %v4827, 0.125
    %v5127 = vmul.f32 %v4832, 0.125
    %v5128 = vmul.f32 %v4837, 0.125
    %v5129 = vmul.f32 %v4842, 0.125
    %v5130 = vmul.f32 %v4847, 0.125
    %v5131 = vmul.f32 %v4852, 0.125
    %v5132 = vmul.f32 %v4857, 0.125
    %v5133 = vmul.f32 %v4862, 0.125
    %v5134 = vmul.f32 %v4867, 0.125
    %v5135 = vmul.f32 %v4872, 0.125
    %v5136 = vmul.f32 %v4877, 0.125
    %v5137 = vmul.f32 %v5043, 0.125
    %v5138 = vmul.f32 %v5048, 0.125
    %v5139 = vmul.f32 %v5053, 0.125
    %v5140 = vmul.f32 %v5058, 0.125
    %v5141 = vmul.f32 %v5063, 0.125
    %v5142 = vmul.f32 %v5068, 0.125
    %v5143 = vmul.f32 %v5073, 0.125
    %v5144 = vmul.f32 %v5078, 0.125
    %v5145 = vmul.f32 %v5083, 0.125
    %v5146 = vmul.f32 %v5088, 0.125
    %v5147 = vmul.f32 %v5093, 0.125
    %v5148 = vmul.f32 %v5098, 0.125
    %v5149 = vmul.f32 %v5103, 0.125
    %v5150 = vmul.f32 %v5108, 0.125
    %v5151 = vmul.f32 %v5113, 0.125
    %v5152 = vmul.f32 %v5118, 0.125
    %5153 = vmax.xlane.f32.xlu0 %v5121
    %v5154 = vpop.xlane.xlu0 %5153
    %5155 = vmax.xlane.f32.xlu0 %v5122
    %v5156 = vpop.xlane.xlu0 %5155
    %5157 = vmax.xlane.f32.xlu0 %v5123
    %v5158 = vpop.xlane.xlu0 %5157
    %5159 = vmax.xlane.f32.xlu0 %v5124
    %v5160 = vpop.xlane.xlu0 %5159
    %5161 = vmax.xlane.f32.xlu0 %v5125
    %v5162 = vpop.xlane.xlu0 %5161
    %5163 = vmax.xlane.f32.xlu0 %v5126
    %v5164 = vpop.xlane.xlu0 %5163
    %5165 = vmax.xlane.f32.xlu0 %v5127
    %v5166 = vpop.xlane.xlu0 %5165
    %5167 = vmax.xlane.f32.xlu0 %v5128
    %v5168 = vpop.xlane.xlu0 %5167
    %5169 = vmax.xlane.f32.xlu0 %v5129
    %v5170 = vpop.xlane.xlu0 %5169
    %5171 = vmax.xlane.f32.xlu0 %v5130
    %v5172 = vpop.xlane.xlu0 %5171
    %5173 = vmax.xlane.f32.xlu0 %v5131
    %v5174 = vpop.xlane.xlu0 %5173
    %5175 = vmax.xlane.f32.xlu0 %v5132
    %v5176 = vpop.xlane.xlu0 %5175
    %5177 = vmax.xlane.f32.xlu0 %v5133
    %v5178 = vpop.xlane.xlu0 %5177
    %5179 = vmax.xlane.f32.xlu0 %v5134
    %v5180 = vpop.xlane.xlu0 %5179
    %5181 = vmax.xlane.f32.xlu0 %v5135
    %v5182 = vpop.xlane.xlu0 %5181
    %5183 = vmax.xlane.f32.xlu0 %v5136
    %v5184 = vpop.xlane.xlu0 %5183
    %5185 = vmax.xlane.f32.xlu0 %v5137
    %v5186 = vpop.xlane.xlu0 %5185
    %5187 = vmax.xlane.f32.xlu0 %v5138
    %v5188 = vpop.xlane.xlu0 %5187
    %5189 = vmax.xlane.f32.xlu0 %v5139
    %v5190 = vpop.xlane.xlu0 %5189
    %5191 = vmax.xlane.f32.xlu0 %v5140
    %v5192 = vpop.xlane.xlu0 %5191
    %5193 = vmax.xlane.f32.xlu0 %v5141
    %v5194 = vpop.xlane.xlu0 %5193
    %5195 = vmax.xlane.f32.xlu0 %v5142
    %v5196 = vpop.xlane.xlu0 %5195
    %5197 = vmax.xlane.f32.xlu0 %v5143
    %v5198 = vpop.xlane.xlu0 %5197
    %5199 = vmax.xlane.f32.xlu0 %v5144
    %v5200 = vpop.xlane.xlu0 %5199
    %5201 = vmax.xlane.f32.xlu0 %v5145
    %v5202 = vpop.xlane.xlu0 %5201
    %5203 = vmax.xlane.f32.xlu0 %v5146
    %v5204 = vpop.xlane.xlu0 %5203
    %5205 = vmax.xlane.f32.xlu0 %v5147
    %v5206 = vpop.xlane.xlu0 %5205
    %5207 = vmax.xlane.f32.xlu0 %v5148
    %v5208 = vpop.xlane.xlu0 %5207
    %5209 = vmax.xlane.f32.xlu0 %v5149
    %v5210 = vpop.xlane.xlu0 %5209
    %5211 = vmax.xlane.f32.xlu0 %v5150
    %v5212 = vpop.xlane.xlu0 %5211
    %5213 = vmax.xlane.f32.xlu0 %v5151
    %v5214 = vpop.xlane.xlu0 %5213
    %5215 = vmax.xlane.f32.xlu0 %v5152
    %v5216 = vpop.xlane.xlu0 %5215
    %v5217 = vsub.f32 %v5121, %v5154
    %v5218 = vsub.f32 %v5122, %v5156
    %v5219 = vsub.f32 %v5123, %v5158
    %v5220 = vsub.f32 %v5124, %v5160
    %v5221 = vsub.f32 %v5125, %v5162
    %v5222 = vsub.f32 %v5126, %v5164
    %v5223 = vsub.f32 %v5127, %v5166
    %v5224 = vsub.f32 %v5128, %v5168
    %v5225 = vsub.f32 %v5129, %v5170
    %v5226 = vsub.f32 %v5130, %v5172
    %v5227 = vsub.f32 %v5131, %v5174
    %v5228 = vsub.f32 %v5132, %v5176
    %v5229 = vsub.f32 %v5133, %v5178
    %v5230 = vsub.f32 %v5134, %v5180
    %v5231 = vsub.f32 %v5135, %v5182
    %v5232 = vsub.f32 %v5136, %v5184
    %v5233 = vsub.f32 %v5137, %v5186
    %v5234 = vsub.f32 %v5138, %v5188
    %v5235 = vsub.f32 %v5139, %v5190
    %v5236 = vsub.f32 %v5140, %v5192
    %v5237 = vsub.f32 %v5141, %v5194
    %v5238 = vsub.f32 %v5142, %v5196
    %v5239 = vsub.f32 %v5143, %v5198
    %v5240 = vsub.f32 %v5144, %v5200
    %v5241 = vsub.f32 %v5145, %v5202
    %v5242 = vsub.f32 %v5146, %v5204
    %v5243 = vsub.f32 %v5147, %v5206
    %v5244 = vsub.f32 %v5148, %v5208
    %v5245 = vsub.f32 %v5149, %v5210
    %v5246 = vsub.f32 %v5150, %v5212
    %v5247 = vsub.f32 %v5151, %v5214
    %v5248 = vsub.f32 %v5152, %v5216
    %v5249 = vmul.f32 %v5217, 1.442695
    %v5250 = vpow.pop %v5249
    %v5251 = vmul.f32 %v5218, 1.442695
    %v5252 = vpow.pop %v5251
    %v5253 = vmul.f32 %v5219, 1.442695
    %v5254 = vpow.pop %v5253
    %v5255 = vmul.f32 %v5220, 1.442695
    %v5256 = vpow.pop %v5255
    %v5257 = vmul.f32 %v5221, 1.442695
    %v5258 = vpow.pop %v5257
    %v5259 = vmul.f32 %v5222, 1.442695
    %v5260 = vpow.pop %v5259
    %v5261 = vmul.f32 %v5223, 1.442695
    %v5262 = vpow.pop %v5261
    %v5263 = vmul.f32 %v5224, 1.442695
    %v5264 = vpow.pop %v5263
    %v5265 = vmul.f32 %v5225, 1.442695
    %v5266 = vpow.pop %v5265
    %v5267 = vmul.f32 %v5226, 1.442695
    %v5268 = vpow.pop %v5267
    %v5269 = vmul.f32 %v5227, 1.442695
    %v5270 = vpow.pop %v5269
    %v5271 = vmul.f32 %v5228, 1.442695
    %v5272 = vpow.pop %v5271
    %v5273 = vmul.f32 %v5229, 1.442695
    %v5274 = vpow.pop %v5273
    %v5275 = vmul.f32 %v5230, 1.442695
    %v5276 = vpow.pop %v5275
    %v5277 = vmul.f32 %v5231, 1.442695
    %v5278 = vpow.pop %v5277
    %v5279 = vmul.f32 %v5232, 1.442695
    %v5280 = vpow.pop %v5279
    %v5281 = vmul.f32 %v5233, 1.442695
    %v5282 = vpow.pop %v5281
    %v5283 = vmul.f32 %v5234, 1.442695
    %v5284 = vpow.pop %v5283
    %v5285 = vmul.f32 %v5235, 1.442695
    %v5286 = vpow.pop %v5285
    %v5287 = vmul.f32 %v5236, 1.442695
    %v5288 = vpow.pop %v5287
    %v5289 = vmul.f32 %v5237, 1.442695
    %v5290 = vpow.pop %v5289
    %v5291 = vmul.f32 %v5238, 1.442695
    %v5292 = vpow.pop %v5291
    %v5293 = vmul.f32 %v5239, 1.442695
    %v5294 = vpow.pop %v5293
    %v5295 = vmul.f32 %v5240, 1.442695
    %v5296 = vpow.pop %v5295
    %v5297 = vmul.f32 %v5241, 1.442695
    %v5298 = vpow.pop %v5297
    %v5299 = vmul.f32 %v5242, 1.442695
    %v5300 = vpow.pop %v5299
    %v5301 = vmul.f32 %v5243, 1.442695
    %v5302 = vpow.pop %v5301
    %v5303 = vmul.f32 %v5244, 1.442695
    %v5304 = vpow.pop %v5303
    %v5305 = vmul.f32 %v5245, 1.442695
    %v5306 = vpow.pop %v5305
    %v5307 = vmul.f32 %v5246, 1.442695
    %v5308 = vpow.pop %v5307
    %v5309 = vmul.f32 %v5247, 1.442695
    %v5310 = vpow.pop %v5309
    %v5311 = vmul.f32 %v5248, 1.442695
    %v5312 = vpow.pop %v5311
    %5313 = vadd.xlane.f32.xlu0 %v5250
    %v5314 = vpop.xlane.xlu0 %5313
    %5315 = vadd.xlane.f32.xlu0 %v5252
    %v5316 = vpop.xlane.xlu0 %5315
    %5317 = vadd.xlane.f32.xlu0 %v5254
    %v5318 = vpop.xlane.xlu0 %5317
    %5319 = vadd.xlane.f32.xlu0 %v5256
    %v5320 = vpop.xlane.xlu0 %5319
    %5321 = vadd.xlane.f32.xlu0 %v5258
    %v5322 = vpop.xlane.xlu0 %5321
    %5323 = vadd.xlane.f32.xlu0 %v5260
    %v5324 = vpop.xlane.xlu0 %5323
    %5325 = vadd.xlane.f32.xlu0 %v5262
    %v5326 = vpop.xlane.xlu0 %5325
    %5327 = vadd.xlane.f32.xlu0 %v5264
    %v5328 = vpop.xlane.xlu0 %5327
    %5329 = vadd.xlane.f32.xlu0 %v5266
    %v5330 = vpop.xlane.xlu0 %5329
    %5331 = vadd.xlane.f32.xlu0 %v5268
    %v5332 = vpop.xlane.xlu0 %5331
    %5333 = vadd.xlane.f32.xlu0 %v5270
    %v5334 = vpop.xlane.xlu0 %5333
    %5335 = vadd.xlane.f32.xlu0 %v5272
    %v5336 = vpop.xlane.xlu0 %5335
    %5337 = vadd.xlane.f32.xlu0 %v5274
    %v5338 = vpop.xlane.xlu0 %5337
    %5339 = vadd.xlane.f32.xlu0 %v5276
    %v5340 = vpop.xlane.xlu0 %5339
    %5341 = vadd.xlane.f32.xlu0 %v5278
    %v5342 = vpop.xlane.xlu0 %5341
    %5343 = vadd.xlane.f32.xlu0 %v5280
    %v5344 = vpop.xlane.xlu0 %5343
    %5345 = vadd.xlane.f32.xlu0 %v5282
    %v5346 = vpop.xlane.xlu0 %5345
    %5347 = vadd.xlane.f32.xlu0 %v5284
    %v5348 = vpop.xlane.xlu0 %5347
    %5349 = vadd.xlane.f32.xlu0 %v5286
    %v5350 = vpop.xlane.xlu0 %5349
    %5351 = vadd.xlane.f32.xlu0 %v5288
    %v5352 = vpop.xlane.xlu0 %5351
    %5353 = vadd.xlane.f32.xlu0 %v5290
    %v5354 = vpop.xlane.xlu0 %5353
    %5355 = vadd.xlane.f32.xlu0 %v5292
    %v5356 = vpop.xlane.xlu0 %5355
    %5357 = vadd.xlane.f32.xlu0 %v5294
    %v5358 = vpop.xlane.xlu0 %5357
    %5359 = vadd.xlane.f32.xlu0 %v5296
    %v5360 = vpop.xlane.xlu0 %5359
    %5361 = vadd.xlane.f32.xlu0 %v5298
    %v5362 = vpop.xlane.xlu0 %5361
    %5363 = vadd.xlane.f32.xlu0 %v5300
    %v5364 = vpop.xlane.xlu0 %5363
    %5365 = vadd.xlane.f32.xlu0 %v5302
    %v5366 = vpop.xlane.xlu0 %5365
    %5367 = vadd.xlane.f32.xlu0 %v5304
    %v5368 = vpop.xlane.xlu0 %5367
    %5369 = vadd.xlane.f32.xlu0 %v5306
    %v5370 = vpop.xlane.xlu0 %5369
    %5371 = vadd.xlane.f32.xlu0 %v5308
    %v5372 = vpop.xlane.xlu0 %5371
    %5373 = vadd.xlane.f32.xlu0 %v5310
    %v5374 = vpop.xlane.xlu0 %5373
    %5375 = vadd.xlane.f32.xlu0 %v5312
    %v5376 = vpop.xlane.xlu0 %5375
    %v5377 = vrcp.pop %v5314
    %v5378 = vrcp.pop %v5316
    %v5379 = vrcp.pop %v5318
    %v5380 = vrcp.pop %v5320
    %v5381 = vrcp.pop %v5322
    %v5382 = vrcp.pop %v5324
    %v5383 = vrcp.pop %v5326
    %v5384 = vrcp.pop %v5328
    %v5385 = vrcp.pop %v5330
    %v5386 = vrcp.pop %v5332
    %v5387 = vrcp.pop %v5334
    %v5388 = vrcp.pop %v5336
    %v5389 = vrcp.pop %v5338
    %v5390 = vrcp.pop %v5340
    %v5391 = vrcp.pop %v5342
    %v5392 = vrcp.pop %v5344
    %v5393 = vrcp.pop %v5346
    %v5394 = vrcp.pop %v5348
    %v5395 = vrcp.pop %v5350
    %v5396 = vrcp.pop %v5352
    %v5397 = vrcp.pop %v5354
    %v5398 = vrcp.pop %v5356
    %v5399 = vrcp.pop %v5358
    %v5400 = vrcp.pop %v5360
    %v5401 = vrcp.pop %v5362
    %v5402 = vrcp.pop %v5364
    %v5403 = vrcp.pop %v5366
    %v5404 = vrcp.pop %v5368
    %v5405 = vrcp.pop %v5370
    %v5406 = vrcp.pop %v5372
    %v5407 = vrcp.pop %v5374
    %v5408 = vrcp.pop %v5376
    %v5409 = vmul.f32 %v5250, %v5377
    %v5410 = vmul.f32 %v5252, %v5378
    %v5411 = vmul.f32 %v5254, %v5379
    %v5412 = vmul.f32 %v5256, %v5380
    %v5413 = vmul.f32 %v5258, %v5381
    %v5414 = vmul.f32 %v5260, %v5382
    %v5415 = vmul.f32 %v5262, %v5383
    %v5416 = vmul.f32 %v5264, %v5384
    %v5417 = vmul.f32 %v5266, %v5385
    %v5418 = vmul.f32 %v5268, %v5386
    %v5419 = vmul.f32 %v5270, %v5387
    %v5420 = vmul.f32 %v5272, %v5388
    %v5421 = vmul.f32 %v5274, %v5389
    %v5422 = vmul.f32 %v5276, %v5390
    %v5423 = vmul.f32 %v5278, %v5391
    %v5424 = vmul.f32 %v5280, %v5392
    %v5425 = vmul.f32 %v5282, %v5393
    %v5426 = vmul.f32 %v5284, %v5394
    %v5427 = vmul.f32 %v5286, %v5395
    %v5428 = vmul.f32 %v5288, %v5396
    %v5429 = vmul.f32 %v5290, %v5397
    %v5430 = vmul.f32 %v5292, %v5398
    %v5431 = vmul.f32 %v5294, %v5399
    %v5432 = vmul.f32 %v5296, %v5400
    %v5433 = vmul.f32 %v5298, %v5401
    %v5434 = vmul.f32 %v5300, %v5402
    %v5435 = vmul.f32 %v5302, %v5403
    %v5436 = vmul.f32 %v5304, %v5404
    %v5437 = vmul.f32 %v5306, %v5405
    %v5438 = vmul.f32 %v5308, %v5406
    %v5439 = vmul.f32 %v5310, %v5407
    %v5440 = vmul.f32 %v5312, %v5408
    %5441 = vmatprep.subr.mxu0 0.0
    %5442 = vmatpush1.msra.mxu0 %v1817
    %5443 = vmatprep.subr.mxu0 0.0
    %5444 = vmatpush1.msra.mxu0 %v1823
    %5445 = vmatprep.subr.mxu0 0.0
    %5446 = vmatpush1.msra.mxu0 %v1829
    %5447 = vmatprep.subr.mxu0 0.0
    %5448 = vmatpush1.msra.mxu0 %v1835
    %5449 = vmatprep.subr.mxu0 0.0
    %5450 = vmatpush1.msra.mxu0 %v1841
    %5451 = vmatprep.subr.mxu0 0.0
    %5452 = vmatpush1.msra.mxu0 %v1847
    %5453 = vmatprep.subr.mxu0 0.0
    %5454 = vmatpush1.msra.mxu0 %v1853
    %5455 = vmatprep.subr.mxu0 0.0
    %5456 = vmatpush1.msra.mxu0 %v1859
    %5457 = vmatprep.subr.mxu0 0.0
    %5458 = vmatpush1.msra.mxu0 %v1865
    %5459 = vmatprep.subr.mxu0 0.0
    %5460 = vmatpush1.msra.mxu0 %v1871
    %5461 = vmatprep.subr.mxu0 0.0
    %5462 = vmatpush1.msra.mxu0 %v1877
    %5463 = vmatprep.subr.mxu0 0.0
    %5464 = vmatpush1.msra.mxu0 %v1883
    %5465 = vmatprep.subr.mxu0 0.0
    %5466 = vmatpush1.msra.mxu0 %v1889
    %5467 = vmatprep.subr.mxu0 0.0
    %5468 = vmatpush1.msra.mxu0 %v1895
    %5469 = vmatprep.subr.mxu0 0.0
    %5470 = vmatpush1.msra.mxu0 %v1901
    %5471 = vmatprep.subr.mxu0 0.0
    %5472 = vmatpush1.msra.mxu0 %v1907
    %5473 = vmatprep.subr.mxu0 0.0
    %5474 = vmatpush1.msra.mxu0 0.0
    %5475 = vmatprep.subr.mxu0 0.0
    %5476 = vmatpush1.msra.mxu0 0.0
    %5477 = vmatprep.subr.mxu0 0.0
    %5478 = vmatpush1.msra.mxu0 0.0
    %5479 = vmatprep.subr.mxu0 0.0
    %5480 = vmatpush1.msra.mxu0 0.0
    %5481 = vmatprep.subr.mxu0 0.0
    %5482 = vmatpush1.msra.mxu0 0.0
    %5483 = vmatprep.subr.mxu0 0.0
    %5484 = vmatpush1.msra.mxu0 0.0
    %5485 = vmatprep.subr.mxu0 0.0
    %5486 = vmatpush1.msra.mxu0 0.0
    %5487 = vmatprep.subr.mxu0 0.0
    %5488 = vmatpush1.msra.mxu0 0.0
    %5489 = vmatprep.subr.mxu0 0.0
    %5490 = vmatpush1.msra.mxu0 0.0
    %5491 = vmatprep.subr.mxu0 0.0
    %5492 = vmatpush1.msra.mxu0 0.0
    %5493 = vmatprep.subr.mxu0 0.0
    %5494 = vmatpush1.msra.mxu0 0.0
    %5495 = vmatprep.subr.mxu0 0.0
    %5496 = vmatpush1.msra.mxu0 0.0
    %5497 = vmatprep.subr.mxu0 0.0
    %5498 = vmatpush1.msra.mxu0 0.0
    %5499 = vmatprep.subr.mxu0 0.0
    %5500 = vmatpush1.msra.mxu0 0.0
    %5501 = vmatprep.subr.mxu0 0.0
    %5502 = vmatpush1.msra.mxu0 0.0
    %5503 = vmatprep.subr.mxu0 0.0
    %5504 = vmatpush1.msra.mxu0 0.0
    %5505 = vmatprep.mubr.f32.mxu0 0.0
    %5506 = vmatmul.mubr.f32.gmra.mrb[0].mxu0 %v5409
    %v5507 = vpop.f32.mrb[0].mxu0
    %v5508 = vadd.f32 0.0, %v5507
    %v5509 = vpop.f32.mrb[0].mxu0
    %5510 = vmatprep.mubr.f32.mxu0 0.0
    %5511 = vmatmul.mubr.f32.gmra.mrb[0].mxu0 %v5410
    %v5512 = vpop.f32.mrb[0].mxu0
    %v5513 = vadd.f32 0.0, %v5512
    %v5514 = vpop.f32.mrb[0].mxu0
    %5515 = vmatprep.mubr.f32.mxu0 0.0
    %5516 = vmatmul.mubr.f32.gmra.mrb[0].mxu0 %v5411
    %v5517 = vpop.f32.mrb[0].mxu0
    %v5518 = vadd.f32 0.0, %v5517
    %v5519 = vpop.f32.mrb[0].mxu0
    %5520 = vmatprep.mubr.f32.mxu0 0.0
    %5521 = vmatmul.mubr.f32.gmra.mrb[0].mxu0 %v5412
    %v5522 = vpop.f32.mrb[0].mxu0
    %v5523 = vadd.f32 0.0, %v5522
    %v5524 = vpop.f32.mrb[0].mxu0
    %5525 = vmatprep.mubr.f32.mxu0 0.0
    %5526 = vmatmul.mubr.f32.gmra.mrb[0].mxu0 %v5413
    %v5527 = vpop.f32.mrb[0].mxu0
    %v5528 = vadd.f32 0.0, %v5527
    %v5529 = vpop.f32.mrb[0].mxu0
    %5530 = vmatprep.mubr.f32.mxu0 0.0
    %5531 = vmatmul.mubr.f32.gmra.mrb[0].mxu0 %v5414
    %v5532 = vpop.f32.mrb[0].mxu0
    %v5533 = vadd.f32 0.0, %v5532
    %v5534 = vpop.f32.mrb[0].mxu0
    %5535 = vmatprep.mubr.f32.mxu0 0.0
    %5536 = vmatmul.mubr.f32.gmra.mrb[0].mxu0 %v5415
    %v5537 = vpop.f32.mrb[0].mxu0
    %v5538 = vadd.f32 0.0, %v5537
    %v5539 = vpop.f32.mrb[0].mxu0
    %5540 = vmatprep.mubr.f32.mxu0 0.0
    %5541 = vmatmul.mubr.f32.gmra.mrb[0].mxu0 %v5416
    %v5542 = vpop.f32.mrb[0].mxu0
    %v5543 = vadd.f32 0.0, %v5542
    %v5544 = vpop.f32.mrb[0].mxu0
    %5545 = vmatprep.mubr.f32.mxu0 0.0
    %5546 = vmatmul.mubr.f32.gmra.mrb[0].mxu0 %v5417
    %v5547 = vpop.f32.mrb[0].mxu0
    %v5548 = vadd.f32 0.0, %v5547
    %v5549 = vpop.f32.mrb[0].mxu0
    %5550 = vmatprep.mubr.f32.mxu0 0.0
    %5551 = vmatmul.mubr.f32.gmra.mrb[0].mxu0 %v5418
    %v5552 = vpop.f32.mrb[0].mxu0
    %v5553 = vadd.f32 0.0, %v5552
    %v5554 = vpop.f32.mrb[0].mxu0
    %5555 = vmatprep.mubr.f32.mxu0 0.0
    %5556 = vmatmul.mubr.f32.gmra.mrb[0].mxu0 %v5419
    %v5557 = vpop.f32.mrb[0].mxu0
    %v5558 = vadd.f32 0.0, %v5557
    %v5559 = vpop.f32.mrb[0].mxu0
    %5560 = vmatprep.mubr.f32.mxu0 0.0
    %5561 = vmatmul.mubr.f32.gmra.mrb[0].mxu0 %v5420
    %v5562 = vpop.f32.mrb[0].mxu0
    %v5563 = vadd.f32 0.0, %v5562
    %v5564 = vpop.f32.mrb[0].mxu0
    %5565 = vmatprep.mubr.f32.mxu0 0.0
    %5566 = vmatmul.mubr.f32.gmra.mrb[0].mxu0 %v5421
    %v5567 = vpop.f32.mrb[0].mxu0
    %v5568 = vadd.f32 0.0, %v5567
    %v5569 = vpop.f32.mrb[0].mxu0
    %5570 = vmatprep.mubr.f32.mxu0 0.0
    %5571 = vmatmul.mubr.f32.gmra.mrb[0].mxu0 %v5422
    %v5572 = vpop.f32.mrb[0].mxu0
    %v5573 = vadd.f32 0.0, %v5572
    %v5574 = vpop.f32.mrb[0].mxu0
    %5575 = vmatprep.mubr.f32.mxu0 0.0
    %5576 = vmatmul.mubr.f32.gmra.mrb[0].mxu0 %v5423
    %v5577 = vpop.f32.mrb[0].mxu0
    %v5578 = vadd.f32 0.0, %v5577
    %v5579 = vpop.f32.mrb[0].mxu0
    %5580 = vmatprep.mubr.f32.mxu0 0.0
    %5581 = vmatmul.mubr.f32.gmra.mrb[0].mxu0 %v5424
    %v5582 = vpop.f32.mrb[0].mxu0
    %v5583 = vadd.f32 0.0, %v5582
    %v5584 = vpop.f32.mrb[0].mxu0
    %5585 = vdwg.mxu0
    %5586 = vmatprep.subr.mxu0 0.0
    %5587 = vmatpush1.msra.mxu0 %v1913
    %5588 = vmatprep.subr.mxu0 0.0
    %5589 = vmatpush1.msra.mxu0 %v1919
    %5590 = vmatprep.subr.mxu0 0.0
    %5591 = vmatpush1.msra.mxu0 %v1925
    %5592 = vmatprep.subr.mxu0 0.0
    %5593 = vmatpush1.msra.mxu0 %v1931
    %5594 = vmatprep.subr.mxu0 0.0
    %5595 = vmatpush1.msra.mxu0 %v1937
    %5596 = vmatprep.subr.mxu0 0.0
    %5597 = vmatpush1.msra.mxu0 %v1943
    %5598 = vmatprep.subr.mxu0 0.0
    %5599 = vmatpush1.msra.mxu0 %v1949
    %5600 = vmatprep.subr.mxu0 0.0
    %5601 = vmatpush1.msra.mxu0 %v1955
    %5602 = vmatprep.subr.mxu0 0.0
    %5603 = vmatpush1.msra.mxu0 %v1961
    %5604 = vmatprep.subr.mxu0 0.0
    %5605 = vmatpush1.msra.mxu0 %v1967
    %5606 = vmatprep.subr.mxu0 0.0
    %5607 = vmatpush1.msra.mxu0 %v1973
    %5608 = vmatprep.subr.mxu0 0.0
    %5609 = vmatpush1.msra.mxu0 %v1979
    %5610 = vmatprep.subr.mxu0 0.0
    %5611 = vmatpush1.msra.mxu0 %v1985
    %5612 = vmatprep.subr.mxu0 0.0
    %5613 = vmatpush1.msra.mxu0 %v1991
    %5614 = vmatprep.subr.mxu0 0.0
    %5615 = vmatpush1.msra.mxu0 %v1997
    %5616 = vmatprep.subr.mxu0 0.0
    %5617 = vmatpush1.msra.mxu0 %v2003
    %5618 = vmatprep.subr.mxu0 0.0
    %5619 = vmatpush1.msra.mxu0 0.0
    %5620 = vmatprep.subr.mxu0 0.0
    %5621 = vmatpush1.msra.mxu0 0.0
    %5622 = vmatprep.subr.mxu0 0.0
    %5623 = vmatpush1.msra.mxu0 0.0
    %5624 = vmatprep.subr.mxu0 0.0
    %5625 = vmatpush1.msra.mxu0 0.0
    %5626 = vmatprep.subr.mxu0 0.0
    %5627 = vmatpush1.msra.mxu0 0.0
    %5628 = vmatprep.subr.mxu0 0.0
    %5629 = vmatpush1.msra.mxu0 0.0
    %5630 = vmatprep.subr.mxu0 0.0
    %5631 = vmatpush1.msra.mxu0 0.0
    %5632 = vmatprep.subr.mxu0 0.0
    %5633 = vmatpush1.msra.mxu0 0.0
    %5634 = vmatprep.subr.mxu0 0.0
    %5635 = vmatpush1.msra.mxu0 0.0
    %5636 = vmatprep.subr.mxu0 0.0
    %5637 = vmatpush1.msra.mxu0 0.0
    %5638 = vmatprep.subr.mxu0 0.0
    %5639 = vmatpush1.msra.mxu0 0.0
    %5640 = vmatprep.subr.mxu0 0.0
    %5641 = vmatpush1.msra.mxu0 0.0
    %5642 = vmatprep.subr.mxu0 0.0
    %5643 = vmatpush1.msra.mxu0 0.0
    %5644 = vmatprep.subr.mxu0 0.0
    %5645 = vmatpush1.msra.mxu0 0.0
    %5646 = vmatprep.subr.mxu0 0.0
    %5647 = vmatpush1.msra.mxu0 0.0
    %5648 = vmatprep.subr.mxu0 0.0
    %5649 = vmatpush1.msra.mxu0 0.0
    %5650 = vmatprep.mubr.f32.mxu0 0.0
    %5651 = vmatmul.mubr.f32.gmra.mrb[0].mxu0 %v5425
    %v5652 = vpop.f32.mrb[0].mxu0
    %v5653 = vadd.f32 0.0, %v5652
    %v5654 = vpop.f32.mrb[0].mxu0
    %5655 = vmatprep.mubr.f32.mxu0 0.0
    %5656 = vmatmul.mubr.f32.gmra.mrb[0].mxu0 %v5426
    %v5657 = vpop.f32.mrb[0].mxu0
    %v5658 = vadd.f32 0.0, %v5657
    %v5659 = vpop.f32.mrb[0].mxu0
    %5660 = vmatprep.mubr.f32.mxu0 0.0
    %5661 = vmatmul.mubr.f32.gmra.mrb[0].mxu0 %v5427
    %v5662 = vpop.f32.mrb[0].mxu0
    %v5663 = vadd.f32 0.0, %v5662
    %v5664 = vpop.f32.mrb[0].mxu0
    %5665 = vmatprep.mubr.f32.mxu0 0.0
    %5666 = vmatmul.mubr.f32.gmra.mrb[0].mxu0 %v5428
    %v5667 = vpop.f32.mrb[0].mxu0
    %v5668 = vadd.f32 0.0, %v5667
    %v5669 = vpop.f32.mrb[0].mxu0
    %5670 = vmatprep.mubr.f32.mxu0 0.0
    %5671 = vmatmul.mubr.f32.gmra.mrb[0].mxu0 %v5429
    %v5672 = vpop.f32.mrb[0].mxu0
    %v5673 = vadd.f32 0.0, %v5672
    %v5674 = vpop.f32.mrb[0].mxu0
    %5675 = vmatprep.mubr.f32.mxu0 0.0
    %5676 = vmatmul.mubr.f32.gmra.mrb[0].mxu0 %v5430
    %v5677 = vpop.f32.mrb[0].mxu0
    %v5678 = vadd.f32 0.0, %v5677
    %v5679 = vpop.f32.mrb[0].mxu0
    %5680 = vmatprep.mubr.f32.mxu0 0.0
    %5681 = vmatmul.mubr.f32.gmra.mrb[0].mxu0 %v5431
    %v5682 = vpop.f32.mrb[0].mxu0
    %v5683 = vadd.f32 0.0, %v5682
    %v5684 = vpop.f32.mrb[0].mxu0
    %5685 = vmatprep.mubr.f32.mxu0 0.0
    %5686 = vmatmul.mubr.f32.gmra.mrb[0].mxu0 %v5432
    %v5687 = vpop.f32.mrb[0].mxu0
    %v5688 = vadd.f32 0.0, %v5687
    %v5689 = vpop.f32.mrb[0].mxu0
    %5690 = vmatprep.mubr.f32.mxu0 0.0
    %5691 = vmatmul.mubr.f32.gmra.mrb[0].mxu0 %v5433
    %v5692 = vpop.f32.mrb[0].mxu0
    %v5693 = vadd.f32 0.0, %v5692
    %v5694 = vpop.f32.mrb[0].mxu0
    %5695 = vmatprep.mubr.f32.mxu0 0.0
    %5696 = vmatmul.mubr.f32.gmra.mrb[0].mxu0 %v5434
    %v5697 = vpop.f32.mrb[0].mxu0
    %v5698 = vadd.f32 0.0, %v5697
    %v5699 = vpop.f32.mrb[0].mxu0
    %5700 = vmatprep.mubr.f32.mxu0 0.0
    %5701 = vmatmul.mubr.f32.gmra.mrb[0].mxu0 %v5435
    %v5702 = vpop.f32.mrb[0].mxu0
    %v5703 = vadd.f32 0.0, %v5702
    %v5704 = vpop.f32.mrb[0].mxu0
    %5705 = vmatprep.mubr.f32.mxu0 0.0
    %5706 = vmatmul.mubr.f32.gmra.mrb[0].mxu0 %v5436
    %v5707 = vpop.f32.mrb[0].mxu0
    %v5708 = vadd.f32 0.0, %v5707
    %v5709 = vpop.f32.mrb[0].mxu0
    %5710 = vmatprep.mubr.f32.mxu0 0.0
    %5711 = vmatmul.mubr.f32.gmra.mrb[0].mxu0 %v5437
    %v5712 = vpop.f32.mrb[0].mxu0
    %v5713 = vadd.f32 0.0, %v5712
    %v5714 = vpop.f32.mrb[0].mxu0
    %5715 = vmatprep.mubr.f32.mxu0 0.0
    %5716 = vmatmul.mubr.f32.gmra.mrb[0].mxu0 %v5438
    %v5717 = vpop.f32.mrb[0].mxu0
    %v5718 = vadd.f32 0.0, %v5717
    %v5719 = vpop.f32.mrb[0].mxu0
    %5720 = vmatprep.mubr.f32.mxu0 0.0
    %5721 = vmatmul.mubr.f32.gmra.mrb[0].mxu0 %v5439
    %v5722 = vpop.f32.mrb[0].mxu0
    %v5723 = vadd.f32 0.0, %v5722
    %v5724 = vpop.f32.mrb[0].mxu0
    %5725 = vmatprep.mubr.f32.mxu0 0.0
    %5726 = vmatmul.mubr.f32.gmra.mrb[0].mxu0 %v5440
    %v5727 = vpop.f32.mrb[0].mxu0
    %v5728 = vadd.f32 0.0, %v5727
    %v5729 = vpop.f32.mrb[0].mxu0
    %5730 = vdwg.mxu0
    %5731 = vrot.lane.b32.xlu0 %v789, 64
    %v5732 = vpop.permute.xlu0 %5731
    %5733 = vrot.lane.b32.xlu0 %v795, 64
    %v5734 = vpop.permute.xlu0 %5733
    %5735 = vrot.lane.b32.xlu0 %v801, 64
    %v5736 = vpop.permute.xlu0 %5735
    %5737 = vrot.lane.b32.xlu0 %v807, 64
    %v5738 = vpop.permute.xlu0 %5737
    %5739 = vrot.lane.b32.xlu0 %v813, 64
    %v5740 = vpop.permute.xlu0 %5739
    %5741 = vrot.lane.b32.xlu0 %v819, 64
    %v5742 = vpop.permute.xlu0 %5741
    %5743 = vrot.lane.b32.xlu0 %v825, 64
    %v5744 = vpop.permute.xlu0 %5743
    %5745 = vrot.lane.b32.xlu0 %v831, 64
    %v5746 = vpop.permute.xlu0 %5745
    %5747 = vrot.lane.b32.xlu0 %v837, 64
    %v5748 = vpop.permute.xlu0 %5747
    %5749 = vrot.lane.b32.xlu0 %v843, 64
    %v5750 = vpop.permute.xlu0 %5749
    %5751 = vrot.lane.b32.xlu0 %v849, 64
    %v5752 = vpop.permute.xlu0 %5751
    %5753 = vrot.lane.b32.xlu0 %v855, 64
    %v5754 = vpop.permute.xlu0 %5753
    %5755 = vrot.lane.b32.xlu0 %v861, 64
    %v5756 = vpop.permute.xlu0 %5755
    %5757 = vrot.lane.b32.xlu0 %v867, 64
    %v5758 = vpop.permute.xlu0 %5757
    %5759 = vrot.lane.b32.xlu0 %v873, 64
    %v5760 = vpop.permute.xlu0 %5759
    %5761 = vrot.lane.b32.xlu0 %v879, 64
    %v5762 = vpop.permute.xlu0 %5761
    %5763 = vrot.lane.b32.xlu0 %v1303, 64
    %v5764 = vpop.permute.xlu0 %5763
    %5765 = vrot.lane.b32.xlu0 %v1309, 64
    %v5766 = vpop.permute.xlu0 %5765
    %5767 = vrot.lane.b32.xlu0 %v1315, 64
    %v5768 = vpop.permute.xlu0 %5767
    %5769 = vrot.lane.b32.xlu0 %v1321, 64
    %v5770 = vpop.permute.xlu0 %5769
    %5771 = vrot.lane.b32.xlu0 %v1327, 64
    %v5772 = vpop.permute.xlu0 %5771
    %5773 = vrot.lane.b32.xlu0 %v1333, 64
    %v5774 = vpop.permute.xlu0 %5773
    %5775 = vrot.lane.b32.xlu0 %v1339, 64
    %v5776 = vpop.permute.xlu0 %5775
    %5777 = vrot.lane.b32.xlu0 %v1345, 64
    %v5778 = vpop.permute.xlu0 %5777
    %5779 = vrot.lane.b32.xlu0 %v1351, 64
    %v5780 = vpop.permute.xlu0 %5779
    %5781 = vrot.lane.b32.xlu0 %v1357, 64
    %v5782 = vpop.permute.xlu0 %5781
    %5783 = vrot.lane.b32.xlu0 %v1363, 64
    %v5784 = vpop.permute.xlu0 %5783
    %5785 = vrot.lane.b32.xlu0 %v1369, 64
    %v5786 = vpop.permute.xlu0 %5785
    %5787 = vrot.lane.b32.xlu0 %v1375, 64
    %v5788 = vpop.permute.xlu0 %5787
    %5789 = vrot.lane.b32.xlu0 %v1381, 64
    %v5790 = vpop.permute.xlu0 %5789
    %5791 = vrot.lane.b32.xlu0 %v1387, 64
    %v5792 = vpop.permute.xlu0 %5791
    %5793 = vrot.lane.b32.xlu0 %v1393, 64
    %v5794 = vpop.permute.xlu0 %5793
    %v5795 = vsel %vm2262, %v5732, 0
    %v5797 = vsel %vm2262, %v5734, 0
    %v5799 = vsel %vm2262, %v5736, 0
    %v5801 = vsel %vm2262, %v5738, 0
    %v5803 = vsel %vm2262, %v5740, 0
    %v5805 = vsel %vm2262, %v5742, 0
    %v5807 = vsel %vm2262, %v5744, 0
    %v5809 = vsel %vm2262, %v5746, 0
    %v5811 = vsel %vm2262, %v5748, 0
    %v5813 = vsel %vm2262, %v5750, 0
    %v5815 = vsel %vm2262, %v5752, 0
    %v5817 = vsel %vm2262, %v5754, 0
    %v5819 = vsel %vm2262, %v5756, 0
    %v5821 = vsel %vm2262, %v5758, 0
    %v5823 = vsel %vm2262, %v5760, 0
    %v5825 = vsel %vm2262, %v5762, 0
    %v5827 = vsel %vm2262, %v5764, 0
    %v5829 = vsel %vm2262, %v5766, 0
    %v5831 = vsel %vm2262, %v5768, 0
    %v5833 = vsel %vm2262, %v5770, 0
    %v5835 = vsel %vm2262, %v5772, 0
    %v5837 = vsel %vm2262, %v5774, 0
    %v5839 = vsel %vm2262, %v5776, 0
    %v5841 = vsel %vm2262, %v5778, 0
    %v5843 = vsel %vm2262, %v5780, 0
    %v5845 = vsel %vm2262, %v5782, 0
    %v5847 = vsel %vm2262, %v5784, 0
    %v5849 = vsel %vm2262, %v5786, 0
    %v5851 = vsel %vm2262, %v5788, 0
    %v5853 = vsel %vm2262, %v5790, 0
    %v5855 = vsel %vm2262, %v5792, 0
    %v5857 = vsel %vm2262, %v5794, 0
    %5859 = vmatprep.subr.mxu0 0.0
    %5860 = vmatpush1.xpose.msra.mxu0 %v5827
    %5861 = vmatprep.subr.mxu0 0.0
    %5862 = vmatpush1.xpose.msra.mxu0 %v5829
    %5863 = vmatprep.subr.mxu0 0.0
    %5864 = vmatpush1.xpose.msra.mxu0 %v5831
    %5865 = vmatprep.subr.mxu0 0.0
    %5866 = vmatpush1.xpose.msra.mxu0 %v5833
    %5867 = vmatprep.subr.mxu0 0.0
    %5868 = vmatpush1.xpose.msra.mxu0 %v5835
    %5869 = vmatprep.subr.mxu0 0.0
    %5870 = vmatpush1.xpose.msra.mxu0 %v5837
    %5871 = vmatprep.subr.mxu0 0.0
    %5872 = vmatpush1.xpose.msra.mxu0 %v5839
    %5873 = vmatprep.subr.mxu0 0.0
    %5874 = vmatpush1.xpose.msra.mxu0 %v5841
    %5875 = vmatprep.subr.mxu0 0.0
    %5876 = vmatpush1.xpose.msra.mxu0 %v5843
    %5877 = vmatprep.subr.mxu0 0.0
    %5878 = vmatpush1.xpose.msra.mxu0 %v5845
    %5879 = vmatprep.subr.mxu0 0.0
    %5880 = vmatpush1.xpose.msra.mxu0 %v5847
    %5881 = vmatprep.subr.mxu0 0.0
    %5882 = vmatpush1.xpose.msra.mxu0 %v5849
    %5883 = vmatprep.subr.mxu0 0.0
    %5884 = vmatpush1.xpose.msra.mxu0 %v5851
    %5885 = vmatprep.subr.mxu0 0.0
    %5886 = vmatpush1.xpose.msra.mxu0 %v5853
    %5887 = vmatprep.subr.mxu0 0.0
    %5888 = vmatpush1.xpose.msra.mxu0 %v5855
    %5889 = vmatprep.subr.mxu0 0.0
    %5890 = vmatpush1.xpose.msra.mxu0 %v5857
    %5891 = vmatprep.subr.mxu0 0.0
    %5892 = vmatpush1.xpose.msra.mxu0 0.0
    %5893 = vmatprep.subr.mxu0 0.0
    %5894 = vmatpush1.xpose.msra.mxu0 0.0
    %5895 = vmatprep.subr.mxu0 0.0
    %5896 = vmatpush1.xpose.msra.mxu0 0.0
    %5897 = vmatprep.subr.mxu0 0.0
    %5898 = vmatpush1.xpose.msra.mxu0 0.0
    %5899 = vmatprep.subr.mxu0 0.0
    %5900 = vmatpush1.xpose.msra.mxu0 0.0
    %5901 = vmatprep.subr.mxu0 0.0
    %5902 = vmatpush1.xpose.msra.mxu0 0.0
    %5903 = vmatprep.subr.mxu0 0.0
    %5904 = vmatpush1.xpose.msra.mxu0 0.0
    %5905 = vmatprep.subr.mxu0 0.0
    %5906 = vmatpush1.xpose.msra.mxu0 0.0
    %5907 = vmatprep.subr.mxu0 0.0
    %5908 = vmatpush1.xpose.msra.mxu0 0.0
    %5909 = vmatprep.subr.mxu0 0.0
    %5910 = vmatpush1.xpose.msra.mxu0 0.0
    %5911 = vmatprep.subr.mxu0 0.0
    %5912 = vmatpush1.xpose.msra.mxu0 0.0
    %5913 = vmatprep.subr.mxu0 0.0
    %5914 = vmatpush1.xpose.msra.mxu0 0.0
    %5915 = vmatprep.subr.mxu0 0.0
    %5916 = vmatpush1.xpose.msra.mxu0 0.0
    %5917 = vmatprep.subr.mxu0 0.0
    %5918 = vmatpush1.xpose.msra.mxu0 0.0
    %5919 = vmatprep.subr.mxu0 0.0
    %5920 = vmatpush1.xpose.msra.mxu0 0.0
    %5921 = vmatprep.subr.mxu0 0.0
    %5922 = vmatpush1.xpose.msra.mxu0 0.0
    %5923 = vmatprep.mubr.f32.mxu0 0.0
    %5924 = vmatmul.mubr.f32.gmra.mrb[0].mxu0 %v5795
    %v5925 = vpop.f32.mrb[0].mxu0
    %v5926 = vadd.f32 0.0, %v5925
    %v5927 = vpop.f32.mrb[0].mxu0
    %5928 = vmatprep.mubr.f32.mxu0 0.0
    %5929 = vmatmul.mubr.f32.gmra.mrb[0].mxu0 %v5797
    %v5930 = vpop.f32.mrb[0].mxu0
    %v5931 = vadd.f32 0.0, %v5930
    %v5932 = vpop.f32.mrb[0].mxu0
    %5933 = vmatprep.mubr.f32.mxu0 0.0
    %5934 = vmatmul.mubr.f32.gmra.mrb[0].mxu0 %v5799
    %v5935 = vpop.f32.mrb[0].mxu0
    %v5936 = vadd.f32 0.0, %v5935
    %v5937 = vpop.f32.mrb[0].mxu0
    %5938 = vmatprep.mubr.f32.mxu0 0.0
    %5939 = vmatmul.mubr.f32.gmra.mrb[0].mxu0 %v5801
    %v5940 = vpop.f32.mrb[0].mxu0
    %v5941 = vadd.f32 0.0, %v5940
    %v5942 = vpop.f32.mrb[0].mxu0
    %5943 = vmatprep.mubr.f32.mxu0 0.0
    %5944 = vmatmul.mubr.f32.gmra.mrb[0].mxu0 %v5803
    %v5945 = vpop.f32.mrb[0].mxu0
    %v5946 = vadd.f32 0.0, %v5945
    %v5947 = vpop.f32.mrb[0].mxu0
    %5948 = vmatprep.mubr.f32.mxu0 0.0
    %5949 = vmatmul.mubr.f32.gmra.mrb[0].mxu0 %v5805
    %v5950 = vpop.f32.mrb[0].mxu0
    %v5951 = vadd.f32 0.0, %v5950
    %v5952 = vpop.f32.mrb[0].mxu0
    %5953 = vmatprep.mubr.f32.mxu0 0.0
    %5954 = vmatmul.mubr.f32.gmra.mrb[0].mxu0 %v5807
    %v5955 = vpop.f32.mrb[0].mxu0
    %v5956 = vadd.f32 0.0, %v5955
    %v5957 = vpop.f32.mrb[0].mxu0
    %5958 = vmatprep.mubr.f32.mxu0 0.0
    %5959 = vmatmul.mubr.f32.gmra.mrb[0].mxu0 %v5809
    %v5960 = vpop.f32.mrb[0].mxu0
    %v5961 = vadd.f32 0.0, %v5960
    %v5962 = vpop.f32.mrb[0].mxu0
    %5963 = vmatprep.mubr.f32.mxu0 0.0
    %5964 = vmatmul.mubr.f32.gmra.mrb[0].mxu0 %v5811
    %v5965 = vpop.f32.mrb[0].mxu0
    %v5966 = vadd.f32 0.0, %v5965
    %v5967 = vpop.f32.mrb[0].mxu0
    %5968 = vmatprep.mubr.f32.mxu0 0.0
    %5969 = vmatmul.mubr.f32.gmra.mrb[0].mxu0 %v5813
    %v5970 = vpop.f32.mrb[0].mxu0
    %v5971 = vadd.f32 0.0, %v5970
    %v5972 = vpop.f32.mrb[0].mxu0
    %5973 = vmatprep.mubr.f32.mxu0 0.0
    %5974 = vmatmul.mubr.f32.gmra.mrb[0].mxu0 %v5815
    %v5975 = vpop.f32.mrb[0].mxu0
    %v5976 = vadd.f32 0.0, %v5975
    %v5977 = vpop.f32.mrb[0].mxu0
    %5978 = vmatprep.mubr.f32.mxu0 0.0
    %5979 = vmatmul.mubr.f32.gmra.mrb[0].mxu0 %v5817
    %v5980 = vpop.f32.mrb[0].mxu0
    %v5981 = vadd.f32 0.0, %v5980
    %v5982 = vpop.f32.mrb[0].mxu0
    %5983 = vmatprep.mubr.f32.mxu0 0.0
    %5984 = vmatmul.mubr.f32.gmra.mrb[0].mxu0 %v5819
    %v5985 = vpop.f32.mrb[0].mxu0
    %v5986 = vadd.f32 0.0, %v5985
    %v5987 = vpop.f32.mrb[0].mxu0
    %5988 = vmatprep.mubr.f32.mxu0 0.0
    %5989 = vmatmul.mubr.f32.gmra.mrb[0].mxu0 %v5821
    %v5990 = vpop.f32.mrb[0].mxu0
    %v5991 = vadd.f32 0.0, %v5990
    %v5992 = vpop.f32.mrb[0].mxu0
    %5993 = vmatprep.mubr.f32.mxu0 0.0
    %5994 = vmatmul.mubr.f32.gmra.mrb[0].mxu0 %v5823
    %v5995 = vpop.f32.mrb[0].mxu0
    %v5996 = vadd.f32 0.0, %v5995
    %v5997 = vpop.f32.mrb[0].mxu0
    %5998 = vmatprep.mubr.f32.mxu0 0.0
    %5999 = vmatmul.mubr.f32.gmra.mrb[0].mxu0 %v5825
    %v6000 = vpop.f32.mrb[0].mxu0
    %v6001 = vadd.f32 0.0, %v6000
    %v6002 = vpop.f32.mrb[0].mxu0
    %6003 = vdwg.mxu0
    %6004 = vrot.lane.b32.xlu0 %v885, 64
    %v6005 = vpop.permute.xlu0 %6004
    %6006 = vrot.lane.b32.xlu0 %v891, 64
    %v6007 = vpop.permute.xlu0 %6006
    %6008 = vrot.lane.b32.xlu0 %v897, 64
    %v6009 = vpop.permute.xlu0 %6008
    %6010 = vrot.lane.b32.xlu0 %v903, 64
    %v6011 = vpop.permute.xlu0 %6010
    %6012 = vrot.lane.b32.xlu0 %v909, 64
    %v6013 = vpop.permute.xlu0 %6012
    %6014 = vrot.lane.b32.xlu0 %v915, 64
    %v6015 = vpop.permute.xlu0 %6014
    %6016 = vrot.lane.b32.xlu0 %v921, 64
    %v6017 = vpop.permute.xlu0 %6016
    %6018 = vrot.lane.b32.xlu0 %v927, 64
    %v6019 = vpop.permute.xlu0 %6018
    %6020 = vrot.lane.b32.xlu0 %v933, 64
    %v6021 = vpop.permute.xlu0 %6020
    %6022 = vrot.lane.b32.xlu0 %v939, 64
    %v6023 = vpop.permute.xlu0 %6022
    %6024 = vrot.lane.b32.xlu0 %v945, 64
    %v6025 = vpop.permute.xlu0 %6024
    %6026 = vrot.lane.b32.xlu0 %v951, 64
    %v6027 = vpop.permute.xlu0 %6026
    %6028 = vrot.lane.b32.xlu0 %v957, 64
    %v6029 = vpop.permute.xlu0 %6028
    %6030 = vrot.lane.b32.xlu0 %v963, 64
    %v6031 = vpop.permute.xlu0 %6030
    %6032 = vrot.lane.b32.xlu0 %v969, 64
    %v6033 = vpop.permute.xlu0 %6032
    %6034 = vrot.lane.b32.xlu0 %v975, 64
    %v6035 = vpop.permute.xlu0 %6034
    %6036 = vrot.lane.b32.xlu0 %v1399, 64
    %v6037 = vpop.permute.xlu0 %6036
    %6038 = vrot.lane.b32.xlu0 %v1405, 64
    %v6039 = vpop.permute.xlu0 %6038
    %6040 = vrot.lane.b32.xlu0 %v1411, 64
    %v6041 = vpop.permute.xlu0 %6040
    %6042 = vrot.lane.b32.xlu0 %v1417, 64
    %v6043 = vpop.permute.xlu0 %6042
    %6044 = vrot.lane.b32.xlu0 %v1423, 64
    %v6045 = vpop.permute.xlu0 %6044
    %6046 = vrot.lane.b32.xlu0 %v1429, 64
    %v6047 = vpop.permute.xlu0 %6046
    %6048 = vrot.lane.b32.xlu0 %v1435, 64
    %v6049 = vpop.permute.xlu0 %6048
    %6050 = vrot.lane.b32.xlu0 %v1441, 64
    %v6051 = vpop.permute.xlu0 %6050
    %6052 = vrot.lane.b32.xlu0 %v1447, 64
    %v6053 = vpop.permute.xlu0 %6052
    %6054 = vrot.lane.b32.xlu0 %v1453, 64
    %v6055 = vpop.permute.xlu0 %6054
    %6056 = vrot.lane.b32.xlu0 %v1459, 64
    %v6057 = vpop.permute.xlu0 %6056
    %6058 = vrot.lane.b32.xlu0 %v1465, 64
    %v6059 = vpop.permute.xlu0 %6058
    %6060 = vrot.lane.b32.xlu0 %v1471, 64
    %v6061 = vpop.permute.xlu0 %6060
    %6062 = vrot.lane.b32.xlu0 %v1477, 64
    %v6063 = vpop.permute.xlu0 %6062
    %6064 = vrot.lane.b32.xlu0 %v1483, 64
    %v6065 = vpop.permute.xlu0 %6064
    %6066 = vrot.lane.b32.xlu0 %v1489, 64
    %v6067 = vpop.permute.xlu0 %6066
    %v6068 = vsel %vm2262, %v6005, 0
    %v6070 = vsel %vm2262, %v6007, 0
    %v6072 = vsel %vm2262, %v6009, 0
    %v6074 = vsel %vm2262, %v6011, 0
    %v6076 = vsel %vm2262, %v6013, 0
    %v6078 = vsel %vm2262, %v6015, 0
    %v6080 = vsel %vm2262, %v6017, 0
    %v6082 = vsel %vm2262, %v6019, 0
    %v6084 = vsel %vm2262, %v6021, 0
    %v6086 = vsel %vm2262, %v6023, 0
    %v6088 = vsel %vm2262, %v6025, 0
    %v6090 = vsel %vm2262, %v6027, 0
    %v6092 = vsel %vm2262, %v6029, 0
    %v6094 = vsel %vm2262, %v6031, 0
    %v6096 = vsel %vm2262, %v6033, 0
    %v6098 = vsel %vm2262, %v6035, 0
    %v6100 = vsel %vm2262, %v6037, 0
    %v6102 = vsel %vm2262, %v6039, 0
    %v6104 = vsel %vm2262, %v6041, 0
    %v6106 = vsel %vm2262, %v6043, 0
    %v6108 = vsel %vm2262, %v6045, 0
    %v6110 = vsel %vm2262, %v6047, 0
    %v6112 = vsel %vm2262, %v6049, 0
    %v6114 = vsel %vm2262, %v6051, 0
    %v6116 = vsel %vm2262, %v6053, 0
    %v6118 = vsel %vm2262, %v6055, 0
    %v6120 = vsel %vm2262, %v6057, 0
    %v6122 = vsel %vm2262, %v6059, 0
    %v6124 = vsel %vm2262, %v6061, 0
    %v6126 = vsel %vm2262, %v6063, 0
    %v6128 = vsel %vm2262, %v6065, 0
    %v6130 = vsel %vm2262, %v6067, 0
    %6132 = vmatprep.subr.mxu0 0.0
    %6133 = vmatpush1.xpose.msra.mxu0 %v6100
    %6134 = vmatprep.subr.mxu0 0.0
    %6135 = vmatpush1.xpose.msra.mxu0 %v6102
    %6136 = vmatprep.subr.mxu0 0.0
    %6137 = vmatpush1.xpose.msra.mxu0 %v6104
    %6138 = vmatprep.subr.mxu0 0.0
    %6139 = vmatpush1.xpose.msra.mxu0 %v6106
    %6140 = vmatprep.subr.mxu0 0.0
    %6141 = vmatpush1.xpose.msra.mxu0 %v6108
    %6142 = vmatprep.subr.mxu0 0.0
    %6143 = vmatpush1.xpose.msra.mxu0 %v6110
    %6144 = vmatprep.subr.mxu0 0.0
    %6145 = vmatpush1.xpose.msra.mxu0 %v6112
    %6146 = vmatprep.subr.mxu0 0.0
    %6147 = vmatpush1.xpose.msra.mxu0 %v6114
    %6148 = vmatprep.subr.mxu0 0.0
    %6149 = vmatpush1.xpose.msra.mxu0 %v6116
    %6150 = vmatprep.subr.mxu0 0.0
    %6151 = vmatpush1.xpose.msra.mxu0 %v6118
    %6152 = vmatprep.subr.mxu0 0.0
    %6153 = vmatpush1.xpose.msra.mxu0 %v6120
    %6154 = vmatprep.subr.mxu0 0.0
    %6155 = vmatpush1.xpose.msra.mxu0 %v6122
    %6156 = vmatprep.subr.mxu0 0.0
    %6157 = vmatpush1.xpose.msra.mxu0 %v6124
    %6158 = vmatprep.subr.mxu0 0.0
    %6159 = vmatpush1.xpose.msra.mxu0 %v6126
    %6160 = vmatprep.subr.mxu0 0.0
    %6161 = vmatpush1.xpose.msra.mxu0 %v6128
    %6162 = vmatprep.subr.mxu0 0.0
    %6163 = vmatpush1.xpose.msra.mxu0 %v6130
    %6164 = vmatprep.subr.mxu0 0.0
    %6165 = vmatpush1.xpose.msra.mxu0 0.0
    %6166 = vmatprep.subr.mxu0 0.0
    %6167 = vmatpush1.xpose.msra.mxu0 0.0
    %6168 = vmatprep.subr.mxu0 0.0
    %6169 = vmatpush1.xpose.msra.mxu0 0.0
    %6170 = vmatprep.subr.mxu0 0.0
    %6171 = vmatpush1.xpose.msra.mxu0 0.0
    %6172 = vmatprep.subr.mxu0 0.0
    %6173 = vmatpush1.xpose.msra.mxu0 0.0
    %6174 = vmatprep.subr.mxu0 0.0
    %6175 = vmatpush1.xpose.msra.mxu0 0.0
    %6176 = vmatprep.subr.mxu0 0.0
    %6177 = vmatpush1.xpose.msra.mxu0 0.0
    %6178 = vmatprep.subr.mxu0 0.0
    %6179 = vmatpush1.xpose.msra.mxu0 0.0
    %6180 = vmatprep.subr.mxu0 0.0
    %6181 = vmatpush1.xpose.msra.mxu0 0.0
    %6182 = vmatprep.subr.mxu0 0.0
    %6183 = vmatpush1.xpose.msra.mxu0 0.0
    %6184 = vmatprep.subr.mxu0 0.0
    %6185 = vmatpush1.xpose.msra.mxu0 0.0
    %6186 = vmatprep.subr.mxu0 0.0
    %6187 = vmatpush1.xpose.msra.mxu0 0.0
    %6188 = vmatprep.subr.mxu0 0.0
    %6189 = vmatpush1.xpose.msra.mxu0 0.0
    %6190 = vmatprep.subr.mxu0 0.0
    %6191 = vmatpush1.xpose.msra.mxu0 0.0
    %6192 = vmatprep.subr.mxu0 0.0
    %6193 = vmatpush1.xpose.msra.mxu0 0.0
    %6194 = vmatprep.subr.mxu0 0.0
    %6195 = vmatpush1.xpose.msra.mxu0 0.0
    %6196 = vmatprep.mubr.f32.mxu0 0.0
    %6197 = vmatmul.mubr.f32.gmra.mrb[0].mxu0 %v6068
    %v6198 = vpop.f32.mrb[0].mxu0
    %v6199 = vadd.f32 0.0, %v6198
    %v6200 = vpop.f32.mrb[0].mxu0
    %6201 = vmatprep.mubr.f32.mxu0 0.0
    %6202 = vmatmul.mubr.f32.gmra.mrb[0].mxu0 %v6070
    %v6203 = vpop.f32.mrb[0].mxu0
    %v6204 = vadd.f32 0.0, %v6203
    %v6205 = vpop.f32.mrb[0].mxu0
    %6206 = vmatprep.mubr.f32.mxu0 0.0
    %6207 = vmatmul.mubr.f32.gmra.mrb[0].mxu0 %v6072
    %v6208 = vpop.f32.mrb[0].mxu0
    %v6209 = vadd.f32 0.0, %v6208
    %v6210 = vpop.f32.mrb[0].mxu0
    %6211 = vmatprep.mubr.f32.mxu0 0.0
    %6212 = vmatmul.mubr.f32.gmra.mrb[0].mxu0 %v6074
    %v6213 = vpop.f32.mrb[0].mxu0
    %v6214 = vadd.f32 0.0, %v6213
    %v6215 = vpop.f32.mrb[0].mxu0
    %6216 = vmatprep.mubr.f32.mxu0 0.0
    %6217 = vmatmul.mubr.f32.gmra.mrb[0].mxu0 %v6076
    %v6218 = vpop.f32.mrb[0].mxu0
    %v6219 = vadd.f32 0.0, %v6218
    %v6220 = vpop.f32.mrb[0].mxu0
    %6221 = vmatprep.mubr.f32.mxu0 0.0
    %6222 = vmatmul.mubr.f32.gmra.mrb[0].mxu0 %v6078
    %v6223 = vpop.f32.mrb[0].mxu0
    %v6224 = vadd.f32 0.0, %v6223
    %v6225 = vpop.f32.mrb[0].mxu0
    %6226 = vmatprep.mubr.f32.mxu0 0.0
    %6227 = vmatmul.mubr.f32.gmra.mrb[0].mxu0 %v6080
    %v6228 = vpop.f32.mrb[0].mxu0
    %v6229 = vadd.f32 0.0, %v6228
    %v6230 = vpop.f32.mrb[0].mxu0
    %6231 = vmatprep.mubr.f32.mxu0 0.0
    %6232 = vmatmul.mubr.f32.gmra.mrb[0].mxu0 %v6082
    %v6233 = vpop.f32.mrb[0].mxu0
    %v6234 = vadd.f32 0.0, %v6233
    %v6235 = vpop.f32.mrb[0].mxu0
    %6236 = vmatprep.mubr.f32.mxu0 0.0
    %6237 = vmatmul.mubr.f32.gmra.mrb[0].mxu0 %v6084
    %v6238 = vpop.f32.mrb[0].mxu0
    %v6239 = vadd.f32 0.0, %v6238
    %v6240 = vpop.f32.mrb[0].mxu0
    %6241 = vmatprep.mubr.f32.mxu0 0.0
    %6242 = vmatmul.mubr.f32.gmra.mrb[0].mxu0 %v6086
    %v6243 = vpop.f32.mrb[0].mxu0
    %v6244 = vadd.f32 0.0, %v6243
    %v6245 = vpop.f32.mrb[0].mxu0
    %6246 = vmatprep.mubr.f32.mxu0 0.0
    %6247 = vmatmul.mubr.f32.gmra.mrb[0].mxu0 %v6088
    %v6248 = vpop.f32.mrb[0].mxu0
    %v6249 = vadd.f32 0.0, %v6248
    %v6250 = vpop.f32.mrb[0].mxu0
    %6251 = vmatprep.mubr.f32.mxu0 0.0
    %6252 = vmatmul.mubr.f32.gmra.mrb[0].mxu0 %v6090
    %v6253 = vpop.f32.mrb[0].mxu0
    %v6254 = vadd.f32 0.0, %v6253
    %v6255 = vpop.f32.mrb[0].mxu0
    %6256 = vmatprep.mubr.f32.mxu0 0.0
    %6257 = vmatmul.mubr.f32.gmra.mrb[0].mxu0 %v6092
    %v6258 = vpop.f32.mrb[0].mxu0
    %v6259 = vadd.f32 0.0, %v6258
    %v6260 = vpop.f32.mrb[0].mxu0
    %6261 = vmatprep.mubr.f32.mxu0 0.0
    %6262 = vmatmul.mubr.f32.gmra.mrb[0].mxu0 %v6094
    %v6263 = vpop.f32.mrb[0].mxu0
    %v6264 = vadd.f32 0.0, %v6263
    %v6265 = vpop.f32.mrb[0].mxu0
    %6266 = vmatprep.mubr.f32.mxu0 0.0
    %6267 = vmatmul.mubr.f32.gmra.mrb[0].mxu0 %v6096
    %v6268 = vpop.f32.mrb[0].mxu0
    %v6269 = vadd.f32 0.0, %v6268
    %v6270 = vpop.f32.mrb[0].mxu0
    %6271 = vmatprep.mubr.f32.mxu0 0.0
    %6272 = vmatmul.mubr.f32.gmra.mrb[0].mxu0 %v6098
    %v6273 = vpop.f32.mrb[0].mxu0
    %v6274 = vadd.f32 0.0, %v6273
    %v6275 = vpop.f32.mrb[0].mxu0
    %6276 = vdwg.mxu0
    %v6277 = vmul.f32 %v5926, 0.125
    %v6278 = vmul.f32 %v5931, 0.125
    %v6279 = vmul.f32 %v5936, 0.125
    %v6280 = vmul.f32 %v5941, 0.125
    %v6281 = vmul.f32 %v5946, 0.125
    %v6282 = vmul.f32 %v5951, 0.125
    %v6283 = vmul.f32 %v5956, 0.125
    %v6284 = vmul.f32 %v5961, 0.125
    %v6285 = vmul.f32 %v5966, 0.125
    %v6286 = vmul.f32 %v5971, 0.125
    %v6287 = vmul.f32 %v5976, 0.125
    %v6288 = vmul.f32 %v5981, 0.125
    %v6289 = vmul.f32 %v5986, 0.125
    %v6290 = vmul.f32 %v5991, 0.125
    %v6291 = vmul.f32 %v5996, 0.125
    %v6292 = vmul.f32 %v6001, 0.125
    %v6293 = vmul.f32 %v6199, 0.125
    %v6294 = vmul.f32 %v6204, 0.125
    %v6295 = vmul.f32 %v6209, 0.125
    %v6296 = vmul.f32 %v6214, 0.125
    %v6297 = vmul.f32 %v6219, 0.125
    %v6298 = vmul.f32 %v6224, 0.125
    %v6299 = vmul.f32 %v6229, 0.125
    %v6300 = vmul.f32 %v6234, 0.125
    %v6301 = vmul.f32 %v6239, 0.125
    %v6302 = vmul.f32 %v6244, 0.125
    %v6303 = vmul.f32 %v6249, 0.125
    %v6304 = vmul.f32 %v6254, 0.125
    %v6305 = vmul.f32 %v6259, 0.125
    %v6306 = vmul.f32 %v6264, 0.125
    %v6307 = vmul.f32 %v6269, 0.125
    %v6308 = vmul.f32 %v6274, 0.125
    %6309 = vmax.xlane.f32.xlu0 %v6277
    %v6310 = vpop.xlane.xlu0 %6309
    %6311 = vmax.xlane.f32.xlu0 %v6278
    %v6312 = vpop.xlane.xlu0 %6311
    %6313 = vmax.xlane.f32.xlu0 %v6279
    %v6314 = vpop.xlane.xlu0 %6313
    %6315 = vmax.xlane.f32.xlu0 %v6280
    %v6316 = vpop.xlane.xlu0 %6315
    %6317 = vmax.xlane.f32.xlu0 %v6281
    %v6318 = vpop.xlane.xlu0 %6317
    %6319 = vmax.xlane.f32.xlu0 %v6282
    %v6320 = vpop.xlane.xlu0 %6319
    %6321 = vmax.xlane.f32.xlu0 %v6283
    %v6322 = vpop.xlane.xlu0 %6321
    %6323 = vmax.xlane.f32.xlu0 %v6284
    %v6324 = vpop.xlane.xlu0 %6323
    %6325 = vmax.xlane.f32.xlu0 %v6285
    %v6326 = vpop.xlane.xlu0 %6325
    %6327 = vmax.xlane.f32.xlu0 %v6286
    %v6328 = vpop.xlane.xlu0 %6327
    %6329 = vmax.xlane.f32.xlu0 %v6287
    %v6330 = vpop.xlane.xlu0 %6329
    %6331 = vmax.xlane.f32.xlu0 %v6288
    %v6332 = vpop.xlane.xlu0 %6331
    %6333 = vmax.xlane.f32.xlu0 %v6289
    %v6334 = vpop.xlane.xlu0 %6333
    %6335 = vmax.xlane.f32.xlu0 %v6290
    %v6336 = vpop.xlane.xlu0 %6335
    %6337 = vmax.xlane.f32.xlu0 %v6291
    %v6338 = vpop.xlane.xlu0 %6337
    %6339 = vmax.xlane.f32.xlu0 %v6292
    %v6340 = vpop.xlane.xlu0 %6339
    %6341 = vmax.xlane.f32.xlu0 %v6293
    %v6342 = vpop.xlane.xlu0 %6341
    %6343 = vmax.xlane.f32.xlu0 %v6294
    %v6344 = vpop.xlane.xlu0 %6343
    %6345 = vmax.xlane.f32.xlu0 %v6295
    %v6346 = vpop.xlane.xlu0 %6345
    %6347 = vmax.xlane.f32.xlu0 %v6296
    %v6348 = vpop.xlane.xlu0 %6347
    %6349 = vmax.xlane.f32.xlu0 %v6297
    %v6350 = vpop.xlane.xlu0 %6349
    %6351 = vmax.xlane.f32.xlu0 %v6298
    %v6352 = vpop.xlane.xlu0 %6351
    %6353 = vmax.xlane.f32.xlu0 %v6299
    %v6354 = vpop.xlane.xlu0 %6353
    %6355 = vmax.xlane.f32.xlu0 %v6300
    %v6356 = vpop.xlane.xlu0 %6355
    %6357 = vmax.xlane.f32.xlu0 %v6301
    %v6358 = vpop.xlane.xlu0 %6357
    %6359 = vmax.xlane.f32.xlu0 %v6302
    %v6360 = vpop.xlane.xlu0 %6359
    %6361 = vmax.xlane.f32.xlu0 %v6303
    %v6362 = vpop.xlane.xlu0 %6361
    %6363 = vmax.xlane.f32.xlu0 %v6304
    %v6364 = vpop.xlane.xlu0 %6363
    %6365 = vmax.xlane.f32.xlu0 %v6305
    %v6366 = vpop.xlane.xlu0 %6365
    %6367 = vmax.xlane.f32.xlu0 %v6306
    %v6368 = vpop.xlane.xlu0 %6367
    %6369 = vmax.xlane.f32.xlu0 %v6307
    %v6370 = vpop.xlane.xlu0 %6369
    %6371 = vmax.xlane.f32.xlu0 %v6308
    %v6372 = vpop.xlane.xlu0 %6371
    %v6373 = vsub.f32 %v6277, %v6310
    %v6374 = vsub.f32 %v6278, %v6312
    %v6375 = vsub.f32 %v6279, %v6314
    %v6376 = vsub.f32 %v6280, %v6316
    %v6377 = vsub.f32 %v6281, %v6318
    %v6378 = vsub.f32 %v6282, %v6320
    %v6379 = vsub.f32 %v6283, %v6322
    %v6380 = vsub.f32 %v6284, %v6324
    %v6381 = vsub.f32 %v6285, %v6326
    %v6382 = vsub.f32 %v6286, %v6328
    %v6383 = vsub.f32 %v6287, %v6330
    %v6384 = vsub.f32 %v6288, %v6332
    %v6385 = vsub.f32 %v6289, %v6334
    %v6386 = vsub.f32 %v6290, %v6336
    %v6387 = vsub.f32 %v6291, %v6338
    %v6388 = vsub.f32 %v6292, %v6340
    %v6389 = vsub.f32 %v6293, %v6342
    %v6390 = vsub.f32 %v6294, %v6344
    %v6391 = vsub.f32 %v6295, %v6346
    %v6392 = vsub.f32 %v6296, %v6348
    %v6393 = vsub.f32 %v6297, %v6350
    %v6394 = vsub.f32 %v6298, %v6352
    %v6395 = vsub.f32 %v6299, %v6354
    %v6396 = vsub.f32 %v6300, %v6356
    %v6397 = vsub.f32 %v6301, %v6358
    %v6398 = vsub.f32 %v6302, %v6360
    %v6399 = vsub.f32 %v6303, %v6362
    %v6400 = vsub.f32 %v6304, %v6364
    %v6401 = vsub.f32 %v6305, %v6366
    %v6402 = vsub.f32 %v6306, %v6368
    %v6403 = vsub.f32 %v6307, %v6370
    %v6404 = vsub.f32 %v6308, %v6372
    %v6405 = vmul.f32 %v6373, 1.442695
    %v6406 = vpow.pop %v6405
    %v6407 = vmul.f32 %v6374, 1.442695
    %v6408 = vpow.pop %v6407
    %v6409 = vmul.f32 %v6375, 1.442695
    %v6410 = vpow.pop %v6409
    %v6411 = vmul.f32 %v6376, 1.442695
    %v6412 = vpow.pop %v6411
    %v6413 = vmul.f32 %v6377, 1.442695
    %v6414 = vpow.pop %v6413
    %v6415 = vmul.f32 %v6378, 1.442695
    %v6416 = vpow.pop %v6415
    %v6417 = vmul.f32 %v6379, 1.442695
    %v6418 = vpow.pop %v6417
    %v6419 = vmul.f32 %v6380, 1.442695
    %v6420 = vpow.pop %v6419
    %v6421 = vmul.f32 %v6381, 1.442695
    %v6422 = vpow.pop %v6421
    %v6423 = vmul.f32 %v6382, 1.442695
    %v6424 = vpow.pop %v6423
    %v6425 = vmul.f32 %v6383, 1.442695
    %v6426 = vpow.pop %v6425
    %v6427 = vmul.f32 %v6384, 1.442695
    %v6428 = vpow.pop %v6427
    %v6429 = vmul.f32 %v6385, 1.442695
    %v6430 = vpow.pop %v6429
    %v6431 = vmul.f32 %v6386, 1.442695
    %v6432 = vpow.pop %v6431
    %v6433 = vmul.f32 %v6387, 1.442695
    %v6434 = vpow.pop %v6433
    %v6435 = vmul.f32 %v6388, 1.442695
    %v6436 = vpow.pop %v6435
    %v6437 = vmul.f32 %v6389, 1.442695
    %v6438 = vpow.pop %v6437
    %v6439 = vmul.f32 %v6390, 1.442695
    %v6440 = vpow.pop %v6439
    %v6441 = vmul.f32 %v6391, 1.442695
    %v6442 = vpow.pop %v6441
    %v6443 = vmul.f32 %v6392, 1.442695
    %v6444 = vpow.pop %v6443
    %v6445 = vmul.f32 %v6393, 1.442695
    %v6446 = vpow.pop %v6445
    %v6447 = vmul.f32 %v6394, 1.442695
    %v6448 = vpow.pop %v6447
    %v6449 = vmul.f32 %v6395, 1.442695
    %v6450 = vpow.pop %v6449
    %v6451 = vmul.f32 %v6396, 1.442695
    %v6452 = vpow.pop %v6451
    %v6453 = vmul.f32 %v6397, 1.442695
    %v6454 = vpow.pop %v6453
    %v6455 = vmul.f32 %v6398, 1.442695
    %v6456 = vpow.pop %v6455
    %v6457 = vmul.f32 %v6399, 1.442695
    %v6458 = vpow.pop %v6457
    %v6459 = vmul.f32 %v6400, 1.442695
    %v6460 = vpow.pop %v6459
    %v6461 = vmul.f32 %v6401, 1.442695
    %v6462 = vpow.pop %v6461
    %v6463 = vmul.f32 %v6402, 1.442695
    %v6464 = vpow.pop %v6463
    %v6465 = vmul.f32 %v6403, 1.442695
    %v6466 = vpow.pop %v6465
    %v6467 = vmul.f32 %v6404, 1.442695
    %v6468 = vpow.pop %v6467
    %6469 = vadd.xlane.f32.xlu0 %v6406
    %v6470 = vpop.xlane.xlu0 %6469
    %6471 = vadd.xlane.f32.xlu0 %v6408
    %v6472 = vpop.xlane.xlu0 %6471
    %6473 = vadd.xlane.f32.xlu0 %v6410
    %v6474 = vpop.xlane.xlu0 %6473
    %6475 = vadd.xlane.f32.xlu0 %v6412
    %v6476 = vpop.xlane.xlu0 %6475
    %6477 = vadd.xlane.f32.xlu0 %v6414
    %v6478 = vpop.xlane.xlu0 %6477
    %6479 = vadd.xlane.f32.xlu0 %v6416
    %v6480 = vpop.xlane.xlu0 %6479
    %6481 = vadd.xlane.f32.xlu0 %v6418
    %v6482 = vpop.xlane.xlu0 %6481
    %6483 = vadd.xlane.f32.xlu0 %v6420
    %v6484 = vpop.xlane.xlu0 %6483
    %6485 = vadd.xlane.f32.xlu0 %v6422
    %v6486 = vpop.xlane.xlu0 %6485
    %6487 = vadd.xlane.f32.xlu0 %v6424
    %v6488 = vpop.xlane.xlu0 %6487
    %6489 = vadd.xlane.f32.xlu0 %v6426
    %v6490 = vpop.xlane.xlu0 %6489
    %6491 = vadd.xlane.f32.xlu0 %v6428
    %v6492 = vpop.xlane.xlu0 %6491
    %6493 = vadd.xlane.f32.xlu0 %v6430
    %v6494 = vpop.xlane.xlu0 %6493
    %6495 = vadd.xlane.f32.xlu0 %v6432
    %v6496 = vpop.xlane.xlu0 %6495
    %6497 = vadd.xlane.f32.xlu0 %v6434
    %v6498 = vpop.xlane.xlu0 %6497
    %6499 = vadd.xlane.f32.xlu0 %v6436
    %v6500 = vpop.xlane.xlu0 %6499
    %6501 = vadd.xlane.f32.xlu0 %v6438
    %v6502 = vpop.xlane.xlu0 %6501
    %6503 = vadd.xlane.f32.xlu0 %v6440
    %v6504 = vpop.xlane.xlu0 %6503
    %6505 = vadd.xlane.f32.xlu0 %v6442
    %v6506 = vpop.xlane.xlu0 %6505
    %6507 = vadd.xlane.f32.xlu0 %v6444
    %v6508 = vpop.xlane.xlu0 %6507
    %6509 = vadd.xlane.f32.xlu0 %v6446
    %v6510 = vpop.xlane.xlu0 %6509
    %6511 = vadd.xlane.f32.xlu0 %v6448
    %v6512 = vpop.xlane.xlu0 %6511
    %6513 = vadd.xlane.f32.xlu0 %v6450
    %v6514 = vpop.xlane.xlu0 %6513
    %6515 = vadd.xlane.f32.xlu0 %v6452
    %v6516 = vpop.xlane.xlu0 %6515
    %6517 = vadd.xlane.f32.xlu0 %v6454
    %v6518 = vpop.xlane.xlu0 %6517
    %6519 = vadd.xlane.f32.xlu0 %v6456
    %v6520 = vpop.xlane.xlu0 %6519
    %6521 = vadd.xlane.f32.xlu0 %v6458
    %v6522 = vpop.xlane.xlu0 %6521
    %6523 = vadd.xlane.f32.xlu0 %v6460
    %v6524 = vpop.xlane.xlu0 %6523
    %6525 = vadd.xlane.f32.xlu0 %v6462
    %v6526 = vpop.xlane.xlu0 %6525
    %6527 = vadd.xlane.f32.xlu0 %v6464
    %v6528 = vpop.xlane.xlu0 %6527
    %6529 = vadd.xlane.f32.xlu0 %v6466
    %v6530 = vpop.xlane.xlu0 %6529
    %6531 = vadd.xlane.f32.xlu0 %v6468
    %v6532 = vpop.xlane.xlu0 %6531
    %v6533 = vrcp.pop %v6470
    %v6534 = vrcp.pop %v6472
    %v6535 = vrcp.pop %v6474
    %v6536 = vrcp.pop %v6476
    %v6537 = vrcp.pop %v6478
    %v6538 = vrcp.pop %v6480
    %v6539 = vrcp.pop %v6482
    %v6540 = vrcp.pop %v6484
    %v6541 = vrcp.pop %v6486
    %v6542 = vrcp.pop %v6488
    %v6543 = vrcp.pop %v6490
    %v6544 = vrcp.pop %v6492
    %v6545 = vrcp.pop %v6494
    %v6546 = vrcp.pop %v6496
    %v6547 = vrcp.pop %v6498
    %v6548 = vrcp.pop %v6500
    %v6549 = vrcp.pop %v6502
    %v6550 = vrcp.pop %v6504
    %v6551 = vrcp.pop %v6506
    %v6552 = vrcp.pop %v6508
    %v6553 = vrcp.pop %v6510
    %v6554 = vrcp.pop %v6512
    %v6555 = vrcp.pop %v6514
    %v6556 = vrcp.pop %v6516
    %v6557 = vrcp.pop %v6518
    %v6558 = vrcp.pop %v6520
    %v6559 = vrcp.pop %v6522
    %v6560 = vrcp.pop %v6524
    %v6561 = vrcp.pop %v6526
    %v6562 = vrcp.pop %v6528
    %v6563 = vrcp.pop %v6530
    %v6564 = vrcp.pop %v6532
    %v6565 = vmul.f32 %v6406, %v6533
    %v6566 = vmul.f32 %v6408, %v6534
    %v6567 = vmul.f32 %v6410, %v6535
    %v6568 = vmul.f32 %v6412, %v6536
    %v6569 = vmul.f32 %v6414, %v6537
    %v6570 = vmul.f32 %v6416, %v6538
    %v6571 = vmul.f32 %v6418, %v6539
    %v6572 = vmul.f32 %v6420, %v6540
    %v6573 = vmul.f32 %v6422, %v6541
    %v6574 = vmul.f32 %v6424, %v6542
    %v6575 = vmul.f32 %v6426, %v6543
    %v6576 = vmul.f32 %v6428, %v6544
    %v6577 = vmul.f32 %v6430, %v6545
    %v6578 = vmul.f32 %v6432, %v6546
    %v6579 = vmul.f32 %v6434, %v6547
    %v6580 = vmul.f32 %v6436, %v6548
    %v6581 = vmul.f32 %v6438, %v6549
    %v6582 = vmul.f32 %v6440, %v6550
    %v6583 = vmul.f32 %v6442, %v6551
    %v6584 = vmul.f32 %v6444, %v6552
    %v6585 = vmul.f32 %v6446, %v6553
    %v6586 = vmul.f32 %v6448, %v6554
    %v6587 = vmul.f32 %v6450, %v6555
    %v6588 = vmul.f32 %v6452, %v6556
    %v6589 = vmul.f32 %v6454, %v6557
    %v6590 = vmul.f32 %v6456, %v6558
    %v6591 = vmul.f32 %v6458, %v6559
    %v6592 = vmul.f32 %v6460, %v6560
    %v6593 = vmul.f32 %v6462, %v6561
    %v6594 = vmul.f32 %v6464, %v6562
    %v6595 = vmul.f32 %v6466, %v6563
    %v6596 = vmul.f32 %v6468, %v6564
    %6613 = vrot.lane.b32.xlu0 %v1817, 64
    %v6614 = vpop.permute.xlu0 %6613
    %6615 = vrot.lane.b32.xlu0 %v1823, 64
    %v6616 = vpop.permute.xlu0 %6615
    %6617 = vrot.lane.b32.xlu0 %v1829, 64
    %v6618 = vpop.permute.xlu0 %6617
    %6619 = vrot.lane.b32.xlu0 %v1835, 64
    %v6620 = vpop.permute.xlu0 %6619
    %6621 = vrot.lane.b32.xlu0 %v1841, 64
    %v6622 = vpop.permute.xlu0 %6621
    %6623 = vrot.lane.b32.xlu0 %v1847, 64
    %v6624 = vpop.permute.xlu0 %6623
    %6625 = vrot.lane.b32.xlu0 %v1853, 64
    %v6626 = vpop.permute.xlu0 %6625
    %6627 = vrot.lane.b32.xlu0 %v1859, 64
    %v6628 = vpop.permute.xlu0 %6627
    %6629 = vrot.lane.b32.xlu0 %v1865, 64
    %v6630 = vpop.permute.xlu0 %6629
    %6631 = vrot.lane.b32.xlu0 %v1871, 64
    %v6632 = vpop.permute.xlu0 %6631
    %6633 = vrot.lane.b32.xlu0 %v1877, 64
    %v6634 = vpop.permute.xlu0 %6633
    %6635 = vrot.lane.b32.xlu0 %v1883, 64
    %v6636 = vpop.permute.xlu0 %6635
    %6637 = vrot.lane.b32.xlu0 %v1889, 64
    %v6638 = vpop.permute.xlu0 %6637
    %6639 = vrot.lane.b32.xlu0 %v1895, 64
    %v6640 = vpop.permute.xlu0 %6639
    %6641 = vrot.lane.b32.xlu0 %v1901, 64
    %v6642 = vpop.permute.xlu0 %6641
    %6643 = vrot.lane.b32.xlu0 %v1907, 64
    %v6644 = vpop.permute.xlu0 %6643
    %6661 = vmatprep.subr.mxu0 0.0
    %6662 = vmatpush1.msra.mxu0 %v6614
    %6663 = vmatprep.subr.mxu0 0.0
    %6664 = vmatpush1.msra.mxu0 %v6616
    %6665 = vmatprep.subr.mxu0 0.0
    %6666 = vmatpush1.msra.mxu0 %v6618
    %6667 = vmatprep.subr.mxu0 0.0
    %6668 = vmatpush1.msra.mxu0 %v6620
    %6669 = vmatprep.subr.mxu0 0.0
    %6670 = vmatpush1.msra.mxu0 %v6622
    %6671 = vmatprep.subr.mxu0 0.0
    %6672 = vmatpush1.msra.mxu0 %v6624
    %6673 = vmatprep.subr.mxu0 0.0
    %6674 = vmatpush1.msra.mxu0 %v6626
    %6675 = vmatprep.subr.mxu0 0.0
    %6676 = vmatpush1.msra.mxu0 %v6628
    %6677 = vmatprep.subr.mxu0 0.0
    %6678 = vmatpush1.msra.mxu0 %v6630
    %6679 = vmatprep.subr.mxu0 0.0
    %6680 = vmatpush1.msra.mxu0 %v6632
    %6681 = vmatprep.subr.mxu0 0.0
    %6682 = vmatpush1.msra.mxu0 %v6634
    %6683 = vmatprep.subr.mxu0 0.0
    %6684 = vmatpush1.msra.mxu0 %v6636
    %6685 = vmatprep.subr.mxu0 0.0
    %6686 = vmatpush1.msra.mxu0 %v6638
    %6687 = vmatprep.subr.mxu0 0.0
    %6688 = vmatpush1.msra.mxu0 %v6640
    %6689 = vmatprep.subr.mxu0 0.0
    %6690 = vmatpush1.msra.mxu0 %v6642
    %6691 = vmatprep.subr.mxu0 0.0
    %6692 = vmatpush1.msra.mxu0 %v6644
    %6693 = vmatprep.subr.mxu0 0.0
    %6694 = vmatpush1.msra.mxu0 0.0
    %6695 = vmatprep.subr.mxu0 0.0
    %6696 = vmatpush1.msra.mxu0 0.0
    %6697 = vmatprep.subr.mxu0 0.0
    %6698 = vmatpush1.msra.mxu0 0.0
    %6699 = vmatprep.subr.mxu0 0.0
    %6700 = vmatpush1.msra.mxu0 0.0
    %6701 = vmatprep.subr.mxu0 0.0
    %6702 = vmatpush1.msra.mxu0 0.0
    %6703 = vmatprep.subr.mxu0 0.0
    %6704 = vmatpush1.msra.mxu0 0.0
    %6705 = vmatprep.subr.mxu0 0.0
    %6706 = vmatpush1.msra.mxu0 0.0
    %6707 = vmatprep.subr.mxu0 0.0
    %6708 = vmatpush1.msra.mxu0 0.0
    %6709 = vmatprep.subr.mxu0 0.0
    %6710 = vmatpush1.msra.mxu0 0.0
    %6711 = vmatprep.subr.mxu0 0.0
    %6712 = vmatpush1.msra.mxu0 0.0
    %6713 = vmatprep.subr.mxu0 0.0
    %6714 = vmatpush1.msra.mxu0 0.0
    %6715 = vmatprep.subr.mxu0 0.0
    %6716 = vmatpush1.msra.mxu0 0.0
    %6717 = vmatprep.subr.mxu0 0.0
    %6718 = vmatpush1.msra.mxu0 0.0
    %6719 = vmatprep.subr.mxu0 0.0
    %6720 = vmatpush1.msra.mxu0 0.0
    %6721 = vmatprep.subr.mxu0 0.0
    %6722 = vmatpush1.msra.mxu0 0.0
    %6723 = vmatprep.subr.mxu0 0.0
    %6724 = vmatpush1.msra.mxu0 0.0
    %6725 = vmatprep.mubr.f32.mxu0 0.0
    %6726 = vmatmul.mubr.f32.gmra.mrb[0].mxu0 %v6565
    %v6727 = vpop.f32.mrb[0].mxu0
    %v6728 = vadd.f32 0.0, %v6727
    %v6729 = vpop.f32.mrb[0].mxu0
    %6730 = vmatprep.mubr.f32.mxu0 0.0
    %6731 = vmatmul.mubr.f32.gmra.mrb[0].mxu0 %v6566
    %v6732 = vpop.f32.mrb[0].mxu0
    %v6733 = vadd.f32 0.0, %v6732
    %v6734 = vpop.f32.mrb[0].mxu0
    %6735 = vmatprep.mubr.f32.mxu0 0.0
    %6736 = vmatmul.mubr.f32.gmra.mrb[0].mxu0 %v6567
    %v6737 = vpop.f32.mrb[0].mxu0
    %v6738 = vadd.f32 0.0, %v6737
    %v6739 = vpop.f32.mrb[0].mxu0
    %6740 = vmatprep.mubr.f32.mxu0 0.0
    %6741 = vmatmul.mubr.f32.gmra.mrb[0].mxu0 %v6568
    %v6742 = vpop.f32.mrb[0].mxu0
    %v6743 = vadd.f32 0.0, %v6742
    %v6744 = vpop.f32.mrb[0].mxu0
    %6745 = vmatprep.mubr.f32.mxu0 0.0
    %6746 = vmatmul.mubr.f32.gmra.mrb[0].mxu0 %v6569
    %v6747 = vpop.f32.mrb[0].mxu0
    %v6748 = vadd.f32 0.0, %v6747
    %v6749 = vpop.f32.mrb[0].mxu0
    %6750 = vmatprep.mubr.f32.mxu0 0.0
    %6751 = vmatmul.mubr.f32.gmra.mrb[0].mxu0 %v6570
    %v6752 = vpop.f32.mrb[0].mxu0
    %v6753 = vadd.f32 0.0, %v6752
    %v6754 = vpop.f32.mrb[0].mxu0
    %6755 = vmatprep.mubr.f32.mxu0 0.0
    %6756 = vmatmul.mubr.f32.gmra.mrb[0].mxu0 %v6571
    %v6757 = vpop.f32.mrb[0].mxu0
    %v6758 = vadd.f32 0.0, %v6757
    %v6759 = vpop.f32.mrb[0].mxu0
    %6760 = vmatprep.mubr.f32.mxu0 0.0
    %6761 = vmatmul.mubr.f32.gmra.mrb[0].mxu0 %v6572
    %v6762 = vpop.f32.mrb[0].mxu0
    %v6763 = vadd.f32 0.0, %v6762
    %v6764 = vpop.f32.mrb[0].mxu0
    %6765 = vmatprep.mubr.f32.mxu0 0.0
    %6766 = vmatmul.mubr.f32.gmra.mrb[0].mxu0 %v6573
    %v6767 = vpop.f32.mrb[0].mxu0
    %v6768 = vadd.f32 0.0, %v6767
    %v6769 = vpop.f32.mrb[0].mxu0
    %6770 = vmatprep.mubr.f32.mxu0 0.0
    %6771 = vmatmul.mubr.f32.gmra.mrb[0].mxu0 %v6574
    %v6772 = vpop.f32.mrb[0].mxu0
    %v6773 = vadd.f32 0.0, %v6772
    %v6774 = vpop.f32.mrb[0].mxu0
    %6775 = vmatprep.mubr.f32.mxu0 0.0
    %6776 = vmatmul.mubr.f32.gmra.mrb[0].mxu0 %v6575
    %v6777 = vpop.f32.mrb[0].mxu0
    %v6778 = vadd.f32 0.0, %v6777
    %v6779 = vpop.f32.mrb[0].mxu0
    %6780 = vmatprep.mubr.f32.mxu0 0.0
    %6781 = vmatmul.mubr.f32.gmra.mrb[0].mxu0 %v6576
    %v6782 = vpop.f32.mrb[0].mxu0
    %v6783 = vadd.f32 0.0, %v6782
    %v6784 = vpop.f32.mrb[0].mxu0
    %6785 = vmatprep.mubr.f32.mxu0 0.0
    %6786 = vmatmul.mubr.f32.gmra.mrb[0].mxu0 %v6577
    %v6787 = vpop.f32.mrb[0].mxu0
    %v6788 = vadd.f32 0.0, %v6787
    %v6789 = vpop.f32.mrb[0].mxu0
    %6790 = vmatprep.mubr.f32.mxu0 0.0
    %6791 = vmatmul.mubr.f32.gmra.mrb[0].mxu0 %v6578
    %v6792 = vpop.f32.mrb[0].mxu0
    %v6793 = vadd.f32 0.0, %v6792
    %v6794 = vpop.f32.mrb[0].mxu0
    %6795 = vmatprep.mubr.f32.mxu0 0.0
    %6796 = vmatmul.mubr.f32.gmra.mrb[0].mxu0 %v6579
    %v6797 = vpop.f32.mrb[0].mxu0
    %v6798 = vadd.f32 0.0, %v6797
    %v6799 = vpop.f32.mrb[0].mxu0
    %6800 = vmatprep.mubr.f32.mxu0 0.0
    %6801 = vmatmul.mubr.f32.gmra.mrb[0].mxu0 %v6580
    %v6802 = vpop.f32.mrb[0].mxu0
    %v6803 = vadd.f32 0.0, %v6802
    %v6804 = vpop.f32.mrb[0].mxu0
    %6805 = vdwg.mxu0
    %6822 = vrot.lane.b32.xlu0 %v1913, 64
    %v6823 = vpop.permute.xlu0 %6822
    %6824 = vrot.lane.b32.xlu0 %v1919, 64
    %v6825 = vpop.permute.xlu0 %6824
    %6826 = vrot.lane.b32.xlu0 %v1925, 64
    %v6827 = vpop.permute.xlu0 %6826
    %6828 = vrot.lane.b32.xlu0 %v1931, 64
    %v6829 = vpop.permute.xlu0 %6828
    %6830 = vrot.lane.b32.xlu0 %v1937, 64
    %v6831 = vpop.permute.xlu0 %6830
    %6832 = vrot.lane.b32.xlu0 %v1943, 64
    %v6833 = vpop.permute.xlu0 %6832
    %6834 = vrot.lane.b32.xlu0 %v1949, 64
    %v6835 = vpop.permute.xlu0 %6834
    %6836 = vrot.lane.b32.xlu0 %v1955, 64
    %v6837 = vpop.permute.xlu0 %6836
    %6838 = vrot.lane.b32.xlu0 %v1961, 64
    %v6839 = vpop.permute.xlu0 %6838
    %6840 = vrot.lane.b32.xlu0 %v1967, 64
    %v6841 = vpop.permute.xlu0 %6840
    %6842 = vrot.lane.b32.xlu0 %v1973, 64
    %v6843 = vpop.permute.xlu0 %6842
    %6844 = vrot.lane.b32.xlu0 %v1979, 64
    %v6845 = vpop.permute.xlu0 %6844
    %6846 = vrot.lane.b32.xlu0 %v1985, 64
    %v6847 = vpop.permute.xlu0 %6846
    %6848 = vrot.lane.b32.xlu0 %v1991, 64
    %v6849 = vpop.permute.xlu0 %6848
    %6850 = vrot.lane.b32.xlu0 %v1997, 64
    %v6851 = vpop.permute.xlu0 %6850
    %6852 = vrot.lane.b32.xlu0 %v2003, 64
    %v6853 = vpop.permute.xlu0 %6852
    %6870 = vmatprep.subr.mxu0 0.0
    %6871 = vmatpush1.msra.mxu0 %v6823
    %6872 = vmatprep.subr.mxu0 0.0
    %6873 = vmatpush1.msra.mxu0 %v6825
    %6874 = vmatprep.subr.mxu0 0.0
    %6875 = vmatpush1.msra.mxu0 %v6827
    %6876 = vmatprep.subr.mxu0 0.0
    %6877 = vmatpush1.msra.mxu0 %v6829
    %6878 = vmatprep.subr.mxu0 0.0
    %6879 = vmatpush1.msra.mxu0 %v6831
    %6880 = vmatprep.subr.mxu0 0.0
    %6881 = vmatpush1.msra.mxu0 %v6833
    %6882 = vmatprep.subr.mxu0 0.0
    %6883 = vmatpush1.msra.mxu0 %v6835
    %6884 = vmatprep.subr.mxu0 0.0
    %6885 = vmatpush1.msra.mxu0 %v6837
    %6886 = vmatprep.subr.mxu0 0.0
    %6887 = vmatpush1.msra.mxu0 %v6839
    %6888 = vmatprep.subr.mxu0 0.0
    %6889 = vmatpush1.msra.mxu0 %v6841
    %6890 = vmatprep.subr.mxu0 0.0
    %6891 = vmatpush1.msra.mxu0 %v6843
    %6892 = vmatprep.subr.mxu0 0.0
    %6893 = vmatpush1.msra.mxu0 %v6845
    %6894 = vmatprep.subr.mxu0 0.0
    %6895 = vmatpush1.msra.mxu0 %v6847
    %6896 = vmatprep.subr.mxu0 0.0
    %6897 = vmatpush1.msra.mxu0 %v6849
    %6898 = vmatprep.subr.mxu0 0.0
    %6899 = vmatpush1.msra.mxu0 %v6851
    %6900 = vmatprep.subr.mxu0 0.0
    %6901 = vmatpush1.msra.mxu0 %v6853
    %6902 = vmatprep.subr.mxu0 0.0
    %6903 = vmatpush1.msra.mxu0 0.0
    %6904 = vmatprep.subr.mxu0 0.0
    %6905 = vmatpush1.msra.mxu0 0.0
    %6906 = vmatprep.subr.mxu0 0.0
    %6907 = vmatpush1.msra.mxu0 0.0
    %6908 = vmatprep.subr.mxu0 0.0
    %6909 = vmatpush1.msra.mxu0 0.0
    %6910 = vmatprep.subr.mxu0 0.0
    %6911 = vmatpush1.msra.mxu0 0.0
    %6912 = vmatprep.subr.mxu0 0.0
    %6913 = vmatpush1.msra.mxu0 0.0
    %6914 = vmatprep.subr.mxu0 0.0
    %6915 = vmatpush1.msra.mxu0 0.0
    %6916 = vmatprep.subr.mxu0 0.0
    %6917 = vmatpush1.msra.mxu0 0.0
    %6918 = vmatprep.subr.mxu0 0.0
    %6919 = vmatpush1.msra.mxu0 0.0
    %6920 = vmatprep.subr.mxu0 0.0
    %6921 = vmatpush1.msra.mxu0 0.0
    %6922 = vmatprep.subr.mxu0 0.0
    %6923 = vmatpush1.msra.mxu0 0.0
    %6924 = vmatprep.subr.mxu0 0.0
    %6925 = vmatpush1.msra.mxu0 0.0
    %6926 = vmatprep.subr.mxu0 0.0
    %6927 = vmatpush1.msra.mxu0 0.0
    %6928 = vmatprep.subr.mxu0 0.0
    %6929 = vmatpush1.msra.mxu0 0.0
    %6930 = vmatprep.subr.mxu0 0.0
    %6931 = vmatpush1.msra.mxu0 0.0
    %6932 = vmatprep.subr.mxu0 0.0
    %6933 = vmatpush1.msra.mxu0 0.0
    %6934 = vmatprep.mubr.f32.mxu0 0.0
    %6935 = vmatmul.mubr.f32.gmra.mrb[0].mxu0 %v6581
    %v6936 = vpop.f32.mrb[0].mxu0
    %v6937 = vadd.f32 0.0, %v6936
    %v6938 = vpop.f32.mrb[0].mxu0
    %6939 = vmatprep.mubr.f32.mxu0 0.0
    %6940 = vmatmul.mubr.f32.gmra.mrb[0].mxu0 %v6582
    %v6941 = vpop.f32.mrb[0].mxu0
    %v6942 = vadd.f32 0.0, %v6941
    %v6943 = vpop.f32.mrb[0].mxu0
    %6944 = vmatprep.mubr.f32.mxu0 0.0
    %6945 = vmatmul.mubr.f32.gmra.mrb[0].mxu0 %v6583
    %v6946 = vpop.f32.mrb[0].mxu0
    %v6947 = vadd.f32 0.0, %v6946
    %v6948 = vpop.f32.mrb[0].mxu0
    %6949 = vmatprep.mubr.f32.mxu0 0.0
    %6950 = vmatmul.mubr.f32.gmra.mrb[0].mxu0 %v6584
    %v6951 = vpop.f32.mrb[0].mxu0
    %v6952 = vadd.f32 0.0, %v6951
    %v6953 = vpop.f32.mrb[0].mxu0
    %6954 = vmatprep.mubr.f32.mxu0 0.0
    %6955 = vmatmul.mubr.f32.gmra.mrb[0].mxu0 %v6585
    %v6956 = vpop.f32.mrb[0].mxu0
    %v6957 = vadd.f32 0.0, %v6956
    %v6958 = vpop.f32.mrb[0].mxu0
    %6959 = vmatprep.mubr.f32.mxu0 0.0
    %6960 = vmatmul.mubr.f32.gmra.mrb[0].mxu0 %v6586
    %v6961 = vpop.f32.mrb[0].mxu0
    %v6962 = vadd.f32 0.0, %v6961
    %v6963 = vpop.f32.mrb[0].mxu0
    %6964 = vmatprep.mubr.f32.mxu0 0.0
    %6965 = vmatmul.mubr.f32.gmra.mrb[0].mxu0 %v6587
    %v6966 = vpop.f32.mrb[0].mxu0
    %v6967 = vadd.f32 0.0, %v6966
    %v6968 = vpop.f32.mrb[0].mxu0
    %6969 = vmatprep.mubr.f32.mxu0 0.0
    %6970 = vmatmul.mubr.f32.gmra.mrb[0].mxu0 %v6588
    %v6971 = vpop.f32.mrb[0].mxu0
    %v6972 = vadd.f32 0.0, %v6971
    %v6973 = vpop.f32.mrb[0].mxu0
    %6974 = vmatprep.mubr.f32.mxu0 0.0
    %6975 = vmatmul.mubr.f32.gmra.mrb[0].mxu0 %v6589
    %v6976 = vpop.f32.mrb[0].mxu0
    %v6977 = vadd.f32 0.0, %v6976
    %v6978 = vpop.f32.mrb[0].mxu0
    %6979 = vmatprep.mubr.f32.mxu0 0.0
    %6980 = vmatmul.mubr.f32.gmra.mrb[0].mxu0 %v6590
    %v6981 = vpop.f32.mrb[0].mxu0
    %v6982 = vadd.f32 0.0, %v6981
    %v6983 = vpop.f32.mrb[0].mxu0
    %6984 = vmatprep.mubr.f32.mxu0 0.0
    %6985 = vmatmul.mubr.f32.gmra.mrb[0].mxu0 %v6591
    %v6986 = vpop.f32.mrb[0].mxu0
    %v6987 = vadd.f32 0.0, %v6986
    %v6988 = vpop.f32.mrb[0].mxu0
    %6989 = vmatprep.mubr.f32.mxu0 0.0
    %6990 = vmatmul.mubr.f32.gmra.mrb[0].mxu0 %v6592
    %v6991 = vpop.f32.mrb[0].mxu0
    %v6992 = vadd.f32 0.0, %v6991
    %v6993 = vpop.f32.mrb[0].mxu0
    %6994 = vmatprep.mubr.f32.mxu0 0.0
    %6995 = vmatmul.mubr.f32.gmra.mrb[0].mxu0 %v6593
    %v6996 = vpop.f32.mrb[0].mxu0
    %v6997 = vadd.f32 0.0, %v6996
    %v6998 = vpop.f32.mrb[0].mxu0
    %6999 = vmatprep.mubr.f32.mxu0 0.0
    %7000 = vmatmul.mubr.f32.gmra.mrb[0].mxu0 %v6594
    %v7001 = vpop.f32.mrb[0].mxu0
    %v7002 = vadd.f32 0.0, %v7001
    %v7003 = vpop.f32.mrb[0].mxu0
    %7004 = vmatprep.mubr.f32.mxu0 0.0
    %7005 = vmatmul.mubr.f32.gmra.mrb[0].mxu0 %v6595
    %v7006 = vpop.f32.mrb[0].mxu0
    %v7007 = vadd.f32 0.0, %v7006
    %v7008 = vpop.f32.mrb[0].mxu0
    %7009 = vmatprep.mubr.f32.mxu0 0.0
    %7010 = vmatmul.mubr.f32.gmra.mrb[0].mxu0 %v6596
    %v7011 = vpop.f32.mrb[0].mxu0
    %v7012 = vadd.f32 0.0, %v7011
    %v7013 = vpop.f32.mrb[0].mxu0
    %7014 = vdwg.mxu0
    %v7016 = vsel %vm2262, %v1044, 0
    %v7019 = vsel %vm2262, %v1050, 0
    %v7022 = vsel %vm2262, %v1056, 0
    %v7025 = vsel %vm2262, %v1062, 0
    %v7028 = vsel %vm2262, %v1068, 0
    %v7031 = vsel %vm2262, %v1074, 0
    %v7034 = vsel %vm2262, %v1080, 0
    %v7037 = vsel %vm2262, %v1086, 0
    %v7040 = vsel %vm2262, %v1092, 0
    %v7043 = vsel %vm2262, %v1098, 0
    %v7046 = vsel %vm2262, %v1104, 0
    %v7049 = vsel %vm2262, %v1110, 0
    %v7052 = vsel %vm2262, %v1116, 0
    %v7055 = vsel %vm2262, %v1122, 0
    %v7058 = vsel %vm2262, %v1128, 0
    %v7061 = vsel %vm2262, %v1134, 0
    %v7064 = vsel %vm2262, %v1558, 0
    %v7067 = vsel %vm2262, %v1564, 0
    %v7070 = vsel %vm2262, %v1570, 0
    %v7073 = vsel %vm2262, %v1576, 0
    %v7076 = vsel %vm2262, %v1582, 0
    %v7079 = vsel %vm2262, %v1588, 0
    %v7082 = vsel %vm2262, %v1594, 0
    %v7085 = vsel %vm2262, %v1600, 0
    %v7088 = vsel %vm2262, %v1606, 0
    %v7091 = vsel %vm2262, %v1612, 0
    %v7094 = vsel %vm2262, %v1618, 0
    %v7097 = vsel %vm2262, %v1624, 0
    %v7100 = vsel %vm2262, %v1630, 0
    %v7103 = vsel %vm2262, %v1636, 0
    %v7106 = vsel %vm2262, %v1642, 0
    %v7109 = vsel %vm2262, %v1648, 0
    %7111 = vmatprep.subr.mxu0 0.0
    %7112 = vmatpush1.xpose.msra.mxu0 %v7064
    %7113 = vmatprep.subr.mxu0 0.0
    %7114 = vmatpush1.xpose.msra.mxu0 %v7067
    %7115 = vmatprep.subr.mxu0 0.0
    %7116 = vmatpush1.xpose.msra.mxu0 %v7070
    %7117 = vmatprep.subr.mxu0 0.0
    %7118 = vmatpush1.xpose.msra.mxu0 %v7073
    %7119 = vmatprep.subr.mxu0 0.0
    %7120 = vmatpush1.xpose.msra.mxu0 %v7076
    %7121 = vmatprep.subr.mxu0 0.0
    %7122 = vmatpush1.xpose.msra.mxu0 %v7079
    %7123 = vmatprep.subr.mxu0 0.0
    %7124 = vmatpush1.xpose.msra.mxu0 %v7082
    %7125 = vmatprep.subr.mxu0 0.0
    %7126 = vmatpush1.xpose.msra.mxu0 %v7085
    %7127 = vmatprep.subr.mxu0 0.0
    %7128 = vmatpush1.xpose.msra.mxu0 %v7088
    %7129 = vmatprep.subr.mxu0 0.0
    %7130 = vmatpush1.xpose.msra.mxu0 %v7091
    %7131 = vmatprep.subr.mxu0 0.0
    %7132 = vmatpush1.xpose.msra.mxu0 %v7094
    %7133 = vmatprep.subr.mxu0 0.0
    %7134 = vmatpush1.xpose.msra.mxu0 %v7097
    %7135 = vmatprep.subr.mxu0 0.0
    %7136 = vmatpush1.xpose.msra.mxu0 %v7100
    %7137 = vmatprep.subr.mxu0 0.0
    %7138 = vmatpush1.xpose.msra.mxu0 %v7103
    %7139 = vmatprep.subr.mxu0 0.0
    %7140 = vmatpush1.xpose.msra.mxu0 %v7106
    %7141 = vmatprep.subr.mxu0 0.0
    %7142 = vmatpush1.xpose.msra.mxu0 %v7109
    %7143 = vmatprep.subr.mxu0 0.0
    %7144 = vmatpush1.xpose.msra.mxu0 0.0
    %7145 = vmatprep.subr.mxu0 0.0
    %7146 = vmatpush1.xpose.msra.mxu0 0.0
    %7147 = vmatprep.subr.mxu0 0.0
    %7148 = vmatpush1.xpose.msra.mxu0 0.0
    %7149 = vmatprep.subr.mxu0 0.0
    %7150 = vmatpush1.xpose.msra.mxu0 0.0
    %7151 = vmatprep.subr.mxu0 0.0
    %7152 = vmatpush1.xpose.msra.mxu0 0.0
    %7153 = vmatprep.subr.mxu0 0.0
    %7154 = vmatpush1.xpose.msra.mxu0 0.0
    %7155 = vmatprep.subr.mxu0 0.0
    %7156 = vmatpush1.xpose.msra.mxu0 0.0
    %7157 = vmatprep.subr.mxu0 0.0
    %7158 = vmatpush1.xpose.msra.mxu0 0.0
    %7159 = vmatprep.subr.mxu0 0.0
    %7160 = vmatpush1.xpose.msra.mxu0 0.0
    %7161 = vmatprep.subr.mxu0 0.0
    %7162 = vmatpush1.xpose.msra.mxu0 0.0
    %7163 = vmatprep.subr.mxu0 0.0
    %7164 = vmatpush1.xpose.msra.mxu0 0.0
    %7165 = vmatprep.subr.mxu0 0.0
    %7166 = vmatpush1.xpose.msra.mxu0 0.0
    %7167 = vmatprep.subr.mxu0 0.0
    %7168 = vmatpush1.xpose.msra.mxu0 0.0
    %7169 = vmatprep.subr.mxu0 0.0
    %7170 = vmatpush1.xpose.msra.mxu0 0.0
    %7171 = vmatprep.subr.mxu0 0.0
    %7172 = vmatpush1.xpose.msra.mxu0 0.0
    %7173 = vmatprep.subr.mxu0 0.0
    %7174 = vmatpush1.xpose.msra.mxu0 0.0
    %7175 = vmatprep.mubr.f32.mxu0 0.0
    %7176 = vmatmul.mubr.f32.gmra.mrb[0].mxu0 %v7016
    %v7177 = vpop.f32.mrb[0].mxu0
    %v7178 = vadd.f32 0.0, %v7177
    %v7179 = vpop.f32.mrb[0].mxu0
    %7180 = vmatprep.mubr.f32.mxu0 0.0
    %7181 = vmatmul.mubr.f32.gmra.mrb[0].mxu0 %v7019
    %v7182 = vpop.f32.mrb[0].mxu0
    %v7183 = vadd.f32 0.0, %v7182
    %v7184 = vpop.f32.mrb[0].mxu0
    %7185 = vmatprep.mubr.f32.mxu0 0.0
    %7186 = vmatmul.mubr.f32.gmra.mrb[0].mxu0 %v7022
    %v7187 = vpop.f32.mrb[0].mxu0
    %v7188 = vadd.f32 0.0, %v7187
    %v7189 = vpop.f32.mrb[0].mxu0
    %7190 = vmatprep.mubr.f32.mxu0 0.0
    %7191 = vmatmul.mubr.f32.gmra.mrb[0].mxu0 %v7025
    %v7192 = vpop.f32.mrb[0].mxu0
    %v7193 = vadd.f32 0.0, %v7192
    %v7194 = vpop.f32.mrb[0].mxu0
    %7195 = vmatprep.mubr.f32.mxu0 0.0
    %7196 = vmatmul.mubr.f32.gmra.mrb[0].mxu0 %v7028
    %v7197 = vpop.f32.mrb[0].mxu0
    %v7198 = vadd.f32 0.0, %v7197
    %v7199 = vpop.f32.mrb[0].mxu0
    %7200 = vmatprep.mubr.f32.mxu0 0.0
    %7201 = vmatmul.mubr.f32.gmra.mrb[0].mxu0 %v7031
    %v7202 = vpop.f32.mrb[0].mxu0
    %v7203 = vadd.f32 0.0, %v7202
    %v7204 = vpop.f32.mrb[0].mxu0
    %7205 = vmatprep.mubr.f32.mxu0 0.0
    %7206 = vmatmul.mubr.f32.gmra.mrb[0].mxu0 %v7034
    %v7207 = vpop.f32.mrb[0].mxu0
    %v7208 = vadd.f32 0.0, %v7207
    %v7209 = vpop.f32.mrb[0].mxu0
    %7210 = vmatprep.mubr.f32.mxu0 0.0
    %7211 = vmatmul.mubr.f32.gmra.mrb[0].mxu0 %v7037
    %v7212 = vpop.f32.mrb[0].mxu0
    %v7213 = vadd.f32 0.0, %v7212
    %v7214 = vpop.f32.mrb[0].mxu0
    %7215 = vmatprep.mubr.f32.mxu0 0.0
    %7216 = vmatmul.mubr.f32.gmra.mrb[0].mxu0 %v7040
    %v7217 = vpop.f32.mrb[0].mxu0
    %v7218 = vadd.f32 0.0, %v7217
    %v7219 = vpop.f32.mrb[0].mxu0
    %7220 = vmatprep.mubr.f32.mxu0 0.0
    %7221 = vmatmul.mubr.f32.gmra.mrb[0].mxu0 %v7043
    %v7222 = vpop.f32.mrb[0].mxu0
    %v7223 = vadd.f32 0.0, %v7222
    %v7224 = vpop.f32.mrb[0].mxu0
    %7225 = vmatprep.mubr.f32.mxu0 0.0
    %7226 = vmatmul.mubr.f32.gmra.mrb[0].mxu0 %v7046
    %v7227 = vpop.f32.mrb[0].mxu0
    %v7228 = vadd.f32 0.0, %v7227
    %v7229 = vpop.f32.mrb[0].mxu0
    %7230 = vmatprep.mubr.f32.mxu0 0.0
    %7231 = vmatmul.mubr.f32.gmra.mrb[0].mxu0 %v7049
    %v7232 = vpop.f32.mrb[0].mxu0
    %v7233 = vadd.f32 0.0, %v7232
    %v7234 = vpop.f32.mrb[0].mxu0
    %7235 = vmatprep.mubr.f32.mxu0 0.0
    %7236 = vmatmul.mubr.f32.gmra.mrb[0].mxu0 %v7052
    %v7237 = vpop.f32.mrb[0].mxu0
    %v7238 = vadd.f32 0.0, %v7237
    %v7239 = vpop.f32.mrb[0].mxu0
    %7240 = vmatprep.mubr.f32.mxu0 0.0
    %7241 = vmatmul.mubr.f32.gmra.mrb[0].mxu0 %v7055
    %v7242 = vpop.f32.mrb[0].mxu0
    %v7243 = vadd.f32 0.0, %v7242
    %v7244 = vpop.f32.mrb[0].mxu0
    %7245 = vmatprep.mubr.f32.mxu0 0.0
    %7246 = vmatmul.mubr.f32.gmra.mrb[0].mxu0 %v7058
    %v7247 = vpop.f32.mrb[0].mxu0
    %v7248 = vadd.f32 0.0, %v7247
    %v7249 = vpop.f32.mrb[0].mxu0
    %7250 = vmatprep.mubr.f32.mxu0 0.0
    %7251 = vmatmul.mubr.f32.gmra.mrb[0].mxu0 %v7061
    %v7252 = vpop.f32.mrb[0].mxu0
    %v7253 = vadd.f32 0.0, %v7252
    %v7254 = vpop.f32.mrb[0].mxu0
    %7255 = vdwg.mxu0
    %v7257 = vsel %vm2262, %v1140, 0
    %v7260 = vsel %vm2262, %v1146, 0
    %v7263 = vsel %vm2262, %v1152, 0
    %v7266 = vsel %vm2262, %v1158, 0
    %v7269 = vsel %vm2262, %v1164, 0
    %v7272 = vsel %vm2262, %v1170, 0
    %v7275 = vsel %vm2262, %v1176, 0
    %v7278 = vsel %vm2262, %v1182, 0
    %v7281 = vsel %vm2262, %v1188, 0
    %v7284 = vsel %vm2262, %v1194, 0
    %v7287 = vsel %vm2262, %v1200, 0
    %v7290 = vsel %vm2262, %v1206, 0
    %v7293 = vsel %vm2262, %v1212, 0
    %v7296 = vsel %vm2262, %v1218, 0
    %v7299 = vsel %vm2262, %v1224, 0
    %v7302 = vsel %vm2262, %v1230, 0
    %v7305 = vsel %vm2262, %v1654, 0
    %v7308 = vsel %vm2262, %v1660, 0
    %v7311 = vsel %vm2262, %v1666, 0
    %v7314 = vsel %vm2262, %v1672, 0
    %v7317 = vsel %vm2262, %v1678, 0
    %v7320 = vsel %vm2262, %v1684, 0
    %v7323 = vsel %vm2262, %v1690, 0
    %v7326 = vsel %vm2262, %v1696, 0
    %v7329 = vsel %vm2262, %v1702, 0
    %v7332 = vsel %vm2262, %v1708, 0
    %v7335 = vsel %vm2262, %v1714, 0
    %v7338 = vsel %vm2262, %v1720, 0
    %v7341 = vsel %vm2262, %v1726, 0
    %v7344 = vsel %vm2262, %v1732, 0
    %v7347 = vsel %vm2262, %v1738, 0
    %v7350 = vsel %vm2262, %v1744, 0
    %7352 = vmatprep.subr.mxu0 0.0
    %7353 = vmatpush1.xpose.msra.mxu0 %v7305
    %7354 = vmatprep.subr.mxu0 0.0
    %7355 = vmatpush1.xpose.msra.mxu0 %v7308
    %7356 = vmatprep.subr.mxu0 0.0
    %7357 = vmatpush1.xpose.msra.mxu0 %v7311
    %7358 = vmatprep.subr.mxu0 0.0
    %7359 = vmatpush1.xpose.msra.mxu0 %v7314
    %7360 = vmatprep.subr.mxu0 0.0
    %7361 = vmatpush1.xpose.msra.mxu0 %v7317
    %7362 = vmatprep.subr.mxu0 0.0
    %7363 = vmatpush1.xpose.msra.mxu0 %v7320
    %7364 = vmatprep.subr.mxu0 0.0
    %7365 = vmatpush1.xpose.msra.mxu0 %v7323
    %7366 = vmatprep.subr.mxu0 0.0
    %7367 = vmatpush1.xpose.msra.mxu0 %v7326
    %7368 = vmatprep.subr.mxu0 0.0
    %7369 = vmatpush1.xpose.msra.mxu0 %v7329
    %7370 = vmatprep.subr.mxu0 0.0
    %7371 = vmatpush1.xpose.msra.mxu0 %v7332
    %7372 = vmatprep.subr.mxu0 0.0
    %7373 = vmatpush1.xpose.msra.mxu0 %v7335
    %7374 = vmatprep.subr.mxu0 0.0
    %7375 = vmatpush1.xpose.msra.mxu0 %v7338
    %7376 = vmatprep.subr.mxu0 0.0
    %7377 = vmatpush1.xpose.msra.mxu0 %v7341
    %7378 = vmatprep.subr.mxu0 0.0
    %7379 = vmatpush1.xpose.msra.mxu0 %v7344
    %7380 = vmatprep.subr.mxu0 0.0
    %7381 = vmatpush1.xpose.msra.mxu0 %v7347
    %7382 = vmatprep.subr.mxu0 0.0
    %7383 = vmatpush1.xpose.msra.mxu0 %v7350
    %7384 = vmatprep.subr.mxu0 0.0
    %7385 = vmatpush1.xpose.msra.mxu0 0.0
    %7386 = vmatprep.subr.mxu0 0.0
    %7387 = vmatpush1.xpose.msra.mxu0 0.0
    %7388 = vmatprep.subr.mxu0 0.0
    %7389 = vmatpush1.xpose.msra.mxu0 0.0
    %7390 = vmatprep.subr.mxu0 0.0
    %7391 = vmatpush1.xpose.msra.mxu0 0.0
    %7392 = vmatprep.subr.mxu0 0.0
    %7393 = vmatpush1.xpose.msra.mxu0 0.0
    %7394 = vmatprep.subr.mxu0 0.0
    %7395 = vmatpush1.xpose.msra.mxu0 0.0
    %7396 = vmatprep.subr.mxu0 0.0
    %7397 = vmatpush1.xpose.msra.mxu0 0.0
    %7398 = vmatprep.subr.mxu0 0.0
    %7399 = vmatpush1.xpose.msra.mxu0 0.0
    %7400 = vmatprep.subr.mxu0 0.0
    %7401 = vmatpush1.xpose.msra.mxu0 0.0
    %7402 = vmatprep.subr.mxu0 0.0
    %7403 = vmatpush1.xpose.msra.mxu0 0.0
    %7404 = vmatprep.subr.mxu0 0.0
    %7405 = vmatpush1.xpose.msra.mxu0 0.0
    %7406 = vmatprep.subr.mxu0 0.0
    %7407 = vmatpush1.xpose.msra.mxu0 0.0
    %7408 = vmatprep.subr.mxu0 0.0
    %7409 = vmatpush1.xpose.msra.mxu0 0.0
    %7410 = vmatprep.subr.mxu0 0.0
    %7411 = vmatpush1.xpose.msra.mxu0 0.0
    %7412 = vmatprep.subr.mxu0 0.0
    %7413 = vmatpush1.xpose.msra.mxu0 0.0
    %7414 = vmatprep.subr.mxu0 0.0
    %7415 = vmatpush1.xpose.msra.mxu0 0.0
    %7416 = vmatprep.mubr.f32.mxu0 0.0
    %7417 = vmatmul.mubr.f32.gmra.mrb[0].mxu0 %v7257
    %v7418 = vpop.f32.mrb[0].mxu0
    %v7419 = vadd.f32 0.0, %v7418
    %v7420 = vpop.f32.mrb[0].mxu0
    %7421 = vmatprep.mubr.f32.mxu0 0.0
    %7422 = vmatmul.mubr.f32.gmra.mrb[0].mxu0 %v7260
    %v7423 = vpop.f32.mrb[0].mxu0
    %v7424 = vadd.f32 0.0, %v7423
    %v7425 = vpop.f32.mrb[0].mxu0
    %7426 = vmatprep.mubr.f32.mxu0 0.0
    %7427 = vmatmul.mubr.f32.gmra.mrb[0].mxu0 %v7263
    %v7428 = vpop.f32.mrb[0].mxu0
    %v7429 = vadd.f32 0.0, %v7428
    %v7430 = vpop.f32.mrb[0].mxu0
    %7431 = vmatprep.mubr.f32.mxu0 0.0
    %7432 = vmatmul.mubr.f32.gmra.mrb[0].mxu0 %v7266
    %v7433 = vpop.f32.mrb[0].mxu0
    %v7434 = vadd.f32 0.0, %v7433
    %v7435 = vpop.f32.mrb[0].mxu0
    %7436 = vmatprep.mubr.f32.mxu0 0.0
    %7437 = vmatmul.mubr.f32.gmra.mrb[0].mxu0 %v7269
    %v7438 = vpop.f32.mrb[0].mxu0
    %v7439 = vadd.f32 0.0, %v7438
    %v7440 = vpop.f32.mrb[0].mxu0
    %7441 = vmatprep.mubr.f32.mxu0 0.0
    %7442 = vmatmul.mubr.f32.gmra.mrb[0].mxu0 %v7272
    %v7443 = vpop.f32.mrb[0].mxu0
    %v7444 = vadd.f32 0.0, %v7443
    %v7445 = vpop.f32.mrb[0].mxu0
    %7446 = vmatprep.mubr.f32.mxu0 0.0
    %7447 = vmatmul.mubr.f32.gmra.mrb[0].mxu0 %v7275
    %v7448 = vpop.f32.mrb[0].mxu0
    %v7449 = vadd.f32 0.0, %v7448
    %v7450 = vpop.f32.mrb[0].mxu0
    %7451 = vmatprep.mubr.f32.mxu0 0.0
    %7452 = vmatmul.mubr.f32.gmra.mrb[0].mxu0 %v7278
    %v7453 = vpop.f32.mrb[0].mxu0
    %v7454 = vadd.f32 0.0, %v7453
    %v7455 = vpop.f32.mrb[0].mxu0
    %7456 = vmatprep.mubr.f32.mxu0 0.0
    %7457 = vmatmul.mubr.f32.gmra.mrb[0].mxu0 %v7281
    %v7458 = vpop.f32.mrb[0].mxu0
    %v7459 = vadd.f32 0.0, %v7458
    %v7460 = vpop.f32.mrb[0].mxu0
    %7461 = vmatprep.mubr.f32.mxu0 0.0
    %7462 = vmatmul.mubr.f32.gmra.mrb[0].mxu0 %v7284
    %v7463 = vpop.f32.mrb[0].mxu0
    %v7464 = vadd.f32 0.0, %v7463
    %v7465 = vpop.f32.mrb[0].mxu0
    %7466 = vmatprep.mubr.f32.mxu0 0.0
    %7467 = vmatmul.mubr.f32.gmra.mrb[0].mxu0 %v7287
    %v7468 = vpop.f32.mrb[0].mxu0
    %v7469 = vadd.f32 0.0, %v7468
    %v7470 = vpop.f32.mrb[0].mxu0
    %7471 = vmatprep.mubr.f32.mxu0 0.0
    %7472 = vmatmul.mubr.f32.gmra.mrb[0].mxu0 %v7290
    %v7473 = vpop.f32.mrb[0].mxu0
    %v7474 = vadd.f32 0.0, %v7473
    %v7475 = vpop.f32.mrb[0].mxu0
    %7476 = vmatprep.mubr.f32.mxu0 0.0
    %7477 = vmatmul.mubr.f32.gmra.mrb[0].mxu0 %v7293
    %v7478 = vpop.f32.mrb[0].mxu0
    %v7479 = vadd.f32 0.0, %v7478
    %v7480 = vpop.f32.mrb[0].mxu0
    %7481 = vmatprep.mubr.f32.mxu0 0.0
    %7482 = vmatmul.mubr.f32.gmra.mrb[0].mxu0 %v7296
    %v7483 = vpop.f32.mrb[0].mxu0
    %v7484 = vadd.f32 0.0, %v7483
    %v7485 = vpop.f32.mrb[0].mxu0
    %7486 = vmatprep.mubr.f32.mxu0 0.0
    %7487 = vmatmul.mubr.f32.gmra.mrb[0].mxu0 %v7299
    %v7488 = vpop.f32.mrb[0].mxu0
    %v7489 = vadd.f32 0.0, %v7488
    %v7490 = vpop.f32.mrb[0].mxu0
    %7491 = vmatprep.mubr.f32.mxu0 0.0
    %7492 = vmatmul.mubr.f32.gmra.mrb[0].mxu0 %v7302
    %v7493 = vpop.f32.mrb[0].mxu0
    %v7494 = vadd.f32 0.0, %v7493
    %v7495 = vpop.f32.mrb[0].mxu0
    %7496 = vdwg.mxu0
    %v7497 = vmul.f32 %v7178, 0.125
    %v7498 = vmul.f32 %v7183, 0.125
    %v7499 = vmul.f32 %v7188, 0.125
    %v7500 = vmul.f32 %v7193, 0.125
    %v7501 = vmul.f32 %v7198, 0.125
    %v7502 = vmul.f32 %v7203, 0.125
    %v7503 = vmul.f32 %v7208, 0.125
    %v7504 = vmul.f32 %v7213, 0.125
    %v7505 = vmul.f32 %v7218, 0.125
    %v7506 = vmul.f32 %v7223, 0.125
    %v7507 = vmul.f32 %v7228, 0.125
    %v7508 = vmul.f32 %v7233, 0.125
    %v7509 = vmul.f32 %v7238, 0.125
    %v7510 = vmul.f32 %v7243, 0.125
    %v7511 = vmul.f32 %v7248, 0.125
    %v7512 = vmul.f32 %v7253, 0.125
    %v7513 = vmul.f32 %v7419, 0.125
    %v7514 = vmul.f32 %v7424, 0.125
    %v7515 = vmul.f32 %v7429, 0.125
    %v7516 = vmul.f32 %v7434, 0.125
    %v7517 = vmul.f32 %v7439, 0.125
    %v7518 = vmul.f32 %v7444, 0.125
    %v7519 = vmul.f32 %v7449, 0.125
    %v7520 = vmul.f32 %v7454, 0.125
    %v7521 = vmul.f32 %v7459, 0.125
    %v7522 = vmul.f32 %v7464, 0.125
    %v7523 = vmul.f32 %v7469, 0.125
    %v7524 = vmul.f32 %v7474, 0.125
    %v7525 = vmul.f32 %v7479, 0.125
    %v7526 = vmul.f32 %v7484, 0.125
    %v7527 = vmul.f32 %v7489, 0.125
    %v7528 = vmul.f32 %v7494, 0.125
    %7529 = vmax.xlane.f32.xlu0 %v7497
    %v7530 = vpop.xlane.xlu0 %7529
    %7531 = vmax.xlane.f32.xlu0 %v7498
    %v7532 = vpop.xlane.xlu0 %7531
    %7533 = vmax.xlane.f32.xlu0 %v7499
    %v7534 = vpop.xlane.xlu0 %7533
    %7535 = vmax.xlane.f32.xlu0 %v7500
    %v7536 = vpop.xlane.xlu0 %7535
    %7537 = vmax.xlane.f32.xlu0 %v7501
    %v7538 = vpop.xlane.xlu0 %7537
    %7539 = vmax.xlane.f32.xlu0 %v7502
    %v7540 = vpop.xlane.xlu0 %7539
    %7541 = vmax.xlane.f32.xlu0 %v7503
    %v7542 = vpop.xlane.xlu0 %7541
    %7543 = vmax.xlane.f32.xlu0 %v7504
    %v7544 = vpop.xlane.xlu0 %7543
    %7545 = vmax.xlane.f32.xlu0 %v7505
    %v7546 = vpop.xlane.xlu0 %7545
    %7547 = vmax.xlane.f32.xlu0 %v7506
    %v7548 = vpop.xlane.xlu0 %7547
    %7549 = vmax.xlane.f32.xlu0 %v7507
    %v7550 = vpop.xlane.xlu0 %7549
    %7551 = vmax.xlane.f32.xlu0 %v7508
    %v7552 = vpop.xlane.xlu0 %7551
    %7553 = vmax.xlane.f32.xlu0 %v7509
    %v7554 = vpop.xlane.xlu0 %7553
    %7555 = vmax.xlane.f32.xlu0 %v7510
    %v7556 = vpop.xlane.xlu0 %7555
    %7557 = vmax.xlane.f32.xlu0 %v7511
    %v7558 = vpop.xlane.xlu0 %7557
    %7559 = vmax.xlane.f32.xlu0 %v7512
    %v7560 = vpop.xlane.xlu0 %7559
    %7561 = vmax.xlane.f32.xlu0 %v7513
    %v7562 = vpop.xlane.xlu0 %7561
    %7563 = vmax.xlane.f32.xlu0 %v7514
    %v7564 = vpop.xlane.xlu0 %7563
    %7565 = vmax.xlane.f32.xlu0 %v7515
    %v7566 = vpop.xlane.xlu0 %7565
    %7567 = vmax.xlane.f32.xlu0 %v7516
    %v7568 = vpop.xlane.xlu0 %7567
    %7569 = vmax.xlane.f32.xlu0 %v7517
    %v7570 = vpop.xlane.xlu0 %7569
    %7571 = vmax.xlane.f32.xlu0 %v7518
    %v7572 = vpop.xlane.xlu0 %7571
    %7573 = vmax.xlane.f32.xlu0 %v7519
    %v7574 = vpop.xlane.xlu0 %7573
    %7575 = vmax.xlane.f32.xlu0 %v7520
    %v7576 = vpop.xlane.xlu0 %7575
    %7577 = vmax.xlane.f32.xlu0 %v7521
    %v7578 = vpop.xlane.xlu0 %7577
    %7579 = vmax.xlane.f32.xlu0 %v7522
    %v7580 = vpop.xlane.xlu0 %7579
    %7581 = vmax.xlane.f32.xlu0 %v7523
    %v7582 = vpop.xlane.xlu0 %7581
    %7583 = vmax.xlane.f32.xlu0 %v7524
    %v7584 = vpop.xlane.xlu0 %7583
    %7585 = vmax.xlane.f32.xlu0 %v7525
    %v7586 = vpop.xlane.xlu0 %7585
    %7587 = vmax.xlane.f32.xlu0 %v7526
    %v7588 = vpop.xlane.xlu0 %7587
    %7589 = vmax.xlane.f32.xlu0 %v7527
    %v7590 = vpop.xlane.xlu0 %7589
    %7591 = vmax.xlane.f32.xlu0 %v7528
    %v7592 = vpop.xlane.xlu0 %7591
    %v7593 = vsub.f32 %v7497, %v7530
    %v7594 = vsub.f32 %v7498, %v7532
    %v7595 = vsub.f32 %v7499, %v7534
    %v7596 = vsub.f32 %v7500, %v7536
    %v7597 = vsub.f32 %v7501, %v7538
    %v7598 = vsub.f32 %v7502, %v7540
    %v7599 = vsub.f32 %v7503, %v7542
    %v7600 = vsub.f32 %v7504, %v7544
    %v7601 = vsub.f32 %v7505, %v7546
    %v7602 = vsub.f32 %v7506, %v7548
    %v7603 = vsub.f32 %v7507, %v7550
    %v7604 = vsub.f32 %v7508, %v7552
    %v7605 = vsub.f32 %v7509, %v7554
    %v7606 = vsub.f32 %v7510, %v7556
    %v7607 = vsub.f32 %v7511, %v7558
    %v7608 = vsub.f32 %v7512, %v7560
    %v7609 = vsub.f32 %v7513, %v7562
    %v7610 = vsub.f32 %v7514, %v7564
    %v7611 = vsub.f32 %v7515, %v7566
    %v7612 = vsub.f32 %v7516, %v7568
    %v7613 = vsub.f32 %v7517, %v7570
    %v7614 = vsub.f32 %v7518, %v7572
    %v7615 = vsub.f32 %v7519, %v7574
    %v7616 = vsub.f32 %v7520, %v7576
    %v7617 = vsub.f32 %v7521, %v7578
    %v7618 = vsub.f32 %v7522, %v7580
    %v7619 = vsub.f32 %v7523, %v7582
    %v7620 = vsub.f32 %v7524, %v7584
    %v7621 = vsub.f32 %v7525, %v7586
    %v7622 = vsub.f32 %v7526, %v7588
    %v7623 = vsub.f32 %v7527, %v7590
    %v7624 = vsub.f32 %v7528, %v7592
    %v7625 = vmul.f32 %v7593, 1.442695
    %v7626 = vpow.pop %v7625
    %v7627 = vmul.f32 %v7594, 1.442695
    %v7628 = vpow.pop %v7627
    %v7629 = vmul.f32 %v7595, 1.442695
    %v7630 = vpow.pop %v7629
    %v7631 = vmul.f32 %v7596, 1.442695
    %v7632 = vpow.pop %v7631
    %v7633 = vmul.f32 %v7597, 1.442695
    %v7634 = vpow.pop %v7633
    %v7635 = vmul.f32 %v7598, 1.442695
    %v7636 = vpow.pop %v7635
    %v7637 = vmul.f32 %v7599, 1.442695
    %v7638 = vpow.pop %v7637
    %v7639 = vmul.f32 %v7600, 1.442695
    %v7640 = vpow.pop %v7639
    %v7641 = vmul.f32 %v7601, 1.442695
    %v7642 = vpow.pop %v7641
    %v7643 = vmul.f32 %v7602, 1.442695
    %v7644 = vpow.pop %v7643
    %v7645 = vmul.f32 %v7603, 1.442695
    %v7646 = vpow.pop %v7645
    %v7647 = vmul.f32 %v7604, 1.442695
    %v7648 = vpow.pop %v7647
    %v7649 = vmul.f32 %v7605, 1.442695
    %v7650 = vpow.pop %v7649
    %v7651 = vmul.f32 %v7606, 1.442695
    %v7652 = vpow.pop %v7651
    %v7653 = vmul.f32 %v7607, 1.442695
    %v7654 = vpow.pop %v7653
    %v7655 = vmul.f32 %v7608, 1.442695
    %v7656 = vpow.pop %v7655
    %v7657 = vmul.f32 %v7609, 1.442695
    %v7658 = vpow.pop %v7657
    %v7659 = vmul.f32 %v7610, 1.442695
    %v7660 = vpow.pop %v7659
    %v7661 = vmul.f32 %v7611, 1.442695
    %v7662 = vpow.pop %v7661
    %v7663 = vmul.f32 %v7612, 1.442695
    %v7664 = vpow.pop %v7663
    %v7665 = vmul.f32 %v7613, 1.442695
    %v7666 = vpow.pop %v7665
    %v7667 = vmul.f32 %v7614, 1.442695
    %v7668 = vpow.pop %v7667
    %v7669 = vmul.f32 %v7615, 1.442695
    %v7670 = vpow.pop %v7669
    %v7671 = vmul.f32 %v7616, 1.442695
    %v7672 = vpow.pop %v7671
    %v7673 = vmul.f32 %v7617, 1.442695
    %v7674 = vpow.pop %v7673
    %v7675 = vmul.f32 %v7618, 1.442695
    %v7676 = vpow.pop %v7675
    %v7677 = vmul.f32 %v7619, 1.442695
    %v7678 = vpow.pop %v7677
    %v7679 = vmul.f32 %v7620, 1.442695
    %v7680 = vpow.pop %v7679
    %v7681 = vmul.f32 %v7621, 1.442695
    %v7682 = vpow.pop %v7681
    %v7683 = vmul.f32 %v7622, 1.442695
    %v7684 = vpow.pop %v7683
    %v7685 = vmul.f32 %v7623, 1.442695
    %v7686 = vpow.pop %v7685
    %v7687 = vmul.f32 %v7624, 1.442695
    %v7688 = vpow.pop %v7687
    %7689 = vadd.xlane.f32.xlu0 %v7626
    %v7690 = vpop.xlane.xlu0 %7689
    %7691 = vadd.xlane.f32.xlu0 %v7628
    %v7692 = vpop.xlane.xlu0 %7691
    %7693 = vadd.xlane.f32.xlu0 %v7630
    %v7694 = vpop.xlane.xlu0 %7693
    %7695 = vadd.xlane.f32.xlu0 %v7632
    %v7696 = vpop.xlane.xlu0 %7695
    %7697 = vadd.xlane.f32.xlu0 %v7634
    %v7698 = vpop.xlane.xlu0 %7697
    %7699 = vadd.xlane.f32.xlu0 %v7636
    %v7700 = vpop.xlane.xlu0 %7699
    %7701 = vadd.xlane.f32.xlu0 %v7638
    %v7702 = vpop.xlane.xlu0 %7701
    %7703 = vadd.xlane.f32.xlu0 %v7640
    %v7704 = vpop.xlane.xlu0 %7703
    %7705 = vadd.xlane.f32.xlu0 %v7642
    %v7706 = vpop.xlane.xlu0 %7705
    %7707 = vadd.xlane.f32.xlu0 %v7644
    %v7708 = vpop.xlane.xlu0 %7707
    %7709 = vadd.xlane.f32.xlu0 %v7646
    %v7710 = vpop.xlane.xlu0 %7709
    %7711 = vadd.xlane.f32.xlu0 %v7648
    %v7712 = vpop.xlane.xlu0 %7711
    %7713 = vadd.xlane.f32.xlu0 %v7650
    %v7714 = vpop.xlane.xlu0 %7713
    %7715 = vadd.xlane.f32.xlu0 %v7652
    %v7716 = vpop.xlane.xlu0 %7715
    %7717 = vadd.xlane.f32.xlu0 %v7654
    %v7718 = vpop.xlane.xlu0 %7717
    %7719 = vadd.xlane.f32.xlu0 %v7656
    %v7720 = vpop.xlane.xlu0 %7719
    %7721 = vadd.xlane.f32.xlu0 %v7658
    %v7722 = vpop.xlane.xlu0 %7721
    %7723 = vadd.xlane.f32.xlu0 %v7660
    %v7724 = vpop.xlane.xlu0 %7723
    %7725 = vadd.xlane.f32.xlu0 %v7662
    %v7726 = vpop.xlane.xlu0 %7725
    %7727 = vadd.xlane.f32.xlu0 %v7664
    %v7728 = vpop.xlane.xlu0 %7727
    %7729 = vadd.xlane.f32.xlu0 %v7666
    %v7730 = vpop.xlane.xlu0 %7729
    %7731 = vadd.xlane.f32.xlu0 %v7668
    %v7732 = vpop.xlane.xlu0 %7731
    %7733 = vadd.xlane.f32.xlu0 %v7670
    %v7734 = vpop.xlane.xlu0 %7733
    %7735 = vadd.xlane.f32.xlu0 %v7672
    %v7736 = vpop.xlane.xlu0 %7735
    %7737 = vadd.xlane.f32.xlu0 %v7674
    %v7738 = vpop.xlane.xlu0 %7737
    %7739 = vadd.xlane.f32.xlu0 %v7676
    %v7740 = vpop.xlane.xlu0 %7739
    %7741 = vadd.xlane.f32.xlu0 %v7678
    %v7742 = vpop.xlane.xlu0 %7741
    %7743 = vadd.xlane.f32.xlu0 %v7680
    %v7744 = vpop.xlane.xlu0 %7743
    %7745 = vadd.xlane.f32.xlu0 %v7682
    %v7746 = vpop.xlane.xlu0 %7745
    %7747 = vadd.xlane.f32.xlu0 %v7684
    %v7748 = vpop.xlane.xlu0 %7747
    %7749 = vadd.xlane.f32.xlu0 %v7686
    %v7750 = vpop.xlane.xlu0 %7749
    %7751 = vadd.xlane.f32.xlu0 %v7688
    %v7752 = vpop.xlane.xlu0 %7751
    %v7753 = vrcp.pop %v7690
    %v7754 = vrcp.pop %v7692
    %v7755 = vrcp.pop %v7694
    %v7756 = vrcp.pop %v7696
    %v7757 = vrcp.pop %v7698
    %v7758 = vrcp.pop %v7700
    %v7759 = vrcp.pop %v7702
    %v7760 = vrcp.pop %v7704
    %v7761 = vrcp.pop %v7706
    %v7762 = vrcp.pop %v7708
    %v7763 = vrcp.pop %v7710
    %v7764 = vrcp.pop %v7712
    %v7765 = vrcp.pop %v7714
    %v7766 = vrcp.pop %v7716
    %v7767 = vrcp.pop %v7718
    %v7768 = vrcp.pop %v7720
    %v7769 = vrcp.pop %v7722
    %v7770 = vrcp.pop %v7724
    %v7771 = vrcp.pop %v7726
    %v7772 = vrcp.pop %v7728
    %v7773 = vrcp.pop %v7730
    %v7774 = vrcp.pop %v7732
    %v7775 = vrcp.pop %v7734
    %v7776 = vrcp.pop %v7736
    %v7777 = vrcp.pop %v7738
    %v7778 = vrcp.pop %v7740
    %v7779 = vrcp.pop %v7742
    %v7780 = vrcp.pop %v7744
    %v7781 = vrcp.pop %v7746
    %v7782 = vrcp.pop %v7748
    %v7783 = vrcp.pop %v7750
    %v7784 = vrcp.pop %v7752
    %v7785 = vmul.f32 %v7626, %v7753
    %v7786 = vmul.f32 %v7628, %v7754
    %v7787 = vmul.f32 %v7630, %v7755
    %v7788 = vmul.f32 %v7632, %v7756
    %v7789 = vmul.f32 %v7634, %v7757
    %v7790 = vmul.f32 %v7636, %v7758
    %v7791 = vmul.f32 %v7638, %v7759
    %v7792 = vmul.f32 %v7640, %v7760
    %v7793 = vmul.f32 %v7642, %v7761
    %v7794 = vmul.f32 %v7644, %v7762
    %v7795 = vmul.f32 %v7646, %v7763
    %v7796 = vmul.f32 %v7648, %v7764
    %v7797 = vmul.f32 %v7650, %v7765
    %v7798 = vmul.f32 %v7652, %v7766
    %v7799 = vmul.f32 %v7654, %v7767
    %v7800 = vmul.f32 %v7656, %v7768
    %v7801 = vmul.f32 %v7658, %v7769
    %v7802 = vmul.f32 %v7660, %v7770
    %v7803 = vmul.f32 %v7662, %v7771
    %v7804 = vmul.f32 %v7664, %v7772
    %v7805 = vmul.f32 %v7666, %v7773
    %v7806 = vmul.f32 %v7668, %v7774
    %v7807 = vmul.f32 %v7670, %v7775
    %v7808 = vmul.f32 %v7672, %v7776
    %v7809 = vmul.f32 %v7674, %v7777
    %v7810 = vmul.f32 %v7676, %v7778
    %v7811 = vmul.f32 %v7678, %v7779
    %v7812 = vmul.f32 %v7680, %v7780
    %v7813 = vmul.f32 %v7682, %v7781
    %v7814 = vmul.f32 %v7684, %v7782
    %v7815 = vmul.f32 %v7686, %v7783
    %v7816 = vmul.f32 %v7688, %v7784
    %7817 = vmatprep.subr.mxu0 0.0
    %7818 = vmatpush1.msra.mxu0 %v2072
    %7819 = vmatprep.subr.mxu0 0.0
    %7820 = vmatpush1.msra.mxu0 %v2078
    %7821 = vmatprep.subr.mxu0 0.0
    %7822 = vmatpush1.msra.mxu0 %v2084
    %7823 = vmatprep.subr.mxu0 0.0
    %7824 = vmatpush1.msra.mxu0 %v2090
    %7825 = vmatprep.subr.mxu0 0.0
    %7826 = vmatpush1.msra.mxu0 %v2096
    %7827 = vmatprep.subr.mxu0 0.0
    %7828 = vmatpush1.msra.mxu0 %v2102
    %7829 = vmatprep.subr.mxu0 0.0
    %7830 = vmatpush1.msra.mxu0 %v2108
    %7831 = vmatprep.subr.mxu0 0.0
    %7832 = vmatpush1.msra.mxu0 %v2114
    %7833 = vmatprep.subr.mxu0 0.0
    %7834 = vmatpush1.msra.mxu0 %v2120
    %7835 = vmatprep.subr.mxu0 0.0
    %7836 = vmatpush1.msra.mxu0 %v2126
    %7837 = vmatprep.subr.mxu0 0.0
    %7838 = vmatpush1.msra.mxu0 %v2132
    %7839 = vmatprep.subr.mxu0 0.0
    %7840 = vmatpush1.msra.mxu0 %v2138
    %7841 = vmatprep.subr.mxu0 0.0
    %7842 = vmatpush1.msra.mxu0 %v2144
    %7843 = vmatprep.subr.mxu0 0.0
    %7844 = vmatpush1.msra.mxu0 %v2150
    %7845 = vmatprep.subr.mxu0 0.0
    %7846 = vmatpush1.msra.mxu0 %v2156
    %7847 = vmatprep.subr.mxu0 0.0
    %7848 = vmatpush1.msra.mxu0 %v2162
    %7849 = vmatprep.subr.mxu0 0.0
    %7850 = vmatpush1.msra.mxu0 0.0
    %7851 = vmatprep.subr.mxu0 0.0
    %7852 = vmatpush1.msra.mxu0 0.0
    %7853 = vmatprep.subr.mxu0 0.0
    %7854 = vmatpush1.msra.mxu0 0.0
    %7855 = vmatprep.subr.mxu0 0.0
    %7856 = vmatpush1.msra.mxu0 0.0
    %7857 = vmatprep.subr.mxu0 0.0
    %7858 = vmatpush1.msra.mxu0 0.0
    %7859 = vmatprep.subr.mxu0 0.0
    %7860 = vmatpush1.msra.mxu0 0.0
    %7861 = vmatprep.subr.mxu0 0.0
    %7862 = vmatpush1.msra.mxu0 0.0
    %7863 = vmatprep.subr.mxu0 0.0
    %7864 = vmatpush1.msra.mxu0 0.0
    %7865 = vmatprep.subr.mxu0 0.0
    %7866 = vmatpush1.msra.mxu0 0.0
    %7867 = vmatprep.subr.mxu0 0.0
    %7868 = vmatpush1.msra.mxu0 0.0
    %7869 = vmatprep.subr.mxu0 0.0
    %7870 = vmatpush1.msra.mxu0 0.0
    %7871 = vmatprep.subr.mxu0 0.0
    %7872 = vmatpush1.msra.mxu0 0.0
    %7873 = vmatprep.subr.mxu0 0.0
    %7874 = vmatpush1.msra.mxu0 0.0
    %7875 = vmatprep.subr.mxu0 0.0
    %7876 = vmatpush1.msra.mxu0 0.0
    %7877 = vmatprep.subr.mxu0 0.0
    %7878 = vmatpush1.msra.mxu0 0.0
    %7879 = vmatprep.subr.mxu0 0.0
    %7880 = vmatpush1.msra.mxu0 0.0
    %7881 = vmatprep.mubr.f32.mxu0 0.0
    %7882 = vmatmul.mubr.f32.gmra.mrb[0].mxu0 %v7785
    %v7883 = vpop.f32.mrb[0].mxu0
    %v7884 = vadd.f32 0.0, %v7883
    %v7885 = vpop.f32.mrb[0].mxu0
    %7886 = vmatprep.mubr.f32.mxu0 0.0
    %7887 = vmatmul.mubr.f32.gmra.mrb[0].mxu0 %v7786
    %v7888 = vpop.f32.mrb[0].mxu0
    %v7889 = vadd.f32 0.0, %v7888
    %v7890 = vpop.f32.mrb[0].mxu0
    %7891 = vmatprep.mubr.f32.mxu0 0.0
    %7892 = vmatmul.mubr.f32.gmra.mrb[0].mxu0 %v7787
    %v7893 = vpop.f32.mrb[0].mxu0
    %v7894 = vadd.f32 0.0, %v7893
    %v7895 = vpop.f32.mrb[0].mxu0
    %7896 = vmatprep.mubr.f32.mxu0 0.0
    %7897 = vmatmul.mubr.f32.gmra.mrb[0].mxu0 %v7788
    %v7898 = vpop.f32.mrb[0].mxu0
    %v7899 = vadd.f32 0.0, %v7898
    %v7900 = vpop.f32.mrb[0].mxu0
    %7901 = vmatprep.mubr.f32.mxu0 0.0
    %7902 = vmatmul.mubr.f32.gmra.mrb[0].mxu0 %v7789
    %v7903 = vpop.f32.mrb[0].mxu0
    %v7904 = vadd.f32 0.0, %v7903
    %v7905 = vpop.f32.mrb[0].mxu0
    %7906 = vmatprep.mubr.f32.mxu0 0.0
    %7907 = vmatmul.mubr.f32.gmra.mrb[0].mxu0 %v7790
    %v7908 = vpop.f32.mrb[0].mxu0
    %v7909 = vadd.f32 0.0, %v7908
    %v7910 = vpop.f32.mrb[0].mxu0
    %7911 = vmatprep.mubr.f32.mxu0 0.0
    %7912 = vmatmul.mubr.f32.gmra.mrb[0].mxu0 %v7791
    %v7913 = vpop.f32.mrb[0].mxu0
    %v7914 = vadd.f32 0.0, %v7913
    %v7915 = vpop.f32.mrb[0].mxu0
    %7916 = vmatprep.mubr.f32.mxu0 0.0
    %7917 = vmatmul.mubr.f32.gmra.mrb[0].mxu0 %v7792
    %v7918 = vpop.f32.mrb[0].mxu0
    %v7919 = vadd.f32 0.0, %v7918
    %v7920 = vpop.f32.mrb[0].mxu0
    %7921 = vmatprep.mubr.f32.mxu0 0.0
    %7922 = vmatmul.mubr.f32.gmra.mrb[0].mxu0 %v7793
    %v7923 = vpop.f32.mrb[0].mxu0
    %v7924 = vadd.f32 0.0, %v7923
    %v7925 = vpop.f32.mrb[0].mxu0
    %7926 = vmatprep.mubr.f32.mxu0 0.0
    %7927 = vmatmul.mubr.f32.gmra.mrb[0].mxu0 %v7794
    %v7928 = vpop.f32.mrb[0].mxu0
    %v7929 = vadd.f32 0.0, %v7928
    %v7930 = vpop.f32.mrb[0].mxu0
    %7931 = vmatprep.mubr.f32.mxu0 0.0
    %7932 = vmatmul.mubr.f32.gmra.mrb[0].mxu0 %v7795
    %v7933 = vpop.f32.mrb[0].mxu0
    %v7934 = vadd.f32 0.0, %v7933
    %v7935 = vpop.f32.mrb[0].mxu0
    %7936 = vmatprep.mubr.f32.mxu0 0.0
    %7937 = vmatmul.mubr.f32.gmra.mrb[0].mxu0 %v7796
    %v7938 = vpop.f32.mrb[0].mxu0
    %v7939 = vadd.f32 0.0, %v7938
    %v7940 = vpop.f32.mrb[0].mxu0
    %7941 = vmatprep.mubr.f32.mxu0 0.0
    %7942 = vmatmul.mubr.f32.gmra.mrb[0].mxu0 %v7797
    %v7943 = vpop.f32.mrb[0].mxu0
    %v7944 = vadd.f32 0.0, %v7943
    %v7945 = vpop.f32.mrb[0].mxu0
    %7946 = vmatprep.mubr.f32.mxu0 0.0
    %7947 = vmatmul.mubr.f32.gmra.mrb[0].mxu0 %v7798
    %v7948 = vpop.f32.mrb[0].mxu0
    %v7949 = vadd.f32 0.0, %v7948
    %v7950 = vpop.f32.mrb[0].mxu0
    %7951 = vmatprep.mubr.f32.mxu0 0.0
    %7952 = vmatmul.mubr.f32.gmra.mrb[0].mxu0 %v7799
    %v7953 = vpop.f32.mrb[0].mxu0
    %v7954 = vadd.f32 0.0, %v7953
    %v7955 = vpop.f32.mrb[0].mxu0
    %7956 = vmatprep.mubr.f32.mxu0 0.0
    %7957 = vmatmul.mubr.f32.gmra.mrb[0].mxu0 %v7800
    %v7958 = vpop.f32.mrb[0].mxu0
    %v7959 = vadd.f32 0.0, %v7958
    %v7960 = vpop.f32.mrb[0].mxu0
    %7961 = vdwg.mxu0
    %7962 = vmatprep.subr.mxu0 0.0
    %7963 = vmatpush1.msra.mxu0 %v2168
    %7964 = vmatprep.subr.mxu0 0.0
    %7965 = vmatpush1.msra.mxu0 %v2174
    %7966 = vmatprep.subr.mxu0 0.0
    %7967 = vmatpush1.msra.mxu0 %v2180
    %7968 = vmatprep.subr.mxu0 0.0
    %7969 = vmatpush1.msra.mxu0 %v2186
    %7970 = vmatprep.subr.mxu0 0.0
    %7971 = vmatpush1.msra.mxu0 %v2192
    %7972 = vmatprep.subr.mxu0 0.0
    %7973 = vmatpush1.msra.mxu0 %v2198
    %7974 = vmatprep.subr.mxu0 0.0
    %7975 = vmatpush1.msra.mxu0 %v2204
    %7976 = vmatprep.subr.mxu0 0.0
    %7977 = vmatpush1.msra.mxu0 %v2210
    %7978 = vmatprep.subr.mxu0 0.0
    %7979 = vmatpush1.msra.mxu0 %v2216
    %7980 = vmatprep.subr.mxu0 0.0
    %7981 = vmatpush1.msra.mxu0 %v2222
    %7982 = vmatprep.subr.mxu0 0.0
    %7983 = vmatpush1.msra.mxu0 %v2228
    %7984 = vmatprep.subr.mxu0 0.0
    %7985 = vmatpush1.msra.mxu0 %v2234
    %7986 = vmatprep.subr.mxu0 0.0
    %7987 = vmatpush1.msra.mxu0 %v2240
    %7988 = vmatprep.subr.mxu0 0.0
    %7989 = vmatpush1.msra.mxu0 %v2246
    %7990 = vmatprep.subr.mxu0 0.0
    %7991 = vmatpush1.msra.mxu0 %v2252
    %7992 = vmatprep.subr.mxu0 0.0
    %7993 = vmatpush1.msra.mxu0 %v2258
    %7994 = vmatprep.subr.mxu0 0.0
    %7995 = vmatpush1.msra.mxu0 0.0
    %7996 = vmatprep.subr.mxu0 0.0
    %7997 = vmatpush1.msra.mxu0 0.0
    %7998 = vmatprep.subr.mxu0 0.0
    %7999 = vmatpush1.msra.mxu0 0.0
    %8000 = vmatprep.subr.mxu0 0.0
    %8001 = vmatpush1.msra.mxu0 0.0
    %8002 = vmatprep.subr.mxu0 0.0
    %8003 = vmatpush1.msra.mxu0 0.0
    %8004 = vmatprep.subr.mxu0 0.0
    %8005 = vmatpush1.msra.mxu0 0.0
    %8006 = vmatprep.subr.mxu0 0.0
    %8007 = vmatpush1.msra.mxu0 0.0
    %8008 = vmatprep.subr.mxu0 0.0
    %8009 = vmatpush1.msra.mxu0 0.0
    %8010 = vmatprep.subr.mxu0 0.0
    %8011 = vmatpush1.msra.mxu0 0.0
    %8012 = vmatprep.subr.mxu0 0.0
    %8013 = vmatpush1.msra.mxu0 0.0
    %8014 = vmatprep.subr.mxu0 0.0
    %8015 = vmatpush1.msra.mxu0 0.0
    %8016 = vmatprep.subr.mxu0 0.0
    %8017 = vmatpush1.msra.mxu0 0.0
    %8018 = vmatprep.subr.mxu0 0.0
    %8019 = vmatpush1.msra.mxu0 0.0
    %8020 = vmatprep.subr.mxu0 0.0
    %8021 = vmatpush1.msra.mxu0 0.0
    %8022 = vmatprep.subr.mxu0 0.0
    %8023 = vmatpush1.msra.mxu0 0.0
    %8024 = vmatprep.subr.mxu0 0.0
    %8025 = vmatpush1.msra.mxu0 0.0
    %8026 = vmatprep.mubr.f32.mxu0 0.0
    %8027 = vmatmul.mubr.f32.gmra.mrb[0].mxu0 %v7801
    %v8028 = vpop.f32.mrb[0].mxu0
    %v8029 = vadd.f32 0.0, %v8028
    %v8030 = vpop.f32.mrb[0].mxu0
    %8031 = vmatprep.mubr.f32.mxu0 0.0
    %8032 = vmatmul.mubr.f32.gmra.mrb[0].mxu0 %v7802
    %v8033 = vpop.f32.mrb[0].mxu0
    %v8034 = vadd.f32 0.0, %v8033
    %v8035 = vpop.f32.mrb[0].mxu0
    %8036 = vmatprep.mubr.f32.mxu0 0.0
    %8037 = vmatmul.mubr.f32.gmra.mrb[0].mxu0 %v7803
    %v8038 = vpop.f32.mrb[0].mxu0
    %v8039 = vadd.f32 0.0, %v8038
    %v8040 = vpop.f32.mrb[0].mxu0
    %8041 = vmatprep.mubr.f32.mxu0 0.0
    %8042 = vmatmul.mubr.f32.gmra.mrb[0].mxu0 %v7804
    %v8043 = vpop.f32.mrb[0].mxu0
    %v8044 = vadd.f32 0.0, %v8043
    %v8045 = vpop.f32.mrb[0].mxu0
    %8046 = vmatprep.mubr.f32.mxu0 0.0
    %8047 = vmatmul.mubr.f32.gmra.mrb[0].mxu0 %v7805
    %v8048 = vpop.f32.mrb[0].mxu0
    %v8049 = vadd.f32 0.0, %v8048
    %v8050 = vpop.f32.mrb[0].mxu0
    %8051 = vmatprep.mubr.f32.mxu0 0.0
    %8052 = vmatmul.mubr.f32.gmra.mrb[0].mxu0 %v7806
    %v8053 = vpop.f32.mrb[0].mxu0
    %v8054 = vadd.f32 0.0, %v8053
    %v8055 = vpop.f32.mrb[0].mxu0
    %8056 = vmatprep.mubr.f32.mxu0 0.0
    %8057 = vmatmul.mubr.f32.gmra.mrb[0].mxu0 %v7807
    %v8058 = vpop.f32.mrb[0].mxu0
    %v8059 = vadd.f32 0.0, %v8058
    %v8060 = vpop.f32.mrb[0].mxu0
    %8061 = vmatprep.mubr.f32.mxu0 0.0
    %8062 = vmatmul.mubr.f32.gmra.mrb[0].mxu0 %v7808
    %v8063 = vpop.f32.mrb[0].mxu0
    %v8064 = vadd.f32 0.0, %v8063
    %v8065 = vpop.f32.mrb[0].mxu0
    %8066 = vmatprep.mubr.f32.mxu0 0.0
    %8067 = vmatmul.mubr.f32.gmra.mrb[0].mxu0 %v7809
    %v8068 = vpop.f32.mrb[0].mxu0
    %v8069 = vadd.f32 0.0, %v8068
    %v8070 = vpop.f32.mrb[0].mxu0
    %8071 = vmatprep.mubr.f32.mxu0 0.0
    %8072 = vmatmul.mubr.f32.gmra.mrb[0].mxu0 %v7810
    %v8073 = vpop.f32.mrb[0].mxu0
    %v8074 = vadd.f32 0.0, %v8073
    %v8075 = vpop.f32.mrb[0].mxu0
    %8076 = vmatprep.mubr.f32.mxu0 0.0
    %8077 = vmatmul.mubr.f32.gmra.mrb[0].mxu0 %v7811
    %v8078 = vpop.f32.mrb[0].mxu0
    %v8079 = vadd.f32 0.0, %v8078
    %v8080 = vpop.f32.mrb[0].mxu0
    %8081 = vmatprep.mubr.f32.mxu0 0.0
    %8082 = vmatmul.mubr.f32.gmra.mrb[0].mxu0 %v7812
    %v8083 = vpop.f32.mrb[0].mxu0
    %v8084 = vadd.f32 0.0, %v8083
    %v8085 = vpop.f32.mrb[0].mxu0
    %8086 = vmatprep.mubr.f32.mxu0 0.0
    %8087 = vmatmul.mubr.f32.gmra.mrb[0].mxu0 %v7813
    %v8088 = vpop.f32.mrb[0].mxu0
    %v8089 = vadd.f32 0.0, %v8088
    %v8090 = vpop.f32.mrb[0].mxu0
    %8091 = vmatprep.mubr.f32.mxu0 0.0
    %8092 = vmatmul.mubr.f32.gmra.mrb[0].mxu0 %v7814
    %v8093 = vpop.f32.mrb[0].mxu0
    %v8094 = vadd.f32 0.0, %v8093
    %v8095 = vpop.f32.mrb[0].mxu0
    %8096 = vmatprep.mubr.f32.mxu0 0.0
    %8097 = vmatmul.mubr.f32.gmra.mrb[0].mxu0 %v7815
    %v8098 = vpop.f32.mrb[0].mxu0
    %v8099 = vadd.f32 0.0, %v8098
    %v8100 = vpop.f32.mrb[0].mxu0
    %8101 = vmatprep.mubr.f32.mxu0 0.0
    %8102 = vmatmul.mubr.f32.gmra.mrb[0].mxu0 %v7816
    %v8103 = vpop.f32.mrb[0].mxu0
    %v8104 = vadd.f32 0.0, %v8103
    %v8105 = vpop.f32.mrb[0].mxu0
    %8106 = vdwg.mxu0
    %8107 = vrot.lane.b32.xlu0 %v1044, 64
    %v8108 = vpop.permute.xlu0 %8107
    %8109 = vrot.lane.b32.xlu0 %v1050, 64
    %v8110 = vpop.permute.xlu0 %8109
    %8111 = vrot.lane.b32.xlu0 %v1056, 64
    %v8112 = vpop.permute.xlu0 %8111
    %8113 = vrot.lane.b32.xlu0 %v1062, 64
    %v8114 = vpop.permute.xlu0 %8113
    %8115 = vrot.lane.b32.xlu0 %v1068, 64
    %v8116 = vpop.permute.xlu0 %8115
    %8117 = vrot.lane.b32.xlu0 %v1074, 64
    %v8118 = vpop.permute.xlu0 %8117
    %8119 = vrot.lane.b32.xlu0 %v1080, 64
    %v8120 = vpop.permute.xlu0 %8119
    %8121 = vrot.lane.b32.xlu0 %v1086, 64
    %v8122 = vpop.permute.xlu0 %8121
    %8123 = vrot.lane.b32.xlu0 %v1092, 64
    %v8124 = vpop.permute.xlu0 %8123
    %8125 = vrot.lane.b32.xlu0 %v1098, 64
    %v8126 = vpop.permute.xlu0 %8125
    %8127 = vrot.lane.b32.xlu0 %v1104, 64
    %v8128 = vpop.permute.xlu0 %8127
    %8129 = vrot.lane.b32.xlu0 %v1110, 64
    %v8130 = vpop.permute.xlu0 %8129
    %8131 = vrot.lane.b32.xlu0 %v1116, 64
    %v8132 = vpop.permute.xlu0 %8131
    %8133 = vrot.lane.b32.xlu0 %v1122, 64
    %v8134 = vpop.permute.xlu0 %8133
    %8135 = vrot.lane.b32.xlu0 %v1128, 64
    %v8136 = vpop.permute.xlu0 %8135
    %8137 = vrot.lane.b32.xlu0 %v1134, 64
    %v8138 = vpop.permute.xlu0 %8137
    %8139 = vrot.lane.b32.xlu0 %v1558, 64
    %v8140 = vpop.permute.xlu0 %8139
    %8141 = vrot.lane.b32.xlu0 %v1564, 64
    %v8142 = vpop.permute.xlu0 %8141
    %8143 = vrot.lane.b32.xlu0 %v1570, 64
    %v8144 = vpop.permute.xlu0 %8143
    %8145 = vrot.lane.b32.xlu0 %v1576, 64
    %v8146 = vpop.permute.xlu0 %8145
    %8147 = vrot.lane.b32.xlu0 %v1582, 64
    %v8148 = vpop.permute.xlu0 %8147
    %8149 = vrot.lane.b32.xlu0 %v1588, 64
    %v8150 = vpop.permute.xlu0 %8149
    %8151 = vrot.lane.b32.xlu0 %v1594, 64
    %v8152 = vpop.permute.xlu0 %8151
    %8153 = vrot.lane.b32.xlu0 %v1600, 64
    %v8154 = vpop.permute.xlu0 %8153
    %8155 = vrot.lane.b32.xlu0 %v1606, 64
    %v8156 = vpop.permute.xlu0 %8155
    %8157 = vrot.lane.b32.xlu0 %v1612, 64
    %v8158 = vpop.permute.xlu0 %8157
    %8159 = vrot.lane.b32.xlu0 %v1618, 64
    %v8160 = vpop.permute.xlu0 %8159
    %8161 = vrot.lane.b32.xlu0 %v1624, 64
    %v8162 = vpop.permute.xlu0 %8161
    %8163 = vrot.lane.b32.xlu0 %v1630, 64
    %v8164 = vpop.permute.xlu0 %8163
    %8165 = vrot.lane.b32.xlu0 %v1636, 64
    %v8166 = vpop.permute.xlu0 %8165
    %8167 = vrot.lane.b32.xlu0 %v1642, 64
    %v8168 = vpop.permute.xlu0 %8167
    %8169 = vrot.lane.b32.xlu0 %v1648, 64
    %v8170 = vpop.permute.xlu0 %8169
    %v8171 = vsel %vm2262, %v8108, 0
    %v8173 = vsel %vm2262, %v8110, 0
    %v8175 = vsel %vm2262, %v8112, 0
    %v8177 = vsel %vm2262, %v8114, 0
    %v8179 = vsel %vm2262, %v8116, 0
    %v8181 = vsel %vm2262, %v8118, 0
    %v8183 = vsel %vm2262, %v8120, 0
    %v8185 = vsel %vm2262, %v8122, 0
    %v8187 = vsel %vm2262, %v8124, 0
    %v8189 = vsel %vm2262, %v8126, 0
    %v8191 = vsel %vm2262, %v8128, 0
    %v8193 = vsel %vm2262, %v8130, 0
    %v8195 = vsel %vm2262, %v8132, 0
    %v8197 = vsel %vm2262, %v8134, 0
    %v8199 = vsel %vm2262, %v8136, 0
    %v8201 = vsel %vm2262, %v8138, 0
    %v8203 = vsel %vm2262, %v8140, 0
    %v8205 = vsel %vm2262, %v8142, 0
    %v8207 = vsel %vm2262, %v8144, 0
    %v8209 = vsel %vm2262, %v8146, 0
    %v8211 = vsel %vm2262, %v8148, 0
    %v8213 = vsel %vm2262, %v8150, 0
    %v8215 = vsel %vm2262, %v8152, 0
    %v8217 = vsel %vm2262, %v8154, 0
    %v8219 = vsel %vm2262, %v8156, 0
    %v8221 = vsel %vm2262, %v8158, 0
    %v8223 = vsel %vm2262, %v8160, 0
    %v8225 = vsel %vm2262, %v8162, 0
    %v8227 = vsel %vm2262, %v8164, 0
    %v8229 = vsel %vm2262, %v8166, 0
    %v8231 = vsel %vm2262, %v8168, 0
    %v8233 = vsel %vm2262, %v8170, 0
    %8235 = vmatprep.subr.mxu0 0.0
    %8236 = vmatpush1.xpose.msra.mxu0 %v8203
    %8237 = vmatprep.subr.mxu0 0.0
    %8238 = vmatpush1.xpose.msra.mxu0 %v8205
    %8239 = vmatprep.subr.mxu0 0.0
    %8240 = vmatpush1.xpose.msra.mxu0 %v8207
    %8241 = vmatprep.subr.mxu0 0.0
    %8242 = vmatpush1.xpose.msra.mxu0 %v8209
    %8243 = vmatprep.subr.mxu0 0.0
    %8244 = vmatpush1.xpose.msra.mxu0 %v8211
    %8245 = vmatprep.subr.mxu0 0.0
    %8246 = vmatpush1.xpose.msra.mxu0 %v8213
    %8247 = vmatprep.subr.mxu0 0.0
    %8248 = vmatpush1.xpose.msra.mxu0 %v8215
    %8249 = vmatprep.subr.mxu0 0.0
    %8250 = vmatpush1.xpose.msra.mxu0 %v8217
    %8251 = vmatprep.subr.mxu0 0.0
    %8252 = vmatpush1.xpose.msra.mxu0 %v8219
    %8253 = vmatprep.subr.mxu0 0.0
    %8254 = vmatpush1.xpose.msra.mxu0 %v8221
    %8255 = vmatprep.subr.mxu0 0.0
    %8256 = vmatpush1.xpose.msra.mxu0 %v8223
    %8257 = vmatprep.subr.mxu0 0.0
    %8258 = vmatpush1.xpose.msra.mxu0 %v8225
    %8259 = vmatprep.subr.mxu0 0.0
    %8260 = vmatpush1.xpose.msra.mxu0 %v8227
    %8261 = vmatprep.subr.mxu0 0.0
    %8262 = vmatpush1.xpose.msra.mxu0 %v8229
    %8263 = vmatprep.subr.mxu0 0.0
    %8264 = vmatpush1.xpose.msra.mxu0 %v8231
    %8265 = vmatprep.subr.mxu0 0.0
    %8266 = vmatpush1.xpose.msra.mxu0 %v8233
    %8267 = vmatprep.subr.mxu0 0.0
    %8268 = vmatpush1.xpose.msra.mxu0 0.0
    %8269 = vmatprep.subr.mxu0 0.0
    %8270 = vmatpush1.xpose.msra.mxu0 0.0
    %8271 = vmatprep.subr.mxu0 0.0
    %8272 = vmatpush1.xpose.msra.mxu0 0.0
    %8273 = vmatprep.subr.mxu0 0.0
    %8274 = vmatpush1.xpose.msra.mxu0 0.0
    %8275 = vmatprep.subr.mxu0 0.0
    %8276 = vmatpush1.xpose.msra.mxu0 0.0
    %8277 = vmatprep.subr.mxu0 0.0
    %8278 = vmatpush1.xpose.msra.mxu0 0.0
    %8279 = vmatprep.subr.mxu0 0.0
    %8280 = vmatpush1.xpose.msra.mxu0 0.0
    %8281 = vmatprep.subr.mxu0 0.0
    %8282 = vmatpush1.xpose.msra.mxu0 0.0
    %8283 = vmatprep.subr.mxu0 0.0
    %8284 = vmatpush1.xpose.msra.mxu0 0.0
    %8285 = vmatprep.subr.mxu0 0.0
    %8286 = vmatpush1.xpose.msra.mxu0 0.0
    %8287 = vmatprep.subr.mxu0 0.0
    %8288 = vmatpush1.xpose.msra.mxu0 0.0
    %8289 = vmatprep.subr.mxu0 0.0
    %8290 = vmatpush1.xpose.msra.mxu0 0.0
    %8291 = vmatprep.subr.mxu0 0.0
    %8292 = vmatpush1.xpose.msra.mxu0 0.0
    %8293 = vmatprep.subr.mxu0 0.0
    %8294 = vmatpush1.xpose.msra.mxu0 0.0
    %8295 = vmatprep.subr.mxu0 0.0
    %8296 = vmatpush1.xpose.msra.mxu0 0.0
    %8297 = vmatprep.subr.mxu0 0.0
    %8298 = vmatpush1.xpose.msra.mxu0 0.0
    %8299 = vmatprep.mubr.f32.mxu0 0.0
    %8300 = vmatmul.mubr.f32.gmra.mrb[0].mxu0 %v8171
    %v8301 = vpop.f32.mrb[0].mxu0
    %v8302 = vadd.f32 0.0, %v8301
    %v8303 = vpop.f32.mrb[0].mxu0
    %8304 = vmatprep.mubr.f32.mxu0 0.0
    %8305 = vmatmul.mubr.f32.gmra.mrb[0].mxu0 %v8173
    %v8306 = vpop.f32.mrb[0].mxu0
    %v8307 = vadd.f32 0.0, %v8306
    %v8308 = vpop.f32.mrb[0].mxu0
    %8309 = vmatprep.mubr.f32.mxu0 0.0
    %8310 = vmatmul.mubr.f32.gmra.mrb[0].mxu0 %v8175
    %v8311 = vpop.f32.mrb[0].mxu0
    %v8312 = vadd.f32 0.0, %v8311
    %v8313 = vpop.f32.mrb[0].mxu0
    %8314 = vmatprep.mubr.f32.mxu0 0.0
    %8315 = vmatmul.mubr.f32.gmra.mrb[0].mxu0 %v8177
    %v8316 = vpop.f32.mrb[0].mxu0
    %v8317 = vadd.f32 0.0, %v8316
    %v8318 = vpop.f32.mrb[0].mxu0
    %8319 = vmatprep.mubr.f32.mxu0 0.0
    %8320 = vmatmul.mubr.f32.gmra.mrb[0].mxu0 %v8179
    %v8321 = vpop.f32.mrb[0].mxu0
    %v8322 = vadd.f32 0.0, %v8321
    %v8323 = vpop.f32.mrb[0].mxu0
    %8324 = vmatprep.mubr.f32.mxu0 0.0
    %8325 = vmatmul.mubr.f32.gmra.mrb[0].mxu0 %v8181
    %v8326 = vpop.f32.mrb[0].mxu0
    %v8327 = vadd.f32 0.0, %v8326
    %v8328 = vpop.f32.mrb[0].mxu0
    %8329 = vmatprep.mubr.f32.mxu0 0.0
    %8330 = vmatmul.mubr.f32.gmra.mrb[0].mxu0 %v8183
    %v8331 = vpop.f32.mrb[0].mxu0
    %v8332 = vadd.f32 0.0, %v8331
    %v8333 = vpop.f32.mrb[0].mxu0
    %8334 = vmatprep.mubr.f32.mxu0 0.0
    %8335 = vmatmul.mubr.f32.gmra.mrb[0].mxu0 %v8185
    %v8336 = vpop.f32.mrb[0].mxu0
    %v8337 = vadd.f32 0.0, %v8336
    %v8338 = vpop.f32.mrb[0].mxu0
    %8339 = vmatprep.mubr.f32.mxu0 0.0
    %8340 = vmatmul.mubr.f32.gmra.mrb[0].mxu0 %v8187
    %v8341 = vpop.f32.mrb[0].mxu0
    %v8342 = vadd.f32 0.0, %v8341
    %v8343 = vpop.f32.mrb[0].mxu0
    %8344 = vmatprep.mubr.f32.mxu0 0.0
    %8345 = vmatmul.mubr.f32.gmra.mrb[0].mxu0 %v8189
    %v8346 = vpop.f32.mrb[0].mxu0
    %v8347 = vadd.f32 0.0, %v8346
    %v8348 = vpop.f32.mrb[0].mxu0
    %8349 = vmatprep.mubr.f32.mxu0 0.0
    %8350 = vmatmul.mubr.f32.gmra.mrb[0].mxu0 %v8191
    %v8351 = vpop.f32.mrb[0].mxu0
    %v8352 = vadd.f32 0.0, %v8351
    %v8353 = vpop.f32.mrb[0].mxu0
    %8354 = vmatprep.mubr.f32.mxu0 0.0
    %8355 = vmatmul.mubr.f32.gmra.mrb[0].mxu0 %v8193
    %v8356 = vpop.f32.mrb[0].mxu0
    %v8357 = vadd.f32 0.0, %v8356
    %v8358 = vpop.f32.mrb[0].mxu0
    %8359 = vmatprep.mubr.f32.mxu0 0.0
    %8360 = vmatmul.mubr.f32.gmra.mrb[0].mxu0 %v8195
    %v8361 = vpop.f32.mrb[0].mxu0
    %v8362 = vadd.f32 0.0, %v8361
    %v8363 = vpop.f32.mrb[0].mxu0
    %8364 = vmatprep.mubr.f32.mxu0 0.0
    %8365 = vmatmul.mubr.f32.gmra.mrb[0].mxu0 %v8197
    %v8366 = vpop.f32.mrb[0].mxu0
    %v8367 = vadd.f32 0.0, %v8366
    %v8368 = vpop.f32.mrb[0].mxu0
    %8369 = vmatprep.mubr.f32.mxu0 0.0
    %8370 = vmatmul.mubr.f32.gmra.mrb[0].mxu0 %v8199
    %v8371 = vpop.f32.mrb[0].mxu0
    %v8372 = vadd.f32 0.0, %v8371
    %v8373 = vpop.f32.mrb[0].mxu0
    %8374 = vmatprep.mubr.f32.mxu0 0.0
    %8375 = vmatmul.mubr.f32.gmra.mrb[0].mxu0 %v8201
    %v8376 = vpop.f32.mrb[0].mxu0
    %v8377 = vadd.f32 0.0, %v8376
    %v8378 = vpop.f32.mrb[0].mxu0
    %8379 = vdwg.mxu0
    %8380 = vrot.lane.b32.xlu0 %v1140, 64
    %v8381 = vpop.permute.xlu0 %8380
    %8382 = vrot.lane.b32.xlu0 %v1146, 64
    %v8383 = vpop.permute.xlu0 %8382
    %8384 = vrot.lane.b32.xlu0 %v1152, 64
    %v8385 = vpop.permute.xlu0 %8384
    %8386 = vrot.lane.b32.xlu0 %v1158, 64
    %v8387 = vpop.permute.xlu0 %8386
    %8388 = vrot.lane.b32.xlu0 %v1164, 64
    %v8389 = vpop.permute.xlu0 %8388
    %8390 = vrot.lane.b32.xlu0 %v1170, 64
    %v8391 = vpop.permute.xlu0 %8390
    %8392 = vrot.lane.b32.xlu0 %v1176, 64
    %v8393 = vpop.permute.xlu0 %8392
    %8394 = vrot.lane.b32.xlu0 %v1182, 64
    %v8395 = vpop.permute.xlu0 %8394
    %8396 = vrot.lane.b32.xlu0 %v1188, 64
    %v8397 = vpop.permute.xlu0 %8396
    %8398 = vrot.lane.b32.xlu0 %v1194, 64
    %v8399 = vpop.permute.xlu0 %8398
    %8400 = vrot.lane.b32.xlu0 %v1200, 64
    %v8401 = vpop.permute.xlu0 %8400
    %8402 = vrot.lane.b32.xlu0 %v1206, 64
    %v8403 = vpop.permute.xlu0 %8402
    %8404 = vrot.lane.b32.xlu0 %v1212, 64
    %v8405 = vpop.permute.xlu0 %8404
    %8406 = vrot.lane.b32.xlu0 %v1218, 64
    %v8407 = vpop.permute.xlu0 %8406
    %8408 = vrot.lane.b32.xlu0 %v1224, 64
    %v8409 = vpop.permute.xlu0 %8408
    %8410 = vrot.lane.b32.xlu0 %v1230, 64
    %v8411 = vpop.permute.xlu0 %8410
    %8412 = vrot.lane.b32.xlu0 %v1654, 64
    %v8413 = vpop.permute.xlu0 %8412
    %8414 = vrot.lane.b32.xlu0 %v1660, 64
    %v8415 = vpop.permute.xlu0 %8414
    %8416 = vrot.lane.b32.xlu0 %v1666, 64
    %v8417 = vpop.permute.xlu0 %8416
    %8418 = vrot.lane.b32.xlu0 %v1672, 64
    %v8419 = vpop.permute.xlu0 %8418
    %8420 = vrot.lane.b32.xlu0 %v1678, 64
    %v8421 = vpop.permute.xlu0 %8420
    %8422 = vrot.lane.b32.xlu0 %v1684, 64
    %v8423 = vpop.permute.xlu0 %8422
    %8424 = vrot.lane.b32.xlu0 %v1690, 64
    %v8425 = vpop.permute.xlu0 %8424
    %8426 = vrot.lane.b32.xlu0 %v1696, 64
    %v8427 = vpop.permute.xlu0 %8426
    %8428 = vrot.lane.b32.xlu0 %v1702, 64
    %v8429 = vpop.permute.xlu0 %8428
    %8430 = vrot.lane.b32.xlu0 %v1708, 64
    %v8431 = vpop.permute.xlu0 %8430
    %8432 = vrot.lane.b32.xlu0 %v1714, 64
    %v8433 = vpop.permute.xlu0 %8432
    %8434 = vrot.lane.b32.xlu0 %v1720, 64
    %v8435 = vpop.permute.xlu0 %8434
    %8436 = vrot.lane.b32.xlu0 %v1726, 64
    %v8437 = vpop.permute.xlu0 %8436
    %8438 = vrot.lane.b32.xlu0 %v1732, 64
    %v8439 = vpop.permute.xlu0 %8438
    %8440 = vrot.lane.b32.xlu0 %v1738, 64
    %v8441 = vpop.permute.xlu0 %8440
    %8442 = vrot.lane.b32.xlu0 %v1744, 64
    %v8443 = vpop.permute.xlu0 %8442
    %v8444 = vsel %vm2262, %v8381, 0
    %v8446 = vsel %vm2262, %v8383, 0
    %v8448 = vsel %vm2262, %v8385, 0
    %v8450 = vsel %vm2262, %v8387, 0
    %v8452 = vsel %vm2262, %v8389, 0
    %v8454 = vsel %vm2262, %v8391, 0
    %v8456 = vsel %vm2262, %v8393, 0
    %v8458 = vsel %vm2262, %v8395, 0
    %v8460 = vsel %vm2262, %v8397, 0
    %v8462 = vsel %vm2262, %v8399, 0
    %v8464 = vsel %vm2262, %v8401, 0
    %v8466 = vsel %vm2262, %v8403, 0
    %v8468 = vsel %vm2262, %v8405, 0
    %v8470 = vsel %vm2262, %v8407, 0
    %v8472 = vsel %vm2262, %v8409, 0
    %v8474 = vsel %vm2262, %v8411, 0
    %v8476 = vsel %vm2262, %v8413, 0
    %v8478 = vsel %vm2262, %v8415, 0
    %v8480 = vsel %vm2262, %v8417, 0
    %v8482 = vsel %vm2262, %v8419, 0
    %v8484 = vsel %vm2262, %v8421, 0
    %v8486 = vsel %vm2262, %v8423, 0
    %v8488 = vsel %vm2262, %v8425, 0
    %v8490 = vsel %vm2262, %v8427, 0
    %v8492 = vsel %vm2262, %v8429, 0
    %v8494 = vsel %vm2262, %v8431, 0
    %v8496 = vsel %vm2262, %v8433, 0
    %v8498 = vsel %vm2262, %v8435, 0
    %v8500 = vsel %vm2262, %v8437, 0
    %v8502 = vsel %vm2262, %v8439, 0
    %v8504 = vsel %vm2262, %v8441, 0
    %v8506 = vsel %vm2262, %v8443, 0
    %8508 = vmatprep.subr.mxu0 0.0
    %8509 = vmatpush1.xpose.msra.mxu0 %v8476
    %8510 = vmatprep.subr.mxu0 0.0
    %8511 = vmatpush1.xpose.msra.mxu0 %v8478
    %8512 = vmatprep.subr.mxu0 0.0
    %8513 = vmatpush1.xpose.msra.mxu0 %v8480
    %8514 = vmatprep.subr.mxu0 0.0
    %8515 = vmatpush1.xpose.msra.mxu0 %v8482
    %8516 = vmatprep.subr.mxu0 0.0
    %8517 = vmatpush1.xpose.msra.mxu0 %v8484
    %8518 = vmatprep.subr.mxu0 0.0
    %8519 = vmatpush1.xpose.msra.mxu0 %v8486
    %8520 = vmatprep.subr.mxu0 0.0
    %8521 = vmatpush1.xpose.msra.mxu0 %v8488
    %8522 = vmatprep.subr.mxu0 0.0
    %8523 = vmatpush1.xpose.msra.mxu0 %v8490
    %8524 = vmatprep.subr.mxu0 0.0
    %8525 = vmatpush1.xpose.msra.mxu0 %v8492
    %8526 = vmatprep.subr.mxu0 0.0
    %8527 = vmatpush1.xpose.msra.mxu0 %v8494
    %8528 = vmatprep.subr.mxu0 0.0
    %8529 = vmatpush1.xpose.msra.mxu0 %v8496
    %8530 = vmatprep.subr.mxu0 0.0
    %8531 = vmatpush1.xpose.msra.mxu0 %v8498
    %8532 = vmatprep.subr.mxu0 0.0
    %8533 = vmatpush1.xpose.msra.mxu0 %v8500
    %8534 = vmatprep.subr.mxu0 0.0
    %8535 = vmatpush1.xpose.msra.mxu0 %v8502
    %8536 = vmatprep.subr.mxu0 0.0
    %8537 = vmatpush1.xpose.msra.mxu0 %v8504
    %8538 = vmatprep.subr.mxu0 0.0
    %8539 = vmatpush1.xpose.msra.mxu0 %v8506
    %8540 = vmatprep.subr.mxu0 0.0
    %8541 = vmatpush1.xpose.msra.mxu0 0.0
    %8542 = vmatprep.subr.mxu0 0.0
    %8543 = vmatpush1.xpose.msra.mxu0 0.0
    %8544 = vmatprep.subr.mxu0 0.0
    %8545 = vmatpush1.xpose.msra.mxu0 0.0
    %8546 = vmatprep.subr.mxu0 0.0
    %8547 = vmatpush1.xpose.msra.mxu0 0.0
    %8548 = vmatprep.subr.mxu0 0.0
    %8549 = vmatpush1.xpose.msra.mxu0 0.0
    %8550 = vmatprep.subr.mxu0 0.0
    %8551 = vmatpush1.xpose.msra.mxu0 0.0
    %8552 = vmatprep.subr.mxu0 0.0
    %8553 = vmatpush1.xpose.msra.mxu0 0.0
    %8554 = vmatprep.subr.mxu0 0.0
    %8555 = vmatpush1.xpose.msra.mxu0 0.0
    %8556 = vmatprep.subr.mxu0 0.0
    %8557 = vmatpush1.xpose.msra.mxu0 0.0
    %8558 = vmatprep.subr.mxu0 0.0
    %8559 = vmatpush1.xpose.msra.mxu0 0.0
    %8560 = vmatprep.subr.mxu0 0.0
    %8561 = vmatpush1.xpose.msra.mxu0 0.0
    %8562 = vmatprep.subr.mxu0 0.0
    %8563 = vmatpush1.xpose.msra.mxu0 0.0
    %8564 = vmatprep.subr.mxu0 0.0
    %8565 = vmatpush1.xpose.msra.mxu0 0.0
    %8566 = vmatprep.subr.mxu0 0.0
    %8567 = vmatpush1.xpose.msra.mxu0 0.0
    %8568 = vmatprep.subr.mxu0 0.0
    %8569 = vmatpush1.xpose.msra.mxu0 0.0
    %8570 = vmatprep.subr.mxu0 0.0
    %8571 = vmatpush1.xpose.msra.mxu0 0.0
    %8572 = vmatprep.mubr.f32.mxu0 0.0
    %8573 = vmatmul.mubr.f32.gmra.mrb[0].mxu0 %v8444
    %v8574 = vpop.f32.mrb[0].mxu0
    %v8575 = vadd.f32 0.0, %v8574
    %v8576 = vpop.f32.mrb[0].mxu0
    %8577 = vmatprep.mubr.f32.mxu0 0.0
    %8578 = vmatmul.mubr.f32.gmra.mrb[0].mxu0 %v8446
    %v8579 = vpop.f32.mrb[0].mxu0
    %v8580 = vadd.f32 0.0, %v8579
    %v8581 = vpop.f32.mrb[0].mxu0
    %8582 = vmatprep.mubr.f32.mxu0 0.0
    %8583 = vmatmul.mubr.f32.gmra.mrb[0].mxu0 %v8448
    %v8584 = vpop.f32.mrb[0].mxu0
    %v8585 = vadd.f32 0.0, %v8584
    %v8586 = vpop.f32.mrb[0].mxu0
    %8587 = vmatprep.mubr.f32.mxu0 0.0
    %8588 = vmatmul.mubr.f32.gmra.mrb[0].mxu0 %v8450
    %v8589 = vpop.f32.mrb[0].mxu0
    %v8590 = vadd.f32 0.0, %v8589
    %v8591 = vpop.f32.mrb[0].mxu0
    %8592 = vmatprep.mubr.f32.mxu0 0.0
    %8593 = vmatmul.mubr.f32.gmra.mrb[0].mxu0 %v8452
    %v8594 = vpop.f32.mrb[0].mxu0
    %v8595 = vadd.f32 0.0, %v8594
    %v8596 = vpop.f32.mrb[0].mxu0
    %8597 = vmatprep.mubr.f32.mxu0 0.0
    %8598 = vmatmul.mubr.f32.gmra.mrb[0].mxu0 %v8454
    %v8599 = vpop.f32.mrb[0].mxu0
    %v8600 = vadd.f32 0.0, %v8599
    %v8601 = vpop.f32.mrb[0].mxu0
    %8602 = vmatprep.mubr.f32.mxu0 0.0
    %8603 = vmatmul.mubr.f32.gmra.mrb[0].mxu0 %v8456
    %v8604 = vpop.f32.mrb[0].mxu0
    %v8605 = vadd.f32 0.0, %v8604
    %v8606 = vpop.f32.mrb[0].mxu0
    %8607 = vmatprep.mubr.f32.mxu0 0.0
    %8608 = vmatmul.mubr.f32.gmra.mrb[0].mxu0 %v8458
    %v8609 = vpop.f32.mrb[0].mxu0
    %v8610 = vadd.f32 0.0, %v8609
    %v8611 = vpop.f32.mrb[0].mxu0
    %8612 = vmatprep.mubr.f32.mxu0 0.0
    %8613 = vmatmul.mubr.f32.gmra.mrb[0].mxu0 %v8460
    %v8614 = vpop.f32.mrb[0].mxu0
    %v8615 = vadd.f32 0.0, %v8614
    %v8616 = vpop.f32.mrb[0].mxu0
    %8617 = vmatprep.mubr.f32.mxu0 0.0
    %8618 = vmatmul.mubr.f32.gmra.mrb[0].mxu0 %v8462
    %v8619 = vpop.f32.mrb[0].mxu0
    %v8620 = vadd.f32 0.0, %v8619
    %v8621 = vpop.f32.mrb[0].mxu0
    %8622 = vmatprep.mubr.f32.mxu0 0.0
    %8623 = vmatmul.mubr.f32.gmra.mrb[0].mxu0 %v8464
    %v8624 = vpop.f32.mrb[0].mxu0
    %v8625 = vadd.f32 0.0, %v8624
    %v8626 = vpop.f32.mrb[0].mxu0
    %8627 = vmatprep.mubr.f32.mxu0 0.0
    %8628 = vmatmul.mubr.f32.gmra.mrb[0].mxu0 %v8466
    %v8629 = vpop.f32.mrb[0].mxu0
    %v8630 = vadd.f32 0.0, %v8629
    %v8631 = vpop.f32.mrb[0].mxu0
    %8632 = vmatprep.mubr.f32.mxu0 0.0
    %8633 = vmatmul.mubr.f32.gmra.mrb[0].mxu0 %v8468
    %v8634 = vpop.f32.mrb[0].mxu0
    %v8635 = vadd.f32 0.0, %v8634
    %v8636 = vpop.f32.mrb[0].mxu0
    %8637 = vmatprep.mubr.f32.mxu0 0.0
    %8638 = vmatmul.mubr.f32.gmra.mrb[0].mxu0 %v8470
    %v8639 = vpop.f32.mrb[0].mxu0
    %v8640 = vadd.f32 0.0, %v8639
    %v8641 = vpop.f32.mrb[0].mxu0
    %8642 = vmatprep.mubr.f32.mxu0 0.0
    %8643 = vmatmul.mubr.f32.gmra.mrb[0].mxu0 %v8472
    %v8644 = vpop.f32.mrb[0].mxu0
    %v8645 = vadd.f32 0.0, %v8644
    %v8646 = vpop.f32.mrb[0].mxu0
    %8647 = vmatprep.mubr.f32.mxu0 0.0
    %8648 = vmatmul.mubr.f32.gmra.mrb[0].mxu0 %v8474
    %v8649 = vpop.f32.mrb[0].mxu0
    %v8650 = vadd.f32 0.0, %v8649
    %v8651 = vpop.f32.mrb[0].mxu0
    %8652 = vdwg.mxu0
    %v8653 = vmul.f32 %v8302, 0.125
    %v8654 = vmul.f32 %v8307, 0.125
    %v8655 = vmul.f32 %v8312, 0.125
    %v8656 = vmul.f32 %v8317, 0.125
    %v8657 = vmul.f32 %v8322, 0.125
    %v8658 = vmul.f32 %v8327, 0.125
    %v8659 = vmul.f32 %v8332, 0.125
    %v8660 = vmul.f32 %v8337, 0.125
    %v8661 = vmul.f32 %v8342, 0.125
    %v8662 = vmul.f32 %v8347, 0.125
    %v8663 = vmul.f32 %v8352, 0.125
    %v8664 = vmul.f32 %v8357, 0.125
    %v8665 = vmul.f32 %v8362, 0.125
    %v8666 = vmul.f32 %v8367, 0.125
    %v8667 = vmul.f32 %v8372, 0.125
    %v8668 = vmul.f32 %v8377, 0.125
    %v8669 = vmul.f32 %v8575, 0.125
    %v8670 = vmul.f32 %v8580, 0.125
    %v8671 = vmul.f32 %v8585, 0.125
    %v8672 = vmul.f32 %v8590, 0.125
    %v8673 = vmul.f32 %v8595, 0.125
    %v8674 = vmul.f32 %v8600, 0.125
    %v8675 = vmul.f32 %v8605, 0.125
    %v8676 = vmul.f32 %v8610, 0.125
    %v8677 = vmul.f32 %v8615, 0.125
    %v8678 = vmul.f32 %v8620, 0.125
    %v8679 = vmul.f32 %v8625, 0.125
    %v8680 = vmul.f32 %v8630, 0.125
    %v8681 = vmul.f32 %v8635, 0.125
    %v8682 = vmul.f32 %v8640, 0.125
    %v8683 = vmul.f32 %v8645, 0.125
    %v8684 = vmul.f32 %v8650, 0.125
    %8685 = vmax.xlane.f32.xlu0 %v8653
    %v8686 = vpop.xlane.xlu0 %8685
    %8687 = vmax.xlane.f32.xlu0 %v8654
    %v8688 = vpop.xlane.xlu0 %8687
    %8689 = vmax.xlane.f32.xlu0 %v8655
    %v8690 = vpop.xlane.xlu0 %8689
    %8691 = vmax.xlane.f32.xlu0 %v8656
    %v8692 = vpop.xlane.xlu0 %8691
    %8693 = vmax.xlane.f32.xlu0 %v8657
    %v8694 = vpop.xlane.xlu0 %8693
    %8695 = vmax.xlane.f32.xlu0 %v8658
    %v8696 = vpop.xlane.xlu0 %8695
    %8697 = vmax.xlane.f32.xlu0 %v8659
    %v8698 = vpop.xlane.xlu0 %8697
    %8699 = vmax.xlane.f32.xlu0 %v8660
    %v8700 = vpop.xlane.xlu0 %8699
    %8701 = vmax.xlane.f32.xlu0 %v8661
    %v8702 = vpop.xlane.xlu0 %8701
    %8703 = vmax.xlane.f32.xlu0 %v8662
    %v8704 = vpop.xlane.xlu0 %8703
    %8705 = vmax.xlane.f32.xlu0 %v8663
    %v8706 = vpop.xlane.xlu0 %8705
    %8707 = vmax.xlane.f32.xlu0 %v8664
    %v8708 = vpop.xlane.xlu0 %8707
    %8709 = vmax.xlane.f32.xlu0 %v8665
    %v8710 = vpop.xlane.xlu0 %8709
    %8711 = vmax.xlane.f32.xlu0 %v8666
    %v8712 = vpop.xlane.xlu0 %8711
    %8713 = vmax.xlane.f32.xlu0 %v8667
    %v8714 = vpop.xlane.xlu0 %8713
    %8715 = vmax.xlane.f32.xlu0 %v8668
    %v8716 = vpop.xlane.xlu0 %8715
    %8717 = vmax.xlane.f32.xlu0 %v8669
    %v8718 = vpop.xlane.xlu0 %8717
    %8719 = vmax.xlane.f32.xlu0 %v8670
    %v8720 = vpop.xlane.xlu0 %8719
    %8721 = vmax.xlane.f32.xlu0 %v8671
    %v8722 = vpop.xlane.xlu0 %8721
    %8723 = vmax.xlane.f32.xlu0 %v8672
    %v8724 = vpop.xlane.xlu0 %8723
    %8725 = vmax.xlane.f32.xlu0 %v8673
    %v8726 = vpop.xlane.xlu0 %8725
    %8727 = vmax.xlane.f32.xlu0 %v8674
    %v8728 = vpop.xlane.xlu0 %8727
    %8729 = vmax.xlane.f32.xlu0 %v8675
    %v8730 = vpop.xlane.xlu0 %8729
    %8731 = vmax.xlane.f32.xlu0 %v8676
    %v8732 = vpop.xlane.xlu0 %8731
    %8733 = vmax.xlane.f32.xlu0 %v8677
    %v8734 = vpop.xlane.xlu0 %8733
    %8735 = vmax.xlane.f32.xlu0 %v8678
    %v8736 = vpop.xlane.xlu0 %8735
    %8737 = vmax.xlane.f32.xlu0 %v8679
    %v8738 = vpop.xlane.xlu0 %8737
    %8739 = vmax.xlane.f32.xlu0 %v8680
    %v8740 = vpop.xlane.xlu0 %8739
    %8741 = vmax.xlane.f32.xlu0 %v8681
    %v8742 = vpop.xlane.xlu0 %8741
    %8743 = vmax.xlane.f32.xlu0 %v8682
    %v8744 = vpop.xlane.xlu0 %8743
    %8745 = vmax.xlane.f32.xlu0 %v8683
    %v8746 = vpop.xlane.xlu0 %8745
    %8747 = vmax.xlane.f32.xlu0 %v8684
    %v8748 = vpop.xlane.xlu0 %8747
    %v8749 = vsub.f32 %v8653, %v8686
    %v8750 = vsub.f32 %v8654, %v8688
    %v8751 = vsub.f32 %v8655, %v8690
    %v8752 = vsub.f32 %v8656, %v8692
    %v8753 = vsub.f32 %v8657, %v8694
    %v8754 = vsub.f32 %v8658, %v8696
    %v8755 = vsub.f32 %v8659, %v8698
    %v8756 = vsub.f32 %v8660, %v8700
    %v8757 = vsub.f32 %v8661, %v8702
    %v8758 = vsub.f32 %v8662, %v8704
    %v8759 = vsub.f32 %v8663, %v8706
    %v8760 = vsub.f32 %v8664, %v8708
    %v8761 = vsub.f32 %v8665, %v8710
    %v8762 = vsub.f32 %v8666, %v8712
    %v8763 = vsub.f32 %v8667, %v8714
    %v8764 = vsub.f32 %v8668, %v8716
    %v8765 = vsub.f32 %v8669, %v8718
    %v8766 = vsub.f32 %v8670, %v8720
    %v8767 = vsub.f32 %v8671, %v8722
    %v8768 = vsub.f32 %v8672, %v8724
    %v8769 = vsub.f32 %v8673, %v8726
    %v8770 = vsub.f32 %v8674, %v8728
    %v8771 = vsub.f32 %v8675, %v8730
    %v8772 = vsub.f32 %v8676, %v8732
    %v8773 = vsub.f32 %v8677, %v8734
    %v8774 = vsub.f32 %v8678, %v8736
    %v8775 = vsub.f32 %v8679, %v8738
    %v8776 = vsub.f32 %v8680, %v8740
    %v8777 = vsub.f32 %v8681, %v8742
    %v8778 = vsub.f32 %v8682, %v8744
    %v8779 = vsub.f32 %v8683, %v8746
    %v8780 = vsub.f32 %v8684, %v8748
    %v8781 = vmul.f32 %v8749, 1.442695
    %v8782 = vpow.pop %v8781
    %v8783 = vmul.f32 %v8750, 1.442695
    %v8784 = vpow.pop %v8783
    %v8785 = vmul.f32 %v8751, 1.442695
    %v8786 = vpow.pop %v8785
    %v8787 = vmul.f32 %v8752, 1.442695
    %v8788 = vpow.pop %v8787
    %v8789 = vmul.f32 %v8753, 1.442695
    %v8790 = vpow.pop %v8789
    %v8791 = vmul.f32 %v8754, 1.442695
    %v8792 = vpow.pop %v8791
    %v8793 = vmul.f32 %v8755, 1.442695
    %v8794 = vpow.pop %v8793
    %v8795 = vmul.f32 %v8756, 1.442695
    %v8796 = vpow.pop %v8795
    %v8797 = vmul.f32 %v8757, 1.442695
    %v8798 = vpow.pop %v8797
    %v8799 = vmul.f32 %v8758, 1.442695
    %v8800 = vpow.pop %v8799
    %v8801 = vmul.f32 %v8759, 1.442695
    %v8802 = vpow.pop %v8801
    %v8803 = vmul.f32 %v8760, 1.442695
    %v8804 = vpow.pop %v8803
    %v8805 = vmul.f32 %v8761, 1.442695
    %v8806 = vpow.pop %v8805
    %v8807 = vmul.f32 %v8762, 1.442695
    %v8808 = vpow.pop %v8807
    %v8809 = vmul.f32 %v8763, 1.442695
    %v8810 = vpow.pop %v8809
    %v8811 = vmul.f32 %v8764, 1.442695
    %v8812 = vpow.pop %v8811
    %v8813 = vmul.f32 %v8765, 1.442695
    %v8814 = vpow.pop %v8813
    %v8815 = vmul.f32 %v8766, 1.442695
    %v8816 = vpow.pop %v8815
    %v8817 = vmul.f32 %v8767, 1.442695
    %v8818 = vpow.pop %v8817
    %v8819 = vmul.f32 %v8768, 1.442695
    %v8820 = vpow.pop %v8819
    %v8821 = vmul.f32 %v8769, 1.442695
    %v8822 = vpow.pop %v8821
    %v8823 = vmul.f32 %v8770, 1.442695
    %v8824 = vpow.pop %v8823
    %v8825 = vmul.f32 %v8771, 1.442695
    %v8826 = vpow.pop %v8825
    %v8827 = vmul.f32 %v8772, 1.442695
    %v8828 = vpow.pop %v8827
    %v8829 = vmul.f32 %v8773, 1.442695
    %v8830 = vpow.pop %v8829
    %v8831 = vmul.f32 %v8774, 1.442695
    %v8832 = vpow.pop %v8831
    %v8833 = vmul.f32 %v8775, 1.442695
    %v8834 = vpow.pop %v8833
    %v8835 = vmul.f32 %v8776, 1.442695
    %v8836 = vpow.pop %v8835
    %v8837 = vmul.f32 %v8777, 1.442695
    %v8838 = vpow.pop %v8837
    %v8839 = vmul.f32 %v8778, 1.442695
    %v8840 = vpow.pop %v8839
    %v8841 = vmul.f32 %v8779, 1.442695
    %v8842 = vpow.pop %v8841
    %v8843 = vmul.f32 %v8780, 1.442695
    %v8844 = vpow.pop %v8843
    %8845 = vadd.xlane.f32.xlu0 %v8782
    %v8846 = vpop.xlane.xlu0 %8845
    %8847 = vadd.xlane.f32.xlu0 %v8784
    %v8848 = vpop.xlane.xlu0 %8847
    %8849 = vadd.xlane.f32.xlu0 %v8786
    %v8850 = vpop.xlane.xlu0 %8849
    %8851 = vadd.xlane.f32.xlu0 %v8788
    %v8852 = vpop.xlane.xlu0 %8851
    %8853 = vadd.xlane.f32.xlu0 %v8790
    %v8854 = vpop.xlane.xlu0 %8853
    %8855 = vadd.xlane.f32.xlu0 %v8792
    %v8856 = vpop.xlane.xlu0 %8855
    %8857 = vadd.xlane.f32.xlu0 %v8794
    %v8858 = vpop.xlane.xlu0 %8857
    %8859 = vadd.xlane.f32.xlu0 %v8796
    %v8860 = vpop.xlane.xlu0 %8859
    %8861 = vadd.xlane.f32.xlu0 %v8798
    %v8862 = vpop.xlane.xlu0 %8861
    %8863 = vadd.xlane.f32.xlu0 %v8800
    %v8864 = vpop.xlane.xlu0 %8863
    %8865 = vadd.xlane.f32.xlu0 %v8802
    %v8866 = vpop.xlane.xlu0 %8865
    %8867 = vadd.xlane.f32.xlu0 %v8804
    %v8868 = vpop.xlane.xlu0 %8867
    %8869 = vadd.xlane.f32.xlu0 %v8806
    %v8870 = vpop.xlane.xlu0 %8869
    %8871 = vadd.xlane.f32.xlu0 %v8808
    %v8872 = vpop.xlane.xlu0 %8871
    %8873 = vadd.xlane.f32.xlu0 %v8810
    %v8874 = vpop.xlane.xlu0 %8873
    %8875 = vadd.xlane.f32.xlu0 %v8812
    %v8876 = vpop.xlane.xlu0 %8875
    %8877 = vadd.xlane.f32.xlu0 %v8814
    %v8878 = vpop.xlane.xlu0 %8877
    %8879 = vadd.xlane.f32.xlu0 %v8816
    %v8880 = vpop.xlane.xlu0 %8879
    %8881 = vadd.xlane.f32.xlu0 %v8818
    %v8882 = vpop.xlane.xlu0 %8881
    %8883 = vadd.xlane.f32.xlu0 %v8820
    %v8884 = vpop.xlane.xlu0 %8883
    %8885 = vadd.xlane.f32.xlu0 %v8822
    %v8886 = vpop.xlane.xlu0 %8885
    %8887 = vadd.xlane.f32.xlu0 %v8824
    %v8888 = vpop.xlane.xlu0 %8887
    %8889 = vadd.xlane.f32.xlu0 %v8826
    %v8890 = vpop.xlane.xlu0 %8889
    %8891 = vadd.xlane.f32.xlu0 %v8828
    %v8892 = vpop.xlane.xlu0 %8891
    %8893 = vadd.xlane.f32.xlu0 %v8830
    %v8894 = vpop.xlane.xlu0 %8893
    %8895 = vadd.xlane.f32.xlu0 %v8832
    %v8896 = vpop.xlane.xlu0 %8895
    %8897 = vadd.xlane.f32.xlu0 %v8834
    %v8898 = vpop.xlane.xlu0 %8897
    %8899 = vadd.xlane.f32.xlu0 %v8836
    %v8900 = vpop.xlane.xlu0 %8899
    %8901 = vadd.xlane.f32.xlu0 %v8838
    %v8902 = vpop.xlane.xlu0 %8901
    %8903 = vadd.xlane.f32.xlu0 %v8840
    %v8904 = vpop.xlane.xlu0 %8903
    %8905 = vadd.xlane.f32.xlu0 %v8842
    %v8906 = vpop.xlane.xlu0 %8905
    %8907 = vadd.xlane.f32.xlu0 %v8844
    %v8908 = vpop.xlane.xlu0 %8907
    %v8909 = vrcp.pop %v8846
    %v8910 = vrcp.pop %v8848
    %v8911 = vrcp.pop %v8850
    %v8912 = vrcp.pop %v8852
    %v8913 = vrcp.pop %v8854
    %v8914 = vrcp.pop %v8856
    %v8915 = vrcp.pop %v8858
    %v8916 = vrcp.pop %v8860
    %v8917 = vrcp.pop %v8862
    %v8918 = vrcp.pop %v8864
    %v8919 = vrcp.pop %v8866
    %v8920 = vrcp.pop %v8868
    %v8921 = vrcp.pop %v8870
    %v8922 = vrcp.pop %v8872
    %v8923 = vrcp.pop %v8874
    %v8924 = vrcp.pop %v8876
    %v8925 = vrcp.pop %v8878
    %v8926 = vrcp.pop %v8880
    %v8927 = vrcp.pop %v8882
    %v8928 = vrcp.pop %v8884
    %v8929 = vrcp.pop %v8886
    %v8930 = vrcp.pop %v8888
    %v8931 = vrcp.pop %v8890
    %v8932 = vrcp.pop %v8892
    %v8933 = vrcp.pop %v8894
    %v8934 = vrcp.pop %v8896
    %v8935 = vrcp.pop %v8898
    %v8936 = vrcp.pop %v8900
    %v8937 = vrcp.pop %v8902
    %v8938 = vrcp.pop %v8904
    %v8939 = vrcp.pop %v8906
    %v8940 = vrcp.pop %v8908
    %v8941 = vmul.f32 %v8782, %v8909
    %v8942 = vmul.f32 %v8784, %v8910
    %v8943 = vmul.f32 %v8786, %v8911
    %v8944 = vmul.f32 %v8788, %v8912
    %v8945 = vmul.f32 %v8790, %v8913
    %v8946 = vmul.f32 %v8792, %v8914
    %v8947 = vmul.f32 %v8794, %v8915
    %v8948 = vmul.f32 %v8796, %v8916
    %v8949 = vmul.f32 %v8798, %v8917
    %v8950 = vmul.f32 %v8800, %v8918
    %v8951 = vmul.f32 %v8802, %v8919
    %v8952 = vmul.f32 %v8804, %v8920
    %v8953 = vmul.f32 %v8806, %v8921
    %v8954 = vmul.f32 %v8808, %v8922
    %v8955 = vmul.f32 %v8810, %v8923
    %v8956 = vmul.f32 %v8812, %v8924
    %v8957 = vmul.f32 %v8814, %v8925
    %v8958 = vmul.f32 %v8816, %v8926
    %v8959 = vmul.f32 %v8818, %v8927
    %v8960 = vmul.f32 %v8820, %v8928
    %v8961 = vmul.f32 %v8822, %v8929
    %v8962 = vmul.f32 %v8824, %v8930
    %v8963 = vmul.f32 %v8826, %v8931
    %v8964 = vmul.f32 %v8828, %v8932
    %v8965 = vmul.f32 %v8830, %v8933
    %v8966 = vmul.f32 %v8832, %v8934
    %v8967 = vmul.f32 %v8834, %v8935
    %v8968 = vmul.f32 %v8836, %v8936
    %v8969 = vmul.f32 %v8838, %v8937
    %v8970 = vmul.f32 %v8840, %v8938
    %v8971 = vmul.f32 %v8842, %v8939
    %v8972 = vmul.f32 %v8844, %v8940
    %8989 = vrot.lane.b32.xlu0 %v2072, 64
    %v8990 = vpop.permute.xlu0 %8989
    %8991 = vrot.lane.b32.xlu0 %v2078, 64
    %v8992 = vpop.permute.xlu0 %8991
    %8993 = vrot.lane.b32.xlu0 %v2084, 64
    %v8994 = vpop.permute.xlu0 %8993
    %8995 = vrot.lane.b32.xlu0 %v2090, 64
    %v8996 = vpop.permute.xlu0 %8995
    %8997 = vrot.lane.b32.xlu0 %v2096, 64
    %v8998 = vpop.permute.xlu0 %8997
    %8999 = vrot.lane.b32.xlu0 %v2102, 64
    %v9000 = vpop.permute.xlu0 %8999
    %9001 = vrot.lane.b32.xlu0 %v2108, 64
    %v9002 = vpop.permute.xlu0 %9001
    %9003 = vrot.lane.b32.xlu0 %v2114, 64
    %v9004 = vpop.permute.xlu0 %9003
    %9005 = vrot.lane.b32.xlu0 %v2120, 64
    %v9006 = vpop.permute.xlu0 %9005
    %9007 = vrot.lane.b32.xlu0 %v2126, 64
    %v9008 = vpop.permute.xlu0 %9007
    %9009 = vrot.lane.b32.xlu0 %v2132, 64
    %v9010 = vpop.permute.xlu0 %9009
    %9011 = vrot.lane.b32.xlu0 %v2138, 64
    %v9012 = vpop.permute.xlu0 %9011
    %9013 = vrot.lane.b32.xlu0 %v2144, 64
    %v9014 = vpop.permute.xlu0 %9013
    %9015 = vrot.lane.b32.xlu0 %v2150, 64
    %v9016 = vpop.permute.xlu0 %9015
    %9017 = vrot.lane.b32.xlu0 %v2156, 64
    %v9018 = vpop.permute.xlu0 %9017
    %9019 = vrot.lane.b32.xlu0 %v2162, 64
    %v9020 = vpop.permute.xlu0 %9019
    %9037 = vmatprep.subr.mxu0 0.0
    %9038 = vmatpush1.msra.mxu0 %v8990
    %9039 = vmatprep.subr.mxu0 0.0
    %9040 = vmatpush1.msra.mxu0 %v8992
    %9041 = vmatprep.subr.mxu0 0.0
    %9042 = vmatpush1.msra.mxu0 %v8994
    %9043 = vmatprep.subr.mxu0 0.0
    %9044 = vmatpush1.msra.mxu0 %v8996
    %9045 = vmatprep.subr.mxu0 0.0
    %9046 = vmatpush1.msra.mxu0 %v8998
    %9047 = vmatprep.subr.mxu0 0.0
    %9048 = vmatpush1.msra.mxu0 %v9000
    %9049 = vmatprep.subr.mxu0 0.0
    %9050 = vmatpush1.msra.mxu0 %v9002
    %9051 = vmatprep.subr.mxu0 0.0
    %9052 = vmatpush1.msra.mxu0 %v9004
    %9053 = vmatprep.subr.mxu0 0.0
    %9054 = vmatpush1.msra.mxu0 %v9006
    %9055 = vmatprep.subr.mxu0 0.0
    %9056 = vmatpush1.msra.mxu0 %v9008
    %9057 = vmatprep.subr.mxu0 0.0
    %9058 = vmatpush1.msra.mxu0 %v9010
    %9059 = vmatprep.subr.mxu0 0.0
    %9060 = vmatpush1.msra.mxu0 %v9012
    %9061 = vmatprep.subr.mxu0 0.0
    %9062 = vmatpush1.msra.mxu0 %v9014
    %9063 = vmatprep.subr.mxu0 0.0
    %9064 = vmatpush1.msra.mxu0 %v9016
    %9065 = vmatprep.subr.mxu0 0.0
    %9066 = vmatpush1.msra.mxu0 %v9018
    %9067 = vmatprep.subr.mxu0 0.0
    %9068 = vmatpush1.msra.mxu0 %v9020
    %9069 = vmatprep.subr.mxu0 0.0
    %9070 = vmatpush1.msra.mxu0 0.0
    %9071 = vmatprep.subr.mxu0 0.0
    %9072 = vmatpush1.msra.mxu0 0.0
    %9073 = vmatprep.subr.mxu0 0.0
    %9074 = vmatpush1.msra.mxu0 0.0
    %9075 = vmatprep.subr.mxu0 0.0
    %9076 = vmatpush1.msra.mxu0 0.0
    %9077 = vmatprep.subr.mxu0 0.0
    %9078 = vmatpush1.msra.mxu0 0.0
    %9079 = vmatprep.subr.mxu0 0.0
    %9080 = vmatpush1.msra.mxu0 0.0
    %9081 = vmatprep.subr.mxu0 0.0
    %9082 = vmatpush1.msra.mxu0 0.0
    %9083 = vmatprep.subr.mxu0 0.0
    %9084 = vmatpush1.msra.mxu0 0.0
    %9085 = vmatprep.subr.mxu0 0.0
    %9086 = vmatpush1.msra.mxu0 0.0
    %9087 = vmatprep.subr.mxu0 0.0
    %9088 = vmatpush1.msra.mxu0 0.0
    %9089 = vmatprep.subr.mxu0 0.0
    %9090 = vmatpush1.msra.mxu0 0.0
    %9091 = vmatprep.subr.mxu0 0.0
    %9092 = vmatpush1.msra.mxu0 0.0
    %9093 = vmatprep.subr.mxu0 0.0
    %9094 = vmatpush1.msra.mxu0 0.0
    %9095 = vmatprep.subr.mxu0 0.0
    %9096 = vmatpush1.msra.mxu0 0.0
    %9097 = vmatprep.subr.mxu0 0.0
    %9098 = vmatpush1.msra.mxu0 0.0
    %9099 = vmatprep.subr.mxu0 0.0
    %9100 = vmatpush1.msra.mxu0 0.0
    %9101 = vmatprep.mubr.f32.mxu0 0.0
    %9102 = vmatmul.mubr.f32.gmra.mrb[0].mxu0 %v8941
    %v9103 = vpop.f32.mrb[0].mxu0
    %v9104 = vadd.f32 0.0, %v9103
    %v9105 = vpop.f32.mrb[0].mxu0
    %9106 = vmatprep.mubr.f32.mxu0 0.0
    %9107 = vmatmul.mubr.f32.gmra.mrb[0].mxu0 %v8942
    %v9108 = vpop.f32.mrb[0].mxu0
    %v9109 = vadd.f32 0.0, %v9108
    %v9110 = vpop.f32.mrb[0].mxu0
    %9111 = vmatprep.mubr.f32.mxu0 0.0
    %9112 = vmatmul.mubr.f32.gmra.mrb[0].mxu0 %v8943
    %v9113 = vpop.f32.mrb[0].mxu0
    %v9114 = vadd.f32 0.0, %v9113
    %v9115 = vpop.f32.mrb[0].mxu0
    %9116 = vmatprep.mubr.f32.mxu0 0.0
    %9117 = vmatmul.mubr.f32.gmra.mrb[0].mxu0 %v8944
    %v9118 = vpop.f32.mrb[0].mxu0
    %v9119 = vadd.f32 0.0, %v9118
    %v9120 = vpop.f32.mrb[0].mxu0
    %9121 = vmatprep.mubr.f32.mxu0 0.0
    %9122 = vmatmul.mubr.f32.gmra.mrb[0].mxu0 %v8945
    %v9123 = vpop.f32.mrb[0].mxu0
    %v9124 = vadd.f32 0.0, %v9123
    %v9125 = vpop.f32.mrb[0].mxu0
    %9126 = vmatprep.mubr.f32.mxu0 0.0
    %9127 = vmatmul.mubr.f32.gmra.mrb[0].mxu0 %v8946
    %v9128 = vpop.f32.mrb[0].mxu0
    %v9129 = vadd.f32 0.0, %v9128
    %v9130 = vpop.f32.mrb[0].mxu0
    %9131 = vmatprep.mubr.f32.mxu0 0.0
    %9132 = vmatmul.mubr.f32.gmra.mrb[0].mxu0 %v8947
    %v9133 = vpop.f32.mrb[0].mxu0
    %v9134 = vadd.f32 0.0, %v9133
    %v9135 = vpop.f32.mrb[0].mxu0
    %9136 = vmatprep.mubr.f32.mxu0 0.0
    %9137 = vmatmul.mubr.f32.gmra.mrb[0].mxu0 %v8948
    %v9138 = vpop.f32.mrb[0].mxu0
    %v9139 = vadd.f32 0.0, %v9138
    %v9140 = vpop.f32.mrb[0].mxu0
    %9141 = vmatprep.mubr.f32.mxu0 0.0
    %9142 = vmatmul.mubr.f32.gmra.mrb[0].mxu0 %v8949
    %v9143 = vpop.f32.mrb[0].mxu0
    %v9144 = vadd.f32 0.0, %v9143
    %v9145 = vpop.f32.mrb[0].mxu0
    %9146 = vmatprep.mubr.f32.mxu0 0.0
    %9147 = vmatmul.mubr.f32.gmra.mrb[0].mxu0 %v8950
    %v9148 = vpop.f32.mrb[0].mxu0
    %v9149 = vadd.f32 0.0, %v9148
    %v9150 = vpop.f32.mrb[0].mxu0
    %9151 = vmatprep.mubr.f32.mxu0 0.0
    %9152 = vmatmul.mubr.f32.gmra.mrb[0].mxu0 %v8951
    %v9153 = vpop.f32.mrb[0].mxu0
    %v9154 = vadd.f32 0.0, %v9153
    %v9155 = vpop.f32.mrb[0].mxu0
    %9156 = vmatprep.mubr.f32.mxu0 0.0
    %9157 = vmatmul.mubr.f32.gmra.mrb[0].mxu0 %v8952
    %v9158 = vpop.f32.mrb[0].mxu0
    %v9159 = vadd.f32 0.0, %v9158
    %v9160 = vpop.f32.mrb[0].mxu0
    %9161 = vmatprep.mubr.f32.mxu0 0.0
    %9162 = vmatmul.mubr.f32.gmra.mrb[0].mxu0 %v8953
    %v9163 = vpop.f32.mrb[0].mxu0
    %v9164 = vadd.f32 0.0, %v9163
    %v9165 = vpop.f32.mrb[0].mxu0
    %9166 = vmatprep.mubr.f32.mxu0 0.0
    %9167 = vmatmul.mubr.f32.gmra.mrb[0].mxu0 %v8954
    %v9168 = vpop.f32.mrb[0].mxu0
    %v9169 = vadd.f32 0.0, %v9168
    %v9170 = vpop.f32.mrb[0].mxu0
    %9171 = vmatprep.mubr.f32.mxu0 0.0
    %9172 = vmatmul.mubr.f32.gmra.mrb[0].mxu0 %v8955
    %v9173 = vpop.f32.mrb[0].mxu0
    %v9174 = vadd.f32 0.0, %v9173
    %v9175 = vpop.f32.mrb[0].mxu0
    %9176 = vmatprep.mubr.f32.mxu0 0.0
    %9177 = vmatmul.mubr.f32.gmra.mrb[0].mxu0 %v8956
    %v9178 = vpop.f32.mrb[0].mxu0
    %v9179 = vadd.f32 0.0, %v9178
    %v9180 = vpop.f32.mrb[0].mxu0
    %9181 = vdwg.mxu0
    %9198 = vrot.lane.b32.xlu0 %v2168, 64
    %v9199 = vpop.permute.xlu0 %9198
    %9200 = vrot.lane.b32.xlu0 %v2174, 64
    %v9201 = vpop.permute.xlu0 %9200
    %9202 = vrot.lane.b32.xlu0 %v2180, 64
    %v9203 = vpop.permute.xlu0 %9202
    %9204 = vrot.lane.b32.xlu0 %v2186, 64
    %v9205 = vpop.permute.xlu0 %9204
    %9206 = vrot.lane.b32.xlu0 %v2192, 64
    %v9207 = vpop.permute.xlu0 %9206
    %9208 = vrot.lane.b32.xlu0 %v2198, 64
    %v9209 = vpop.permute.xlu0 %9208
    %9210 = vrot.lane.b32.xlu0 %v2204, 64
    %v9211 = vpop.permute.xlu0 %9210
    %9212 = vrot.lane.b32.xlu0 %v2210, 64
    %v9213 = vpop.permute.xlu0 %9212
    %9214 = vrot.lane.b32.xlu0 %v2216, 64
    %v9215 = vpop.permute.xlu0 %9214
    %9216 = vrot.lane.b32.xlu0 %v2222, 64
    %v9217 = vpop.permute.xlu0 %9216
    %9218 = vrot.lane.b32.xlu0 %v2228, 64
    %v9219 = vpop.permute.xlu0 %9218
    %9220 = vrot.lane.b32.xlu0 %v2234, 64
    %v9221 = vpop.permute.xlu0 %9220
    %9222 = vrot.lane.b32.xlu0 %v2240, 64
    %v9223 = vpop.permute.xlu0 %9222
    %9224 = vrot.lane.b32.xlu0 %v2246, 64
    %v9225 = vpop.permute.xlu0 %9224
    %9226 = vrot.lane.b32.xlu0 %v2252, 64
    %v9227 = vpop.permute.xlu0 %9226
    %9228 = vrot.lane.b32.xlu0 %v2258, 64
    %v9229 = vpop.permute.xlu0 %9228
    %9246 = vmatprep.subr.mxu0 0.0
    %9247 = vmatpush1.msra.mxu0 %v9199
    %9248 = vmatprep.subr.mxu0 0.0
    %9249 = vmatpush1.msra.mxu0 %v9201
    %9250 = vmatprep.subr.mxu0 0.0
    %9251 = vmatpush1.msra.mxu0 %v9203
    %9252 = vmatprep.subr.mxu0 0.0
    %9253 = vmatpush1.msra.mxu0 %v9205
    %9254 = vmatprep.subr.mxu0 0.0
    %9255 = vmatpush1.msra.mxu0 %v9207
    %9256 = vmatprep.subr.mxu0 0.0
    %9257 = vmatpush1.msra.mxu0 %v9209
    %9258 = vmatprep.subr.mxu0 0.0
    %9259 = vmatpush1.msra.mxu0 %v9211
    %9260 = vmatprep.subr.mxu0 0.0
    %9261 = vmatpush1.msra.mxu0 %v9213
    %9262 = vmatprep.subr.mxu0 0.0
    %9263 = vmatpush1.msra.mxu0 %v9215
    %9264 = vmatprep.subr.mxu0 0.0
    %9265 = vmatpush1.msra.mxu0 %v9217
    %9266 = vmatprep.subr.mxu0 0.0
    %9267 = vmatpush1.msra.mxu0 %v9219
    %9268 = vmatprep.subr.mxu0 0.0
    %9269 = vmatpush1.msra.mxu0 %v9221
    %9270 = vmatprep.subr.mxu0 0.0
    %9271 = vmatpush1.msra.mxu0 %v9223
    %9272 = vmatprep.subr.mxu0 0.0
    %9273 = vmatpush1.msra.mxu0 %v9225
    %9274 = vmatprep.subr.mxu0 0.0
    %9275 = vmatpush1.msra.mxu0 %v9227
    %9276 = vmatprep.subr.mxu0 0.0
    %9277 = vmatpush1.msra.mxu0 %v9229
    %9278 = vmatprep.subr.mxu0 0.0
    %9279 = vmatpush1.msra.mxu0 0.0
    %9280 = vmatprep.subr.mxu0 0.0
    %9281 = vmatpush1.msra.mxu0 0.0
    %9282 = vmatprep.subr.mxu0 0.0
    %9283 = vmatpush1.msra.mxu0 0.0
    %9284 = vmatprep.subr.mxu0 0.0
    %9285 = vmatpush1.msra.mxu0 0.0
    %9286 = vmatprep.subr.mxu0 0.0
    %9287 = vmatpush1.msra.mxu0 0.0
    %9288 = vmatprep.subr.mxu0 0.0
    %9289 = vmatpush1.msra.mxu0 0.0
    %9290 = vmatprep.subr.mxu0 0.0
    %9291 = vmatpush1.msra.mxu0 0.0
    %9292 = vmatprep.subr.mxu0 0.0
    %9293 = vmatpush1.msra.mxu0 0.0
    %9294 = vmatprep.subr.mxu0 0.0
    %9295 = vmatpush1.msra.mxu0 0.0
    %9296 = vmatprep.subr.mxu0 0.0
    %9297 = vmatpush1.msra.mxu0 0.0
    %9298 = vmatprep.subr.mxu0 0.0
    %9299 = vmatpush1.msra.mxu0 0.0
    %9300 = vmatprep.subr.mxu0 0.0
    %9301 = vmatpush1.msra.mxu0 0.0
    %9302 = vmatprep.subr.mxu0 0.0
    %9303 = vmatpush1.msra.mxu0 0.0
    %9304 = vmatprep.subr.mxu0 0.0
    %9305 = vmatpush1.msra.mxu0 0.0
    %9306 = vmatprep.subr.mxu0 0.0
    %9307 = vmatpush1.msra.mxu0 0.0
    %9308 = vmatprep.subr.mxu0 0.0
    %9309 = vmatpush1.msra.mxu0 0.0
    %9310 = vmatprep.mubr.f32.mxu0 0.0
    %9311 = vmatmul.mubr.f32.gmra.mrb[0].mxu0 %v8957
    %v9312 = vpop.f32.mrb[0].mxu0
    %v9313 = vadd.f32 0.0, %v9312
    %v9314 = vpop.f32.mrb[0].mxu0
    %9315 = vmatprep.mubr.f32.mxu0 0.0
    %9316 = vmatmul.mubr.f32.gmra.mrb[0].mxu0 %v8958
    %v9317 = vpop.f32.mrb[0].mxu0
    %v9318 = vadd.f32 0.0, %v9317
    %v9319 = vpop.f32.mrb[0].mxu0
    %9320 = vmatprep.mubr.f32.mxu0 0.0
    %9321 = vmatmul.mubr.f32.gmra.mrb[0].mxu0 %v8959
    %v9322 = vpop.f32.mrb[0].mxu0
    %v9323 = vadd.f32 0.0, %v9322
    %v9324 = vpop.f32.mrb[0].mxu0
    %9325 = vmatprep.mubr.f32.mxu0 0.0
    %9326 = vmatmul.mubr.f32.gmra.mrb[0].mxu0 %v8960
    %v9327 = vpop.f32.mrb[0].mxu0
    %v9328 = vadd.f32 0.0, %v9327
    %v9329 = vpop.f32.mrb[0].mxu0
    %9330 = vmatprep.mubr.f32.mxu0 0.0
    %9331 = vmatmul.mubr.f32.gmra.mrb[0].mxu0 %v8961
    %v9332 = vpop.f32.mrb[0].mxu0
    %v9333 = vadd.f32 0.0, %v9332
    %v9334 = vpop.f32.mrb[0].mxu0
    %9335 = vmatprep.mubr.f32.mxu0 0.0
    %9336 = vmatmul.mubr.f32.gmra.mrb[0].mxu0 %v8962
    %v9337 = vpop.f32.mrb[0].mxu0
    %v9338 = vadd.f32 0.0, %v9337
    %v9339 = vpop.f32.mrb[0].mxu0
    %9340 = vmatprep.mubr.f32.mxu0 0.0
    %9341 = vmatmul.mubr.f32.gmra.mrb[0].mxu0 %v8963
    %v9342 = vpop.f32.mrb[0].mxu0
    %v9343 = vadd.f32 0.0, %v9342
    %v9344 = vpop.f32.mrb[0].mxu0
    %9345 = vmatprep.mubr.f32.mxu0 0.0
    %9346 = vmatmul.mubr.f32.gmra.mrb[0].mxu0 %v8964
    %v9347 = vpop.f32.mrb[0].mxu0
    %v9348 = vadd.f32 0.0, %v9347
    %v9349 = vpop.f32.mrb[0].mxu0
    %9350 = vmatprep.mubr.f32.mxu0 0.0
    %9351 = vmatmul.mubr.f32.gmra.mrb[0].mxu0 %v8965
    %v9352 = vpop.f32.mrb[0].mxu0
    %v9353 = vadd.f32 0.0, %v9352
    %v9354 = vpop.f32.mrb[0].mxu0
    %9355 = vmatprep.mubr.f32.mxu0 0.0
    %9356 = vmatmul.mubr.f32.gmra.mrb[0].mxu0 %v8966
    %v9357 = vpop.f32.mrb[0].mxu0
    %v9358 = vadd.f32 0.0, %v9357
    %v9359 = vpop.f32.mrb[0].mxu0
    %9360 = vmatprep.mubr.f32.mxu0 0.0
    %9361 = vmatmul.mubr.f32.gmra.mrb[0].mxu0 %v8967
    %v9362 = vpop.f32.mrb[0].mxu0
    %v9363 = vadd.f32 0.0, %v9362
    %v9364 = vpop.f32.mrb[0].mxu0
    %9365 = vmatprep.mubr.f32.mxu0 0.0
    %9366 = vmatmul.mubr.f32.gmra.mrb[0].mxu0 %v8968
    %v9367 = vpop.f32.mrb[0].mxu0
    %v9368 = vadd.f32 0.0, %v9367
    %v9369 = vpop.f32.mrb[0].mxu0
    %9370 = vmatprep.mubr.f32.mxu0 0.0
    %9371 = vmatmul.mubr.f32.gmra.mrb[0].mxu0 %v8969
    %v9372 = vpop.f32.mrb[0].mxu0
    %v9373 = vadd.f32 0.0, %v9372
    %v9374 = vpop.f32.mrb[0].mxu0
    %9375 = vmatprep.mubr.f32.mxu0 0.0
    %9376 = vmatmul.mubr.f32.gmra.mrb[0].mxu0 %v8970
    %v9377 = vpop.f32.mrb[0].mxu0
    %v9378 = vadd.f32 0.0, %v9377
    %v9379 = vpop.f32.mrb[0].mxu0
    %9380 = vmatprep.mubr.f32.mxu0 0.0
    %9381 = vmatmul.mubr.f32.gmra.mrb[0].mxu0 %v8971
    %v9382 = vpop.f32.mrb[0].mxu0
    %v9383 = vadd.f32 0.0, %v9382
    %v9384 = vpop.f32.mrb[0].mxu0
    %9385 = vmatprep.mubr.f32.mxu0 0.0
    %9386 = vmatmul.mubr.f32.gmra.mrb[0].mxu0 %v8972
    %v9387 = vpop.f32.mrb[0].mxu0
    %v9388 = vadd.f32 0.0, %v9387
    %v9389 = vpop.f32.mrb[0].mxu0
    %9390 = vdwg.mxu0
    %v9392 = vsel %vm2262, %v1046, 0
    %v9395 = vsel %vm2262, %v1052, 0
    %v9398 = vsel %vm2262, %v1058, 0
    %v9401 = vsel %vm2262, %v1064, 0
    %v9404 = vsel %vm2262, %v1070, 0
    %v9407 = vsel %vm2262, %v1076, 0
    %v9410 = vsel %vm2262, %v1082, 0
    %v9413 = vsel %vm2262, %v1088, 0
    %v9416 = vsel %vm2262, %v1094, 0
    %v9419 = vsel %vm2262, %v1100, 0
    %v9422 = vsel %vm2262, %v1106, 0
    %v9425 = vsel %vm2262, %v1112, 0
    %v9428 = vsel %vm2262, %v1118, 0
    %v9431 = vsel %vm2262, %v1124, 0
    %v9434 = vsel %vm2262, %v1130, 0
    %v9437 = vsel %vm2262, %v1136, 0
    %v9440 = vsel %vm2262, %v1560, 0
    %v9443 = vsel %vm2262, %v1566, 0
    %v9446 = vsel %vm2262, %v1572, 0
    %v9449 = vsel %vm2262, %v1578, 0
    %v9452 = vsel %vm2262, %v1584, 0
    %v9455 = vsel %vm2262, %v1590, 0
    %v9458 = vsel %vm2262, %v1596, 0
    %v9461 = vsel %vm2262, %v1602, 0
    %v9464 = vsel %vm2262, %v1608, 0
    %v9467 = vsel %vm2262, %v1614, 0
    %v9470 = vsel %vm2262, %v1620, 0
    %v9473 = vsel %vm2262, %v1626, 0
    %v9476 = vsel %vm2262, %v1632, 0
    %v9479 = vsel %vm2262, %v1638, 0
    %v9482 = vsel %vm2262, %v1644, 0
    %v9485 = vsel %vm2262, %v1650, 0
    %9487 = vmatprep.subr.mxu0 0.0
    %9488 = vmatpush1.xpose.msra.mxu0 %v9440
    %9489 = vmatprep.subr.mxu0 0.0
    %9490 = vmatpush1.xpose.msra.mxu0 %v9443
    %9491 = vmatprep.subr.mxu0 0.0
    %9492 = vmatpush1.xpose.msra.mxu0 %v9446
    %9493 = vmatprep.subr.mxu0 0.0
    %9494 = vmatpush1.xpose.msra.mxu0 %v9449
    %9495 = vmatprep.subr.mxu0 0.0
    %9496 = vmatpush1.xpose.msra.mxu0 %v9452
    %9497 = vmatprep.subr.mxu0 0.0
    %9498 = vmatpush1.xpose.msra.mxu0 %v9455
    %9499 = vmatprep.subr.mxu0 0.0
    %9500 = vmatpush1.xpose.msra.mxu0 %v9458
    %9501 = vmatprep.subr.mxu0 0.0
    %9502 = vmatpush1.xpose.msra.mxu0 %v9461
    %9503 = vmatprep.subr.mxu0 0.0
    %9504 = vmatpush1.xpose.msra.mxu0 %v9464
    %9505 = vmatprep.subr.mxu0 0.0
    %9506 = vmatpush1.xpose.msra.mxu0 %v9467
    %9507 = vmatprep.subr.mxu0 0.0
    %9508 = vmatpush1.xpose.msra.mxu0 %v9470
    %9509 = vmatprep.subr.mxu0 0.0
    %9510 = vmatpush1.xpose.msra.mxu0 %v9473
    %9511 = vmatprep.subr.mxu0 0.0
    %9512 = vmatpush1.xpose.msra.mxu0 %v9476
    %9513 = vmatprep.subr.mxu0 0.0
    %9514 = vmatpush1.xpose.msra.mxu0 %v9479
    %9515 = vmatprep.subr.mxu0 0.0
    %9516 = vmatpush1.xpose.msra.mxu0 %v9482
    %9517 = vmatprep.subr.mxu0 0.0
    %9518 = vmatpush1.xpose.msra.mxu0 %v9485
    %9519 = vmatprep.subr.mxu0 0.0
    %9520 = vmatpush1.xpose.msra.mxu0 0.0
    %9521 = vmatprep.subr.mxu0 0.0
    %9522 = vmatpush1.xpose.msra.mxu0 0.0
    %9523 = vmatprep.subr.mxu0 0.0
    %9524 = vmatpush1.xpose.msra.mxu0 0.0
    %9525 = vmatprep.subr.mxu0 0.0
    %9526 = vmatpush1.xpose.msra.mxu0 0.0
    %9527 = vmatprep.subr.mxu0 0.0
    %9528 = vmatpush1.xpose.msra.mxu0 0.0
    %9529 = vmatprep.subr.mxu0 0.0
    %9530 = vmatpush1.xpose.msra.mxu0 0.0
    %9531 = vmatprep.subr.mxu0 0.0
    %9532 = vmatpush1.xpose.msra.mxu0 0.0
    %9533 = vmatprep.subr.mxu0 0.0
    %9534 = vmatpush1.xpose.msra.mxu0 0.0
    %9535 = vmatprep.subr.mxu0 0.0
    %9536 = vmatpush1.xpose.msra.mxu0 0.0
    %9537 = vmatprep.subr.mxu0 0.0
    %9538 = vmatpush1.xpose.msra.mxu0 0.0
    %9539 = vmatprep.subr.mxu0 0.0
    %9540 = vmatpush1.xpose.msra.mxu0 0.0
    %9541 = vmatprep.subr.mxu0 0.0
    %9542 = vmatpush1.xpose.msra.mxu0 0.0
    %9543 = vmatprep.subr.mxu0 0.0
    %9544 = vmatpush1.xpose.msra.mxu0 0.0
    %9545 = vmatprep.subr.mxu0 0.0
    %9546 = vmatpush1.xpose.msra.mxu0 0.0
    %9547 = vmatprep.subr.mxu0 0.0
    %9548 = vmatpush1.xpose.msra.mxu0 0.0
    %9549 = vmatprep.subr.mxu0 0.0
    %9550 = vmatpush1.xpose.msra.mxu0 0.0
    %9551 = vmatprep.mubr.f32.mxu0 0.0
    %9552 = vmatmul.mubr.f32.gmra.mrb[0].mxu0 %v9392
    %v9553 = vpop.f32.mrb[0].mxu0
    %v9554 = vadd.f32 0.0, %v9553
    %v9555 = vpop.f32.mrb[0].mxu0
    %9556 = vmatprep.mubr.f32.mxu0 0.0
    %9557 = vmatmul.mubr.f32.gmra.mrb[0].mxu0 %v9395
    %v9558 = vpop.f32.mrb[0].mxu0
    %v9559 = vadd.f32 0.0, %v9558
    %v9560 = vpop.f32.mrb[0].mxu0
    %9561 = vmatprep.mubr.f32.mxu0 0.0
    %9562 = vmatmul.mubr.f32.gmra.mrb[0].mxu0 %v9398
    %v9563 = vpop.f32.mrb[0].mxu0
    %v9564 = vadd.f32 0.0, %v9563
    %v9565 = vpop.f32.mrb[0].mxu0
    %9566 = vmatprep.mubr.f32.mxu0 0.0
    %9567 = vmatmul.mubr.f32.gmra.mrb[0].mxu0 %v9401
    %v9568 = vpop.f32.mrb[0].mxu0
    %v9569 = vadd.f32 0.0, %v9568
    %v9570 = vpop.f32.mrb[0].mxu0
    %9571 = vmatprep.mubr.f32.mxu0 0.0
    %9572 = vmatmul.mubr.f32.gmra.mrb[0].mxu0 %v9404
    %v9573 = vpop.f32.mrb[0].mxu0
    %v9574 = vadd.f32 0.0, %v9573
    %v9575 = vpop.f32.mrb[0].mxu0
    %9576 = vmatprep.mubr.f32.mxu0 0.0
    %9577 = vmatmul.mubr.f32.gmra.mrb[0].mxu0 %v9407
    %v9578 = vpop.f32.mrb[0].mxu0
    %v9579 = vadd.f32 0.0, %v9578
    %v9580 = vpop.f32.mrb[0].mxu0
    %9581 = vmatprep.mubr.f32.mxu0 0.0
    %9582 = vmatmul.mubr.f32.gmra.mrb[0].mxu0 %v9410
    %v9583 = vpop.f32.mrb[0].mxu0
    %v9584 = vadd.f32 0.0, %v9583
    %v9585 = vpop.f32.mrb[0].mxu0
    %9586 = vmatprep.mubr.f32.mxu0 0.0
    %9587 = vmatmul.mubr.f32.gmra.mrb[0].mxu0 %v9413
    %v9588 = vpop.f32.mrb[0].mxu0
    %v9589 = vadd.f32 0.0, %v9588
    %v9590 = vpop.f32.mrb[0].mxu0
    %9591 = vmatprep.mubr.f32.mxu0 0.0
    %9592 = vmatmul.mubr.f32.gmra.mrb[0].mxu0 %v9416
    %v9593 = vpop.f32.mrb[0].mxu0
    %v9594 = vadd.f32 0.0, %v9593
    %v9595 = vpop.f32.mrb[0].mxu0
    %9596 = vmatprep.mubr.f32.mxu0 0.0
    %9597 = vmatmul.mubr.f32.gmra.mrb[0].mxu0 %v9419
    %v9598 = vpop.f32.mrb[0].mxu0
    %v9599 = vadd.f32 0.0, %v9598
    %v9600 = vpop.f32.mrb[0].mxu0
    %9601 = vmatprep.mubr.f32.mxu0 0.0
    %9602 = vmatmul.mubr.f32.gmra.mrb[0].mxu0 %v9422
    %v9603 = vpop.f32.mrb[0].mxu0
    %v9604 = vadd.f32 0.0, %v9603
    %v9605 = vpop.f32.mrb[0].mxu0
    %9606 = vmatprep.mubr.f32.mxu0 0.0
    %9607 = vmatmul.mubr.f32.gmra.mrb[0].mxu0 %v9425
    %v9608 = vpop.f32.mrb[0].mxu0
    %v9609 = vadd.f32 0.0, %v9608
    %v9610 = vpop.f32.mrb[0].mxu0
    %9611 = vmatprep.mubr.f32.mxu0 0.0
    %9612 = vmatmul.mubr.f32.gmra.mrb[0].mxu0 %v9428
    %v9613 = vpop.f32.mrb[0].mxu0
    %v9614 = vadd.f32 0.0, %v9613
    %v9615 = vpop.f32.mrb[0].mxu0
    %9616 = vmatprep.mubr.f32.mxu0 0.0
    %9617 = vmatmul.mubr.f32.gmra.mrb[0].mxu0 %v9431
    %v9618 = vpop.f32.mrb[0].mxu0
    %v9619 = vadd.f32 0.0, %v9618
    %v9620 = vpop.f32.mrb[0].mxu0
    %9621 = vmatprep.mubr.f32.mxu0 0.0
    %9622 = vmatmul.mubr.f32.gmra.mrb[0].mxu0 %v9434
    %v9623 = vpop.f32.mrb[0].mxu0
    %v9624 = vadd.f32 0.0, %v9623
    %v9625 = vpop.f32.mrb[0].mxu0
    %9626 = vmatprep.mubr.f32.mxu0 0.0
    %9627 = vmatmul.mubr.f32.gmra.mrb[0].mxu0 %v9437
    %v9628 = vpop.f32.mrb[0].mxu0
    %v9629 = vadd.f32 0.0, %v9628
    %v9630 = vpop.f32.mrb[0].mxu0
    %9631 = vdwg.mxu0
    %v9633 = vsel %vm2262, %v1142, 0
    %v9636 = vsel %vm2262, %v1148, 0
    %v9639 = vsel %vm2262, %v1154, 0
    %v9642 = vsel %vm2262, %v1160, 0
    %v9645 = vsel %vm2262, %v1166, 0
    %v9648 = vsel %vm2262, %v1172, 0
    %v9651 = vsel %vm2262, %v1178, 0
    %v9654 = vsel %vm2262, %v1184, 0
    %v9657 = vsel %vm2262, %v1190, 0
    %v9660 = vsel %vm2262, %v1196, 0
    %v9663 = vsel %vm2262, %v1202, 0
    %v9666 = vsel %vm2262, %v1208, 0
    %v9669 = vsel %vm2262, %v1214, 0
    %v9672 = vsel %vm2262, %v1220, 0
    %v9675 = vsel %vm2262, %v1226, 0
    %v9678 = vsel %vm2262, %v1232, 0
    %v9681 = vsel %vm2262, %v1656, 0
    %v9684 = vsel %vm2262, %v1662, 0
    %v9687 = vsel %vm2262, %v1668, 0
    %v9690 = vsel %vm2262, %v1674, 0
    %v9693 = vsel %vm2262, %v1680, 0
    %v9696 = vsel %vm2262, %v1686, 0
    %v9699 = vsel %vm2262, %v1692, 0
    %v9702 = vsel %vm2262, %v1698, 0
    %v9705 = vsel %vm2262, %v1704, 0
    %v9708 = vsel %vm2262, %v1710, 0
    %v9711 = vsel %vm2262, %v1716, 0
    %v9714 = vsel %vm2262, %v1722, 0
    %v9717 = vsel %vm2262, %v1728, 0
    %v9720 = vsel %vm2262, %v1734, 0
    %v9723 = vsel %vm2262, %v1740, 0
    %v9726 = vsel %vm2262, %v1746, 0
    %9728 = vmatprep.subr.mxu0 0.0
    %9729 = vmatpush1.xpose.msra.mxu0 %v9681
    %9730 = vmatprep.subr.mxu0 0.0
    %9731 = vmatpush1.xpose.msra.mxu0 %v9684
    %9732 = vmatprep.subr.mxu0 0.0
    %9733 = vmatpush1.xpose.msra.mxu0 %v9687
    %9734 = vmatprep.subr.mxu0 0.0
    %9735 = vmatpush1.xpose.msra.mxu0 %v9690
    %9736 = vmatprep.subr.mxu0 0.0
    %9737 = vmatpush1.xpose.msra.mxu0 %v9693
    %9738 = vmatprep.subr.mxu0 0.0
    %9739 = vmatpush1.xpose.msra.mxu0 %v9696
    %9740 = vmatprep.subr.mxu0 0.0
    %9741 = vmatpush1.xpose.msra.mxu0 %v9699
    %9742 = vmatprep.subr.mxu0 0.0
    %9743 = vmatpush1.xpose.msra.mxu0 %v9702
    %9744 = vmatprep.subr.mxu0 0.0
    %9745 = vmatpush1.xpose.msra.mxu0 %v9705
    %9746 = vmatprep.subr.mxu0 0.0
    %9747 = vmatpush1.xpose.msra.mxu0 %v9708
    %9748 = vmatprep.subr.mxu0 0.0
    %9749 = vmatpush1.xpose.msra.mxu0 %v9711
    %9750 = vmatprep.subr.mxu0 0.0
    %9751 = vmatpush1.xpose.msra.mxu0 %v9714
    %9752 = vmatprep.subr.mxu0 0.0
    %9753 = vmatpush1.xpose.msra.mxu0 %v9717
    %9754 = vmatprep.subr.mxu0 0.0
    %9755 = vmatpush1.xpose.msra.mxu0 %v9720
    %9756 = vmatprep.subr.mxu0 0.0
    %9757 = vmatpush1.xpose.msra.mxu0 %v9723
    %9758 = vmatprep.subr.mxu0 0.0
    %9759 = vmatpush1.xpose.msra.mxu0 %v9726
    %9760 = vmatprep.subr.mxu0 0.0
    %9761 = vmatpush1.xpose.msra.mxu0 0.0
    %9762 = vmatprep.subr.mxu0 0.0
    %9763 = vmatpush1.xpose.msra.mxu0 0.0
    %9764 = vmatprep.subr.mxu0 0.0
    %9765 = vmatpush1.xpose.msra.mxu0 0.0
    %9766 = vmatprep.subr.mxu0 0.0
    %9767 = vmatpush1.xpose.msra.mxu0 0.0
    %9768 = vmatprep.subr.mxu0 0.0
    %9769 = vmatpush1.xpose.msra.mxu0 0.0
    %9770 = vmatprep.subr.mxu0 0.0
    %9771 = vmatpush1.xpose.msra.mxu0 0.0
    %9772 = vmatprep.subr.mxu0 0.0
    %9773 = vmatpush1.xpose.msra.mxu0 0.0
    %9774 = vmatprep.subr.mxu0 0.0
    %9775 = vmatpush1.xpose.msra.mxu0 0.0
    %9776 = vmatprep.subr.mxu0 0.0
    %9777 = vmatpush1.xpose.msra.mxu0 0.0
    %9778 = vmatprep.subr.mxu0 0.0
    %9779 = vmatpush1.xpose.msra.mxu0 0.0
    %9780 = vmatprep.subr.mxu0 0.0
    %9781 = vmatpush1.xpose.msra.mxu0 0.0
    %9782 = vmatprep.subr.mxu0 0.0
    %9783 = vmatpush1.xpose.msra.mxu0 0.0
    %9784 = vmatprep.subr.mxu0 0.0
    %9785 = vmatpush1.xpose.msra.mxu0 0.0
    %9786 = vmatprep.subr.mxu0 0.0
    %9787 = vmatpush1.xpose.msra.mxu0 0.0
    %9788 = vmatprep.subr.mxu0 0.0
    %9789 = vmatpush1.xpose.msra.mxu0 0.0
    %9790 = vmatprep.subr.mxu0 0.0
    %9791 = vmatpush1.xpose.msra.mxu0 0.0
    %9792 = vmatprep.mubr.f32.mxu0 0.0
    %9793 = vmatmul.mubr.f32.gmra.mrb[0].mxu0 %v9633
    %v9794 = vpop.f32.mrb[0].mxu0
    %v9795 = vadd.f32 0.0, %v9794
    %v9796 = vpop.f32.mrb[0].mxu0
    %9797 = vmatprep.mubr.f32.mxu0 0.0
    %9798 = vmatmul.mubr.f32.gmra.mrb[0].mxu0 %v9636
    %v9799 = vpop.f32.mrb[0].mxu0
    %v9800 = vadd.f32 0.0, %v9799
    %v9801 = vpop.f32.mrb[0].mxu0
    %9802 = vmatprep.mubr.f32.mxu0 0.0
    %9803 = vmatmul.mubr.f32.gmra.mrb[0].mxu0 %v9639
    %v9804 = vpop.f32.mrb[0].mxu0
    %v9805 = vadd.f32 0.0, %v9804
    %v9806 = vpop.f32.mrb[0].mxu0
    %9807 = vmatprep.mubr.f32.mxu0 0.0
    %9808 = vmatmul.mubr.f32.gmra.mrb[0].mxu0 %v9642
    %v9809 = vpop.f32.mrb[0].mxu0
    %v9810 = vadd.f32 0.0, %v9809
    %v9811 = vpop.f32.mrb[0].mxu0
    %9812 = vmatprep.mubr.f32.mxu0 0.0
    %9813 = vmatmul.mubr.f32.gmra.mrb[0].mxu0 %v9645
    %v9814 = vpop.f32.mrb[0].mxu0
    %v9815 = vadd.f32 0.0, %v9814
    %v9816 = vpop.f32.mrb[0].mxu0
    %9817 = vmatprep.mubr.f32.mxu0 0.0
    %9818 = vmatmul.mubr.f32.gmra.mrb[0].mxu0 %v9648
    %v9819 = vpop.f32.mrb[0].mxu0
    %v9820 = vadd.f32 0.0, %v9819
    %v9821 = vpop.f32.mrb[0].mxu0
    %9822 = vmatprep.mubr.f32.mxu0 0.0
    %9823 = vmatmul.mubr.f32.gmra.mrb[0].mxu0 %v9651
    %v9824 = vpop.f32.mrb[0].mxu0
    %v9825 = vadd.f32 0.0, %v9824
    %v9826 = vpop.f32.mrb[0].mxu0
    %9827 = vmatprep.mubr.f32.mxu0 0.0
    %9828 = vmatmul.mubr.f32.gmra.mrb[0].mxu0 %v9654
    %v9829 = vpop.f32.mrb[0].mxu0
    %v9830 = vadd.f32 0.0, %v9829
    %v9831 = vpop.f32.mrb[0].mxu0
    %9832 = vmatprep.mubr.f32.mxu0 0.0
    %9833 = vmatmul.mubr.f32.gmra.mrb[0].mxu0 %v9657
    %v9834 = vpop.f32.mrb[0].mxu0
    %v9835 = vadd.f32 0.0, %v9834
    %v9836 = vpop.f32.mrb[0].mxu0
    %9837 = vmatprep.mubr.f32.mxu0 0.0
    %9838 = vmatmul.mubr.f32.gmra.mrb[0].mxu0 %v9660
    %v9839 = vpop.f32.mrb[0].mxu0
    %v9840 = vadd.f32 0.0, %v9839
    %v9841 = vpop.f32.mrb[0].mxu0
    %9842 = vmatprep.mubr.f32.mxu0 0.0
    %9843 = vmatmul.mubr.f32.gmra.mrb[0].mxu0 %v9663
    %v9844 = vpop.f32.mrb[0].mxu0
    %v9845 = vadd.f32 0.0, %v9844
    %v9846 = vpop.f32.mrb[0].mxu0
    %9847 = vmatprep.mubr.f32.mxu0 0.0
    %9848 = vmatmul.mubr.f32.gmra.mrb[0].mxu0 %v9666
    %v9849 = vpop.f32.mrb[0].mxu0
    %v9850 = vadd.f32 0.0, %v9849
    %v9851 = vpop.f32.mrb[0].mxu0
    %9852 = vmatprep.mubr.f32.mxu0 0.0
    %9853 = vmatmul.mubr.f32.gmra.mrb[0].mxu0 %v9669
    %v9854 = vpop.f32.mrb[0].mxu0
    %v9855 = vadd.f32 0.0, %v9854
    %v9856 = vpop.f32.mrb[0].mxu0
    %9857 = vmatprep.mubr.f32.mxu0 0.0
    %9858 = vmatmul.mubr.f32.gmra.mrb[0].mxu0 %v9672
    %v9859 = vpop.f32.mrb[0].mxu0
    %v9860 = vadd.f32 0.0, %v9859
    %v9861 = vpop.f32.mrb[0].mxu0
    %9862 = vmatprep.mubr.f32.mxu0 0.0
    %9863 = vmatmul.mubr.f32.gmra.mrb[0].mxu0 %v9675
    %v9864 = vpop.f32.mrb[0].mxu0
    %v9865 = vadd.f32 0.0, %v9864
    %v9866 = vpop.f32.mrb[0].mxu0
    %9867 = vmatprep.mubr.f32.mxu0 0.0
    %9868 = vmatmul.mubr.f32.gmra.mrb[0].mxu0 %v9678
    %v9869 = vpop.f32.mrb[0].mxu0
    %v9870 = vadd.f32 0.0, %v9869
    %v9871 = vpop.f32.mrb[0].mxu0
    %9872 = vdwg.mxu0
    %v9873 = vmul.f32 %v9554, 0.125
    %v9874 = vmul.f32 %v9559, 0.125
    %v9875 = vmul.f32 %v9564, 0.125
    %v9876 = vmul.f32 %v9569, 0.125
    %v9877 = vmul.f32 %v9574, 0.125
    %v9878 = vmul.f32 %v9579, 0.125
    %v9879 = vmul.f32 %v9584, 0.125
    %v9880 = vmul.f32 %v9589, 0.125
    %v9881 = vmul.f32 %v9594, 0.125
    %v9882 = vmul.f32 %v9599, 0.125
    %v9883 = vmul.f32 %v9604, 0.125
    %v9884 = vmul.f32 %v9609, 0.125
    %v9885 = vmul.f32 %v9614, 0.125
    %v9886 = vmul.f32 %v9619, 0.125
    %v9887 = vmul.f32 %v9624, 0.125
    %v9888 = vmul.f32 %v9629, 0.125
    %v9889 = vmul.f32 %v9795, 0.125
    %v9890 = vmul.f32 %v9800, 0.125
    %v9891 = vmul.f32 %v9805, 0.125
    %v9892 = vmul.f32 %v9810, 0.125
    %v9893 = vmul.f32 %v9815, 0.125
    %v9894 = vmul.f32 %v9820, 0.125
    %v9895 = vmul.f32 %v9825, 0.125
    %v9896 = vmul.f32 %v9830, 0.125
    %v9897 = vmul.f32 %v9835, 0.125
    %v9898 = vmul.f32 %v9840, 0.125
    %v9899 = vmul.f32 %v9845, 0.125
    %v9900 = vmul.f32 %v9850, 0.125
    %v9901 = vmul.f32 %v9855, 0.125
    %v9902 = vmul.f32 %v9860, 0.125
    %v9903 = vmul.f32 %v9865, 0.125
    %v9904 = vmul.f32 %v9870, 0.125
    %9905 = vmax.xlane.f32.xlu0 %v9873
    %v9906 = vpop.xlane.xlu0 %9905
    %9907 = vmax.xlane.f32.xlu0 %v9874
    %v9908 = vpop.xlane.xlu0 %9907
    %9909 = vmax.xlane.f32.xlu0 %v9875
    %v9910 = vpop.xlane.xlu0 %9909
    %9911 = vmax.xlane.f32.xlu0 %v9876
    %v9912 = vpop.xlane.xlu0 %9911
    %9913 = vmax.xlane.f32.xlu0 %v9877
    %v9914 = vpop.xlane.xlu0 %9913
    %9915 = vmax.xlane.f32.xlu0 %v9878
    %v9916 = vpop.xlane.xlu0 %9915
    %9917 = vmax.xlane.f32.xlu0 %v9879
    %v9918 = vpop.xlane.xlu0 %9917
    %9919 = vmax.xlane.f32.xlu0 %v9880
    %v9920 = vpop.xlane.xlu0 %9919
    %9921 = vmax.xlane.f32.xlu0 %v9881
    %v9922 = vpop.xlane.xlu0 %9921
    %9923 = vmax.xlane.f32.xlu0 %v9882
    %v9924 = vpop.xlane.xlu0 %9923
    %9925 = vmax.xlane.f32.xlu0 %v9883
    %v9926 = vpop.xlane.xlu0 %9925
    %9927 = vmax.xlane.f32.xlu0 %v9884
    %v9928 = vpop.xlane.xlu0 %9927
    %9929 = vmax.xlane.f32.xlu0 %v9885
    %v9930 = vpop.xlane.xlu0 %9929
    %9931 = vmax.xlane.f32.xlu0 %v9886
    %v9932 = vpop.xlane.xlu0 %9931
    %9933 = vmax.xlane.f32.xlu0 %v9887
    %v9934 = vpop.xlane.xlu0 %9933
    %9935 = vmax.xlane.f32.xlu0 %v9888
    %v9936 = vpop.xlane.xlu0 %9935
    %9937 = vmax.xlane.f32.xlu0 %v9889
    %v9938 = vpop.xlane.xlu0 %9937
    %9939 = vmax.xlane.f32.xlu0 %v9890
    %v9940 = vpop.xlane.xlu0 %9939
    %9941 = vmax.xlane.f32.xlu0 %v9891
    %v9942 = vpop.xlane.xlu0 %9941
    %9943 = vmax.xlane.f32.xlu0 %v9892
    %v9944 = vpop.xlane.xlu0 %9943
    %9945 = vmax.xlane.f32.xlu0 %v9893
    %v9946 = vpop.xlane.xlu0 %9945
    %9947 = vmax.xlane.f32.xlu0 %v9894
    %v9948 = vpop.xlane.xlu0 %9947
    %9949 = vmax.xlane.f32.xlu0 %v9895
    %v9950 = vpop.xlane.xlu0 %9949
    %9951 = vmax.xlane.f32.xlu0 %v9896
    %v9952 = vpop.xlane.xlu0 %9951
    %9953 = vmax.xlane.f32.xlu0 %v9897
    %v9954 = vpop.xlane.xlu0 %9953
    %9955 = vmax.xlane.f32.xlu0 %v9898
    %v9956 = vpop.xlane.xlu0 %9955
    %9957 = vmax.xlane.f32.xlu0 %v9899
    %v9958 = vpop.xlane.xlu0 %9957
    %9959 = vmax.xlane.f32.xlu0 %v9900
    %v9960 = vpop.xlane.xlu0 %9959
    %9961 = vmax.xlane.f32.xlu0 %v9901
    %v9962 = vpop.xlane.xlu0 %9961
    %9963 = vmax.xlane.f32.xlu0 %v9902
    %v9964 = vpop.xlane.xlu0 %9963
    %9965 = vmax.xlane.f32.xlu0 %v9903
    %v9966 = vpop.xlane.xlu0 %9965
    %9967 = vmax.xlane.f32.xlu0 %v9904
    %v9968 = vpop.xlane.xlu0 %9967
    %v9969 = vsub.f32 %v9873, %v9906
    %v9970 = vsub.f32 %v9874, %v9908
    %v9971 = vsub.f32 %v9875, %v9910
    %v9972 = vsub.f32 %v9876, %v9912
    %v9973 = vsub.f32 %v9877, %v9914
    %v9974 = vsub.f32 %v9878, %v9916
    %v9975 = vsub.f32 %v9879, %v9918
    %v9976 = vsub.f32 %v9880, %v9920
    %v9977 = vsub.f32 %v9881, %v9922
    %v9978 = vsub.f32 %v9882, %v9924
    %v9979 = vsub.f32 %v9883, %v9926
    %v9980 = vsub.f32 %v9884, %v9928
    %v9981 = vsub.f32 %v9885, %v9930
    %v9982 = vsub.f32 %v9886, %v9932
    %v9983 = vsub.f32 %v9887, %v9934
    %v9984 = vsub.f32 %v9888, %v9936
    %v9985 = vsub.f32 %v9889, %v9938
    %v9986 = vsub.f32 %v9890, %v9940
    %v9987 = vsub.f32 %v9891, %v9942
    %v9988 = vsub.f32 %v9892, %v9944
    %v9989 = vsub.f32 %v9893, %v9946
    %v9990 = vsub.f32 %v9894, %v9948
    %v9991 = vsub.f32 %v9895, %v9950
    %v9992 = vsub.f32 %v9896, %v9952
    %v9993 = vsub.f32 %v9897, %v9954
    %v9994 = vsub.f32 %v9898, %v9956
    %v9995 = vsub.f32 %v9899, %v9958
    %v9996 = vsub.f32 %v9900, %v9960
    %v9997 = vsub.f32 %v9901, %v9962
    %v9998 = vsub.f32 %v9902, %v9964
    %v9999 = vsub.f32 %v9903, %v9966
    %v10000 = vsub.f32 %v9904, %v9968
    %v10001 = vmul.f32 %v9969, 1.442695
    %v10002 = vpow.pop %v10001
    %v10003 = vmul.f32 %v9970, 1.442695
    %v10004 = vpow.pop %v10003
    %v10005 = vmul.f32 %v9971, 1.442695
    %v10006 = vpow.pop %v10005
    %v10007 = vmul.f32 %v9972, 1.442695
    %v10008 = vpow.pop %v10007
    %v10009 = vmul.f32 %v9973, 1.442695
    %v10010 = vpow.pop %v10009
    %v10011 = vmul.f32 %v9974, 1.442695
    %v10012 = vpow.pop %v10011
    %v10013 = vmul.f32 %v9975, 1.442695
    %v10014 = vpow.pop %v10013
    %v10015 = vmul.f32 %v9976, 1.442695
    %v10016 = vpow.pop %v10015
    %v10017 = vmul.f32 %v9977, 1.442695
    %v10018 = vpow.pop %v10017
    %v10019 = vmul.f32 %v9978, 1.442695
    %v10020 = vpow.pop %v10019
    %v10021 = vmul.f32 %v9979, 1.442695
    %v10022 = vpow.pop %v10021
    %v10023 = vmul.f32 %v9980, 1.442695
    %v10024 = vpow.pop %v10023
    %v10025 = vmul.f32 %v9981, 1.442695
    %v10026 = vpow.pop %v10025
    %v10027 = vmul.f32 %v9982, 1.442695
    %v10028 = vpow.pop %v10027
    %v10029 = vmul.f32 %v9983, 1.442695
    %v10030 = vpow.pop %v10029
    %v10031 = vmul.f32 %v9984, 1.442695
    %v10032 = vpow.pop %v10031
    %v10033 = vmul.f32 %v9985, 1.442695
    %v10034 = vpow.pop %v10033
    %v10035 = vmul.f32 %v9986, 1.442695
    %v10036 = vpow.pop %v10035
    %v10037 = vmul.f32 %v9987, 1.442695
    %v10038 = vpow.pop %v10037
    %v10039 = vmul.f32 %v9988, 1.442695
    %v10040 = vpow.pop %v10039
    %v10041 = vmul.f32 %v9989, 1.442695
    %v10042 = vpow.pop %v10041
    %v10043 = vmul.f32 %v9990, 1.442695
    %v10044 = vpow.pop %v10043
    %v10045 = vmul.f32 %v9991, 1.442695
    %v10046 = vpow.pop %v10045
    %v10047 = vmul.f32 %v9992, 1.442695
    %v10048 = vpow.pop %v10047
    %v10049 = vmul.f32 %v9993, 1.442695
    %v10050 = vpow.pop %v10049
    %v10051 = vmul.f32 %v9994, 1.442695
    %v10052 = vpow.pop %v10051
    %v10053 = vmul.f32 %v9995, 1.442695
    %v10054 = vpow.pop %v10053
    %v10055 = vmul.f32 %v9996, 1.442695
    %v10056 = vpow.pop %v10055
    %v10057 = vmul.f32 %v9997, 1.442695
    %v10058 = vpow.pop %v10057
    %v10059 = vmul.f32 %v9998, 1.442695
    %v10060 = vpow.pop %v10059
    %v10061 = vmul.f32 %v9999, 1.442695
    %v10062 = vpow.pop %v10061
    %v10063 = vmul.f32 %v10000, 1.442695
    %v10064 = vpow.pop %v10063
    %10065 = vadd.xlane.f32.xlu0 %v10002
    %v10066 = vpop.xlane.xlu0 %10065
    %10067 = vadd.xlane.f32.xlu0 %v10004
    %v10068 = vpop.xlane.xlu0 %10067
    %10069 = vadd.xlane.f32.xlu0 %v10006
    %v10070 = vpop.xlane.xlu0 %10069
    %10071 = vadd.xlane.f32.xlu0 %v10008
    %v10072 = vpop.xlane.xlu0 %10071
    %10073 = vadd.xlane.f32.xlu0 %v10010
    %v10074 = vpop.xlane.xlu0 %10073
    %10075 = vadd.xlane.f32.xlu0 %v10012
    %v10076 = vpop.xlane.xlu0 %10075
    %10077 = vadd.xlane.f32.xlu0 %v10014
    %v10078 = vpop.xlane.xlu0 %10077
    %10079 = vadd.xlane.f32.xlu0 %v10016
    %v10080 = vpop.xlane.xlu0 %10079
    %10081 = vadd.xlane.f32.xlu0 %v10018
    %v10082 = vpop.xlane.xlu0 %10081
    %10083 = vadd.xlane.f32.xlu0 %v10020
    %v10084 = vpop.xlane.xlu0 %10083
    %10085 = vadd.xlane.f32.xlu0 %v10022
    %v10086 = vpop.xlane.xlu0 %10085
    %10087 = vadd.xlane.f32.xlu0 %v10024
    %v10088 = vpop.xlane.xlu0 %10087
    %10089 = vadd.xlane.f32.xlu0 %v10026
    %v10090 = vpop.xlane.xlu0 %10089
    %10091 = vadd.xlane.f32.xlu0 %v10028
    %v10092 = vpop.xlane.xlu0 %10091
    %10093 = vadd.xlane.f32.xlu0 %v10030
    %v10094 = vpop.xlane.xlu0 %10093
    %10095 = vadd.xlane.f32.xlu0 %v10032
    %v10096 = vpop.xlane.xlu0 %10095
    %10097 = vadd.xlane.f32.xlu0 %v10034
    %v10098 = vpop.xlane.xlu0 %10097
    %10099 = vadd.xlane.f32.xlu0 %v10036
    %v10100 = vpop.xlane.xlu0 %10099
    %10101 = vadd.xlane.f32.xlu0 %v10038
    %v10102 = vpop.xlane.xlu0 %10101
    %10103 = vadd.xlane.f32.xlu0 %v10040
    %v10104 = vpop.xlane.xlu0 %10103
    %10105 = vadd.xlane.f32.xlu0 %v10042
    %v10106 = vpop.xlane.xlu0 %10105
    %10107 = vadd.xlane.f32.xlu0 %v10044
    %v10108 = vpop.xlane.xlu0 %10107
    %10109 = vadd.xlane.f32.xlu0 %v10046
    %v10110 = vpop.xlane.xlu0 %10109
    %10111 = vadd.xlane.f32.xlu0 %v10048
    %v10112 = vpop.xlane.xlu0 %10111
    %10113 = vadd.xlane.f32.xlu0 %v10050
    %v10114 = vpop.xlane.xlu0 %10113
    %10115 = vadd.xlane.f32.xlu0 %v10052
    %v10116 = vpop.xlane.xlu0 %10115
    %10117 = vadd.xlane.f32.xlu0 %v10054
    %v10118 = vpop.xlane.xlu0 %10117
    %10119 = vadd.xlane.f32.xlu0 %v10056
    %v10120 = vpop.xlane.xlu0 %10119
    %10121 = vadd.xlane.f32.xlu0 %v10058
    %v10122 = vpop.xlane.xlu0 %10121
    %10123 = vadd.xlane.f32.xlu0 %v10060
    %v10124 = vpop.xlane.xlu0 %10123
    %10125 = vadd.xlane.f32.xlu0 %v10062
    %v10126 = vpop.xlane.xlu0 %10125
    %10127 = vadd.xlane.f32.xlu0 %v10064
    %v10128 = vpop.xlane.xlu0 %10127
    %v10129 = vrcp.pop %v10066
    %v10130 = vrcp.pop %v10068
    %v10131 = vrcp.pop %v10070
    %v10132 = vrcp.pop %v10072
    %v10133 = vrcp.pop %v10074
    %v10134 = vrcp.pop %v10076
    %v10135 = vrcp.pop %v10078
    %v10136 = vrcp.pop %v10080
    %v10137 = vrcp.pop %v10082
    %v10138 = vrcp.pop %v10084
    %v10139 = vrcp.pop %v10086
    %v10140 = vrcp.pop %v10088
    %v10141 = vrcp.pop %v10090
    %v10142 = vrcp.pop %v10092
    %v10143 = vrcp.pop %v10094
    %v10144 = vrcp.pop %v10096
    %v10145 = vrcp.pop %v10098
    %v10146 = vrcp.pop %v10100
    %v10147 = vrcp.pop %v10102
    %v10148 = vrcp.pop %v10104
    %v10149 = vrcp.pop %v10106
    %v10150 = vrcp.pop %v10108
    %v10151 = vrcp.pop %v10110
    %v10152 = vrcp.pop %v10112
    %v10153 = vrcp.pop %v10114
    %v10154 = vrcp.pop %v10116
    %v10155 = vrcp.pop %v10118
    %v10156 = vrcp.pop %v10120
    %v10157 = vrcp.pop %v10122
    %v10158 = vrcp.pop %v10124
    %v10159 = vrcp.pop %v10126
    %v10160 = vrcp.pop %v10128
    %v10161 = vmul.f32 %v10002, %v10129
    %v10162 = vmul.f32 %v10004, %v10130
    %v10163 = vmul.f32 %v10006, %v10131
    %v10164 = vmul.f32 %v10008, %v10132
    %v10165 = vmul.f32 %v10010, %v10133
    %v10166 = vmul.f32 %v10012, %v10134
    %v10167 = vmul.f32 %v10014, %v10135
    %v10168 = vmul.f32 %v10016, %v10136
    %v10169 = vmul.f32 %v10018, %v10137
    %v10170 = vmul.f32 %v10020, %v10138
    %v10171 = vmul.f32 %v10022, %v10139
    %v10172 = vmul.f32 %v10024, %v10140
    %v10173 = vmul.f32 %v10026, %v10141
    %v10174 = vmul.f32 %v10028, %v10142
    %v10175 = vmul.f32 %v10030, %v10143
    %v10176 = vmul.f32 %v10032, %v10144
    %v10177 = vmul.f32 %v10034, %v10145
    %v10178 = vmul.f32 %v10036, %v10146
    %v10179 = vmul.f32 %v10038, %v10147
    %v10180 = vmul.f32 %v10040, %v10148
    %v10181 = vmul.f32 %v10042, %v10149
    %v10182 = vmul.f32 %v10044, %v10150
    %v10183 = vmul.f32 %v10046, %v10151
    %v10184 = vmul.f32 %v10048, %v10152
    %v10185 = vmul.f32 %v10050, %v10153
    %v10186 = vmul.f32 %v10052, %v10154
    %v10187 = vmul.f32 %v10054, %v10155
    %v10188 = vmul.f32 %v10056, %v10156
    %v10189 = vmul.f32 %v10058, %v10157
    %v10190 = vmul.f32 %v10060, %v10158
    %v10191 = vmul.f32 %v10062, %v10159
    %v10192 = vmul.f32 %v10064, %v10160
    %10193 = vmatprep.subr.mxu0 0.0
    %10194 = vmatpush1.msra.mxu0 %v2074
    %10195 = vmatprep.subr.mxu0 0.0
    %10196 = vmatpush1.msra.mxu0 %v2080
    %10197 = vmatprep.subr.mxu0 0.0
    %10198 = vmatpush1.msra.mxu0 %v2086
    %10199 = vmatprep.subr.mxu0 0.0
    %10200 = vmatpush1.msra.mxu0 %v2092
    %10201 = vmatprep.subr.mxu0 0.0
    %10202 = vmatpush1.msra.mxu0 %v2098
    %10203 = vmatprep.subr.mxu0 0.0
    %10204 = vmatpush1.msra.mxu0 %v2104
    %10205 = vmatprep.subr.mxu0 0.0
    %10206 = vmatpush1.msra.mxu0 %v2110
    %10207 = vmatprep.subr.mxu0 0.0
    %10208 = vmatpush1.msra.mxu0 %v2116
    %10209 = vmatprep.subr.mxu0 0.0
    %10210 = vmatpush1.msra.mxu0 %v2122
    %10211 = vmatprep.subr.mxu0 0.0
    %10212 = vmatpush1.msra.mxu0 %v2128
    %10213 = vmatprep.subr.mxu0 0.0
    %10214 = vmatpush1.msra.mxu0 %v2134
    %10215 = vmatprep.subr.mxu0 0.0
    %10216 = vmatpush1.msra.mxu0 %v2140
    %10217 = vmatprep.subr.mxu0 0.0
    %10218 = vmatpush1.msra.mxu0 %v2146
    %10219 = vmatprep.subr.mxu0 0.0
    %10220 = vmatpush1.msra.mxu0 %v2152
    %10221 = vmatprep.subr.mxu0 0.0
    %10222 = vmatpush1.msra.mxu0 %v2158
    %10223 = vmatprep.subr.mxu0 0.0
    %10224 = vmatpush1.msra.mxu0 %v2164
    %10225 = vmatprep.subr.mxu0 0.0
    %10226 = vmatpush1.msra.mxu0 0.0
    %10227 = vmatprep.subr.mxu0 0.0
    %10228 = vmatpush1.msra.mxu0 0.0
    %10229 = vmatprep.subr.mxu0 0.0
    %10230 = vmatpush1.msra.mxu0 0.0
    %10231 = vmatprep.subr.mxu0 0.0
    %10232 = vmatpush1.msra.mxu0 0.0
    %10233 = vmatprep.subr.mxu0 0.0
    %10234 = vmatpush1.msra.mxu0 0.0
    %10235 = vmatprep.subr.mxu0 0.0
    %10236 = vmatpush1.msra.mxu0 0.0
    %10237 = vmatprep.subr.mxu0 0.0
    %10238 = vmatpush1.msra.mxu0 0.0
    %10239 = vmatprep.subr.mxu0 0.0
    %10240 = vmatpush1.msra.mxu0 0.0
    %10241 = vmatprep.subr.mxu0 0.0
    %10242 = vmatpush1.msra.mxu0 0.0
    %10243 = vmatprep.subr.mxu0 0.0
    %10244 = vmatpush1.msra.mxu0 0.0
    %10245 = vmatprep.subr.mxu0 0.0
    %10246 = vmatpush1.msra.mxu0 0.0
    %10247 = vmatprep.subr.mxu0 0.0
    %10248 = vmatpush1.msra.mxu0 0.0
    %10249 = vmatprep.subr.mxu0 0.0
    %10250 = vmatpush1.msra.mxu0 0.0
    %10251 = vmatprep.subr.mxu0 0.0
    %10252 = vmatpush1.msra.mxu0 0.0
    %10253 = vmatprep.subr.mxu0 0.0
    %10254 = vmatpush1.msra.mxu0 0.0
    %10255 = vmatprep.subr.mxu0 0.0
    %10256 = vmatpush1.msra.mxu0 0.0
    %10257 = vmatprep.mubr.f32.mxu0 0.0
    %10258 = vmatmul.mubr.f32.gmra.mrb[0].mxu0 %v10161
    %v10259 = vpop.f32.mrb[0].mxu0
    %v10260 = vadd.f32 0.0, %v10259
    %v10261 = vpop.f32.mrb[0].mxu0
    %10262 = vmatprep.mubr.f32.mxu0 0.0
    %10263 = vmatmul.mubr.f32.gmra.mrb[0].mxu0 %v10162
    %v10264 = vpop.f32.mrb[0].mxu0
    %v10265 = vadd.f32 0.0, %v10264
    %v10266 = vpop.f32.mrb[0].mxu0
    %10267 = vmatprep.mubr.f32.mxu0 0.0
    %10268 = vmatmul.mubr.f32.gmra.mrb[0].mxu0 %v10163
    %v10269 = vpop.f32.mrb[0].mxu0
    %v10270 = vadd.f32 0.0, %v10269
    %v10271 = vpop.f32.mrb[0].mxu0
    %10272 = vmatprep.mubr.f32.mxu0 0.0
    %10273 = vmatmul.mubr.f32.gmra.mrb[0].mxu0 %v10164
    %v10274 = vpop.f32.mrb[0].mxu0
    %v10275 = vadd.f32 0.0, %v10274
    %v10276 = vpop.f32.mrb[0].mxu0
    %10277 = vmatprep.mubr.f32.mxu0 0.0
    %10278 = vmatmul.mubr.f32.gmra.mrb[0].mxu0 %v10165
    %v10279 = vpop.f32.mrb[0].mxu0
    %v10280 = vadd.f32 0.0, %v10279
    %v10281 = vpop.f32.mrb[0].mxu0
    %10282 = vmatprep.mubr.f32.mxu0 0.0
    %10283 = vmatmul.mubr.f32.gmra.mrb[0].mxu0 %v10166
    %v10284 = vpop.f32.mrb[0].mxu0
    %v10285 = vadd.f32 0.0, %v10284
    %v10286 = vpop.f32.mrb[0].mxu0
    %10287 = vmatprep.mubr.f32.mxu0 0.0
    %10288 = vmatmul.mubr.f32.gmra.mrb[0].mxu0 %v10167
    %v10289 = vpop.f32.mrb[0].mxu0
    %v10290 = vadd.f32 0.0, %v10289
    %v10291 = vpop.f32.mrb[0].mxu0
    %10292 = vmatprep.mubr.f32.mxu0 0.0
    %10293 = vmatmul.mubr.f32.gmra.mrb[0].mxu0 %v10168
    %v10294 = vpop.f32.mrb[0].mxu0
    %v10295 = vadd.f32 0.0, %v10294
    %v10296 = vpop.f32.mrb[0].mxu0
    %10297 = vmatprep.mubr.f32.mxu0 0.0
    %10298 = vmatmul.mubr.f32.gmra.mrb[0].mxu0 %v10169
    %v10299 = vpop.f32.mrb[0].mxu0
    %v10300 = vadd.f32 0.0, %v10299
    %v10301 = vpop.f32.mrb[0].mxu0
    %10302 = vmatprep.mubr.f32.mxu0 0.0
    %10303 = vmatmul.mubr.f32.gmra.mrb[0].mxu0 %v10170
    %v10304 = vpop.f32.mrb[0].mxu0
    %v10305 = vadd.f32 0.0, %v10304
    %v10306 = vpop.f32.mrb[0].mxu0
    %10307 = vmatprep.mubr.f32.mxu0 0.0
    %10308 = vmatmul.mubr.f32.gmra.mrb[0].mxu0 %v10171
    %v10309 = vpop.f32.mrb[0].mxu0
    %v10310 = vadd.f32 0.0, %v10309
    %v10311 = vpop.f32.mrb[0].mxu0
    %10312 = vmatprep.mubr.f32.mxu0 0.0
    %10313 = vmatmul.mubr.f32.gmra.mrb[0].mxu0 %v10172
    %v10314 = vpop.f32.mrb[0].mxu0
    %v10315 = vadd.f32 0.0, %v10314
    %v10316 = vpop.f32.mrb[0].mxu0
    %10317 = vmatprep.mubr.f32.mxu0 0.0
    %10318 = vmatmul.mubr.f32.gmra.mrb[0].mxu0 %v10173
    %v10319 = vpop.f32.mrb[0].mxu0
    %v10320 = vadd.f32 0.0, %v10319
    %v10321 = vpop.f32.mrb[0].mxu0
    %10322 = vmatprep.mubr.f32.mxu0 0.0
    %10323 = vmatmul.mubr.f32.gmra.mrb[0].mxu0 %v10174
    %v10324 = vpop.f32.mrb[0].mxu0
    %v10325 = vadd.f32 0.0, %v10324
    %v10326 = vpop.f32.mrb[0].mxu0
    %10327 = vmatprep.mubr.f32.mxu0 0.0
    %10328 = vmatmul.mubr.f32.gmra.mrb[0].mxu0 %v10175
    %v10329 = vpop.f32.mrb[0].mxu0
    %v10330 = vadd.f32 0.0, %v10329
    %v10331 = vpop.f32.mrb[0].mxu0
    %10332 = vmatprep.mubr.f32.mxu0 0.0
    %10333 = vmatmul.mubr.f32.gmra.mrb[0].mxu0 %v10176
    %v10334 = vpop.f32.mrb[0].mxu0
    %v10335 = vadd.f32 0.0, %v10334
    %v10336 = vpop.f32.mrb[0].mxu0
    %10337 = vdwg.mxu0
    %10338 = vmatprep.subr.mxu0 0.0
    %10339 = vmatpush1.msra.mxu0 %v2170
    %10340 = vmatprep.subr.mxu0 0.0
    %10341 = vmatpush1.msra.mxu0 %v2176
    %10342 = vmatprep.subr.mxu0 0.0
    %10343 = vmatpush1.msra.mxu0 %v2182
    %10344 = vmatprep.subr.mxu0 0.0
    %10345 = vmatpush1.msra.mxu0 %v2188
    %10346 = vmatprep.subr.mxu0 0.0
    %10347 = vmatpush1.msra.mxu0 %v2194
    %10348 = vmatprep.subr.mxu0 0.0
    %10349 = vmatpush1.msra.mxu0 %v2200
    %10350 = vmatprep.subr.mxu0 0.0
    %10351 = vmatpush1.msra.mxu0 %v2206
    %10352 = vmatprep.subr.mxu0 0.0
    %10353 = vmatpush1.msra.mxu0 %v2212
    %10354 = vmatprep.subr.mxu0 0.0
    %10355 = vmatpush1.msra.mxu0 %v2218
    %10356 = vmatprep.subr.mxu0 0.0
    %10357 = vmatpush1.msra.mxu0 %v2224
    %10358 = vmatprep.subr.mxu0 0.0
    %10359 = vmatpush1.msra.mxu0 %v2230
    %10360 = vmatprep.subr.mxu0 0.0
    %10361 = vmatpush1.msra.mxu0 %v2236
    %10362 = vmatprep.subr.mxu0 0.0
    %10363 = vmatpush1.msra.mxu0 %v2242
    %10364 = vmatprep.subr.mxu0 0.0
    %10365 = vmatpush1.msra.mxu0 %v2248
    %10366 = vmatprep.subr.mxu0 0.0
    %10367 = vmatpush1.msra.mxu0 %v2254
    %10368 = vmatprep.subr.mxu0 0.0
    %10369 = vmatpush1.msra.mxu0 %v2260
    %10370 = vmatprep.subr.mxu0 0.0
    %10371 = vmatpush1.msra.mxu0 0.0
    %10372 = vmatprep.subr.mxu0 0.0
    %10373 = vmatpush1.msra.mxu0 0.0
    %10374 = vmatprep.subr.mxu0 0.0
    %10375 = vmatpush1.msra.mxu0 0.0
    %10376 = vmatprep.subr.mxu0 0.0
    %10377 = vmatpush1.msra.mxu0 0.0
    %10378 = vmatprep.subr.mxu0 0.0
    %10379 = vmatpush1.msra.mxu0 0.0
    %10380 = vmatprep.subr.mxu0 0.0
    %10381 = vmatpush1.msra.mxu0 0.0
    %10382 = vmatprep.subr.mxu0 0.0
    %10383 = vmatpush1.msra.mxu0 0.0
    %10384 = vmatprep.subr.mxu0 0.0
    %10385 = vmatpush1.msra.mxu0 0.0
    %10386 = vmatprep.subr.mxu0 0.0
    %10387 = vmatpush1.msra.mxu0 0.0
    %10388 = vmatprep.subr.mxu0 0.0
    %10389 = vmatpush1.msra.mxu0 0.0
    %10390 = vmatprep.subr.mxu0 0.0
    %10391 = vmatpush1.msra.mxu0 0.0
    %10392 = vmatprep.subr.mxu0 0.0
    %10393 = vmatpush1.msra.mxu0 0.0
    %10394 = vmatprep.subr.mxu0 0.0
    %10395 = vmatpush1.msra.mxu0 0.0
    %10396 = vmatprep.subr.mxu0 0.0
    %10397 = vmatpush1.msra.mxu0 0.0
    %10398 = vmatprep.subr.mxu0 0.0
    %10399 = vmatpush1.msra.mxu0 0.0
    %10400 = vmatprep.subr.mxu0 0.0
    %10401 = vmatpush1.msra.mxu0 0.0
    %10402 = vmatprep.mubr.f32.mxu0 0.0
    %10403 = vmatmul.mubr.f32.gmra.mrb[0].mxu0 %v10177
    %v10404 = vpop.f32.mrb[0].mxu0
    %v10405 = vadd.f32 0.0, %v10404
    %v10406 = vpop.f32.mrb[0].mxu0
    %10407 = vmatprep.mubr.f32.mxu0 0.0
    %10408 = vmatmul.mubr.f32.gmra.mrb[0].mxu0 %v10178
    %v10409 = vpop.f32.mrb[0].mxu0
    %v10410 = vadd.f32 0.0, %v10409
    %v10411 = vpop.f32.mrb[0].mxu0
    %10412 = vmatprep.mubr.f32.mxu0 0.0
    %10413 = vmatmul.mubr.f32.gmra.mrb[0].mxu0 %v10179
    %v10414 = vpop.f32.mrb[0].mxu0
    %v10415 = vadd.f32 0.0, %v10414
    %v10416 = vpop.f32.mrb[0].mxu0
    %10417 = vmatprep.mubr.f32.mxu0 0.0
    %10418 = vmatmul.mubr.f32.gmra.mrb[0].mxu0 %v10180
    %v10419 = vpop.f32.mrb[0].mxu0
    %v10420 = vadd.f32 0.0, %v10419
    %v10421 = vpop.f32.mrb[0].mxu0
    %10422 = vmatprep.mubr.f32.mxu0 0.0
    %10423 = vmatmul.mubr.f32.gmra.mrb[0].mxu0 %v10181
    %v10424 = vpop.f32.mrb[0].mxu0
    %v10425 = vadd.f32 0.0, %v10424
    %v10426 = vpop.f32.mrb[0].mxu0
    %10427 = vmatprep.mubr.f32.mxu0 0.0
    %10428 = vmatmul.mubr.f32.gmra.mrb[0].mxu0 %v10182
    %v10429 = vpop.f32.mrb[0].mxu0
    %v10430 = vadd.f32 0.0, %v10429
    %v10431 = vpop.f32.mrb[0].mxu0
    %10432 = vmatprep.mubr.f32.mxu0 0.0
    %10433 = vmatmul.mubr.f32.gmra.mrb[0].mxu0 %v10183
    %v10434 = vpop.f32.mrb[0].mxu0
    %v10435 = vadd.f32 0.0, %v10434
    %v10436 = vpop.f32.mrb[0].mxu0
    %10437 = vmatprep.mubr.f32.mxu0 0.0
    %10438 = vmatmul.mubr.f32.gmra.mrb[0].mxu0 %v10184
    %v10439 = vpop.f32.mrb[0].mxu0
    %v10440 = vadd.f32 0.0, %v10439
    %v10441 = vpop.f32.mrb[0].mxu0
    %10442 = vmatprep.mubr.f32.mxu0 0.0
    %10443 = vmatmul.mubr.f32.gmra.mrb[0].mxu0 %v10185
    %v10444 = vpop.f32.mrb[0].mxu0
    %v10445 = vadd.f32 0.0, %v10444
    %v10446 = vpop.f32.mrb[0].mxu0
    %10447 = vmatprep.mubr.f32.mxu0 0.0
    %10448 = vmatmul.mubr.f32.gmra.mrb[0].mxu0 %v10186
    %v10449 = vpop.f32.mrb[0].mxu0
    %v10450 = vadd.f32 0.0, %v10449
    %v10451 = vpop.f32.mrb[0].mxu0
    %10452 = vmatprep.mubr.f32.mxu0 0.0
    %10453 = vmatmul.mubr.f32.gmra.mrb[0].mxu0 %v10187
    %v10454 = vpop.f32.mrb[0].mxu0
    %v10455 = vadd.f32 0.0, %v10454
    %v10456 = vpop.f32.mrb[0].mxu0
    %10457 = vmatprep.mubr.f32.mxu0 0.0
    %10458 = vmatmul.mubr.f32.gmra.mrb[0].mxu0 %v10188
    %v10459 = vpop.f32.mrb[0].mxu0
    %v10460 = vadd.f32 0.0, %v10459
    %v10461 = vpop.f32.mrb[0].mxu0
    %10462 = vmatprep.mubr.f32.mxu0 0.0
    %10463 = vmatmul.mubr.f32.gmra.mrb[0].mxu0 %v10189
    %v10464 = vpop.f32.mrb[0].mxu0
    %v10465 = vadd.f32 0.0, %v10464
    %v10466 = vpop.f32.mrb[0].mxu0
    %10467 = vmatprep.mubr.f32.mxu0 0.0
    %10468 = vmatmul.mubr.f32.gmra.mrb[0].mxu0 %v10190
    %v10469 = vpop.f32.mrb[0].mxu0
    %v10470 = vadd.f32 0.0, %v10469
    %v10471 = vpop.f32.mrb[0].mxu0
    %10472 = vmatprep.mubr.f32.mxu0 0.0
    %10473 = vmatmul.mubr.f32.gmra.mrb[0].mxu0 %v10191
    %v10474 = vpop.f32.mrb[0].mxu0
    %v10475 = vadd.f32 0.0, %v10474
    %v10476 = vpop.f32.mrb[0].mxu0
    %10477 = vmatprep.mubr.f32.mxu0 0.0
    %10478 = vmatmul.mubr.f32.gmra.mrb[0].mxu0 %v10192
    %v10479 = vpop.f32.mrb[0].mxu0
    %v10480 = vadd.f32 0.0, %v10479
    %v10481 = vpop.f32.mrb[0].mxu0
    %10482 = vdwg.mxu0
    %10483 = vrot.lane.b32.xlu0 %v1046, 64
    %v10484 = vpop.permute.xlu0 %10483
    %10485 = vrot.lane.b32.xlu0 %v1052, 64
    %v10486 = vpop.permute.xlu0 %10485
    %10487 = vrot.lane.b32.xlu0 %v1058, 64
    %v10488 = vpop.permute.xlu0 %10487
    %10489 = vrot.lane.b32.xlu0 %v1064, 64
    %v10490 = vpop.permute.xlu0 %10489
    %10491 = vrot.lane.b32.xlu0 %v1070, 64
    %v10492 = vpop.permute.xlu0 %10491
    %10493 = vrot.lane.b32.xlu0 %v1076, 64
    %v10494 = vpop.permute.xlu0 %10493
    %10495 = vrot.lane.b32.xlu0 %v1082, 64
    %v10496 = vpop.permute.xlu0 %10495
    %10497 = vrot.lane.b32.xlu0 %v1088, 64
    %v10498 = vpop.permute.xlu0 %10497
    %10499 = vrot.lane.b32.xlu0 %v1094, 64
    %v10500 = vpop.permute.xlu0 %10499
    %10501 = vrot.lane.b32.xlu0 %v1100, 64
    %v10502 = vpop.permute.xlu0 %10501
    %10503 = vrot.lane.b32.xlu0 %v1106, 64
    %v10504 = vpop.permute.xlu0 %10503
    %10505 = vrot.lane.b32.xlu0 %v1112, 64
    %v10506 = vpop.permute.xlu0 %10505
    %10507 = vrot.lane.b32.xlu0 %v1118, 64
    %v10508 = vpop.permute.xlu0 %10507
    %10509 = vrot.lane.b32.xlu0 %v1124, 64
    %v10510 = vpop.permute.xlu0 %10509
    %10511 = vrot.lane.b32.xlu0 %v1130, 64
    %v10512 = vpop.permute.xlu0 %10511
    %10513 = vrot.lane.b32.xlu0 %v1136, 64
    %v10514 = vpop.permute.xlu0 %10513
    %10515 = vrot.lane.b32.xlu0 %v1560, 64
    %v10516 = vpop.permute.xlu0 %10515
    %10517 = vrot.lane.b32.xlu0 %v1566, 64
    %v10518 = vpop.permute.xlu0 %10517
    %10519 = vrot.lane.b32.xlu0 %v1572, 64
    %v10520 = vpop.permute.xlu0 %10519
    %10521 = vrot.lane.b32.xlu0 %v1578, 64
    %v10522 = vpop.permute.xlu0 %10521
    %10523 = vrot.lane.b32.xlu0 %v1584, 64
    %v10524 = vpop.permute.xlu0 %10523
    %10525 = vrot.lane.b32.xlu0 %v1590, 64
    %v10526 = vpop.permute.xlu0 %10525
    %10527 = vrot.lane.b32.xlu0 %v1596, 64
    %v10528 = vpop.permute.xlu0 %10527
    %10529 = vrot.lane.b32.xlu0 %v1602, 64
    %v10530 = vpop.permute.xlu0 %10529
    %10531 = vrot.lane.b32.xlu0 %v1608, 64
    %v10532 = vpop.permute.xlu0 %10531
    %10533 = vrot.lane.b32.xlu0 %v1614, 64
    %v10534 = vpop.permute.xlu0 %10533
    %10535 = vrot.lane.b32.xlu0 %v1620, 64
    %v10536 = vpop.permute.xlu0 %10535
    %10537 = vrot.lane.b32.xlu0 %v1626, 64
    %v10538 = vpop.permute.xlu0 %10537
    %10539 = vrot.lane.b32.xlu0 %v1632, 64
    %v10540 = vpop.permute.xlu0 %10539
    %10541 = vrot.lane.b32.xlu0 %v1638, 64
    %v10542 = vpop.permute.xlu0 %10541
    %10543 = vrot.lane.b32.xlu0 %v1644, 64
    %v10544 = vpop.permute.xlu0 %10543
    %10545 = vrot.lane.b32.xlu0 %v1650, 64
    %v10546 = vpop.permute.xlu0 %10545
    %v10547 = vsel %vm2262, %v10484, 0
    %v10549 = vsel %vm2262, %v10486, 0
    %v10551 = vsel %vm2262, %v10488, 0
    %v10553 = vsel %vm2262, %v10490, 0
    %v10555 = vsel %vm2262, %v10492, 0
    %v10557 = vsel %vm2262, %v10494, 0
    %v10559 = vsel %vm2262, %v10496, 0
    %v10561 = vsel %vm2262, %v10498, 0
    %v10563 = vsel %vm2262, %v10500, 0
    %v10565 = vsel %vm2262, %v10502, 0
    %v10567 = vsel %vm2262, %v10504, 0
    %v10569 = vsel %vm2262, %v10506, 0
    %v10571 = vsel %vm2262, %v10508, 0
    %v10573 = vsel %vm2262, %v10510, 0
    %v10575 = vsel %vm2262, %v10512, 0
    %v10577 = vsel %vm2262, %v10514, 0
    %v10579 = vsel %vm2262, %v10516, 0
    %v10581 = vsel %vm2262, %v10518, 0
    %v10583 = vsel %vm2262, %v10520, 0
    %v10585 = vsel %vm2262, %v10522, 0
    %v10587 = vsel %vm2262, %v10524, 0
    %v10589 = vsel %vm2262, %v10526, 0
    %v10591 = vsel %vm2262, %v10528, 0
    %v10593 = vsel %vm2262, %v10530, 0
    %v10595 = vsel %vm2262, %v10532, 0
    %v10597 = vsel %vm2262, %v10534, 0
    %v10599 = vsel %vm2262, %v10536, 0
    %v10601 = vsel %vm2262, %v10538, 0
    %v10603 = vsel %vm2262, %v10540, 0
    %v10605 = vsel %vm2262, %v10542, 0
    %v10607 = vsel %vm2262, %v10544, 0
    %v10609 = vsel %vm2262, %v10546, 0
    %10611 = vmatprep.subr.mxu0 0.0
    %10612 = vmatpush1.xpose.msra.mxu0 %v10579
    %10613 = vmatprep.subr.mxu0 0.0
    %10614 = vmatpush1.xpose.msra.mxu0 %v10581
    %10615 = vmatprep.subr.mxu0 0.0
    %10616 = vmatpush1.xpose.msra.mxu0 %v10583
    %10617 = vmatprep.subr.mxu0 0.0
    %10618 = vmatpush1.xpose.msra.mxu0 %v10585
    %10619 = vmatprep.subr.mxu0 0.0
    %10620 = vmatpush1.xpose.msra.mxu0 %v10587
    %10621 = vmatprep.subr.mxu0 0.0
    %10622 = vmatpush1.xpose.msra.mxu0 %v10589
    %10623 = vmatprep.subr.mxu0 0.0
    %10624 = vmatpush1.xpose.msra.mxu0 %v10591
    %10625 = vmatprep.subr.mxu0 0.0
    %10626 = vmatpush1.xpose.msra.mxu0 %v10593
    %10627 = vmatprep.subr.mxu0 0.0
    %10628 = vmatpush1.xpose.msra.mxu0 %v10595
    %10629 = vmatprep.subr.mxu0 0.0
    %10630 = vmatpush1.xpose.msra.mxu0 %v10597
    %10631 = vmatprep.subr.mxu0 0.0
    %10632 = vmatpush1.xpose.msra.mxu0 %v10599
    %10633 = vmatprep.subr.mxu0 0.0
    %10634 = vmatpush1.xpose.msra.mxu0 %v10601
    %10635 = vmatprep.subr.mxu0 0.0
    %10636 = vmatpush1.xpose.msra.mxu0 %v10603
    %10637 = vmatprep.subr.mxu0 0.0
    %10638 = vmatpush1.xpose.msra.mxu0 %v10605
    %10639 = vmatprep.subr.mxu0 0.0
    %10640 = vmatpush1.xpose.msra.mxu0 %v10607
    %10641 = vmatprep.subr.mxu0 0.0
    %10642 = vmatpush1.xpose.msra.mxu0 %v10609
    %10643 = vmatprep.subr.mxu0 0.0
    %10644 = vmatpush1.xpose.msra.mxu0 0.0
    %10645 = vmatprep.subr.mxu0 0.0
    %10646 = vmatpush1.xpose.msra.mxu0 0.0
    %10647 = vmatprep.subr.mxu0 0.0
    %10648 = vmatpush1.xpose.msra.mxu0 0.0
    %10649 = vmatprep.subr.mxu0 0.0
    %10650 = vmatpush1.xpose.msra.mxu0 0.0
    %10651 = vmatprep.subr.mxu0 0.0
    %10652 = vmatpush1.xpose.msra.mxu0 0.0
    %10653 = vmatprep.subr.mxu0 0.0
    %10654 = vmatpush1.xpose.msra.mxu0 0.0
    %10655 = vmatprep.subr.mxu0 0.0
    %10656 = vmatpush1.xpose.msra.mxu0 0.0
    %10657 = vmatprep.subr.mxu0 0.0
    %10658 = vmatpush1.xpose.msra.mxu0 0.0
    %10659 = vmatprep.subr.mxu0 0.0
    %10660 = vmatpush1.xpose.msra.mxu0 0.0
    %10661 = vmatprep.subr.mxu0 0.0
    %10662 = vmatpush1.xpose.msra.mxu0 0.0
    %10663 = vmatprep.subr.mxu0 0.0
    %10664 = vmatpush1.xpose.msra.mxu0 0.0
    %10665 = vmatprep.subr.mxu0 0.0
    %10666 = vmatpush1.xpose.msra.mxu0 0.0
    %10667 = vmatprep.subr.mxu0 0.0
    %10668 = vmatpush1.xpose.msra.mxu0 0.0
    %10669 = vmatprep.subr.mxu0 0.0
    %10670 = vmatpush1.xpose.msra.mxu0 0.0
    %10671 = vmatprep.subr.mxu0 0.0
    %10672 = vmatpush1.xpose.msra.mxu0 0.0
    %10673 = vmatprep.subr.mxu0 0.0
    %10674 = vmatpush1.xpose.msra.mxu0 0.0
    %10675 = vmatprep.mubr.f32.mxu0 0.0
    %10676 = vmatmul.mubr.f32.gmra.mrb[0].mxu0 %v10547
    %v10677 = vpop.f32.mrb[0].mxu0
    %v10678 = vadd.f32 0.0, %v10677
    %v10679 = vpop.f32.mrb[0].mxu0
    %10680 = vmatprep.mubr.f32.mxu0 0.0
    %10681 = vmatmul.mubr.f32.gmra.mrb[0].mxu0 %v10549
    %v10682 = vpop.f32.mrb[0].mxu0
    %v10683 = vadd.f32 0.0, %v10682
    %v10684 = vpop.f32.mrb[0].mxu0
    %10685 = vmatprep.mubr.f32.mxu0 0.0
    %10686 = vmatmul.mubr.f32.gmra.mrb[0].mxu0 %v10551
    %v10687 = vpop.f32.mrb[0].mxu0
    %v10688 = vadd.f32 0.0, %v10687
    %v10689 = vpop.f32.mrb[0].mxu0
    %10690 = vmatprep.mubr.f32.mxu0 0.0
    %10691 = vmatmul.mubr.f32.gmra.mrb[0].mxu0 %v10553
    %v10692 = vpop.f32.mrb[0].mxu0
    %v10693 = vadd.f32 0.0, %v10692
    %v10694 = vpop.f32.mrb[0].mxu0
    %10695 = vmatprep.mubr.f32.mxu0 0.0
    %10696 = vmatmul.mubr.f32.gmra.mrb[0].mxu0 %v10555
    %v10697 = vpop.f32.mrb[0].mxu0
    %v10698 = vadd.f32 0.0, %v10697
    %v10699 = vpop.f32.mrb[0].mxu0
    %10700 = vmatprep.mubr.f32.mxu0 0.0
    %10701 = vmatmul.mubr.f32.gmra.mrb[0].mxu0 %v10557
    %v10702 = vpop.f32.mrb[0].mxu0
    %v10703 = vadd.f32 0.0, %v10702
    %v10704 = vpop.f32.mrb[0].mxu0
    %10705 = vmatprep.mubr.f32.mxu0 0.0
    %10706 = vmatmul.mubr.f32.gmra.mrb[0].mxu0 %v10559
    %v10707 = vpop.f32.mrb[0].mxu0
    %v10708 = vadd.f32 0.0, %v10707
    %v10709 = vpop.f32.mrb[0].mxu0
    %10710 = vmatprep.mubr.f32.mxu0 0.0
    %10711 = vmatmul.mubr.f32.gmra.mrb[0].mxu0 %v10561
    %v10712 = vpop.f32.mrb[0].mxu0
    %v10713 = vadd.f32 0.0, %v10712
    %v10714 = vpop.f32.mrb[0].mxu0
    %10715 = vmatprep.mubr.f32.mxu0 0.0
    %10716 = vmatmul.mubr.f32.gmra.mrb[0].mxu0 %v10563
    %v10717 = vpop.f32.mrb[0].mxu0
    %v10718 = vadd.f32 0.0, %v10717
    %v10719 = vpop.f32.mrb[0].mxu0
    %10720 = vmatprep.mubr.f32.mxu0 0.0
    %10721 = vmatmul.mubr.f32.gmra.mrb[0].mxu0 %v10565
    %v10722 = vpop.f32.mrb[0].mxu0
    %v10723 = vadd.f32 0.0, %v10722
    %v10724 = vpop.f32.mrb[0].mxu0
    %10725 = vmatprep.mubr.f32.mxu0 0.0
    %10726 = vmatmul.mubr.f32.gmra.mrb[0].mxu0 %v10567
    %v10727 = vpop.f32.mrb[0].mxu0
    %v10728 = vadd.f32 0.0, %v10727
    %v10729 = vpop.f32.mrb[0].mxu0
    %10730 = vmatprep.mubr.f32.mxu0 0.0
    %10731 = vmatmul.mubr.f32.gmra.mrb[0].mxu0 %v10569
    %v10732 = vpop.f32.mrb[0].mxu0
    %v10733 = vadd.f32 0.0, %v10732
    %v10734 = vpop.f32.mrb[0].mxu0
    %10735 = vmatprep.mubr.f32.mxu0 0.0
    %10736 = vmatmul.mubr.f32.gmra.mrb[0].mxu0 %v10571
    %v10737 = vpop.f32.mrb[0].mxu0
    %v10738 = vadd.f32 0.0, %v10737
    %v10739 = vpop.f32.mrb[0].mxu0
    %10740 = vmatprep.mubr.f32.mxu0 0.0
    %10741 = vmatmul.mubr.f32.gmra.mrb[0].mxu0 %v10573
    %v10742 = vpop.f32.mrb[0].mxu0
    %v10743 = vadd.f32 0.0, %v10742
    %v10744 = vpop.f32.mrb[0].mxu0
    %10745 = vmatprep.mubr.f32.mxu0 0.0
    %10746 = vmatmul.mubr.f32.gmra.mrb[0].mxu0 %v10575
    %v10747 = vpop.f32.mrb[0].mxu0
    %v10748 = vadd.f32 0.0, %v10747
    %v10749 = vpop.f32.mrb[0].mxu0
    %10750 = vmatprep.mubr.f32.mxu0 0.0
    %10751 = vmatmul.mubr.f32.gmra.mrb[0].mxu0 %v10577
    %v10752 = vpop.f32.mrb[0].mxu0
    %v10753 = vadd.f32 0.0, %v10752
    %v10754 = vpop.f32.mrb[0].mxu0
    %10755 = vdwg.mxu0
    %10756 = vrot.lane.b32.xlu0 %v1142, 64
    %v10757 = vpop.permute.xlu0 %10756
    %10758 = vrot.lane.b32.xlu0 %v1148, 64
    %v10759 = vpop.permute.xlu0 %10758
    %10760 = vrot.lane.b32.xlu0 %v1154, 64
    %v10761 = vpop.permute.xlu0 %10760
    %10762 = vrot.lane.b32.xlu0 %v1160, 64
    %v10763 = vpop.permute.xlu0 %10762
    %10764 = vrot.lane.b32.xlu0 %v1166, 64
    %v10765 = vpop.permute.xlu0 %10764
    %10766 = vrot.lane.b32.xlu0 %v1172, 64
    %v10767 = vpop.permute.xlu0 %10766
    %10768 = vrot.lane.b32.xlu0 %v1178, 64
    %v10769 = vpop.permute.xlu0 %10768
    %10770 = vrot.lane.b32.xlu0 %v1184, 64
    %v10771 = vpop.permute.xlu0 %10770
    %10772 = vrot.lane.b32.xlu0 %v1190, 64
    %v10773 = vpop.permute.xlu0 %10772
    %10774 = vrot.lane.b32.xlu0 %v1196, 64
    %v10775 = vpop.permute.xlu0 %10774
    %10776 = vrot.lane.b32.xlu0 %v1202, 64
    %v10777 = vpop.permute.xlu0 %10776
    %10778 = vrot.lane.b32.xlu0 %v1208, 64
    %v10779 = vpop.permute.xlu0 %10778
    %10780 = vrot.lane.b32.xlu0 %v1214, 64
    %v10781 = vpop.permute.xlu0 %10780
    %10782 = vrot.lane.b32.xlu0 %v1220, 64
    %v10783 = vpop.permute.xlu0 %10782
    %10784 = vrot.lane.b32.xlu0 %v1226, 64
    %v10785 = vpop.permute.xlu0 %10784
    %10786 = vrot.lane.b32.xlu0 %v1232, 64
    %v10787 = vpop.permute.xlu0 %10786
    %10788 = vrot.lane.b32.xlu0 %v1656, 64
    %v10789 = vpop.permute.xlu0 %10788
    %10790 = vrot.lane.b32.xlu0 %v1662, 64
    %v10791 = vpop.permute.xlu0 %10790
    %10792 = vrot.lane.b32.xlu0 %v1668, 64
    %v10793 = vpop.permute.xlu0 %10792
    %10794 = vrot.lane.b32.xlu0 %v1674, 64
    %v10795 = vpop.permute.xlu0 %10794
    %10796 = vrot.lane.b32.xlu0 %v1680, 64
    %v10797 = vpop.permute.xlu0 %10796
    %10798 = vrot.lane.b32.xlu0 %v1686, 64
    %v10799 = vpop.permute.xlu0 %10798
    %10800 = vrot.lane.b32.xlu0 %v1692, 64
    %v10801 = vpop.permute.xlu0 %10800
    %10802 = vrot.lane.b32.xlu0 %v1698, 64
    %v10803 = vpop.permute.xlu0 %10802
    %10804 = vrot.lane.b32.xlu0 %v1704, 64
    %v10805 = vpop.permute.xlu0 %10804
    %10806 = vrot.lane.b32.xlu0 %v1710, 64
    %v10807 = vpop.permute.xlu0 %10806
    %10808 = vrot.lane.b32.xlu0 %v1716, 64
    %v10809 = vpop.permute.xlu0 %10808
    %10810 = vrot.lane.b32.xlu0 %v1722, 64
    %v10811 = vpop.permute.xlu0 %10810
    %10812 = vrot.lane.b32.xlu0 %v1728, 64
    %v10813 = vpop.permute.xlu0 %10812
    %10814 = vrot.lane.b32.xlu0 %v1734, 64
    %v10815 = vpop.permute.xlu0 %10814
    %10816 = vrot.lane.b32.xlu0 %v1740, 64
    %v10817 = vpop.permute.xlu0 %10816
    %10818 = vrot.lane.b32.xlu0 %v1746, 64
    %v10819 = vpop.permute.xlu0 %10818
    %v10820 = vsel %vm2262, %v10757, 0
    %v10822 = vsel %vm2262, %v10759, 0
    %v10824 = vsel %vm2262, %v10761, 0
    %v10826 = vsel %vm2262, %v10763, 0
    %v10828 = vsel %vm2262, %v10765, 0
    %v10830 = vsel %vm2262, %v10767, 0
    %v10832 = vsel %vm2262, %v10769, 0
    %v10834 = vsel %vm2262, %v10771, 0
    %v10836 = vsel %vm2262, %v10773, 0
    %v10838 = vsel %vm2262, %v10775, 0
    %v10840 = vsel %vm2262, %v10777, 0
    %v10842 = vsel %vm2262, %v10779, 0
    %v10844 = vsel %vm2262, %v10781, 0
    %v10846 = vsel %vm2262, %v10783, 0
    %v10848 = vsel %vm2262, %v10785, 0
    %v10850 = vsel %vm2262, %v10787, 0
    %v10852 = vsel %vm2262, %v10789, 0
    %v10854 = vsel %vm2262, %v10791, 0
    %v10856 = vsel %vm2262, %v10793, 0
    %v10858 = vsel %vm2262, %v10795, 0
    %v10860 = vsel %vm2262, %v10797, 0
    %v10862 = vsel %vm2262, %v10799, 0
    %v10864 = vsel %vm2262, %v10801, 0
    %v10866 = vsel %vm2262, %v10803, 0
    %v10868 = vsel %vm2262, %v10805, 0
    %v10870 = vsel %vm2262, %v10807, 0
    %v10872 = vsel %vm2262, %v10809, 0
    %v10874 = vsel %vm2262, %v10811, 0
    %v10876 = vsel %vm2262, %v10813, 0
    %v10878 = vsel %vm2262, %v10815, 0
    %v10880 = vsel %vm2262, %v10817, 0
    %v10882 = vsel %vm2262, %v10819, 0
    %10884 = vmatprep.subr.mxu0 0.0
    %10885 = vmatpush1.xpose.msra.mxu0 %v10852
    %10886 = vmatprep.subr.mxu0 0.0
    %10887 = vmatpush1.xpose.msra.mxu0 %v10854
    %10888 = vmatprep.subr.mxu0 0.0
    %10889 = vmatpush1.xpose.msra.mxu0 %v10856
    %10890 = vmatprep.subr.mxu0 0.0
    %10891 = vmatpush1.xpose.msra.mxu0 %v10858
    %10892 = vmatprep.subr.mxu0 0.0
    %10893 = vmatpush1.xpose.msra.mxu0 %v10860
    %10894 = vmatprep.subr.mxu0 0.0
    %10895 = vmatpush1.xpose.msra.mxu0 %v10862
    %10896 = vmatprep.subr.mxu0 0.0
    %10897 = vmatpush1.xpose.msra.mxu0 %v10864
    %10898 = vmatprep.subr.mxu0 0.0
    %10899 = vmatpush1.xpose.msra.mxu0 %v10866
    %10900 = vmatprep.subr.mxu0 0.0
    %10901 = vmatpush1.xpose.msra.mxu0 %v10868
    %10902 = vmatprep.subr.mxu0 0.0
    %10903 = vmatpush1.xpose.msra.mxu0 %v10870
    %10904 = vmatprep.subr.mxu0 0.0
    %10905 = vmatpush1.xpose.msra.mxu0 %v10872
    %10906 = vmatprep.subr.mxu0 0.0
    %10907 = vmatpush1.xpose.msra.mxu0 %v10874
    %10908 = vmatprep.subr.mxu0 0.0
    %10909 = vmatpush1.xpose.msra.mxu0 %v10876
    %10910 = vmatprep.subr.mxu0 0.0
    %10911 = vmatpush1.xpose.msra.mxu0 %v10878
    %10912 = vmatprep.subr.mxu0 0.0
    %10913 = vmatpush1.xpose.msra.mxu0 %v10880
    %10914 = vmatprep.subr.mxu0 0.0
    %10915 = vmatpush1.xpose.msra.mxu0 %v10882
    %10916 = vmatprep.subr.mxu0 0.0
    %10917 = vmatpush1.xpose.msra.mxu0 0.0
    %10918 = vmatprep.subr.mxu0 0.0
    %10919 = vmatpush1.xpose.msra.mxu0 0.0
    %10920 = vmatprep.subr.mxu0 0.0
    %10921 = vmatpush1.xpose.msra.mxu0 0.0
    %10922 = vmatprep.subr.mxu0 0.0
    %10923 = vmatpush1.xpose.msra.mxu0 0.0
    %10924 = vmatprep.subr.mxu0 0.0
    %10925 = vmatpush1.xpose.msra.mxu0 0.0
    %10926 = vmatprep.subr.mxu0 0.0
    %10927 = vmatpush1.xpose.msra.mxu0 0.0
    %10928 = vmatprep.subr.mxu0 0.0
    %10929 = vmatpush1.xpose.msra.mxu0 0.0
    %10930 = vmatprep.subr.mxu0 0.0
    %10931 = vmatpush1.xpose.msra.mxu0 0.0
    %10932 = vmatprep.subr.mxu0 0.0
    %10933 = vmatpush1.xpose.msra.mxu0 0.0
    %10934 = vmatprep.subr.mxu0 0.0
    %10935 = vmatpush1.xpose.msra.mxu0 0.0
    %10936 = vmatprep.subr.mxu0 0.0
    %10937 = vmatpush1.xpose.msra.mxu0 0.0
    %10938 = vmatprep.subr.mxu0 0.0
    %10939 = vmatpush1.xpose.msra.mxu0 0.0
    %10940 = vmatprep.subr.mxu0 0.0
    %10941 = vmatpush1.xpose.msra.mxu0 0.0
    %10942 = vmatprep.subr.mxu0 0.0
    %10943 = vmatpush1.xpose.msra.mxu0 0.0
    %10944 = vmatprep.subr.mxu0 0.0
    %10945 = vmatpush1.xpose.msra.mxu0 0.0
    %10946 = vmatprep.subr.mxu0 0.0
    %10947 = vmatpush1.xpose.msra.mxu0 0.0
    %10948 = vmatprep.mubr.f32.mxu0 0.0
    %10949 = vmatmul.mubr.f32.gmra.mrb[0].mxu0 %v10820
    %v10950 = vpop.f32.mrb[0].mxu0
    %v10951 = vadd.f32 0.0, %v10950
    %v10952 = vpop.f32.mrb[0].mxu0
    %10953 = vmatprep.mubr.f32.mxu0 0.0
    %10954 = vmatmul.mubr.f32.gmra.mrb[0].mxu0 %v10822
    %v10955 = vpop.f32.mrb[0].mxu0
    %v10956 = vadd.f32 0.0, %v10955
    %v10957 = vpop.f32.mrb[0].mxu0
    %10958 = vmatprep.mubr.f32.mxu0 0.0
    %10959 = vmatmul.mubr.f32.gmra.mrb[0].mxu0 %v10824
    %v10960 = vpop.f32.mrb[0].mxu0
    %v10961 = vadd.f32 0.0, %v10960
    %v10962 = vpop.f32.mrb[0].mxu0
    %10963 = vmatprep.mubr.f32.mxu0 0.0
    %10964 = vmatmul.mubr.f32.gmra.mrb[0].mxu0 %v10826
    %v10965 = vpop.f32.mrb[0].mxu0
    %v10966 = vadd.f32 0.0, %v10965
    %v10967 = vpop.f32.mrb[0].mxu0
    %10968 = vmatprep.mubr.f32.mxu0 0.0
    %10969 = vmatmul.mubr.f32.gmra.mrb[0].mxu0 %v10828
    %v10970 = vpop.f32.mrb[0].mxu0
    %v10971 = vadd.f32 0.0, %v10970
    %v10972 = vpop.f32.mrb[0].mxu0
    %10973 = vmatprep.mubr.f32.mxu0 0.0
    %10974 = vmatmul.mubr.f32.gmra.mrb[0].mxu0 %v10830
    %v10975 = vpop.f32.mrb[0].mxu0
    %v10976 = vadd.f32 0.0, %v10975
    %v10977 = vpop.f32.mrb[0].mxu0
    %10978 = vmatprep.mubr.f32.mxu0 0.0
    %10979 = vmatmul.mubr.f32.gmra.mrb[0].mxu0 %v10832
    %v10980 = vpop.f32.mrb[0].mxu0
    %v10981 = vadd.f32 0.0, %v10980
    %v10982 = vpop.f32.mrb[0].mxu0
    %10983 = vmatprep.mubr.f32.mxu0 0.0
    %10984 = vmatmul.mubr.f32.gmra.mrb[0].mxu0 %v10834
    %v10985 = vpop.f32.mrb[0].mxu0
    %v10986 = vadd.f32 0.0, %v10985
    %v10987 = vpop.f32.mrb[0].mxu0
    %10988 = vmatprep.mubr.f32.mxu0 0.0
    %10989 = vmatmul.mubr.f32.gmra.mrb[0].mxu0 %v10836
    %v10990 = vpop.f32.mrb[0].mxu0
    %v10991 = vadd.f32 0.0, %v10990
    %v10992 = vpop.f32.mrb[0].mxu0
    %10993 = vmatprep.mubr.f32.mxu0 0.0
    %10994 = vmatmul.mubr.f32.gmra.mrb[0].mxu0 %v10838
    %v10995 = vpop.f32.mrb[0].mxu0
    %v10996 = vadd.f32 0.0, %v10995
    %v10997 = vpop.f32.mrb[0].mxu0
    %10998 = vmatprep.mubr.f32.mxu0 0.0
    %10999 = vmatmul.mubr.f32.gmra.mrb[0].mxu0 %v10840
    %v11000 = vpop.f32.mrb[0].mxu0
    %v11001 = vadd.f32 0.0, %v11000
    %v11002 = vpop.f32.mrb[0].mxu0
    %11003 = vmatprep.mubr.f32.mxu0 0.0
    %11004 = vmatmul.mubr.f32.gmra.mrb[0].mxu0 %v10842
    %v11005 = vpop.f32.mrb[0].mxu0
    %v11006 = vadd.f32 0.0, %v11005
    %v11007 = vpop.f32.mrb[0].mxu0
    %11008 = vmatprep.mubr.f32.mxu0 0.0
    %11009 = vmatmul.mubr.f32.gmra.mrb[0].mxu0 %v10844
    %v11010 = vpop.f32.mrb[0].mxu0
    %v11011 = vadd.f32 0.0, %v11010
    %v11012 = vpop.f32.mrb[0].mxu0
    %11013 = vmatprep.mubr.f32.mxu0 0.0
    %11014 = vmatmul.mubr.f32.gmra.mrb[0].mxu0 %v10846
    %v11015 = vpop.f32.mrb[0].mxu0
    %v11016 = vadd.f32 0.0, %v11015
    %v11017 = vpop.f32.mrb[0].mxu0
    %11018 = vmatprep.mubr.f32.mxu0 0.0
    %11019 = vmatmul.mubr.f32.gmra.mrb[0].mxu0 %v10848
    %v11020 = vpop.f32.mrb[0].mxu0
    %v11021 = vadd.f32 0.0, %v11020
    %v11022 = vpop.f32.mrb[0].mxu0
    %11023 = vmatprep.mubr.f32.mxu0 0.0
    %11024 = vmatmul.mubr.f32.gmra.mrb[0].mxu0 %v10850
    %v11025 = vpop.f32.mrb[0].mxu0
    %v11026 = vadd.f32 0.0, %v11025
    %v11027 = vpop.f32.mrb[0].mxu0
    %11028 = vdwg.mxu0
    %v11029 = vmul.f32 %v10678, 0.125
    %v11030 = vmul.f32 %v10683, 0.125
    %v11031 = vmul.f32 %v10688, 0.125
    %v11032 = vmul.f32 %v10693, 0.125
    %v11033 = vmul.f32 %v10698, 0.125
    %v11034 = vmul.f32 %v10703, 0.125
    %v11035 = vmul.f32 %v10708, 0.125
    %v11036 = vmul.f32 %v10713, 0.125
    %v11037 = vmul.f32 %v10718, 0.125
    %v11038 = vmul.f32 %v10723, 0.125
    %v11039 = vmul.f32 %v10728, 0.125
    %v11040 = vmul.f32 %v10733, 0.125
    %v11041 = vmul.f32 %v10738, 0.125
    %v11042 = vmul.f32 %v10743, 0.125
    %v11043 = vmul.f32 %v10748, 0.125
    %v11044 = vmul.f32 %v10753, 0.125
    %v11045 = vmul.f32 %v10951, 0.125
    %v11046 = vmul.f32 %v10956, 0.125
    %v11047 = vmul.f32 %v10961, 0.125
    %v11048 = vmul.f32 %v10966, 0.125
    %v11049 = vmul.f32 %v10971, 0.125
    %v11050 = vmul.f32 %v10976, 0.125
    %v11051 = vmul.f32 %v10981, 0.125
    %v11052 = vmul.f32 %v10986, 0.125
    %v11053 = vmul.f32 %v10991, 0.125
    %v11054 = vmul.f32 %v10996, 0.125
    %v11055 = vmul.f32 %v11001, 0.125
    %v11056 = vmul.f32 %v11006, 0.125
    %v11057 = vmul.f32 %v11011, 0.125
    %v11058 = vmul.f32 %v11016, 0.125
    %v11059 = vmul.f32 %v11021, 0.125
    %v11060 = vmul.f32 %v11026, 0.125
    %11061 = vmax.xlane.f32.xlu0 %v11029
    %v11062 = vpop.xlane.xlu0 %11061
    %11063 = vmax.xlane.f32.xlu0 %v11030
    %v11064 = vpop.xlane.xlu0 %11063
    %11065 = vmax.xlane.f32.xlu0 %v11031
    %v11066 = vpop.xlane.xlu0 %11065
    %11067 = vmax.xlane.f32.xlu0 %v11032
    %v11068 = vpop.xlane.xlu0 %11067
    %11069 = vmax.xlane.f32.xlu0 %v11033
    %v11070 = vpop.xlane.xlu0 %11069
    %11071 = vmax.xlane.f32.xlu0 %v11034
    %v11072 = vpop.xlane.xlu0 %11071
    %11073 = vmax.xlane.f32.xlu0 %v11035
    %v11074 = vpop.xlane.xlu0 %11073
    %11075 = vmax.xlane.f32.xlu0 %v11036
    %v11076 = vpop.xlane.xlu0 %11075
    %11077 = vmax.xlane.f32.xlu0 %v11037
    %v11078 = vpop.xlane.xlu0 %11077
    %11079 = vmax.xlane.f32.xlu0 %v11038
    %v11080 = vpop.xlane.xlu0 %11079
    %11081 = vmax.xlane.f32.xlu0 %v11039
    %v11082 = vpop.xlane.xlu0 %11081
    %11083 = vmax.xlane.f32.xlu0 %v11040
    %v11084 = vpop.xlane.xlu0 %11083
    %11085 = vmax.xlane.f32.xlu0 %v11041
    %v11086 = vpop.xlane.xlu0 %11085
    %11087 = vmax.xlane.f32.xlu0 %v11042
    %v11088 = vpop.xlane.xlu0 %11087
    %11089 = vmax.xlane.f32.xlu0 %v11043
    %v11090 = vpop.xlane.xlu0 %11089
    %11091 = vmax.xlane.f32.xlu0 %v11044
    %v11092 = vpop.xlane.xlu0 %11091
    %11093 = vmax.xlane.f32.xlu0 %v11045
    %v11094 = vpop.xlane.xlu0 %11093
    %11095 = vmax.xlane.f32.xlu0 %v11046
    %v11096 = vpop.xlane.xlu0 %11095
    %11097 = vmax.xlane.f32.xlu0 %v11047
    %v11098 = vpop.xlane.xlu0 %11097
    %11099 = vmax.xlane.f32.xlu0 %v11048
    %v11100 = vpop.xlane.xlu0 %11099
    %11101 = vmax.xlane.f32.xlu0 %v11049
    %v11102 = vpop.xlane.xlu0 %11101
    %11103 = vmax.xlane.f32.xlu0 %v11050
    %v11104 = vpop.xlane.xlu0 %11103
    %11105 = vmax.xlane.f32.xlu0 %v11051
    %v11106 = vpop.xlane.xlu0 %11105
    %11107 = vmax.xlane.f32.xlu0 %v11052
    %v11108 = vpop.xlane.xlu0 %11107
    %11109 = vmax.xlane.f32.xlu0 %v11053
    %v11110 = vpop.xlane.xlu0 %11109
    %11111 = vmax.xlane.f32.xlu0 %v11054
    %v11112 = vpop.xlane.xlu0 %11111
    %11113 = vmax.xlane.f32.xlu0 %v11055
    %v11114 = vpop.xlane.xlu0 %11113
    %11115 = vmax.xlane.f32.xlu0 %v11056
    %v11116 = vpop.xlane.xlu0 %11115
    %11117 = vmax.xlane.f32.xlu0 %v11057
    %v11118 = vpop.xlane.xlu0 %11117
    %11119 = vmax.xlane.f32.xlu0 %v11058
    %v11120 = vpop.xlane.xlu0 %11119
    %11121 = vmax.xlane.f32.xlu0 %v11059
    %v11122 = vpop.xlane.xlu0 %11121
    %11123 = vmax.xlane.f32.xlu0 %v11060
    %v11124 = vpop.xlane.xlu0 %11123
    %v11125 = vsub.f32 %v11029, %v11062
    %v11126 = vsub.f32 %v11030, %v11064
    %v11127 = vsub.f32 %v11031, %v11066
    %v11128 = vsub.f32 %v11032, %v11068
    %v11129 = vsub.f32 %v11033, %v11070
    %v11130 = vsub.f32 %v11034, %v11072
    %v11131 = vsub.f32 %v11035, %v11074
    %v11132 = vsub.f32 %v11036, %v11076
    %v11133 = vsub.f32 %v11037, %v11078
    %v11134 = vsub.f32 %v11038, %v11080
    %v11135 = vsub.f32 %v11039, %v11082
    %v11136 = vsub.f32 %v11040, %v11084
    %v11137 = vsub.f32 %v11041, %v11086
    %v11138 = vsub.f32 %v11042, %v11088
    %v11139 = vsub.f32 %v11043, %v11090
    %v11140 = vsub.f32 %v11044, %v11092
    %v11141 = vsub.f32 %v11045, %v11094
    %v11142 = vsub.f32 %v11046, %v11096
    %v11143 = vsub.f32 %v11047, %v11098
    %v11144 = vsub.f32 %v11048, %v11100
    %v11145 = vsub.f32 %v11049, %v11102
    %v11146 = vsub.f32 %v11050, %v11104
    %v11147 = vsub.f32 %v11051, %v11106
    %v11148 = vsub.f32 %v11052, %v11108
    %v11149 = vsub.f32 %v11053, %v11110
    %v11150 = vsub.f32 %v11054, %v11112
    %v11151 = vsub.f32 %v11055, %v11114
    %v11152 = vsub.f32 %v11056, %v11116
    %v11153 = vsub.f32 %v11057, %v11118
    %v11154 = vsub.f32 %v11058, %v11120
    %v11155 = vsub.f32 %v11059, %v11122
    %v11156 = vsub.f32 %v11060, %v11124
    %v11157 = vmul.f32 %v11125, 1.442695
    %v11158 = vpow.pop %v11157
    %v11159 = vmul.f32 %v11126, 1.442695
    %v11160 = vpow.pop %v11159
    %v11161 = vmul.f32 %v11127, 1.442695
    %v11162 = vpow.pop %v11161
    %v11163 = vmul.f32 %v11128, 1.442695
    %v11164 = vpow.pop %v11163
    %v11165 = vmul.f32 %v11129, 1.442695
    %v11166 = vpow.pop %v11165
    %v11167 = vmul.f32 %v11130, 1.442695
    %v11168 = vpow.pop %v11167
    %v11169 = vmul.f32 %v11131, 1.442695
    %v11170 = vpow.pop %v11169
    %v11171 = vmul.f32 %v11132, 1.442695
    %v11172 = vpow.pop %v11171
    %v11173 = vmul.f32 %v11133, 1.442695
    %v11174 = vpow.pop %v11173
    %v11175 = vmul.f32 %v11134, 1.442695
    %v11176 = vpow.pop %v11175
    %v11177 = vmul.f32 %v11135, 1.442695
    %v11178 = vpow.pop %v11177
    %v11179 = vmul.f32 %v11136, 1.442695
    %v11180 = vpow.pop %v11179
    %v11181 = vmul.f32 %v11137, 1.442695
    %v11182 = vpow.pop %v11181
    %v11183 = vmul.f32 %v11138, 1.442695
    %v11184 = vpow.pop %v11183
    %v11185 = vmul.f32 %v11139, 1.442695
    %v11186 = vpow.pop %v11185
    %v11187 = vmul.f32 %v11140, 1.442695
    %v11188 = vpow.pop %v11187
    %v11189 = vmul.f32 %v11141, 1.442695
    %v11190 = vpow.pop %v11189
    %v11191 = vmul.f32 %v11142, 1.442695
    %v11192 = vpow.pop %v11191
    %v11193 = vmul.f32 %v11143, 1.442695
    %v11194 = vpow.pop %v11193
    %v11195 = vmul.f32 %v11144, 1.442695
    %v11196 = vpow.pop %v11195
    %v11197 = vmul.f32 %v11145, 1.442695
    %v11198 = vpow.pop %v11197
    %v11199 = vmul.f32 %v11146, 1.442695
    %v11200 = vpow.pop %v11199
    %v11201 = vmul.f32 %v11147, 1.442695
    %v11202 = vpow.pop %v11201
    %v11203 = vmul.f32 %v11148, 1.442695
    %v11204 = vpow.pop %v11203
    %v11205 = vmul.f32 %v11149, 1.442695
    %v11206 = vpow.pop %v11205
    %v11207 = vmul.f32 %v11150, 1.442695
    %v11208 = vpow.pop %v11207
    %v11209 = vmul.f32 %v11151, 1.442695
    %v11210 = vpow.pop %v11209
    %v11211 = vmul.f32 %v11152, 1.442695
    %v11212 = vpow.pop %v11211
    %v11213 = vmul.f32 %v11153, 1.442695
    %v11214 = vpow.pop %v11213
    %v11215 = vmul.f32 %v11154, 1.442695
    %v11216 = vpow.pop %v11215
    %v11217 = vmul.f32 %v11155, 1.442695
    %v11218 = vpow.pop %v11217
    %v11219 = vmul.f32 %v11156, 1.442695
    %v11220 = vpow.pop %v11219
    %11221 = vadd.xlane.f32.xlu0 %v11158
    %v11222 = vpop.xlane.xlu0 %11221
    %11223 = vadd.xlane.f32.xlu0 %v11160
    %v11224 = vpop.xlane.xlu0 %11223
    %11225 = vadd.xlane.f32.xlu0 %v11162
    %v11226 = vpop.xlane.xlu0 %11225
    %11227 = vadd.xlane.f32.xlu0 %v11164
    %v11228 = vpop.xlane.xlu0 %11227
    %11229 = vadd.xlane.f32.xlu0 %v11166
    %v11230 = vpop.xlane.xlu0 %11229
    %11231 = vadd.xlane.f32.xlu0 %v11168
    %v11232 = vpop.xlane.xlu0 %11231
    %11233 = vadd.xlane.f32.xlu0 %v11170
    %v11234 = vpop.xlane.xlu0 %11233
    %11235 = vadd.xlane.f32.xlu0 %v11172
    %v11236 = vpop.xlane.xlu0 %11235
    %11237 = vadd.xlane.f32.xlu0 %v11174
    %v11238 = vpop.xlane.xlu0 %11237
    %11239 = vadd.xlane.f32.xlu0 %v11176
    %v11240 = vpop.xlane.xlu0 %11239
    %11241 = vadd.xlane.f32.xlu0 %v11178
    %v11242 = vpop.xlane.xlu0 %11241
    %11243 = vadd.xlane.f32.xlu0 %v11180
    %v11244 = vpop.xlane.xlu0 %11243
    %11245 = vadd.xlane.f32.xlu0 %v11182
    %v11246 = vpop.xlane.xlu0 %11245
    %11247 = vadd.xlane.f32.xlu0 %v11184
    %v11248 = vpop.xlane.xlu0 %11247
    %11249 = vadd.xlane.f32.xlu0 %v11186
    %v11250 = vpop.xlane.xlu0 %11249
    %11251 = vadd.xlane.f32.xlu0 %v11188
    %v11252 = vpop.xlane.xlu0 %11251
    %11253 = vadd.xlane.f32.xlu0 %v11190
    %v11254 = vpop.xlane.xlu0 %11253
    %11255 = vadd.xlane.f32.xlu0 %v11192
    %v11256 = vpop.xlane.xlu0 %11255
    %11257 = vadd.xlane.f32.xlu0 %v11194
    %v11258 = vpop.xlane.xlu0 %11257
    %11259 = vadd.xlane.f32.xlu0 %v11196
    %v11260 = vpop.xlane.xlu0 %11259
    %11261 = vadd.xlane.f32.xlu0 %v11198
    %v11262 = vpop.xlane.xlu0 %11261
    %11263 = vadd.xlane.f32.xlu0 %v11200
    %v11264 = vpop.xlane.xlu0 %11263
    %11265 = vadd.xlane.f32.xlu0 %v11202
    %v11266 = vpop.xlane.xlu0 %11265
    %11267 = vadd.xlane.f32.xlu0 %v11204
    %v11268 = vpop.xlane.xlu0 %11267
    %11269 = vadd.xlane.f32.xlu0 %v11206
    %v11270 = vpop.xlane.xlu0 %11269
    %11271 = vadd.xlane.f32.xlu0 %v11208
    %v11272 = vpop.xlane.xlu0 %11271
    %11273 = vadd.xlane.f32.xlu0 %v11210
    %v11274 = vpop.xlane.xlu0 %11273
    %11275 = vadd.xlane.f32.xlu0 %v11212
    %v11276 = vpop.xlane.xlu0 %11275
    %11277 = vadd.xlane.f32.xlu0 %v11214
    %v11278 = vpop.xlane.xlu0 %11277
    %11279 = vadd.xlane.f32.xlu0 %v11216
    %v11280 = vpop.xlane.xlu0 %11279
    %11281 = vadd.xlane.f32.xlu0 %v11218
    %v11282 = vpop.xlane.xlu0 %11281
    %11283 = vadd.xlane.f32.xlu0 %v11220
    %v11284 = vpop.xlane.xlu0 %11283
    %v11285 = vrcp.pop %v11222
    %v11286 = vrcp.pop %v11224
    %v11287 = vrcp.pop %v11226
    %v11288 = vrcp.pop %v11228
    %v11289 = vrcp.pop %v11230
    %v11290 = vrcp.pop %v11232
    %v11291 = vrcp.pop %v11234
    %v11292 = vrcp.pop %v11236
    %v11293 = vrcp.pop %v11238
    %v11294 = vrcp.pop %v11240
    %v11295 = vrcp.pop %v11242
    %v11296 = vrcp.pop %v11244
    %v11297 = vrcp.pop %v11246
    %v11298 = vrcp.pop %v11248
    %v11299 = vrcp.pop %v11250
    %v11300 = vrcp.pop %v11252
    %v11301 = vrcp.pop %v11254
    %v11302 = vrcp.pop %v11256
    %v11303 = vrcp.pop %v11258
    %v11304 = vrcp.pop %v11260
    %v11305 = vrcp.pop %v11262
    %v11306 = vrcp.pop %v11264
    %v11307 = vrcp.pop %v11266
    %v11308 = vrcp.pop %v11268
    %v11309 = vrcp.pop %v11270
    %v11310 = vrcp.pop %v11272
    %v11311 = vrcp.pop %v11274
    %v11312 = vrcp.pop %v11276
    %v11313 = vrcp.pop %v11278
    %v11314 = vrcp.pop %v11280
    %v11315 = vrcp.pop %v11282
    %v11316 = vrcp.pop %v11284
    %v11317 = vmul.f32 %v11158, %v11285
    %v11318 = vmul.f32 %v11160, %v11286
    %v11319 = vmul.f32 %v11162, %v11287
    %v11320 = vmul.f32 %v11164, %v11288
    %v11321 = vmul.f32 %v11166, %v11289
    %v11322 = vmul.f32 %v11168, %v11290
    %v11323 = vmul.f32 %v11170, %v11291
    %v11324 = vmul.f32 %v11172, %v11292
    %v11325 = vmul.f32 %v11174, %v11293
    %v11326 = vmul.f32 %v11176, %v11294
    %v11327 = vmul.f32 %v11178, %v11295
    %v11328 = vmul.f32 %v11180, %v11296
    %v11329 = vmul.f32 %v11182, %v11297
    %v11330 = vmul.f32 %v11184, %v11298
    %v11331 = vmul.f32 %v11186, %v11299
    %v11332 = vmul.f32 %v11188, %v11300
    %v11333 = vmul.f32 %v11190, %v11301
    %v11334 = vmul.f32 %v11192, %v11302
    %v11335 = vmul.f32 %v11194, %v11303
    %v11336 = vmul.f32 %v11196, %v11304
    %v11337 = vmul.f32 %v11198, %v11305
    %v11338 = vmul.f32 %v11200, %v11306
    %v11339 = vmul.f32 %v11202, %v11307
    %v11340 = vmul.f32 %v11204, %v11308
    %v11341 = vmul.f32 %v11206, %v11309
    %v11342 = vmul.f32 %v11208, %v11310
    %v11343 = vmul.f32 %v11210, %v11311
    %v11344 = vmul.f32 %v11212, %v11312
    %v11345 = vmul.f32 %v11214, %v11313
    %v11346 = vmul.f32 %v11216, %v11314
    %v11347 = vmul.f32 %v11218, %v11315
    %v11348 = vmul.f32 %v11220, %v11316
    %11365 = vrot.lane.b32.xlu0 %v2074, 64
    %v11366 = vpop.permute.xlu0 %11365
    %11367 = vrot.lane.b32.xlu0 %v2080, 64
    %v11368 = vpop.permute.xlu0 %11367
    %11369 = vrot.lane.b32.xlu0 %v2086, 64
    %v11370 = vpop.permute.xlu0 %11369
    %11371 = vrot.lane.b32.xlu0 %v2092, 64
    %v11372 = vpop.permute.xlu0 %11371
    %11373 = vrot.lane.b32.xlu0 %v2098, 64
    %v11374 = vpop.permute.xlu0 %11373
    %11375 = vrot.lane.b32.xlu0 %v2104, 64
    %v11376 = vpop.permute.xlu0 %11375
    %11377 = vrot.lane.b32.xlu0 %v2110, 64
    %v11378 = vpop.permute.xlu0 %11377
    %11379 = vrot.lane.b32.xlu0 %v2116, 64
    %v11380 = vpop.permute.xlu0 %11379
    %11381 = vrot.lane.b32.xlu0 %v2122, 64
    %v11382 = vpop.permute.xlu0 %11381
    %11383 = vrot.lane.b32.xlu0 %v2128, 64
    %v11384 = vpop.permute.xlu0 %11383
    %11385 = vrot.lane.b32.xlu0 %v2134, 64
    %v11386 = vpop.permute.xlu0 %11385
    %11387 = vrot.lane.b32.xlu0 %v2140, 64
    %v11388 = vpop.permute.xlu0 %11387
    %11389 = vrot.lane.b32.xlu0 %v2146, 64
    %v11390 = vpop.permute.xlu0 %11389
    %11391 = vrot.lane.b32.xlu0 %v2152, 64
    %v11392 = vpop.permute.xlu0 %11391
    %11393 = vrot.lane.b32.xlu0 %v2158, 64
    %v11394 = vpop.permute.xlu0 %11393
    %11395 = vrot.lane.b32.xlu0 %v2164, 64
    %v11396 = vpop.permute.xlu0 %11395
    %11413 = vmatprep.subr.mxu0 0.0
    %11414 = vmatpush1.msra.mxu0 %v11366
    %11415 = vmatprep.subr.mxu0 0.0
    %11416 = vmatpush1.msra.mxu0 %v11368
    %11417 = vmatprep.subr.mxu0 0.0
    %11418 = vmatpush1.msra.mxu0 %v11370
    %11419 = vmatprep.subr.mxu0 0.0
    %11420 = vmatpush1.msra.mxu0 %v11372
    %11421 = vmatprep.subr.mxu0 0.0
    %11422 = vmatpush1.msra.mxu0 %v11374
    %11423 = vmatprep.subr.mxu0 0.0
    %11424 = vmatpush1.msra.mxu0 %v11376
    %11425 = vmatprep.subr.mxu0 0.0
    %11426 = vmatpush1.msra.mxu0 %v11378
    %11427 = vmatprep.subr.mxu0 0.0
    %11428 = vmatpush1.msra.mxu0 %v11380
    %11429 = vmatprep.subr.mxu0 0.0
    %11430 = vmatpush1.msra.mxu0 %v11382
    %11431 = vmatprep.subr.mxu0 0.0
    %11432 = vmatpush1.msra.mxu0 %v11384
    %11433 = vmatprep.subr.mxu0 0.0
    %11434 = vmatpush1.msra.mxu0 %v11386
    %11435 = vmatprep.subr.mxu0 0.0
    %11436 = vmatpush1.msra.mxu0 %v11388
    %11437 = vmatprep.subr.mxu0 0.0
    %11438 = vmatpush1.msra.mxu0 %v11390
    %11439 = vmatprep.subr.mxu0 0.0
    %11440 = vmatpush1.msra.mxu0 %v11392
    %11441 = vmatprep.subr.mxu0 0.0
    %11442 = vmatpush1.msra.mxu0 %v11394
    %11443 = vmatprep.subr.mxu0 0.0
    %11444 = vmatpush1.msra.mxu0 %v11396
    %11445 = vmatprep.subr.mxu0 0.0
    %11446 = vmatpush1.msra.mxu0 0.0
    %11447 = vmatprep.subr.mxu0 0.0
    %11448 = vmatpush1.msra.mxu0 0.0
    %11449 = vmatprep.subr.mxu0 0.0
    %11450 = vmatpush1.msra.mxu0 0.0
    %11451 = vmatprep.subr.mxu0 0.0
    %11452 = vmatpush1.msra.mxu0 0.0
    %11453 = vmatprep.subr.mxu0 0.0
    %11454 = vmatpush1.msra.mxu0 0.0
    %11455 = vmatprep.subr.mxu0 0.0
    %11456 = vmatpush1.msra.mxu0 0.0
    %11457 = vmatprep.subr.mxu0 0.0
    %11458 = vmatpush1.msra.mxu0 0.0
    %11459 = vmatprep.subr.mxu0 0.0
    %11460 = vmatpush1.msra.mxu0 0.0
    %11461 = vmatprep.subr.mxu0 0.0
    %11462 = vmatpush1.msra.mxu0 0.0
    %11463 = vmatprep.subr.mxu0 0.0
    %11464 = vmatpush1.msra.mxu0 0.0
    %11465 = vmatprep.subr.mxu0 0.0
    %11466 = vmatpush1.msra.mxu0 0.0
    %11467 = vmatprep.subr.mxu0 0.0
    %11468 = vmatpush1.msra.mxu0 0.0
    %11469 = vmatprep.subr.mxu0 0.0
    %11470 = vmatpush1.msra.mxu0 0.0
    %11471 = vmatprep.subr.mxu0 0.0
    %11472 = vmatpush1.msra.mxu0 0.0
    %11473 = vmatprep.subr.mxu0 0.0
    %11474 = vmatpush1.msra.mxu0 0.0
    %11475 = vmatprep.subr.mxu0 0.0
    %11476 = vmatpush1.msra.mxu0 0.0
    %11477 = vmatprep.mubr.f32.mxu0 0.0
    %11478 = vmatmul.mubr.f32.gmra.mrb[0].mxu0 %v11317
    %v11479 = vpop.f32.mrb[0].mxu0
    %v11480 = vadd.f32 0.0, %v11479
    %v11481 = vpop.f32.mrb[0].mxu0
    %11482 = vmatprep.mubr.f32.mxu0 0.0
    %11483 = vmatmul.mubr.f32.gmra.mrb[0].mxu0 %v11318
    %v11484 = vpop.f32.mrb[0].mxu0
    %v11485 = vadd.f32 0.0, %v11484
    %v11486 = vpop.f32.mrb[0].mxu0
    %11487 = vmatprep.mubr.f32.mxu0 0.0
    %11488 = vmatmul.mubr.f32.gmra.mrb[0].mxu0 %v11319
    %v11489 = vpop.f32.mrb[0].mxu0
    %v11490 = vadd.f32 0.0, %v11489
    %v11491 = vpop.f32.mrb[0].mxu0
    %11492 = vmatprep.mubr.f32.mxu0 0.0
    %11493 = vmatmul.mubr.f32.gmra.mrb[0].mxu0 %v11320
    %v11494 = vpop.f32.mrb[0].mxu0
    %v11495 = vadd.f32 0.0, %v11494
    %v11496 = vpop.f32.mrb[0].mxu0
    %11497 = vmatprep.mubr.f32.mxu0 0.0
    %11498 = vmatmul.mubr.f32.gmra.mrb[0].mxu0 %v11321
    %v11499 = vpop.f32.mrb[0].mxu0
    %v11500 = vadd.f32 0.0, %v11499
    %v11501 = vpop.f32.mrb[0].mxu0
    %11502 = vmatprep.mubr.f32.mxu0 0.0
    %11503 = vmatmul.mubr.f32.gmra.mrb[0].mxu0 %v11322
    %v11504 = vpop.f32.mrb[0].mxu0
    %v11505 = vadd.f32 0.0, %v11504
    %v11506 = vpop.f32.mrb[0].mxu0
    %11507 = vmatprep.mubr.f32.mxu0 0.0
    %11508 = vmatmul.mubr.f32.gmra.mrb[0].mxu0 %v11323
    %v11509 = vpop.f32.mrb[0].mxu0
    %v11510 = vadd.f32 0.0, %v11509
    %v11511 = vpop.f32.mrb[0].mxu0
    %11512 = vmatprep.mubr.f32.mxu0 0.0
    %11513 = vmatmul.mubr.f32.gmra.mrb[0].mxu0 %v11324
    %v11514 = vpop.f32.mrb[0].mxu0
    %v11515 = vadd.f32 0.0, %v11514
    %v11516 = vpop.f32.mrb[0].mxu0
    %11517 = vmatprep.mubr.f32.mxu0 0.0
    %11518 = vmatmul.mubr.f32.gmra.mrb[0].mxu0 %v11325
    %v11519 = vpop.f32.mrb[0].mxu0
    %v11520 = vadd.f32 0.0, %v11519
    %v11521 = vpop.f32.mrb[0].mxu0
    %11522 = vmatprep.mubr.f32.mxu0 0.0
    %11523 = vmatmul.mubr.f32.gmra.mrb[0].mxu0 %v11326
    %v11524 = vpop.f32.mrb[0].mxu0
    %v11525 = vadd.f32 0.0, %v11524
    %v11526 = vpop.f32.mrb[0].mxu0
    %11527 = vmatprep.mubr.f32.mxu0 0.0
    %11528 = vmatmul.mubr.f32.gmra.mrb[0].mxu0 %v11327
    %v11529 = vpop.f32.mrb[0].mxu0
    %v11530 = vadd.f32 0.0, %v11529
    %v11531 = vpop.f32.mrb[0].mxu0
    %11532 = vmatprep.mubr.f32.mxu0 0.0
    %11533 = vmatmul.mubr.f32.gmra.mrb[0].mxu0 %v11328
    %v11534 = vpop.f32.mrb[0].mxu0
    %v11535 = vadd.f32 0.0, %v11534
    %v11536 = vpop.f32.mrb[0].mxu0
    %11537 = vmatprep.mubr.f32.mxu0 0.0
    %11538 = vmatmul.mubr.f32.gmra.mrb[0].mxu0 %v11329
    %v11539 = vpop.f32.mrb[0].mxu0
    %v11540 = vadd.f32 0.0, %v11539
    %v11541 = vpop.f32.mrb[0].mxu0
    %11542 = vmatprep.mubr.f32.mxu0 0.0
    %11543 = vmatmul.mubr.f32.gmra.mrb[0].mxu0 %v11330
    %v11544 = vpop.f32.mrb[0].mxu0
    %v11545 = vadd.f32 0.0, %v11544
    %v11546 = vpop.f32.mrb[0].mxu0
    %11547 = vmatprep.mubr.f32.mxu0 0.0
    %11548 = vmatmul.mubr.f32.gmra.mrb[0].mxu0 %v11331
    %v11549 = vpop.f32.mrb[0].mxu0
    %v11550 = vadd.f32 0.0, %v11549
    %v11551 = vpop.f32.mrb[0].mxu0
    %11552 = vmatprep.mubr.f32.mxu0 0.0
    %11553 = vmatmul.mubr.f32.gmra.mrb[0].mxu0 %v11332
    %v11554 = vpop.f32.mrb[0].mxu0
    %v11555 = vadd.f32 0.0, %v11554
    %v11556 = vpop.f32.mrb[0].mxu0
    %11557 = vdwg.mxu0
    %11574 = vrot.lane.b32.xlu0 %v2170, 64
    %v11575 = vpop.permute.xlu0 %11574
    %11576 = vrot.lane.b32.xlu0 %v2176, 64
    %v11577 = vpop.permute.xlu0 %11576
    %11578 = vrot.lane.b32.xlu0 %v2182, 64
    %v11579 = vpop.permute.xlu0 %11578
    %11580 = vrot.lane.b32.xlu0 %v2188, 64
    %v11581 = vpop.permute.xlu0 %11580
    %11582 = vrot.lane.b32.xlu0 %v2194, 64
    %v11583 = vpop.permute.xlu0 %11582
    %11584 = vrot.lane.b32.xlu0 %v2200, 64
    %v11585 = vpop.permute.xlu0 %11584
    %11586 = vrot.lane.b32.xlu0 %v2206, 64
    %v11587 = vpop.permute.xlu0 %11586
    %11588 = vrot.lane.b32.xlu0 %v2212, 64
    %v11589 = vpop.permute.xlu0 %11588
    %11590 = vrot.lane.b32.xlu0 %v2218, 64
    %v11591 = vpop.permute.xlu0 %11590
    %11592 = vrot.lane.b32.xlu0 %v2224, 64
    %v11593 = vpop.permute.xlu0 %11592
    %11594 = vrot.lane.b32.xlu0 %v2230, 64
    %v11595 = vpop.permute.xlu0 %11594
    %11596 = vrot.lane.b32.xlu0 %v2236, 64
    %v11597 = vpop.permute.xlu0 %11596
    %11598 = vrot.lane.b32.xlu0 %v2242, 64
    %v11599 = vpop.permute.xlu0 %11598
    %11600 = vrot.lane.b32.xlu0 %v2248, 64
    %v11601 = vpop.permute.xlu0 %11600
    %11602 = vrot.lane.b32.xlu0 %v2254, 64
    %v11603 = vpop.permute.xlu0 %11602
    %11604 = vrot.lane.b32.xlu0 %v2260, 64
    %v11605 = vpop.permute.xlu0 %11604
    %11622 = vmatprep.subr.mxu0 0.0
    %11623 = vmatpush1.msra.mxu0 %v11575
    %11624 = vmatprep.subr.mxu0 0.0
    %11625 = vmatpush1.msra.mxu0 %v11577
    %11626 = vmatprep.subr.mxu0 0.0
    %11627 = vmatpush1.msra.mxu0 %v11579
    %11628 = vmatprep.subr.mxu0 0.0
    %11629 = vmatpush1.msra.mxu0 %v11581
    %11630 = vmatprep.subr.mxu0 0.0
    %11631 = vmatpush1.msra.mxu0 %v11583
    %11632 = vmatprep.subr.mxu0 0.0
    %11633 = vmatpush1.msra.mxu0 %v11585
    %11634 = vmatprep.subr.mxu0 0.0
    %11635 = vmatpush1.msra.mxu0 %v11587
    %11636 = vmatprep.subr.mxu0 0.0
    %11637 = vmatpush1.msra.mxu0 %v11589
    %11638 = vmatprep.subr.mxu0 0.0
    %11639 = vmatpush1.msra.mxu0 %v11591
    %11640 = vmatprep.subr.mxu0 0.0
    %11641 = vmatpush1.msra.mxu0 %v11593
    %11642 = vmatprep.subr.mxu0 0.0
    %11643 = vmatpush1.msra.mxu0 %v11595
    %11644 = vmatprep.subr.mxu0 0.0
    %11645 = vmatpush1.msra.mxu0 %v11597
    %11646 = vmatprep.subr.mxu0 0.0
    %11647 = vmatpush1.msra.mxu0 %v11599
    %11648 = vmatprep.subr.mxu0 0.0
    %11649 = vmatpush1.msra.mxu0 %v11601
    %11650 = vmatprep.subr.mxu0 0.0
    %11651 = vmatpush1.msra.mxu0 %v11603
    %11652 = vmatprep.subr.mxu0 0.0
    %11653 = vmatpush1.msra.mxu0 %v11605
    %11654 = vmatprep.subr.mxu0 0.0
    %11655 = vmatpush1.msra.mxu0 0.0
    %11656 = vmatprep.subr.mxu0 0.0
    %11657 = vmatpush1.msra.mxu0 0.0
    %11658 = vmatprep.subr.mxu0 0.0
    %11659 = vmatpush1.msra.mxu0 0.0
    %11660 = vmatprep.subr.mxu0 0.0
    %11661 = vmatpush1.msra.mxu0 0.0
    %11662 = vmatprep.subr.mxu0 0.0
    %11663 = vmatpush1.msra.mxu0 0.0
    %11664 = vmatprep.subr.mxu0 0.0
    %11665 = vmatpush1.msra.mxu0 0.0
    %11666 = vmatprep.subr.mxu0 0.0
    %11667 = vmatpush1.msra.mxu0 0.0
    %11668 = vmatprep.subr.mxu0 0.0
    %11669 = vmatpush1.msra.mxu0 0.0
    %11670 = vmatprep.subr.mxu0 0.0
    %11671 = vmatpush1.msra.mxu0 0.0
    %11672 = vmatprep.subr.mxu0 0.0
    %11673 = vmatpush1.msra.mxu0 0.0
    %11674 = vmatprep.subr.mxu0 0.0
    %11675 = vmatpush1.msra.mxu0 0.0
    %11676 = vmatprep.subr.mxu0 0.0
    %11677 = vmatpush1.msra.mxu0 0.0
    %11678 = vmatprep.subr.mxu0 0.0
    %11679 = vmatpush1.msra.mxu0 0.0
    %11680 = vmatprep.subr.mxu0 0.0
    %11681 = vmatpush1.msra.mxu0 0.0
    %11682 = vmatprep.subr.mxu0 0.0
    %11683 = vmatpush1.msra.mxu0 0.0
    %11684 = vmatprep.subr.mxu0 0.0
    %11685 = vmatpush1.msra.mxu0 0.0
    %11686 = vmatprep.mubr.f32.mxu0 0.0
    %11687 = vmatmul.mubr.f32.gmra.mrb[0].mxu0 %v11333
    %v11688 = vpop.f32.mrb[0].mxu0
    %v11689 = vadd.f32 0.0, %v11688
    %v11690 = vpop.f32.mrb[0].mxu0
    %11691 = vmatprep.mubr.f32.mxu0 0.0
    %11692 = vmatmul.mubr.f32.gmra.mrb[0].mxu0 %v11334
    %v11693 = vpop.f32.mrb[0].mxu0
    %v11694 = vadd.f32 0.0, %v11693
    %v11695 = vpop.f32.mrb[0].mxu0
    %11696 = vmatprep.mubr.f32.mxu0 0.0
    %11697 = vmatmul.mubr.f32.gmra.mrb[0].mxu0 %v11335
    %v11698 = vpop.f32.mrb[0].mxu0
    %v11699 = vadd.f32 0.0, %v11698
    %v11700 = vpop.f32.mrb[0].mxu0
    %11701 = vmatprep.mubr.f32.mxu0 0.0
    %11702 = vmatmul.mubr.f32.gmra.mrb[0].mxu0 %v11336
    %v11703 = vpop.f32.mrb[0].mxu0
    %v11704 = vadd.f32 0.0, %v11703
    %v11705 = vpop.f32.mrb[0].mxu0
    %11706 = vmatprep.mubr.f32.mxu0 0.0
    %11707 = vmatmul.mubr.f32.gmra.mrb[0].mxu0 %v11337
    %v11708 = vpop.f32.mrb[0].mxu0
    %v11709 = vadd.f32 0.0, %v11708
    %v11710 = vpop.f32.mrb[0].mxu0
    %11711 = vmatprep.mubr.f32.mxu0 0.0
    %11712 = vmatmul.mubr.f32.gmra.mrb[0].mxu0 %v11338
    %v11713 = vpop.f32.mrb[0].mxu0
    %v11714 = vadd.f32 0.0, %v11713
    %v11715 = vpop.f32.mrb[0].mxu0
    %11716 = vmatprep.mubr.f32.mxu0 0.0
    %11717 = vmatmul.mubr.f32.gmra.mrb[0].mxu0 %v11339
    %v11718 = vpop.f32.mrb[0].mxu0
    %v11719 = vadd.f32 0.0, %v11718
    %v11720 = vpop.f32.mrb[0].mxu0
    %11721 = vmatprep.mubr.f32.mxu0 0.0
    %11722 = vmatmul.mubr.f32.gmra.mrb[0].mxu0 %v11340
    %v11723 = vpop.f32.mrb[0].mxu0
    %v11724 = vadd.f32 0.0, %v11723
    %v11725 = vpop.f32.mrb[0].mxu0
    %11726 = vmatprep.mubr.f32.mxu0 0.0
    %11727 = vmatmul.mubr.f32.gmra.mrb[0].mxu0 %v11341
    %v11728 = vpop.f32.mrb[0].mxu0
    %v11729 = vadd.f32 0.0, %v11728
    %v11730 = vpop.f32.mrb[0].mxu0
    %11731 = vmatprep.mubr.f32.mxu0 0.0
    %11732 = vmatmul.mubr.f32.gmra.mrb[0].mxu0 %v11342
    %v11733 = vpop.f32.mrb[0].mxu0
    %v11734 = vadd.f32 0.0, %v11733
    %v11735 = vpop.f32.mrb[0].mxu0
    %11736 = vmatprep.mubr.f32.mxu0 0.0
    %11737 = vmatmul.mubr.f32.gmra.mrb[0].mxu0 %v11343
    %v11738 = vpop.f32.mrb[0].mxu0
    %v11739 = vadd.f32 0.0, %v11738
    %v11740 = vpop.f32.mrb[0].mxu0
    %11741 = vmatprep.mubr.f32.mxu0 0.0
    %11742 = vmatmul.mubr.f32.gmra.mrb[0].mxu0 %v11344
    %v11743 = vpop.f32.mrb[0].mxu0
    %v11744 = vadd.f32 0.0, %v11743
    %v11745 = vpop.f32.mrb[0].mxu0
    %11746 = vmatprep.mubr.f32.mxu0 0.0
    %11747 = vmatmul.mubr.f32.gmra.mrb[0].mxu0 %v11345
    %v11748 = vpop.f32.mrb[0].mxu0
    %v11749 = vadd.f32 0.0, %v11748
    %v11750 = vpop.f32.mrb[0].mxu0
    %11751 = vmatprep.mubr.f32.mxu0 0.0
    %11752 = vmatmul.mubr.f32.gmra.mrb[0].mxu0 %v11346
    %v11753 = vpop.f32.mrb[0].mxu0
    %v11754 = vadd.f32 0.0, %v11753
    %v11755 = vpop.f32.mrb[0].mxu0
    %11756 = vmatprep.mubr.f32.mxu0 0.0
    %11757 = vmatmul.mubr.f32.gmra.mrb[0].mxu0 %v11347
    %v11758 = vpop.f32.mrb[0].mxu0
    %v11759 = vadd.f32 0.0, %v11758
    %v11760 = vpop.f32.mrb[0].mxu0
    %11761 = vmatprep.mubr.f32.mxu0 0.0
    %11762 = vmatmul.mubr.f32.gmra.mrb[0].mxu0 %v11348
    %v11763 = vpop.f32.mrb[0].mxu0
    %v11764 = vadd.f32 0.0, %v11763
    %v11765 = vpop.f32.mrb[0].mxu0
    %11766 = vdwg.mxu0
    %11799 = vrot.lane.b32.xlu0 %v4352, 64
    %v11800 = vpop.permute.xlu0 %11799
    %11801 = vrot.lane.b32.xlu0 %v4357, 64
    %v11802 = vpop.permute.xlu0 %11801
    %11803 = vrot.lane.b32.xlu0 %v4362, 64
    %v11804 = vpop.permute.xlu0 %11803
    %11805 = vrot.lane.b32.xlu0 %v4367, 64
    %v11806 = vpop.permute.xlu0 %11805
    %11807 = vrot.lane.b32.xlu0 %v4372, 64
    %v11808 = vpop.permute.xlu0 %11807
    %11809 = vrot.lane.b32.xlu0 %v4377, 64
    %v11810 = vpop.permute.xlu0 %11809
    %11811 = vrot.lane.b32.xlu0 %v4382, 64
    %v11812 = vpop.permute.xlu0 %11811
    %11813 = vrot.lane.b32.xlu0 %v4387, 64
    %v11814 = vpop.permute.xlu0 %11813
    %11815 = vrot.lane.b32.xlu0 %v4392, 64
    %v11816 = vpop.permute.xlu0 %11815
    %11817 = vrot.lane.b32.xlu0 %v4397, 64
    %v11818 = vpop.permute.xlu0 %11817
    %11819 = vrot.lane.b32.xlu0 %v4402, 64
    %v11820 = vpop.permute.xlu0 %11819
    %11821 = vrot.lane.b32.xlu0 %v4407, 64
    %v11822 = vpop.permute.xlu0 %11821
    %11823 = vrot.lane.b32.xlu0 %v4412, 64
    %v11824 = vpop.permute.xlu0 %11823
    %11825 = vrot.lane.b32.xlu0 %v4417, 64
    %v11826 = vpop.permute.xlu0 %11825
    %11827 = vrot.lane.b32.xlu0 %v4422, 64
    %v11828 = vpop.permute.xlu0 %11827
    %11829 = vrot.lane.b32.xlu0 %v4427, 64
    %v11830 = vpop.permute.xlu0 %11829
    %11831 = vrot.lane.b32.xlu0 %v4561, 64
    %v11832 = vpop.permute.xlu0 %11831
    %11833 = vrot.lane.b32.xlu0 %v4566, 64
    %v11834 = vpop.permute.xlu0 %11833
    %11835 = vrot.lane.b32.xlu0 %v4571, 64
    %v11836 = vpop.permute.xlu0 %11835
    %11837 = vrot.lane.b32.xlu0 %v4576, 64
    %v11838 = vpop.permute.xlu0 %11837
    %11839 = vrot.lane.b32.xlu0 %v4581, 64
    %v11840 = vpop.permute.xlu0 %11839
    %11841 = vrot.lane.b32.xlu0 %v4586, 64
    %v11842 = vpop.permute.xlu0 %11841
    %11843 = vrot.lane.b32.xlu0 %v4591, 64
    %v11844 = vpop.permute.xlu0 %11843
    %11845 = vrot.lane.b32.xlu0 %v4596, 64
    %v11846 = vpop.permute.xlu0 %11845
    %11847 = vrot.lane.b32.xlu0 %v4601, 64
    %v11848 = vpop.permute.xlu0 %11847
    %11849 = vrot.lane.b32.xlu0 %v4606, 64
    %v11850 = vpop.permute.xlu0 %11849
    %11851 = vrot.lane.b32.xlu0 %v4611, 64
    %v11852 = vpop.permute.xlu0 %11851
    %11853 = vrot.lane.b32.xlu0 %v4616, 64
    %v11854 = vpop.permute.xlu0 %11853
    %11855 = vrot.lane.b32.xlu0 %v4621, 64
    %v11856 = vpop.permute.xlu0 %11855
    %11857 = vrot.lane.b32.xlu0 %v4626, 64
    %v11858 = vpop.permute.xlu0 %11857
    %11859 = vrot.lane.b32.xlu0 %v4631, 64
    %v11860 = vpop.permute.xlu0 %11859
    %11861 = vrot.lane.b32.xlu0 %v4636, 64
    %v11862 = vpop.permute.xlu0 %11861
    %11927 = vrot.lane.b32.xlu0 %v6728, 64
    %v11928 = vpop.permute.xlu0 %11927
    %11929 = vrot.lane.b32.xlu0 %v6733, 64
    %v11930 = vpop.permute.xlu0 %11929
    %11931 = vrot.lane.b32.xlu0 %v6738, 64
    %v11932 = vpop.permute.xlu0 %11931
    %11933 = vrot.lane.b32.xlu0 %v6743, 64
    %v11934 = vpop.permute.xlu0 %11933
    %11935 = vrot.lane.b32.xlu0 %v6748, 64
    %v11936 = vpop.permute.xlu0 %11935
    %11937 = vrot.lane.b32.xlu0 %v6753, 64
    %v11938 = vpop.permute.xlu0 %11937
    %11939 = vrot.lane.b32.xlu0 %v6758, 64
    %v11940 = vpop.permute.xlu0 %11939
    %11941 = vrot.lane.b32.xlu0 %v6763, 64
    %v11942 = vpop.permute.xlu0 %11941
    %11943 = vrot.lane.b32.xlu0 %v6768, 64
    %v11944 = vpop.permute.xlu0 %11943
    %11945 = vrot.lane.b32.xlu0 %v6773, 64
    %v11946 = vpop.permute.xlu0 %11945
    %11947 = vrot.lane.b32.xlu0 %v6778, 64
    %v11948 = vpop.permute.xlu0 %11947
    %11949 = vrot.lane.b32.xlu0 %v6783, 64
    %v11950 = vpop.permute.xlu0 %11949
    %11951 = vrot.lane.b32.xlu0 %v6788, 64
    %v11952 = vpop.permute.xlu0 %11951
    %11953 = vrot.lane.b32.xlu0 %v6793, 64
    %v11954 = vpop.permute.xlu0 %11953
    %11955 = vrot.lane.b32.xlu0 %v6798, 64
    %v11956 = vpop.permute.xlu0 %11955
    %11957 = vrot.lane.b32.xlu0 %v6803, 64
    %v11958 = vpop.permute.xlu0 %11957
    %11959 = vrot.lane.b32.xlu0 %v6937, 64
    %v11960 = vpop.permute.xlu0 %11959
    %11961 = vrot.lane.b32.xlu0 %v6942, 64
    %v11962 = vpop.permute.xlu0 %11961
    %11963 = vrot.lane.b32.xlu0 %v6947, 64
    %v11964 = vpop.permute.xlu0 %11963
    %11965 = vrot.lane.b32.xlu0 %v6952, 64
    %v11966 = vpop.permute.xlu0 %11965
    %11967 = vrot.lane.b32.xlu0 %v6957, 64
    %v11968 = vpop.permute.xlu0 %11967
    %11969 = vrot.lane.b32.xlu0 %v6962, 64
    %v11970 = vpop.permute.xlu0 %11969
    %11971 = vrot.lane.b32.xlu0 %v6967, 64
    %v11972 = vpop.permute.xlu0 %11971
    %11973 = vrot.lane.b32.xlu0 %v6972, 64
    %v11974 = vpop.permute.xlu0 %11973
    %11975 = vrot.lane.b32.xlu0 %v6977, 64
    %v11976 = vpop.permute.xlu0 %11975
    %11977 = vrot.lane.b32.xlu0 %v6982, 64
    %v11978 = vpop.permute.xlu0 %11977
    %11979 = vrot.lane.b32.xlu0 %v6987, 64
    %v11980 = vpop.permute.xlu0 %11979
    %11981 = vrot.lane.b32.xlu0 %v6992, 64
    %v11982 = vpop.permute.xlu0 %11981
    %11983 = vrot.lane.b32.xlu0 %v6997, 64
    %v11984 = vpop.permute.xlu0 %11983
    %11985 = vrot.lane.b32.xlu0 %v7002, 64
    %v11986 = vpop.permute.xlu0 %11985
    %11987 = vrot.lane.b32.xlu0 %v7007, 64
    %v11988 = vpop.permute.xlu0 %11987
    %11989 = vrot.lane.b32.xlu0 %v7012, 64
    %v11990 = vpop.permute.xlu0 %11989
    %12055 = vrot.lane.b32.xlu0 %v9104, 64
    %v12056 = vpop.permute.xlu0 %12055
    %12057 = vrot.lane.b32.xlu0 %v9109, 64
    %v12058 = vpop.permute.xlu0 %12057
    %12059 = vrot.lane.b32.xlu0 %v9114, 64
    %v12060 = vpop.permute.xlu0 %12059
    %12061 = vrot.lane.b32.xlu0 %v9119, 64
    %v12062 = vpop.permute.xlu0 %12061
    %12063 = vrot.lane.b32.xlu0 %v9124, 64
    %v12064 = vpop.permute.xlu0 %12063
    %12065 = vrot.lane.b32.xlu0 %v9129, 64
    %v12066 = vpop.permute.xlu0 %12065
    %12067 = vrot.lane.b32.xlu0 %v9134, 64
    %v12068 = vpop.permute.xlu0 %12067
    %12069 = vrot.lane.b32.xlu0 %v9139, 64
    %v12070 = vpop.permute.xlu0 %12069
    %12071 = vrot.lane.b32.xlu0 %v9144, 64
    %v12072 = vpop.permute.xlu0 %12071
    %12073 = vrot.lane.b32.xlu0 %v9149, 64
    %v12074 = vpop.permute.xlu0 %12073
    %12075 = vrot.lane.b32.xlu0 %v9154, 64
    %v12076 = vpop.permute.xlu0 %12075
    %12077 = vrot.lane.b32.xlu0 %v9159, 64
    %v12078 = vpop.permute.xlu0 %12077
    %12079 = vrot.lane.b32.xlu0 %v9164, 64
    %v12080 = vpop.permute.xlu0 %12079
    %12081 = vrot.lane.b32.xlu0 %v9169, 64
    %v12082 = vpop.permute.xlu0 %12081
    %12083 = vrot.lane.b32.xlu0 %v9174, 64
    %v12084 = vpop.permute.xlu0 %12083
    %12085 = vrot.lane.b32.xlu0 %v9179, 64
    %v12086 = vpop.permute.xlu0 %12085
    %12087 = vrot.lane.b32.xlu0 %v9313, 64
    %v12088 = vpop.permute.xlu0 %12087
    %12089 = vrot.lane.b32.xlu0 %v9318, 64
    %v12090 = vpop.permute.xlu0 %12089
    %12091 = vrot.lane.b32.xlu0 %v9323, 64
    %v12092 = vpop.permute.xlu0 %12091
    %12093 = vrot.lane.b32.xlu0 %v9328, 64
    %v12094 = vpop.permute.xlu0 %12093
    %12095 = vrot.lane.b32.xlu0 %v9333, 64
    %v12096 = vpop.permute.xlu0 %12095
    %12097 = vrot.lane.b32.xlu0 %v9338, 64
    %v12098 = vpop.permute.xlu0 %12097
    %12099 = vrot.lane.b32.xlu0 %v9343, 64
    %v12100 = vpop.permute.xlu0 %12099
    %12101 = vrot.lane.b32.xlu0 %v9348, 64
    %v12102 = vpop.permute.xlu0 %12101
    %12103 = vrot.lane.b32.xlu0 %v9353, 64
    %v12104 = vpop.permute.xlu0 %12103
    %12105 = vrot.lane.b32.xlu0 %v9358, 64
    %v12106 = vpop.permute.xlu0 %12105
    %12107 = vrot.lane.b32.xlu0 %v9363, 64
    %v12108 = vpop.permute.xlu0 %12107
    %12109 = vrot.lane.b32.xlu0 %v9368, 64
    %v12110 = vpop.permute.xlu0 %12109
    %12111 = vrot.lane.b32.xlu0 %v9373, 64
    %v12112 = vpop.permute.xlu0 %12111
    %12113 = vrot.lane.b32.xlu0 %v9378, 64
    %v12114 = vpop.permute.xlu0 %12113
    %12115 = vrot.lane.b32.xlu0 %v9383, 64
    %v12116 = vpop.permute.xlu0 %12115
    %12117 = vrot.lane.b32.xlu0 %v9388, 64
    %v12118 = vpop.permute.xlu0 %12117
    %12183 = vrot.lane.b32.xlu0 %v11480, 64
    %v12184 = vpop.permute.xlu0 %12183
    %12185 = vrot.lane.b32.xlu0 %v11485, 64
    %v12186 = vpop.permute.xlu0 %12185
    %12187 = vrot.lane.b32.xlu0 %v11490, 64
    %v12188 = vpop.permute.xlu0 %12187
    %12189 = vrot.lane.b32.xlu0 %v11495, 64
    %v12190 = vpop.permute.xlu0 %12189
    %12191 = vrot.lane.b32.xlu0 %v11500, 64
    %v12192 = vpop.permute.xlu0 %12191
    %12193 = vrot.lane.b32.xlu0 %v11505, 64
    %v12194 = vpop.permute.xlu0 %12193
    %12195 = vrot.lane.b32.xlu0 %v11510, 64
    %v12196 = vpop.permute.xlu0 %12195
    %12197 = vrot.lane.b32.xlu0 %v11515, 64
    %v12198 = vpop.permute.xlu0 %12197
    %12199 = vrot.lane.b32.xlu0 %v11520, 64
    %v12200 = vpop.permute.xlu0 %12199
    %12201 = vrot.lane.b32.xlu0 %v11525, 64
    %v12202 = vpop.permute.xlu0 %12201
    %12203 = vrot.lane.b32.xlu0 %v11530, 64
    %v12204 = vpop.permute.xlu0 %12203
    %12205 = vrot.lane.b32.xlu0 %v11535, 64
    %v12206 = vpop.permute.xlu0 %12205
    %12207 = vrot.lane.b32.xlu0 %v11540, 64
    %v12208 = vpop.permute.xlu0 %12207
    %12209 = vrot.lane.b32.xlu0 %v11545, 64
    %v12210 = vpop.permute.xlu0 %12209
    %12211 = vrot.lane.b32.xlu0 %v11550, 64
    %v12212 = vpop.permute.xlu0 %12211
    %12213 = vrot.lane.b32.xlu0 %v11555, 64
    %v12214 = vpop.permute.xlu0 %12213
    %12215 = vrot.lane.b32.xlu0 %v11689, 64
    %v12216 = vpop.permute.xlu0 %12215
    %12217 = vrot.lane.b32.xlu0 %v11694, 64
    %v12218 = vpop.permute.xlu0 %12217
    %12219 = vrot.lane.b32.xlu0 %v11699, 64
    %v12220 = vpop.permute.xlu0 %12219
    %12221 = vrot.lane.b32.xlu0 %v11704, 64
    %v12222 = vpop.permute.xlu0 %12221
    %12223 = vrot.lane.b32.xlu0 %v11709, 64
    %v12224 = vpop.permute.xlu0 %12223
    %12225 = vrot.lane.b32.xlu0 %v11714, 64
    %v12226 = vpop.permute.xlu0 %12225
    %12227 = vrot.lane.b32.xlu0 %v11719, 64
    %v12228 = vpop.permute.xlu0 %12227
    %12229 = vrot.lane.b32.xlu0 %v11724, 64
    %v12230 = vpop.permute.xlu0 %12229
    %12231 = vrot.lane.b32.xlu0 %v11729, 64
    %v12232 = vpop.permute.xlu0 %12231
    %12233 = vrot.lane.b32.xlu0 %v11734, 64
    %v12234 = vpop.permute.xlu0 %12233
    %12235 = vrot.lane.b32.xlu0 %v11739, 64
    %v12236 = vpop.permute.xlu0 %12235
    %12237 = vrot.lane.b32.xlu0 %v11744, 64
    %v12238 = vpop.permute.xlu0 %12237
    %12239 = vrot.lane.b32.xlu0 %v11749, 64
    %v12240 = vpop.permute.xlu0 %12239
    %12241 = vrot.lane.b32.xlu0 %v11754, 64
    %v12242 = vpop.permute.xlu0 %12241
    %12243 = vrot.lane.b32.xlu0 %v11759, 64
    %v12244 = vpop.permute.xlu0 %12243
    %12245 = vrot.lane.b32.xlu0 %v11764, 64
    %v12246 = vpop.permute.xlu0 %12245
    %v12279 = vsel %vm2262, %v3132, %v11800
    %v12280 = vsel %vm2262, %v3137, %v11802
    %v12281 = vsel %vm2262, %v3142, %v11804
    %v12282 = vsel %vm2262, %v3147, %v11806
    %v12283 = vsel %vm2262, %v3152, %v11808
    %v12284 = vsel %vm2262, %v3157, %v11810
    %v12285 = vsel %vm2262, %v3162, %v11812
    %v12286 = vsel %vm2262, %v3167, %v11814
    %v12287 = vsel %vm2262, %v3172, %v11816
    %v12288 = vsel %vm2262, %v3177, %v11818
    %v12289 = vsel %vm2262, %v3182, %v11820
    %v12290 = vsel %vm2262, %v3187, %v11822
    %v12291 = vsel %vm2262, %v3192, %v11824
    %v12292 = vsel %vm2262, %v3197, %v11826
    %v12293 = vsel %vm2262, %v3202, %v11828
    %v12294 = vsel %vm2262, %v3207, %v11830
    %v12295 = vsel %vm2262, %v3277, %v11832
    %v12296 = vsel %vm2262, %v3282, %v11834
    %v12297 = vsel %vm2262, %v3287, %v11836
    %v12298 = vsel %vm2262, %v3292, %v11838
    %v12299 = vsel %vm2262, %v3297, %v11840
    %v12300 = vsel %vm2262, %v3302, %v11842
    %v12301 = vsel %vm2262, %v3307, %v11844
    %v12302 = vsel %vm2262, %v3312, %v11846
    %v12303 = vsel %vm2262, %v3317, %v11848
    %v12304 = vsel %vm2262, %v3322, %v11850
    %v12305 = vsel %vm2262, %v3327, %v11852
    %v12306 = vsel %vm2262, %v3332, %v11854
    %v12307 = vsel %vm2262, %v3337, %v11856
    %v12308 = vsel %vm2262, %v3342, %v11858
    %v12309 = vsel %vm2262, %v3347, %v11860
    %v12310 = vsel %vm2262, %v3352, %v11862
    %v12311 = vsel %vm2262, %v5508, %v11928
    %v12312 = vsel %vm2262, %v5513, %v11930
    %v12313 = vsel %vm2262, %v5518, %v11932
    %v12314 = vsel %vm2262, %v5523, %v11934
    %v12315 = vsel %vm2262, %v5528, %v11936
    %v12316 = vsel %vm2262, %v5533, %v11938
    %v12317 = vsel %vm2262, %v5538, %v11940
    %v12318 = vsel %vm2262, %v5543, %v11942
    %v12319 = vsel %vm2262, %v5548, %v11944
    %v12320 = vsel %vm2262, %v5553, %v11946
    %v12321 = vsel %vm2262, %v5558, %v11948
    %v12322 = vsel %vm2262, %v5563, %v11950
    %v12323 = vsel %vm2262, %v5568, %v11952
    %v12324 = vsel %vm2262, %v5573, %v11954
    %v12325 = vsel %vm2262, %v5578, %v11956
    %v12326 = vsel %vm2262, %v5583, %v11958
    %v12327 = vsel %vm2262, %v5653, %v11960
    %v12328 = vsel %vm2262, %v5658, %v11962
    %v12329 = vsel %vm2262, %v5663, %v11964
    %v12330 = vsel %vm2262, %v5668, %v11966
    %v12331 = vsel %vm2262, %v5673, %v11968
    %v12332 = vsel %vm2262, %v5678, %v11970
    %v12333 = vsel %vm2262, %v5683, %v11972
    %v12334 = vsel %vm2262, %v5688, %v11974
    %v12335 = vsel %vm2262, %v5693, %v11976
    %v12336 = vsel %vm2262, %v5698, %v11978
    %v12337 = vsel %vm2262, %v5703, %v11980
    %v12338 = vsel %vm2262, %v5708, %v11982
    %v12339 = vsel %vm2262, %v5713, %v11984
    %v12340 = vsel %vm2262, %v5718, %v11986
    %v12341 = vsel %vm2262, %v5723, %v11988
    %v12342 = vsel %vm2262, %v5728, %v11990
    %v12343 = vsel %vm2262, %v7884, %v12056
    %v12344 = vsel %vm2262, %v7889, %v12058
    %v12345 = vsel %vm2262, %v7894, %v12060
    %v12346 = vsel %vm2262, %v7899, %v12062
    %v12347 = vsel %vm2262, %v7904, %v12064
    %v12348 = vsel %vm2262, %v7909, %v12066
    %v12349 = vsel %vm2262, %v7914, %v12068
    %v12350 = vsel %vm2262, %v7919, %v12070
    %v12351 = vsel %vm2262, %v7924, %v12072
    %v12352 = vsel %vm2262, %v7929, %v12074
    %v12353 = vsel %vm2262, %v7934, %v12076
    %v12354 = vsel %vm2262, %v7939, %v12078
    %v12355 = vsel %vm2262, %v7944, %v12080
    %v12356 = vsel %vm2262, %v7949, %v12082
    %v12357 = vsel %vm2262, %v7954, %v12084
    %v12358 = vsel %vm2262, %v7959, %v12086
    %v12359 = vsel %vm2262, %v8029, %v12088
    %v12360 = vsel %vm2262, %v8034, %v12090
    %v12361 = vsel %vm2262, %v8039, %v12092
    %v12362 = vsel %vm2262, %v8044, %v12094
    %v12363 = vsel %vm2262, %v8049, %v12096
    %v12364 = vsel %vm2262, %v8054, %v12098
    %v12365 = vsel %vm2262, %v8059, %v12100
    %v12366 = vsel %vm2262, %v8064, %v12102
    %v12367 = vsel %vm2262, %v8069, %v12104
    %v12368 = vsel %vm2262, %v8074, %v12106
    %v12369 = vsel %vm2262, %v8079, %v12108
    %v12370 = vsel %vm2262, %v8084, %v12110
    %v12371 = vsel %vm2262, %v8089, %v12112
    %v12372 = vsel %vm2262, %v8094, %v12114
    %v12373 = vsel %vm2262, %v8099, %v12116
    %v12374 = vsel %vm2262, %v8104, %v12118
    %v12375 = vsel %vm2262, %v10260, %v12184
    %v12376 = vsel %vm2262, %v10265, %v12186
    %v12377 = vsel %vm2262, %v10270, %v12188
    %v12378 = vsel %vm2262, %v10275, %v12190
    %v12379 = vsel %vm2262, %v10280, %v12192
    %v12380 = vsel %vm2262, %v10285, %v12194
    %v12381 = vsel %vm2262, %v10290, %v12196
    %v12382 = vsel %vm2262, %v10295, %v12198
    %v12383 = vsel %vm2262, %v10300, %v12200
    %v12384 = vsel %vm2262, %v10305, %v12202
    %v12385 = vsel %vm2262, %v10310, %v12204
    %v12386 = vsel %vm2262, %v10315, %v12206
    %v12387 = vsel %vm2262, %v10320, %v12208
    %v12388 = vsel %vm2262, %v10325, %v12210
    %v12389 = vsel %vm2262, %v10330, %v12212
    %v12390 = vsel %vm2262, %v10335, %v12214
    %v12391 = vsel %vm2262, %v10405, %v12216
    %v12392 = vsel %vm2262, %v10410, %v12218
    %v12393 = vsel %vm2262, %v10415, %v12220
    %v12394 = vsel %vm2262, %v10420, %v12222
    %v12395 = vsel %vm2262, %v10425, %v12224
    %v12396 = vsel %vm2262, %v10430, %v12226
    %v12397 = vsel %vm2262, %v10435, %v12228
    %v12398 = vsel %vm2262, %v10440, %v12230
    %v12399 = vsel %vm2262, %v10445, %v12232
    %v12400 = vsel %vm2262, %v10450, %v12234
    %v12401 = vsel %vm2262, %v10455, %v12236
    %v12402 = vsel %vm2262, %v10460, %v12238
    %v12403 = vsel %vm2262, %v10465, %v12240
    %v12404 = vsel %vm2262, %v10470, %v12242
    %v12405 = vsel %vm2262, %v10475, %v12244
    %v12406 = vsel %vm2262, %v10480, %v12246
    %v12407 = vld [vmem:[#allocation7] sm:$0xff]
    %v12408 = vld [vmem:[#allocation7 + $0x8] sm:$0xff]
    %v12409 = vld [vmem:[#allocation7 + $0x10] sm:$0xff]
    %v12410 = vld [vmem:[#allocation7 + $0x18] sm:$0xff]
    %v12411 = vld [vmem:[#allocation7 + $0x20] sm:$0xff]
    %v12412 = vld [vmem:[#allocation7 + $0x28] sm:$0xff]
    %v12413 = vld [vmem:[#allocation7 + $0x30] sm:$0xff]
    %v12414 = vld [vmem:[#allocation7 + $0x38] sm:$0xff]
    %v12415 = vld [vmem:[#allocation7 + $0x40] sm:$0xff]
    %v12416 = vld [vmem:[#allocation7 + $0x48] sm:$0xff]
    %v12417 = vld [vmem:[#allocation7 + $0x50] sm:$0xff]
    %v12418 = vld [vmem:[#allocation7 + $0x58] sm:$0xff]
    %v12419 = vld [vmem:[#allocation7 + $0x60] sm:$0xff]
    %v12420 = vld [vmem:[#allocation7 + $0x68] sm:$0xff]
    %v12421 = vld [vmem:[#allocation7 + $0x70] sm:$0xff]
    %v12422 = vld [vmem:[#allocation7 + $0x78] sm:$0xff]
    %v12423 = vld [vmem:[#allocation7 + $0x80] sm:$0xff]
    %v12424 = vld [vmem:[#allocation7 + $0x88] sm:$0xff]
    %v12425 = vld [vmem:[#allocation7 + $0x90] sm:$0xff]
    %v12426 = vld [vmem:[#allocation7 + $0x98] sm:$0xff]
    %v12427 = vld [vmem:[#allocation7 + $0xa0] sm:$0xff]
    %v12428 = vld [vmem:[#allocation7 + $0xa8] sm:$0xff]
    %v12429 = vld [vmem:[#allocation7 + $0xb0] sm:$0xff]
    %v12430 = vld [vmem:[#allocation7 + $0xb8] sm:$0xff]
    %v12431 = vld [vmem:[#allocation7 + $0xc0] sm:$0xff]
    %v12432 = vld [vmem:[#allocation7 + $0xc8] sm:$0xff]
    %v12433 = vld [vmem:[#allocation7 + $0xd0] sm:$0xff]
    %v12434 = vld [vmem:[#allocation7 + $0xd8] sm:$0xff]
    %v12435 = vld [vmem:[#allocation7 + $0xe0] sm:$0xff]
    %v12436 = vld [vmem:[#allocation7 + $0xe8] sm:$0xff]
    %v12437 = vld [vmem:[#allocation7 + $0xf0] sm:$0xff]
    %v12438 = vld [vmem:[#allocation7 + $0xf8] sm:$0xff]
    %v12439 = vld [vmem:[#allocation7 + $0x100] sm:$0xff]
    %v12440 = vld [vmem:[#allocation7 + $0x108] sm:$0xff]
    %v12441 = vld [vmem:[#allocation7 + $0x110] sm:$0xff]
    %v12442 = vld [vmem:[#allocation7 + $0x118] sm:$0xff]
    %v12443 = vld [vmem:[#allocation7 + $0x120] sm:$0xff]
    %v12444 = vld [vmem:[#allocation7 + $0x128] sm:$0xff]
    %v12445 = vld [vmem:[#allocation7 + $0x130] sm:$0xff]
    %v12446 = vld [vmem:[#allocation7 + $0x138] sm:$0xff]
    %v12447 = vld [vmem:[#allocation7 + $0x140] sm:$0xff]
    %v12448 = vld [vmem:[#allocation7 + $0x148] sm:$0xff]
    %v12449 = vld [vmem:[#allocation7 + $0x150] sm:$0xff]
    %v12450 = vld [vmem:[#allocation7 + $0x158] sm:$0xff]
    %v12451 = vld [vmem:[#allocation7 + $0x160] sm:$0xff]
    %v12452 = vld [vmem:[#allocation7 + $0x168] sm:$0xff]
    %v12453 = vld [vmem:[#allocation7 + $0x170] sm:$0xff]
    %v12454 = vld [vmem:[#allocation7 + $0x178] sm:$0xff]
    %v12455 = vld [vmem:[#allocation7 + $0x180] sm:$0xff]
    %v12456 = vld [vmem:[#allocation7 + $0x188] sm:$0xff]
    %v12457 = vld [vmem:[#allocation7 + $0x190] sm:$0xff]
    %v12458 = vld [vmem:[#allocation7 + $0x198] sm:$0xff]
    %v12459 = vld [vmem:[#allocation7 + $0x1a0] sm:$0xff]
    %v12460 = vld [vmem:[#allocation7 + $0x1a8] sm:$0xff]
    %v12461 = vld [vmem:[#allocation7 + $0x1b0] sm:$0xff]
    %v12462 = vld [vmem:[#allocation7 + $0x1b8] sm:$0xff]
    %v12463 = vld [vmem:[#allocation7 + $0x1c0] sm:$0xff]
    %v12464 = vld [vmem:[#allocation7 + $0x1c8] sm:$0xff]
    %v12465 = vld [vmem:[#allocation7 + $0x1d0] sm:$0xff]
    %v12466 = vld [vmem:[#allocation7 + $0x1d8] sm:$0xff]
    %v12467 = vld [vmem:[#allocation7 + $0x1e0] sm:$0xff]
    %v12468 = vld [vmem:[#allocation7 + $0x1e8] sm:$0xff]
    %v12469 = vld [vmem:[#allocation7 + $0x1f0] sm:$0xff]
    %v12470 = vld [vmem:[#allocation7 + $0x1f8] sm:$0xff]
    %v12471 = vld [vmem:[%s5] sm:$0x1]
    %v12473 = vlaneseq
    %v12474 = vshrl.u32 %v12473, 7
    %v12475 = vsub.s32 0, %v12474
    %v12476 = vrot.slane %v12471, %v12475
    %12478 = vmatprep.subr.mxu0 0.0
    %12479 = vmatpush1.msra.mxu0 %v12407
    %12480 = vmatprep.subr.mxu0 0.0
    %12481 = vmatpush1.msra.mxu0 %v12408
    %12482 = vmatprep.subr.mxu0 0.0
    %12483 = vmatpush1.msra.mxu0 %v12409
    %12484 = vmatprep.subr.mxu0 0.0
    %12485 = vmatpush1.msra.mxu0 %v12410
    %12486 = vmatprep.subr.mxu0 0.0
    %12487 = vmatpush1.msra.mxu0 %v12411
    %12488 = vmatprep.subr.mxu0 0.0
    %12489 = vmatpush1.msra.mxu0 %v12412
    %12490 = vmatprep.subr.mxu0 0.0
    %12491 = vmatpush1.msra.mxu0 %v12413
    %12492 = vmatprep.subr.mxu0 0.0
    %12493 = vmatpush1.msra.mxu0 %v12414
    %12494 = vmatprep.subr.mxu0 0.0
    %12495 = vmatpush1.msra.mxu0 %v12415
    %12496 = vmatprep.subr.mxu0 0.0
    %12497 = vmatpush1.msra.mxu0 %v12416
    %12498 = vmatprep.subr.mxu0 0.0
    %12499 = vmatpush1.msra.mxu0 %v12417
    %12500 = vmatprep.subr.mxu0 0.0
    %12501 = vmatpush1.msra.mxu0 %v12418
    %12502 = vmatprep.subr.mxu0 0.0
    %12503 = vmatpush1.msra.mxu0 %v12419
    %12504 = vmatprep.subr.mxu0 0.0
    %12505 = vmatpush1.msra.mxu0 %v12420
    %12506 = vmatprep.subr.mxu0 0.0
    %12507 = vmatpush1.msra.mxu0 %v12421
    %12508 = vmatprep.subr.mxu0 0.0
    %12509 = vmatpush1.msra.mxu0 %v12422
    %12510 = vmatprep.subr.mxu0 0.0
    %12511 = vmatpush1.msra.mxu0 %v12423
    %12512 = vmatprep.subr.mxu0 0.0
    %12513 = vmatpush1.msra.mxu0 %v12424
    %12514 = vmatprep.subr.mxu0 0.0
    %12515 = vmatpush1.msra.mxu0 %v12425
    %12516 = vmatprep.subr.mxu0 0.0
    %12517 = vmatpush1.msra.mxu0 %v12426
    %12518 = vmatprep.subr.mxu0 0.0
    %12519 = vmatpush1.msra.mxu0 %v12427
    %12520 = vmatprep.subr.mxu0 0.0
    %12521 = vmatpush1.msra.mxu0 %v12428
    %12522 = vmatprep.subr.mxu0 0.0
    %12523 = vmatpush1.msra.mxu0 %v12429
    %12524 = vmatprep.subr.mxu0 0.0
    %12525 = vmatpush1.msra.mxu0 %v12430
    %12526 = vmatprep.subr.mxu0 0.0
    %12527 = vmatpush1.msra.mxu0 %v12431
    %12528 = vmatprep.subr.mxu0 0.0
    %12529 = vmatpush1.msra.mxu0 %v12432
    %12530 = vmatprep.subr.mxu0 0.0
    %12531 = vmatpush1.msra.mxu0 %v12433
    %12532 = vmatprep.subr.mxu0 0.0
    %12533 = vmatpush1.msra.mxu0 %v12434
    %12534 = vmatprep.subr.mxu0 0.0
    %12535 = vmatpush1.msra.mxu0 %v12435
    %12536 = vmatprep.subr.mxu0 0.0
    %12537 = vmatpush1.msra.mxu0 %v12436
    %12538 = vmatprep.subr.mxu0 0.0
    %12539 = vmatpush1.msra.mxu0 %v12437
    %12540 = vmatprep.subr.mxu0 0.0
    %12541 = vmatpush1.msra.mxu0 %v12438
    %12542 = vmatprep.mubr.f32.mxu0 %v12311
    %12543 = vmatmul.mubr.f32.gmra.mrb[0].mxu0 %v12279
    %v12544 = vpop.f32.mrb[0].mxu0
    %v12545 = vadd.f32 %v12476, %v12544
    %v12546 = vpop.f32.mrb[0].mxu0
    %12547 = vmatprep.mubr.f32.mxu0 %v12312
    %12548 = vmatmul.mubr.f32.gmra.mrb[0].mxu0 %v12280
    %v12549 = vpop.f32.mrb[0].mxu0
    %v12550 = vadd.f32 %v12476, %v12549
    %v12551 = vpop.f32.mrb[0].mxu0
    %12552 = vmatprep.mubr.f32.mxu0 %v12313
    %12553 = vmatmul.mubr.f32.gmra.mrb[0].mxu0 %v12281
    %v12554 = vpop.f32.mrb[0].mxu0
    %v12555 = vadd.f32 %v12476, %v12554
    %v12556 = vpop.f32.mrb[0].mxu0
    %12557 = vmatprep.mubr.f32.mxu0 %v12314
    %12558 = vmatmul.mubr.f32.gmra.mrb[0].mxu0 %v12282
    %v12559 = vpop.f32.mrb[0].mxu0
    %v12560 = vadd.f32 %v12476, %v12559
    %v12561 = vpop.f32.mrb[0].mxu0
    %12562 = vmatprep.mubr.f32.mxu0 %v12315
    %12563 = vmatmul.mubr.f32.gmra.mrb[0].mxu0 %v12283
    %v12564 = vpop.f32.mrb[0].mxu0
    %v12565 = vadd.f32 %v12476, %v12564
    %v12566 = vpop.f32.mrb[0].mxu0
    %12567 = vmatprep.mubr.f32.mxu0 %v12316
    %12568 = vmatmul.mubr.f32.gmra.mrb[0].mxu0 %v12284
    %v12569 = vpop.f32.mrb[0].mxu0
    %v12570 = vadd.f32 %v12476, %v12569
    %v12571 = vpop.f32.mrb[0].mxu0
    %12572 = vmatprep.mubr.f32.mxu0 %v12317
    %12573 = vmatmul.mubr.f32.gmra.mrb[0].mxu0 %v12285
    %v12574 = vpop.f32.mrb[0].mxu0
    %v12575 = vadd.f32 %v12476, %v12574
    %v12576 = vpop.f32.mrb[0].mxu0
    %12577 = vmatprep.mubr.f32.mxu0 %v12318
    %12578 = vmatmul.mubr.f32.gmra.mrb[0].mxu0 %v12286
    %v12579 = vpop.f32.mrb[0].mxu0
    %v12580 = vadd.f32 %v12476, %v12579
    %v12581 = vpop.f32.mrb[0].mxu0
    %12582 = vmatprep.mubr.f32.mxu0 %v12319
    %12583 = vmatmul.mubr.f32.gmra.mrb[0].mxu0 %v12287
    %v12584 = vpop.f32.mrb[0].mxu0
    %v12585 = vadd.f32 %v12476, %v12584
    %v12586 = vpop.f32.mrb[0].mxu0
    %12587 = vmatprep.mubr.f32.mxu0 %v12320
    %12588 = vmatmul.mubr.f32.gmra.mrb[0].mxu0 %v12288
    %v12589 = vpop.f32.mrb[0].mxu0
    %v12590 = vadd.f32 %v12476, %v12589
    %v12591 = vpop.f32.mrb[0].mxu0
    %12592 = vmatprep.mubr.f32.mxu0 %v12321
    %12593 = vmatmul.mubr.f32.gmra.mrb[0].mxu0 %v12289
    %v12594 = vpop.f32.mrb[0].mxu0
    %v12595 = vadd.f32 %v12476, %v12594
    %v12596 = vpop.f32.mrb[0].mxu0
    %12597 = vmatprep.mubr.f32.mxu0 %v12322
    %12598 = vmatmul.mubr.f32.gmra.mrb[0].mxu0 %v12290
    %v12599 = vpop.f32.mrb[0].mxu0
    %v12600 = vadd.f32 %v12476, %v12599
    %v12601 = vpop.f32.mrb[0].mxu0
    %12602 = vmatprep.mubr.f32.mxu0 %v12323
    %12603 = vmatmul.mubr.f32.gmra.mrb[0].mxu0 %v12291
    %v12604 = vpop.f32.mrb[0].mxu0
    %v12605 = vadd.f32 %v12476, %v12604
    %v12606 = vpop.f32.mrb[0].mxu0
    %12607 = vmatprep.mubr.f32.mxu0 %v12324
    %12608 = vmatmul.mubr.f32.gmra.mrb[0].mxu0 %v12292
    %v12609 = vpop.f32.mrb[0].mxu0
    %v12610 = vadd.f32 %v12476, %v12609
    %v12611 = vpop.f32.mrb[0].mxu0
    %12612 = vmatprep.mubr.f32.mxu0 %v12325
    %12613 = vmatmul.mubr.f32.gmra.mrb[0].mxu0 %v12293
    %v12614 = vpop.f32.mrb[0].mxu0
    %v12615 = vadd.f32 %v12476, %v12614
    %v12616 = vpop.f32.mrb[0].mxu0
    %12617 = vmatprep.mubr.f32.mxu0 %v12326
    %12618 = vmatmul.mubr.f32.gmra.mrb[0].mxu0 %v12294
    %v12619 = vpop.f32.mrb[0].mxu0
    %v12620 = vadd.f32 %v12476, %v12619
    %v12621 = vpop.f32.mrb[0].mxu0
    %12622 = vmatprep.mubr.f32.mxu0 %v12327
    %12623 = vmatmul.mubr.f32.gmra.mrb[0].mxu0 %v12295
    %v12624 = vpop.f32.mrb[0].mxu0
    %v12625 = vadd.f32 %v12476, %v12624
    %v12626 = vpop.f32.mrb[0].mxu0
    %12627 = vmatprep.mubr.f32.mxu0 %v12328
    %12628 = vmatmul.mubr.f32.gmra.mrb[0].mxu0 %v12296
    %v12629 = vpop.f32.mrb[0].mxu0
    %v12630 = vadd.f32 %v12476, %v12629
    %v12631 = vpop.f32.mrb[0].mxu0
    %12632 = vmatprep.mubr.f32.mxu0 %v12329
    %12633 = vmatmul.mubr.f32.gmra.mrb[0].mxu0 %v12297
    %v12634 = vpop.f32.mrb[0].mxu0
    %v12635 = vadd.f32 %v12476, %v12634
    %v12636 = vpop.f32.mrb[0].mxu0
    %12637 = vmatprep.mubr.f32.mxu0 %v12330
    %12638 = vmatmul.mubr.f32.gmra.mrb[0].mxu0 %v12298
    %v12639 = vpop.f32.mrb[0].mxu0
    %v12640 = vadd.f32 %v12476, %v12639
    %v12641 = vpop.f32.mrb[0].mxu0
    %12642 = vmatprep.mubr.f32.mxu0 %v12331
    %12643 = vmatmul.mubr.f32.gmra.mrb[0].mxu0 %v12299
    %v12644 = vpop.f32.mrb[0].mxu0
    %v12645 = vadd.f32 %v12476, %v12644
    %v12646 = vpop.f32.mrb[0].mxu0
    %12647 = vmatprep.mubr.f32.mxu0 %v12332
    %12648 = vmatmul.mubr.f32.gmra.mrb[0].mxu0 %v12300
    %v12649 = vpop.f32.mrb[0].mxu0
    %v12650 = vadd.f32 %v12476, %v12649
    %v12651 = vpop.f32.mrb[0].mxu0
    %12652 = vmatprep.mubr.f32.mxu0 %v12333
    %12653 = vmatmul.mubr.f32.gmra.mrb[0].mxu0 %v12301
    %v12654 = vpop.f32.mrb[0].mxu0
    %v12655 = vadd.f32 %v12476, %v12654
    %v12656 = vpop.f32.mrb[0].mxu0
    %12657 = vmatprep.mubr.f32.mxu0 %v12334
    %12658 = vmatmul.mubr.f32.gmra.mrb[0].mxu0 %v12302
    %v12659 = vpop.f32.mrb[0].mxu0
    %v12660 = vadd.f32 %v12476, %v12659
    %v12661 = vpop.f32.mrb[0].mxu0
    %12662 = vmatprep.mubr.f32.mxu0 %v12335
    %12663 = vmatmul.mubr.f32.gmra.mrb[0].mxu0 %v12303
    %v12664 = vpop.f32.mrb[0].mxu0
    %v12665 = vadd.f32 %v12476, %v12664
    %v12666 = vpop.f32.mrb[0].mxu0
    %12667 = vmatprep.mubr.f32.mxu0 %v12336
    %12668 = vmatmul.mubr.f32.gmra.mrb[0].mxu0 %v12304
    %v12669 = vpop.f32.mrb[0].mxu0
    %v12670 = vadd.f32 %v12476, %v12669
    %v12671 = vpop.f32.mrb[0].mxu0
    %12672 = vmatprep.mubr.f32.mxu0 %v12337
    %12673 = vmatmul.mubr.f32.gmra.mrb[0].mxu0 %v12305
    %v12674 = vpop.f32.mrb[0].mxu0
    %v12675 = vadd.f32 %v12476, %v12674
    %v12676 = vpop.f32.mrb[0].mxu0
    %12677 = vmatprep.mubr.f32.mxu0 %v12338
    %12678 = vmatmul.mubr.f32.gmra.mrb[0].mxu0 %v12306
    %v12679 = vpop.f32.mrb[0].mxu0
    %v12680 = vadd.f32 %v12476, %v12679
    %v12681 = vpop.f32.mrb[0].mxu0
    %12682 = vmatprep.mubr.f32.mxu0 %v12339
    %12683 = vmatmul.mubr.f32.gmra.mrb[0].mxu0 %v12307
    %v12684 = vpop.f32.mrb[0].mxu0
    %v12685 = vadd.f32 %v12476, %v12684
    %v12686 = vpop.f32.mrb[0].mxu0
    %12687 = vmatprep.mubr.f32.mxu0 %v12340
    %12688 = vmatmul.mubr.f32.gmra.mrb[0].mxu0 %v12308
    %v12689 = vpop.f32.mrb[0].mxu0
    %v12690 = vadd.f32 %v12476, %v12689
    %v12691 = vpop.f32.mrb[0].mxu0
    %12692 = vmatprep.mubr.f32.mxu0 %v12341
    %12693 = vmatmul.mubr.f32.gmra.mrb[0].mxu0 %v12309
    %v12694 = vpop.f32.mrb[0].mxu0
    %v12695 = vadd.f32 %v12476, %v12694
    %v12696 = vpop.f32.mrb[0].mxu0
    %12697 = vmatprep.mubr.f32.mxu0 %v12342
    %12698 = vmatmul.mubr.f32.gmra.mrb[0].mxu0 %v12310
    %v12699 = vpop.f32.mrb[0].mxu0
    %v12700 = vadd.f32 %v12476, %v12699
    %v12701 = vpop.f32.mrb[0].mxu0
    %12702 = vdwg.mxu0
    %12703 = vmatprep.subr.mxu0 0.0
    %12704 = vmatpush1.msra.mxu0 %v12439
    %12705 = vmatprep.subr.mxu0 0.0
    %12706 = vmatpush1.msra.mxu0 %v12440
    %12707 = vmatprep.subr.mxu0 0.0
    %12708 = vmatpush1.msra.mxu0 %v12441
    %12709 = vmatprep.subr.mxu0 0.0
    %12710 = vmatpush1.msra.mxu0 %v12442
    %12711 = vmatprep.subr.mxu0 0.0
    %12712 = vmatpush1.msra.mxu0 %v12443
    %12713 = vmatprep.subr.mxu0 0.0
    %12714 = vmatpush1.msra.mxu0 %v12444
    %12715 = vmatprep.subr.mxu0 0.0
    %12716 = vmatpush1.msra.mxu0 %v12445
    %12717 = vmatprep.subr.mxu0 0.0
    %12718 = vmatpush1.msra.mxu0 %v12446
    %12719 = vmatprep.subr.mxu0 0.0
    %12720 = vmatpush1.msra.mxu0 %v12447
    %12721 = vmatprep.subr.mxu0 0.0
    %12722 = vmatpush1.msra.mxu0 %v12448
    %12723 = vmatprep.subr.mxu0 0.0
    %12724 = vmatpush1.msra.mxu0 %v12449
    %12725 = vmatprep.subr.mxu0 0.0
    %12726 = vmatpush1.msra.mxu0 %v12450
    %12727 = vmatprep.subr.mxu0 0.0
    %12728 = vmatpush1.msra.mxu0 %v12451
    %12729 = vmatprep.subr.mxu0 0.0
    %12730 = vmatpush1.msra.mxu0 %v12452
    %12731 = vmatprep.subr.mxu0 0.0
    %12732 = vmatpush1.msra.mxu0 %v12453
    %12733 = vmatprep.subr.mxu0 0.0
    %12734 = vmatpush1.msra.mxu0 %v12454
    %12735 = vmatprep.subr.mxu0 0.0
    %12736 = vmatpush1.msra.mxu0 %v12455
    %12737 = vmatprep.subr.mxu0 0.0
    %12738 = vmatpush1.msra.mxu0 %v12456
    %12739 = vmatprep.subr.mxu0 0.0
    %12740 = vmatpush1.msra.mxu0 %v12457
    %12741 = vmatprep.subr.mxu0 0.0
    %12742 = vmatpush1.msra.mxu0 %v12458
    %12743 = vmatprep.subr.mxu0 0.0
    %12744 = vmatpush1.msra.mxu0 %v12459
    %12745 = vmatprep.subr.mxu0 0.0
    %12746 = vmatpush1.msra.mxu0 %v12460
    %12747 = vmatprep.subr.mxu0 0.0
    %12748 = vmatpush1.msra.mxu0 %v12461
    %12749 = vmatprep.subr.mxu0 0.0
    %12750 = vmatpush1.msra.mxu0 %v12462
    %12751 = vmatprep.subr.mxu0 0.0
    %12752 = vmatpush1.msra.mxu0 %v12463
    %12753 = vmatprep.subr.mxu0 0.0
    %12754 = vmatpush1.msra.mxu0 %v12464
    %12755 = vmatprep.subr.mxu0 0.0
    %12756 = vmatpush1.msra.mxu0 %v12465
    %12757 = vmatprep.subr.mxu0 0.0
    %12758 = vmatpush1.msra.mxu0 %v12466
    %12759 = vmatprep.subr.mxu0 0.0
    %12760 = vmatpush1.msra.mxu0 %v12467
    %12761 = vmatprep.subr.mxu0 0.0
    %12762 = vmatpush1.msra.mxu0 %v12468
    %12763 = vmatprep.subr.mxu0 0.0
    %12764 = vmatpush1.msra.mxu0 %v12469
    %12765 = vmatprep.subr.mxu0 0.0
    %12766 = vmatpush1.msra.mxu0 %v12470
    %12767 = vmatprep.mubr.f32.mxu0 %v12375
    %12768 = vmatmul.mubr.f32.gmra.mrb[0].mxu0 %v12343
    %v12769 = vpop.f32.mrb[0].mxu0
    %v12770 = vadd.f32 %v12545, %v12769
    %v12771 = vpop.f32.mrb[0].mxu0
    %12772 = vmatprep.mubr.f32.mxu0 %v12376
    %12773 = vmatmul.mubr.f32.gmra.mrb[0].mxu0 %v12344
    %v12774 = vpop.f32.mrb[0].mxu0
    %v12775 = vadd.f32 %v12550, %v12774
    %v12776 = vpop.f32.mrb[0].mxu0
    %12777 = vmatprep.mubr.f32.mxu0 %v12377
    %12778 = vmatmul.mubr.f32.gmra.mrb[0].mxu0 %v12345
    %v12779 = vpop.f32.mrb[0].mxu0
    %v12780 = vadd.f32 %v12555, %v12779
    %v12781 = vpop.f32.mrb[0].mxu0
    %12782 = vmatprep.mubr.f32.mxu0 %v12378
    %12783 = vmatmul.mubr.f32.gmra.mrb[0].mxu0 %v12346
    %v12784 = vpop.f32.mrb[0].mxu0
    %v12785 = vadd.f32 %v12560, %v12784
    %v12786 = vpop.f32.mrb[0].mxu0
    %12787 = vmatprep.mubr.f32.mxu0 %v12379
    %12788 = vmatmul.mubr.f32.gmra.mrb[0].mxu0 %v12347
    %v12789 = vpop.f32.mrb[0].mxu0
    %v12790 = vadd.f32 %v12565, %v12789
    %v12791 = vpop.f32.mrb[0].mxu0
    %12792 = vmatprep.mubr.f32.mxu0 %v12380
    %12793 = vmatmul.mubr.f32.gmra.mrb[0].mxu0 %v12348
    %v12794 = vpop.f32.mrb[0].mxu0
    %v12795 = vadd.f32 %v12570, %v12794
    %v12796 = vpop.f32.mrb[0].mxu0
    %12797 = vmatprep.mubr.f32.mxu0 %v12381
    %12798 = vmatmul.mubr.f32.gmra.mrb[0].mxu0 %v12349
    %v12799 = vpop.f32.mrb[0].mxu0
    %v12800 = vadd.f32 %v12575, %v12799
    %v12801 = vpop.f32.mrb[0].mxu0
    %12802 = vmatprep.mubr.f32.mxu0 %v12382
    %12803 = vmatmul.mubr.f32.gmra.mrb[0].mxu0 %v12350
    %v12804 = vpop.f32.mrb[0].mxu0
    %v12805 = vadd.f32 %v12580, %v12804
    %v12806 = vpop.f32.mrb[0].mxu0
    %12807 = vmatprep.mubr.f32.mxu0 %v12383
    %12808 = vmatmul.mubr.f32.gmra.mrb[0].mxu0 %v12351
    %v12809 = vpop.f32.mrb[0].mxu0
    %v12810 = vadd.f32 %v12585, %v12809
    %v12811 = vpop.f32.mrb[0].mxu0
    %12812 = vmatprep.mubr.f32.mxu0 %v12384
    %12813 = vmatmul.mubr.f32.gmra.mrb[0].mxu0 %v12352
    %v12814 = vpop.f32.mrb[0].mxu0
    %v12815 = vadd.f32 %v12590, %v12814
    %v12816 = vpop.f32.mrb[0].mxu0
    %12817 = vmatprep.mubr.f32.mxu0 %v12385
    %12818 = vmatmul.mubr.f32.gmra.mrb[0].mxu0 %v12353
    %v12819 = vpop.f32.mrb[0].mxu0
    %v12820 = vadd.f32 %v12595, %v12819
    %v12821 = vpop.f32.mrb[0].mxu0
    %12822 = vmatprep.mubr.f32.mxu0 %v12386
    %12823 = vmatmul.mubr.f32.gmra.mrb[0].mxu0 %v12354
    %v12824 = vpop.f32.mrb[0].mxu0
    %v12825 = vadd.f32 %v12600, %v12824
    %v12826 = vpop.f32.mrb[0].mxu0
    %12827 = vmatprep.mubr.f32.mxu0 %v12387
    %12828 = vmatmul.mubr.f32.gmra.mrb[0].mxu0 %v12355
    %v12829 = vpop.f32.mrb[0].mxu0
    %v12830 = vadd.f32 %v12605, %v12829
    %v12831 = vpop.f32.mrb[0].mxu0
    %12832 = vmatprep.mubr.f32.mxu0 %v12388
    %12833 = vmatmul.mubr.f32.gmra.mrb[0].mxu0 %v12356
    %v12834 = vpop.f32.mrb[0].mxu0
    %v12835 = vadd.f32 %v12610, %v12834
    %v12836 = vpop.f32.mrb[0].mxu0
    %12837 = vmatprep.mubr.f32.mxu0 %v12389
    %12838 = vmatmul.mubr.f32.gmra.mrb[0].mxu0 %v12357
    %v12839 = vpop.f32.mrb[0].mxu0
    %v12840 = vadd.f32 %v12615, %v12839
    %v12841 = vpop.f32.mrb[0].mxu0
    %12842 = vmatprep.mubr.f32.mxu0 %v12390
    %12843 = vmatmul.mubr.f32.gmra.mrb[0].mxu0 %v12358
    %v12844 = vpop.f32.mrb[0].mxu0
    %v12845 = vadd.f32 %v12620, %v12844
    %v12846 = vpop.f32.mrb[0].mxu0
    %12847 = vmatprep.mubr.f32.mxu0 %v12391
    %12848 = vmatmul.mubr.f32.gmra.mrb[0].mxu0 %v12359
    %v12849 = vpop.f32.mrb[0].mxu0
    %v12850 = vadd.f32 %v12625, %v12849
    %v12851 = vpop.f32.mrb[0].mxu0
    %12852 = vmatprep.mubr.f32.mxu0 %v12392
    %12853 = vmatmul.mubr.f32.gmra.mrb[0].mxu0 %v12360
    %v12854 = vpop.f32.mrb[0].mxu0
    %v12855 = vadd.f32 %v12630, %v12854
    %v12856 = vpop.f32.mrb[0].mxu0
    %12857 = vmatprep.mubr.f32.mxu0 %v12393
    %12858 = vmatmul.mubr.f32.gmra.mrb[0].mxu0 %v12361
    %v12859 = vpop.f32.mrb[0].mxu0
    %v12860 = vadd.f32 %v12635, %v12859
    %v12861 = vpop.f32.mrb[0].mxu0
    %12862 = vmatprep.mubr.f32.mxu0 %v12394
    %12863 = vmatmul.mubr.f32.gmra.mrb[0].mxu0 %v12362
    %v12864 = vpop.f32.mrb[0].mxu0
    %v12865 = vadd.f32 %v12640, %v12864
    %v12866 = vpop.f32.mrb[0].mxu0
    %12867 = vmatprep.mubr.f32.mxu0 %v12395
    %12868 = vmatmul.mubr.f32.gmra.mrb[0].mxu0 %v12363
    %v12869 = vpop.f32.mrb[0].mxu0
    %v12870 = vadd.f32 %v12645, %v12869
    %v12871 = vpop.f32.mrb[0].mxu0
    %12872 = vmatprep.mubr.f32.mxu0 %v12396
    %12873 = vmatmul.mubr.f32.gmra.mrb[0].mxu0 %v12364
    %v12874 = vpop.f32.mrb[0].mxu0
    %v12875 = vadd.f32 %v12650, %v12874
    %v12876 = vpop.f32.mrb[0].mxu0
    %12877 = vmatprep.mubr.f32.mxu0 %v12397
    %12878 = vmatmul.mubr.f32.gmra.mrb[0].mxu0 %v12365
    %v12879 = vpop.f32.mrb[0].mxu0
    %v12880 = vadd.f32 %v12655, %v12879
    %v12881 = vpop.f32.mrb[0].mxu0
    %12882 = vmatprep.mubr.f32.mxu0 %v12398
    %12883 = vmatmul.mubr.f32.gmra.mrb[0].mxu0 %v12366
    %v12884 = vpop.f32.mrb[0].mxu0
    %v12885 = vadd.f32 %v12660, %v12884
    %v12886 = vpop.f32.mrb[0].mxu0
    %12887 = vmatprep.mubr.f32.mxu0 %v12399
    %12888 = vmatmul.mubr.f32.gmra.mrb[0].mxu0 %v12367
    %v12889 = vpop.f32.mrb[0].mxu0
    %v12890 = vadd.f32 %v12665, %v12889
    %v12891 = vpop.f32.mrb[0].mxu0
    %12892 = vmatprep.mubr.f32.mxu0 %v12400
    %12893 = vmatmul.mubr.f32.gmra.mrb[0].mxu0 %v12368
    %v12894 = vpop.f32.mrb[0].mxu0
    %v12895 = vadd.f32 %v12670, %v12894
    %v12896 = vpop.f32.mrb[0].mxu0
    %12897 = vmatprep.mubr.f32.mxu0 %v12401
    %12898 = vmatmul.mubr.f32.gmra.mrb[0].mxu0 %v12369
    %v12899 = vpop.f32.mrb[0].mxu0
    %v12900 = vadd.f32 %v12675, %v12899
    %v12901 = vpop.f32.mrb[0].mxu0
    %12902 = vmatprep.mubr.f32.mxu0 %v12402
    %12903 = vmatmul.mubr.f32.gmra.mrb[0].mxu0 %v12370
    %v12904 = vpop.f32.mrb[0].mxu0
    %v12905 = vadd.f32 %v12680, %v12904
    %v12906 = vpop.f32.mrb[0].mxu0
    %12907 = vmatprep.mubr.f32.mxu0 %v12403
    %12908 = vmatmul.mubr.f32.gmra.mrb[0].mxu0 %v12371
    %v12909 = vpop.f32.mrb[0].mxu0
    %v12910 = vadd.f32 %v12685, %v12909
    %v12911 = vpop.f32.mrb[0].mxu0
    %12912 = vmatprep.mubr.f32.mxu0 %v12404
    %12913 = vmatmul.mubr.f32.gmra.mrb[0].mxu0 %v12372
    %v12914 = vpop.f32.mrb[0].mxu0
    %v12915 = vadd.f32 %v12690, %v12914
    %v12916 = vpop.f32.mrb[0].mxu0
    %12917 = vmatprep.mubr.f32.mxu0 %v12405
    %12918 = vmatmul.mubr.f32.gmra.mrb[0].mxu0 %v12373
    %v12919 = vpop.f32.mrb[0].mxu0
    %v12920 = vadd.f32 %v12695, %v12919
    %v12921 = vpop.f32.mrb[0].mxu0
    %12922 = vmatprep.mubr.f32.mxu0 %v12406
    %12923 = vmatmul.mubr.f32.gmra.mrb[0].mxu0 %v12374
    %v12924 = vpop.f32.mrb[0].mxu0
    %v12925 = vadd.f32 %v12700, %v12924
    %v12926 = vpop.f32.mrb[0].mxu0
    %12927 = vdwg.mxu0
    %12928 = vst [vmem:[#allocation8] sm:$0xff] %v12770
    %12929 = vst [vmem:[#allocation8 + $0x8] sm:$0xff] %v12775
    %12930 = vst [vmem:[#allocation8 + $0x10] sm:$0xff] %v12780
    %12931 = vst [vmem:[#allocation8 + $0x18] sm:$0xff] %v12785
    %12932 = vst [vmem:[#allocation8 + $0x20] sm:$0xff] %v12790
    %12933 = vst [vmem:[#allocation8 + $0x28] sm:$0xff] %v12795
    %12934 = vst [vmem:[#allocation8 + $0x30] sm:$0xff] %v12800
    %12935 = vst [vmem:[#allocation8 + $0x38] sm:$0xff] %v12805
    %12936 = vst [vmem:[#allocation8 + $0x40] sm:$0xff] %v12810
    %12937 = vst [vmem:[#allocation8 + $0x48] sm:$0xff] %v12815
    %12938 = vst [vmem:[#allocation8 + $0x50] sm:$0xff] %v12820
    %12939 = vst [vmem:[#allocation8 + $0x58] sm:$0xff] %v12825
    %12940 = vst [vmem:[#allocation8 + $0x60] sm:$0xff] %v12830
    %12941 = vst [vmem:[#allocation8 + $0x68] sm:$0xff] %v12835
    %12942 = vst [vmem:[#allocation8 + $0x70] sm:$0xff] %v12840
    %12943 = vst [vmem:[#allocation8 + $0x78] sm:$0xff] %v12845
    %12944 = vst [vmem:[#allocation8 + $0x80] sm:$0xff] %v12850
    %12945 = vst [vmem:[#allocation8 + $0x88] sm:$0xff] %v12855
    %12946 = vst [vmem:[#allocation8 + $0x90] sm:$0xff] %v12860
    %12947 = vst [vmem:[#allocation8 + $0x98] sm:$0xff] %v12865
    %12948 = vst [vmem:[#allocation8 + $0xa0] sm:$0xff] %v12870
    %12949 = vst [vmem:[#allocation8 + $0xa8] sm:$0xff] %v12875
    %12950 = vst [vmem:[#allocation8 + $0xb0] sm:$0xff] %v12880
    %12951 = vst [vmem:[#allocation8 + $0xb8] sm:$0xff] %v12885
    %12952 = vst [vmem:[#allocation8 + $0xc0] sm:$0xff] %v12890
    %12953 = vst [vmem:[#allocation8 + $0xc8] sm:$0xff] %v12895
    %12954 = vst [vmem:[#allocation8 + $0xd0] sm:$0xff] %v12900
    %12955 = vst [vmem:[#allocation8 + $0xd8] sm:$0xff] %v12905
    %12956 = vst [vmem:[#allocation8 + $0xe0] sm:$0xff] %v12910
    %12957 = vst [vmem:[#allocation8 + $0xe8] sm:$0xff] %v12915
    %12958 = vst [vmem:[#allocation8 + $0xf0] sm:$0xff] %v12920
    %12959 = vst [vmem:[#allocation8 + $0xf8] sm:$0xff] %v12925
    // Predicated region
    $region38: #{_lambda_.1} parent=1 // pred_check
      _
    $region39: #{_lambda_.1} parent=1 // pred_check_branch
      %12961 = sbr.rel (0) target = $region41
    $region40: #{_lambda_.1} parent=1 // pred_region
      %s12963 = ssub.s32 4096, 4096
      %12964 = vsyncadd [#allocation4], %s12963
      %s12965 = sshll.u32 [#allocation8], 4
      %s12966 = int_to_ptr.vmem [resolvable:$true] %s12965
      %12971 = dma.vmem_to_hbm [thread:$0]  %s12966, 4096, %s6, [#allocation4], 128, 128, 8
    $region41: #{_lambda_.1} parent=1 // pred_fallthru
      _
    // Predicated region
    $region42: #{_lambda_.1} parent=1 // pred_check
      _
    $region43: #{_lambda_.1} parent=1 // pred_check_branch
      %12973 = sbr.rel (0) target = $region45
    $region44: #{_lambda_.1} parent=1 // pred_region
      %12974 = dma.done [#allocation4], 4096
    $region45: #{_lambda_.1} parent=1 // pred_fallthru
      _
    %12975 = vsyncpa [#allocation3], 1
    %12976 = vsyncpa [#allocation6], 1
    %12977 = vsyncpa [#allocation4], 1

</llo_original>
